<compile_context>
chip_gen: v7x
topology: tpu7x:2x2x1
jax: 0.10.0
libtpu: 0.0.40
codegen_flags: <defaults>
</compile_context>

<pallas_src>
import functools

import jax
import jax.numpy as jnp
from jax.experimental import pallas as pl
from jax.experimental.pallas import tpu as pltpu

BN_EPS = 1e-5
LANE = 128
VMEM_LIMIT = 48 * 1024 * 1024  # <= v7x's 64 MiB physical; fine on v5e/v6e (128 MiB)


def _cdiv(a, b):
    return -(-a // b)


def _round_up(x, m):
    return _cdiv(x, m) * m


def _pick_row_tile(m, max_tile=1024, min_steps=4):
    """Row tile for elementwise kernels: sublane-aligned, aims for >= min_steps grid steps."""
    return max(8, min(max_tile, _round_up(_cdiv(m, min_steps), 8)))


def _pick_pair_block(n_pairs, max_pairs=16, min_steps=4):
    """Pooled output rows per grid step: largest divisor of n_pairs keeping >= min_steps steps."""
    best = 1
    for rb in range(1, min(max_pairs, n_pairs) + 1):
        if n_pairs % rb == 0 and n_pairs // rb >= min(min_steps, n_pairs):
            best = rb
    return best


# ---------------------------------------------------------------------------
# Kernels
# ---------------------------------------------------------------------------
def _conv_stats_kernel(x_ref, w_ref, y_ref, s_ref, *, khq, kwq, ho, wo):
    """Stride-1 conv as a sum of khq*kwq shifted matmuls + per-image BN stats.

    x_ref: (1, Hq, Wq, Cie) bf16  spatially padded input (one image)
    w_ref: (khq*kwq, Cie, Cp) bf16 one (Cie, Cp) weight slab per kernel offset
    y_ref: (1, ho*wo, Cp) bf16     raw conv output (bias-free)
    s_ref: (1, 8, Cp) f32          row 0 = sum, row 1 = sum of squares
    """
    x = x_ref[...]                            # full-block load; VMEM/vreg resident
    cie = x.shape[-1]
    cp = y_ref.shape[-1]
    acc = jnp.zeros((ho * wo, cp), jnp.float32)
    for qi in range(khq):
        for qj in range(kwq):
            patch = x[0, qi:qi + ho, qj:qj + wo, :].reshape(ho * wo, cie)
            q = qi * kwq + qj
            w_slab = w_ref[q:q + 1, :, :].reshape(cie, cp)
            acc = acc + jnp.dot(patch, w_slab, preferred_element_type=jnp.float32)
    y_ref[...] = acc[None].astype(y_ref.dtype)
    ssum = jnp.sum(acc, axis=0, keepdims=True)
    ssq = jnp.sum(acc * acc, axis=0, keepdims=True)
    s_ref[...] = jnp.concatenate(
        [ssum, ssq, jnp.zeros((6, cp), jnp.float32)], axis=0)[None]


def _bn_relu_kernel(y_ref, scale_ref, shift_ref, o_ref):
    """Elementwise folded-BN affine + ReLU.  y_ref: (MT, Cp) bf16 -> o_ref bf16."""
    y = y_ref[...].astype(jnp.float32)
    z = jnp.maximum(y * scale_ref[...] + shift_ref[...], 0.0)
    o_ref[...] = z.astype(o_ref.dtype)


def _bn_relu_pool_kernel(y_ref, scale_ref, shift_ref, o_ref):
    """Fused folded-BN affine + ReLU + MaxPool2d(2, 2).

    y_ref: (2*RB, Wq, 2*Cp) bf16 -- adjacent column pairs packed along lanes
    o_ref: (RB, Wq, Cp) bf16
    """
    cp = o_ref.shape[-1]
    y = y_ref[...].astype(jnp.float32)
    sc = scale_ref[...]
    sh = shift_ref[...]
    left = jnp.maximum(y[:, :, :cp] * sc + sh, 0.0)      # even output columns
    right = jnp.maximum(y[:, :, cp:] * sc + sh, 0.0)     # odd output columns
    cols = jnp.maximum(left, right)                      # (2*RB, Wq, Cp)
    rows = cols.reshape(cols.shape[0] // 2, 2, cols.shape[1], cp)
    o_ref[...] = jnp.maximum(rows[:, 0], rows[:, 1]).astype(o_ref.dtype)


# ---------------------------------------------------------------------------
# Wrappers
# ---------------------------------------------------------------------------
def _prepare_stride1(x, w, stride, pad):
    """Rewrite (x, w, stride, pad) as an equivalent stride-1 conv.

    Returns x_prep bf16 (N, Hq, Wq, Cie), w_prep f32 (khq*kwq, Cie, Cout),
    khq, kwq, ho, wo with
        out[n, a, b] = sum_{qi, qj} x_prep[n, a+qi, b+qj, :] @ w_prep[qi*kwq + qj].
    Stride > 1 uses a one-time XLA space-to-depth (phase planes folded into
    channels), so the Pallas kernel only ever needs contiguous window slices.
    """
    n, h, wd, cin = x.shape
    kh, kw, wcin, cout = w.shape
    if cin > wcin:  # activation is lane-padded with zero channels -> pad weight Cin
        w = jnp.pad(w, ((0, 0), (0, 0), (0, cin - wcin), (0, 0)))
    ho = (h + 2 * pad - kh) // stride + 1
    wo = (wd + 2 * pad - kw) // stride + 1
    xp = jnp.pad(x, ((0, 0), (pad, pad), (pad, pad), (0, 0)))
    if stride == 1:
        return (xp.astype(jnp.bfloat16), w.reshape(kh * kw, cin, cout),
                kh, kw, ho, wo)

    s = stride
    khq, kwq = _cdiv(kh, s), _cdiv(kw, s)
    rows_t = max(_round_up(xp.shape[1], s), s * (ho + khq - 1))
    cols_t = max(_round_up(xp.shape[2], s), s * (wo + kwq - 1))
    xp = jnp.pad(xp, ((0, 0), (0, rows_t - xp.shape[1]),
                      (0, cols_t - xp.shape[2]), (0, 0)))
    hq, wq = rows_t // s, cols_t // s
    x_prep = jnp.transpose(
        xp.reshape(n, hq, s, wq, s, cin), (0, 1, 3, 2, 4, 5)
    ).reshape(n, hq, wq, s * s * cin)
    w_ext = jnp.pad(w, ((0, s * khq - kh), (0, s * kwq - kw), (0, 0), (0, 0)))
    w_prep = jnp.transpose(
        w_ext.reshape(khq, s, kwq, s, cin, cout), (0, 2, 1, 3, 4, 5)
    ).reshape(khq * kwq, s * s * cin, cout)
    return x_prep.astype(jnp.bfloat16), w_prep, khq, kwq, ho, wo


def _bn_relu(y, scale, shift):
    """y: (N, P, C) bf16 raw conv output -> same-shape bf16 BN+ReLU output."""
    n, p, c = y.shape
    m = n * p
    mt = _pick_row_tile(m)
    mp = _round_up(m, mt)
    y2 = y.reshape(m, c)
    if mp != m:
        y2 = jnp.pad(y2, ((0, mp - m), (0, 0)))
    out = pl.pallas_call(
        _bn_relu_kernel,
        grid=(mp // mt,),
        in_specs=[pl.BlockSpec((mt, c), lambda i: (i, 0)),
                  pl.BlockSpec((1, c), lambda i: (0, 0)),
                  pl.BlockSpec((1, c), lambda i: (0, 0))],
        out_specs=pl.BlockSpec((mt, c), lambda i: (i, 0)),
        out_shape=jax.ShapeDtypeStruct((mp, c), jnp.bfloat16),
        compiler_params=pltpu.CompilerParams(
            dimension_semantics=("parallel",),
            vmem_limit_bytes=VMEM_LIMIT),
    )(y2, scale.reshape(1, c), shift.reshape(1, c))
    return out[:m].reshape(n, p, c)


def _bn_relu_maxpool(y, scale, shift, *, ho, wo):
    """y: (N, ho*wo, C) bf16 -> fused BN+ReLU+MaxPool2d(2,2): (N, ho/2, wo/2, C) bf16."""
    n, _, c = y.shape
    assert ho % 2 == 0 and wo % 2 == 0, (ho, wo)
    rows, wq = n * ho, wo // 2
    yw = y.reshape(rows, wq, 2 * c)   # adjacent column pairs packed along the lane axis
    n_pairs = rows // 2
    rb = _pick_pair_block(n_pairs)
    out = pl.pallas_call(
        _bn_relu_pool_kernel,
        grid=(n_pairs // rb,),
        in_specs=[pl.BlockSpec((2 * rb, wq, 2 * c), lambda i: (i, 0, 0)),
                  pl.BlockSpec((1, 1, c), lambda i: (0, 0, 0)),
                  pl.BlockSpec((1, 1, c), lambda i: (0, 0, 0))],
        out_specs=pl.BlockSpec((rb, wq, c), lambda i: (i, 0, 0)),
        out_shape=jax.ShapeDtypeStruct((n_pairs, wq, c), jnp.bfloat16),
        compiler_params=pltpu.CompilerParams(
            dimension_semantics=("parallel",),
            vmem_limit_bytes=VMEM_LIMIT),
    )(yw, scale.reshape(1, 1, c), shift.reshape(1, 1, c))
    return out.reshape(n, ho // 2, wq, c)


def conv_bn_relu(x, w, gamma, beta, *, stride, pad, pool=False):
    """x: (N, H, W, C) NHWC (C may already be lane-padded with zeros); w: (KH, KW, Cin, Cout) f32.

    Returns bf16 NHWC with Cout padded to the 128-lane width (padded channels are
    exactly zero); spatial dims halved when pool=True.  The conv bias is omitted:
    train-mode BN subtracts the batch mean, which cancels a constant bias exactly.
    """
    n = x.shape[0]
    cout = w.shape[-1]
    cp = _round_up(cout, LANE)

    x_prep, w_prep, khq, kwq, ho, wo = _prepare_stride1(x, w, stride, pad)
    _, hq, wq, cie = x_prep.shape
    khk = khq * kwq
    w_mat = jnp.pad(w_prep, ((0, 0), (0, 0), (0, cp - cout))).astype(jnp.bfloat16)

    # Single conv pass: raw conv output (bf16) + per-image partial BN stats (f32).
    conv_out, stats = pl.pallas_call(
        functools.partial(_conv_stats_kernel, khq=khq, kwq=kwq, ho=ho, wo=wo),
        grid=(n,),
        in_specs=[
            pl.BlockSpec((1, hq, wq, cie), lambda i: (i, 0, 0, 0)),
            pl.BlockSpec((khk, cie, cp), lambda i: (0, 0, 0)),
        ],
        out_specs=(
            pl.BlockSpec((1, ho * wo, cp), lambda i: (i, 0, 0)),
            pl.BlockSpec((1, 8, cp), lambda i: (i, 0, 0)),
        ),
        out_shape=(
            jax.ShapeDtypeStruct((n, ho * wo, cp), jnp.bfloat16),
            jax.ShapeDtypeStruct((n, 8, cp), jnp.float32),
        ),
        compiler_params=pltpu.CompilerParams(
            dimension_semantics=("parallel",),
            vmem_limit_bytes=VMEM_LIMIT),
    )(x_prep, w_mat)

    # Fold train-mode BN into a per-channel affine (f32, biased variance, clamped).
    count = n * ho * wo
    tot = jnp.sum(stats, axis=0)
    mean = tot[0] / count
    var = jnp.maximum(tot[1] / count - mean * mean, 0.0)
    inv = jax.lax.rsqrt(var + BN_EPS)
    gamma_p = jnp.pad(gamma, (0, cp - cout), constant_values=1.0)
    beta_p = jnp.pad(beta, (0, cp - cout))
    scale = gamma_p * inv
    shift = beta_p - mean * gamma_p * inv

    if pool:
        return _bn_relu_maxpool(conv_out, scale, shift, ho=ho, wo=wo)
    return _bn_relu(conv_out, scale, shift).reshape(n, ho, wo, cp)


# ---------------------------------------------------------------------------
# ConvNet forward
# ---------------------------------------------------------------------------
def init_params(key, in_dim, out_dim):
    ks = jax.random.split(key, 6)

    def conv_w(k, kh, kw, cin, cout):
        fan_in = kh * kw * cin
        return jax.random.normal(k, (kh, kw, cin, cout), jnp.float32) / jnp.sqrt(fan_in)

    def conv_b(k, cout):
        return 0.01 * jax.random.normal(k, (cout,), jnp.float32)

    ones = jnp.ones((out_dim,), jnp.float32)
    zeros = jnp.zeros((out_dim,), jnp.float32)
    # b1..b3 kept for module parity but unused in the Pallas path: a constant
    # per-channel conv bias is exactly cancelled by train-mode BN mean subtraction.
    return {
        "w1": conv_w(ks[0], 7, 7, in_dim, out_dim), "b1": conv_b(ks[1], out_dim),
        "g1": ones, "be1": zeros,
        "w2": conv_w(ks[2], 3, 3, out_dim, out_dim), "b2": conv_b(ks[3], out_dim),
        "g2": ones, "be2": zeros,
        "w3": conv_w(ks[4], 3, 3, out_dim, out_dim), "b3": conv_b(ks[5], out_dim),
        "g3": ones, "be3": zeros,
    }


@jax.jit
def convnet_forward(x_nchw, params):
    p = params
    cout = p["w1"].shape[-1]
    x = jnp.transpose(x_nchw, (0, 2, 3, 1))  # NCHW -> NHWC
    # layer_1: Conv(7x7, s=2, p=3) + BN + ReLU
    x = conv_bn_relu(x, p["w1"], p["g1"], p["be1"], stride=2, pad=3, pool=False)
    # layer_2: Conv(3x3, s=1, p=1) + BN + ReLU + MaxPool(2,2)
    x = conv_bn_relu(x, p["w2"], p["g2"], p["be2"], stride=1, pad=1, pool=True)
    # layer_3: Conv(3x3, s=1, p=1) + BN + ReLU + MaxPool(2,2)
    x = conv_bn_relu(x, p["w3"], p["g3"], p["be3"], stride=1, pad=1, pool=True)
    # channel padding is carried through all layers and sliced off only here
    x = x[..., :cout].astype(jnp.float32)
    return jnp.transpose(x, (0, 3, 1, 2))  # NHWC -> NCHW


def _reference_forward(x_nchw, params):
    """Pure-XLA f32 reference (with the conv bias, which train-mode BN cancels)."""
    def conv(x, w, b, stride, pad):
        y = jax.lax.conv_general_dilated(
            x, w, (stride, stride), ((pad, pad), (pad, pad)),
            dimension_numbers=("NHWC", "HWIO", "NHWC"))
        return y + b

    def bn_relu(y, g, b):
        mean = jnp.mean(y, axis=(0, 1, 2))
        var = jnp.var(y, axis=(0, 1, 2))
        return jnp.maximum((y - mean) * jax.lax.rsqrt(var + BN_EPS) * g + b, 0.0)

    def pool(y):
        n, h, w, c = y.shape
        return jnp.max(y.reshape(n, h // 2, 2, w // 2, 2, c), axis=(2, 4))

    p = params
    x = jnp.transpose(x_nchw, (0, 2, 3, 1))
    x = bn_relu(conv(x, p["w1"], p["b1"], 2, 3), p["g1"], p["be1"])
    x = pool(bn_relu(conv(x, p["w2"], p["b2"], 1, 1), p["g2"], p["be2"]))
    x = pool(bn_relu(conv(x, p["w3"], p["b3"], 1, 1), p["g3"], p["be3"]))
    return jnp.transpose(x, (0, 3, 1, 2))


if __name__ == "__main__":
    B, C_in, img_h, img_w = 2, 4, 16, 16
    out_dim = 8

    key = jax.random.PRNGKey(0)
    kx, kp = jax.random.split(key)
    x = jax.random.normal(kx, (B, C_in, img_h, img_w), jnp.float32)
    params = init_params(kp, C_in, out_dim)

    y = jax.block_until_ready(convnet_forward(x, params))
    assert y.shape == (B, out_dim, img_h // 8, img_w // 8), y.shape
    assert bool(jnp.all(jnp.isfinite(y))), "non-finite output"

    # bf16 Pallas pipeline vs f32 XLA reference (loose tolerance for bf16 rounding).
    y_ref = jax.block_until_ready(_reference_forward(x, params))
    max_err = float(jnp.max(jnp.abs(y - y_ref)))
    assert max_err < 0.25, f"mismatch vs reference: max |diff| = {max_err}"

    print("KERNEL_OK")
</pallas_src>

<mosaic_0001>
module attributes {stable_mosaic.version = 11 : i64} {
  func.func @_conv_stats_kernel(%arg0: i32, %arg1: memref<1x11x11x16xbf16, #tpu.memory_space<vmem>>, %arg2: memref<16x16x128xbf16, #tpu.memory_space<vmem>>, %arg3: memref<1x64x128xbf16, #tpu.memory_space<vmem>>, %arg4: memref<1x8x128xf32, #tpu.memory_space<vmem>>) attributes {dimension_semantics = [#tpu.dimension_semantics<parallel>], iteration_bounds = array<i64: 2>, scalar_prefetch = 0 : i64, scratch_operands = 0 : i64, tpu.core_type = #tpu.core_type<tc>, window_params = [{transform_indices = @transform_0, window_bounds = array<i64: 1, 11, 11, 16>}, {pipeline_mode = #tpu.pipeline_mode<synchronous>, transform_indices = @transform_1, window_bounds = array<i64: 16, 16, 128>}, {transform_indices = @transform_2, window_bounds = array<i64: 1, 64, 128>}, {transform_indices = @transform_3, window_bounds = array<i64: 1, 8, 128>}]} {
    %c0 = arith.constant 0 : index
    %c0_0 = arith.constant 0 : index
    %c0_1 = arith.constant 0 : index
    %c0_2 = arith.constant 0 : index
    %0 = vector.load %arg1[%c0, %c0_0, %c0_1, %c0_2] : memref<1x11x11x16xbf16, #tpu.memory_space<vmem>>, vector<1x11x11x16xbf16>
    %cst = arith.constant 0.000000e+00 : f32
    %1 = vector.broadcast %cst : f32 to vector<64x128xf32>
    %2 = vector.extract_strided_slice %0 {offsets = [0, 0, 0, 0], sizes = [1, 8, 8, 16], strides = [1, 1, 1, 1]} : vector<1x11x11x16xbf16> to vector<1x8x8x16xbf16>
    %3 = vector.shape_cast %2 : vector<1x8x8x16xbf16> to vector<8x8x16xbf16>
    %4 = vector.shape_cast %3 : vector<8x8x16xbf16> to vector<64x16xbf16>
    %c0_3 = arith.constant 0 : index
    %c0_4 = arith.constant 0 : index
    %c0_5 = arith.constant 0 : index
    %5 = vector.load %arg2[%c0_3, %c0_4, %c0_5] : memref<16x16x128xbf16, #tpu.memory_space<vmem>>, vector<1x16x128xbf16>
    %6 = vector.shape_cast %5 : vector<1x16x128xbf16> to vector<16x128xbf16>
    %cst_6 = arith.constant dense<0.000000e+00> : vector<64x128xf32>
    %7 = tpu.matmul %4, %6, %cst_6 {dimension_numbers = #tpu.dot_dimension_numbers<[1], [0], [0], [1], [0, 0, 1, 1], [], []>} : vector<64x16xbf16>, vector<16x128xbf16>, vector<64x128xf32> -> vector<64x128xf32>
    %8 = arith.addf %1, %7 : vector<64x128xf32>
    %9 = vector.extract_strided_slice %0 {offsets = [0, 0, 1, 0], sizes = [1, 8, 8, 16], strides = [1, 1, 1, 1]} : vector<1x11x11x16xbf16> to vector<1x8x8x16xbf16>
    %10 = vector.shape_cast %9 : vector<1x8x8x16xbf16> to vector<8x8x16xbf16>
    %11 = vector.shape_cast %10 : vector<8x8x16xbf16> to vector<64x16xbf16>
    %c1 = arith.constant 1 : index
    %c0_7 = arith.constant 0 : index
    %c0_8 = arith.constant 0 : index
    %12 = vector.load %arg2[%c1, %c0_7, %c0_8] : memref<16x16x128xbf16, #tpu.memory_space<vmem>>, vector<1x16x128xbf16>
    %13 = vector.shape_cast %12 : vector<1x16x128xbf16> to vector<16x128xbf16>
    %cst_9 = arith.constant dense<0.000000e+00> : vector<64x128xf32>
    %14 = tpu.matmul %11, %13, %cst_9 {dimension_numbers = #tpu.dot_dimension_numbers<[1], [0], [0], [1], [0, 0, 1, 1], [], []>} : vector<64x16xbf16>, vector<16x128xbf16>, vector<64x128xf32> -> vector<64x128xf32>
    %15 = arith.addf %8, %14 : vector<64x128xf32>
    %16 = vector.extract_strided_slice %0 {offsets = [0, 0, 2, 0], sizes = [1, 8, 8, 16], strides = [1, 1, 1, 1]} : vector<1x11x11x16xbf16> to vector<1x8x8x16xbf16>
    %17 = vector.shape_cast %16 : vector<1x8x8x16xbf16> to vector<8x8x16xbf16>
    %18 = vector.shape_cast %17 : vector<8x8x16xbf16> to vector<64x16xbf16>
    %c2 = arith.constant 2 : index
    %c0_10 = arith.constant 0 : index
    %c0_11 = arith.constant 0 : index
    %19 = vector.load %arg2[%c2, %c0_10, %c0_11] : memref<16x16x128xbf16, #tpu.memory_space<vmem>>, vector<1x16x128xbf16>
    %20 = vector.shape_cast %19 : vector<1x16x128xbf16> to vector<16x128xbf16>
    %cst_12 = arith.constant dense<0.000000e+00> : vector<64x128xf32>
    %21 = tpu.matmul %18, %20, %cst_12 {dimension_numbers = #tpu.dot_dimension_numbers<[1], [0], [0], [1], [0, 0, 1, 1], [], []>} : vector<64x16xbf16>, vector<16x128xbf16>, vector<64x128xf32> -> vector<64x128xf32>
    %22 = arith.addf %15, %21 : vector<64x128xf32>
    %23 = vector.extract_strided_slice %0 {offsets = [0, 0, 3, 0], sizes = [1, 8, 8, 16], strides = [1, 1, 1, 1]} : vector<1x11x11x16xbf16> to vector<1x8x8x16xbf16>
    %24 = vector.shape_cast %23 : vector<1x8x8x16xbf16> to vector<8x8x16xbf16>
    %25 = vector.shape_cast %24 : vector<8x8x16xbf16> to vector<64x16xbf16>
    %c3 = arith.constant 3 : index
    %c0_13 = arith.constant 0 : index
    %c0_14 = arith.constant 0 : index
    %26 = vector.load %arg2[%c3, %c0_13, %c0_14] : memref<16x16x128xbf16, #tpu.memory_space<vmem>>, vector<1x16x128xbf16>
    %27 = vector.shape_cast %26 : vector<1x16x128xbf16> to vector<16x128xbf16>
    %cst_15 = arith.constant dense<0.000000e+00> : vector<64x128xf32>
    %28 = tpu.matmul %25, %27, %cst_15 {dimension_numbers = #tpu.dot_dimension_numbers<[1], [0], [0], [1], [0, 0, 1, 1], [], []>} : vector<64x16xbf16>, vector<16x128xbf16>, vector<64x128xf32> -> vector<64x128xf32>
    %29 = arith.addf %22, %28 : vector<64x128xf32>
    %30 = vector.extract_strided_slice %0 {offsets = [0, 1, 0, 0], sizes = [1, 8, 8, 16], strides = [1, 1, 1, 1]} : vector<1x11x11x16xbf16> to vector<1x8x8x16xbf16>
    %31 = vector.shape_cast %30 : vector<1x8x8x16xbf16> to vector<8x8x16xbf16>
    %32 = vector.shape_cast %31 : vector<8x8x16xbf16> to vector<64x16xbf16>
    %c4 = arith.constant 4 : index
    %c0_16 = arith.constant 0 : index
    %c0_17 = arith.constant 0 : index
    %33 = vector.load %arg2[%c4, %c0_16, %c0_17] : memref<16x16x128xbf16, #tpu.memory_space<vmem>>, vector<1x16x128xbf16>
    %34 = vector.shape_cast %33 : vector<1x16x128xbf16> to vector<16x128xbf16>
    %cst_18 = arith.constant dense<0.000000e+00> : vector<64x128xf32>
    %35 = tpu.matmul %32, %34, %cst_18 {dimension_numbers = #tpu.dot_dimension_numbers<[1], [0], [0], [1], [0, 0, 1, 1], [], []>} : vector<64x16xbf16>, vector<16x128xbf16>, vector<64x128xf32> -> vector<64x128xf32>
    %36 = arith.addf %29, %35 : vector<64x128xf32>
    %37 = vector.extract_strided_slice %0 {offsets = [0, 1, 1, 0], sizes = [1, 8, 8, 16], strides = [1, 1, 1, 1]} : vector<1x11x11x16xbf16> to vector<1x8x8x16xbf16>
    %38 = vector.shape_cast %37 : vector<1x8x8x16xbf16> to vector<8x8x16xbf16>
    %39 = vector.shape_cast %38 : vector<8x8x16xbf16> to vector<64x16xbf16>
    %c5 = arith.constant 5 : index
    %c0_19 = arith.constant 0 : index
    %c0_20 = arith.constant 0 : index
    %40 = vector.load %arg2[%c5, %c0_19, %c0_20] : memref<16x16x128xbf16, #tpu.memory_space<vmem>>, vector<1x16x128xbf16>
    %41 = vector.shape_cast %40 : vector<1x16x128xbf16> to vector<16x128xbf16>
    %cst_21 = arith.constant dense<0.000000e+00> : vector<64x128xf32>
    %42 = tpu.matmul %39, %41, %cst_21 {dimension_numbers = #tpu.dot_dimension_numbers<[1], [0], [0], [1], [0, 0, 1, 1], [], []>} : vector<64x16xbf16>, vector<16x128xbf16>, vector<64x128xf32> -> vector<64x128xf32>
    %43 = arith.addf %36, %42 : vector<64x128xf32>
    %44 = vector.extract_strided_slice %0 {offsets = [0, 1, 2, 0], sizes = [1, 8, 8, 16], strides = [1, 1, 1, 1]} : vector<1x11x11x16xbf16> to vector<1x8x8x16xbf16>
    %45 = vector.shape_cast %44 : vector<1x8x8x16xbf16> to vector<8x8x16xbf16>
    %46 = vector.shape_cast %45 : vector<8x8x16xbf16> to vector<64x16xbf16>
    %c6 = arith.constant 6 : index
    %c0_22 = arith.constant 0 : index
    %c0_23 = arith.constant 0 : index
    %47 = vector.load %arg2[%c6, %c0_22, %c0_23] : memref<16x16x128xbf16, #tpu.memory_space<vmem>>, vector<1x16x128xbf16>
    %48 = vector.shape_cast %47 : vector<1x16x128xbf16> to vector<16x128xbf16>
    %cst_24 = arith.constant dense<0.000000e+00> : vector<64x128xf32>
    %49 = tpu.matmul %46, %48, %cst_24 {dimension_numbers = #tpu.dot_dimension_numbers<[1], [0], [0], [1], [0, 0, 1, 1], [], []>} : vector<64x16xbf16>, vector<16x128xbf16>, vector<64x128xf32> -> vector<64x128xf32>
    %50 = arith.addf %43, %49 : vector<64x128xf32>
    %51 = vector.extract_strided_slice %0 {offsets = [0, 1, 3, 0], sizes = [1, 8, 8, 16], strides = [1, 1, 1, 1]} : vector<1x11x11x16xbf16> to vector<1x8x8x16xbf16>
    %52 = vector.shape_cast %51 : vector<1x8x8x16xbf16> to vector<8x8x16xbf16>
    %53 = vector.shape_cast %52 : vector<8x8x16xbf16> to vector<64x16xbf16>
    %c7 = arith.constant 7 : index
    %c0_25 = arith.constant 0 : index
    %c0_26 = arith.constant 0 : index
    %54 = vector.load %arg2[%c7, %c0_25, %c0_26] : memref<16x16x128xbf16, #tpu.memory_space<vmem>>, vector<1x16x128xbf16>
    %55 = vector.shape_cast %54 : vector<1x16x128xbf16> to vector<16x128xbf16>
    %cst_27 = arith.constant dense<0.000000e+00> : vector<64x128xf32>
    %56 = tpu.matmul %53, %55, %cst_27 {dimension_numbers = #tpu.dot_dimension_numbers<[1], [0], [0], [1], [0, 0, 1, 1], [], []>} : vector<64x16xbf16>, vector<16x128xbf16>, vector<64x128xf32> -> vector<64x128xf32>
    %57 = arith.addf %50, %56 : vector<64x128xf32>
    %58 = vector.extract_strided_slice %0 {offsets = [0, 2, 0, 0], sizes = [1, 8, 8, 16], strides = [1, 1, 1, 1]} : vector<1x11x11x16xbf16> to vector<1x8x8x16xbf16>
    %59 = vector.shape_cast %58 : vector<1x8x8x16xbf16> to vector<8x8x16xbf16>
    %60 = vector.shape_cast %59 : vector<8x8x16xbf16> to vector<64x16xbf16>
    %c8 = arith.constant 8 : index
    %c0_28 = arith.constant 0 : index
    %c0_29 = arith.constant 0 : index
    %61 = vector.load %arg2[%c8, %c0_28, %c0_29] : memref<16x16x128xbf16, #tpu.memory_space<vmem>>, vector<1x16x128xbf16>
    %62 = vector.shape_cast %61 : vector<1x16x128xbf16> to vector<16x128xbf16>
    %cst_30 = arith.constant dense<0.000000e+00> : vector<64x128xf32>
    %63 = tpu.matmul %60, %62, %cst_30 {dimension_numbers = #tpu.dot_dimension_numbers<[1], [0], [0], [1], [0, 0, 1, 1], [], []>} : vector<64x16xbf16>, vector<16x128xbf16>, vector<64x128xf32> -> vector<64x128xf32>
    %64 = arith.addf %57, %63 : vector<64x128xf32>
    %65 = vector.extract_strided_slice %0 {offsets = [0, 2, 1, 0], sizes = [1, 8, 8, 16], strides = [1, 1, 1, 1]} : vector<1x11x11x16xbf16> to vector<1x8x8x16xbf16>
    %66 = vector.shape_cast %65 : vector<1x8x8x16xbf16> to vector<8x8x16xbf16>
    %67 = vector.shape_cast %66 : vector<8x8x16xbf16> to vector<64x16xbf16>
    %c9 = arith.constant 9 : index
    %c0_31 = arith.constant 0 : index
    %c0_32 = arith.constant 0 : index
    %68 = vector.load %arg2[%c9, %c0_31, %c0_32] : memref<16x16x128xbf16, #tpu.memory_space<vmem>>, vector<1x16x128xbf16>
    %69 = vector.shape_cast %68 : vector<1x16x128xbf16> to vector<16x128xbf16>
    %cst_33 = arith.constant dense<0.000000e+00> : vector<64x128xf32>
    %70 = tpu.matmul %67, %69, %cst_33 {dimension_numbers = #tpu.dot_dimension_numbers<[1], [0], [0], [1], [0, 0, 1, 1], [], []>} : vector<64x16xbf16>, vector<16x128xbf16>, vector<64x128xf32> -> vector<64x128xf32>
    %71 = arith.addf %64, %70 : vector<64x128xf32>
    %72 = vector.extract_strided_slice %0 {offsets = [0, 2, 2, 0], sizes = [1, 8, 8, 16], strides = [1, 1, 1, 1]} : vector<1x11x11x16xbf16> to vector<1x8x8x16xbf16>
    %73 = vector.shape_cast %72 : vector<1x8x8x16xbf16> to vector<8x8x16xbf16>
    %74 = vector.shape_cast %73 : vector<8x8x16xbf16> to vector<64x16xbf16>
    %c10 = arith.constant 10 : index
    %c0_34 = arith.constant 0 : index
    %c0_35 = arith.constant 0 : index
    %75 = vector.load %arg2[%c10, %c0_34, %c0_35] : memref<16x16x128xbf16, #tpu.memory_space<vmem>>, vector<1x16x128xbf16>
    %76 = vector.shape_cast %75 : vector<1x16x128xbf16> to vector<16x128xbf16>
    %cst_36 = arith.constant dense<0.000000e+00> : vector<64x128xf32>
    %77 = tpu.matmul %74, %76, %cst_36 {dimension_numbers = #tpu.dot_dimension_numbers<[1], [0], [0], [1], [0, 0, 1, 1], [], []>} : vector<64x16xbf16>, vector<16x128xbf16>, vector<64x128xf32> -> vector<64x128xf32>
    %78 = arith.addf %71, %77 : vector<64x128xf32>
    %79 = vector.extract_strided_slice %0 {offsets = [0, 2, 3, 0], sizes = [1, 8, 8, 16], strides = [1, 1, 1, 1]} : vector<1x11x11x16xbf16> to vector<1x8x8x16xbf16>
    %80 = vector.shape_cast %79 : vector<1x8x8x16xbf16> to vector<8x8x16xbf16>
    %81 = vector.shape_cast %80 : vector<8x8x16xbf16> to vector<64x16xbf16>
    %c11 = arith.constant 11 : index
    %c0_37 = arith.constant 0 : index
    %c0_38 = arith.constant 0 : index
    %82 = vector.load %arg2[%c11, %c0_37, %c0_38] : memref<16x16x128xbf16, #tpu.memory_space<vmem>>, vector<1x16x128xbf16>
    %83 = vector.shape_cast %82 : vector<1x16x128xbf16> to vector<16x128xbf16>
    %cst_39 = arith.constant dense<0.000000e+00> : vector<64x128xf32>
    %84 = tpu.matmul %81, %83, %cst_39 {dimension_numbers = #tpu.dot_dimension_numbers<[1], [0], [0], [1], [0, 0, 1, 1], [], []>} : vector<64x16xbf16>, vector<16x128xbf16>, vector<64x128xf32> -> vector<64x128xf32>
    %85 = arith.addf %78, %84 : vector<64x128xf32>
    %86 = vector.extract_strided_slice %0 {offsets = [0, 3, 0, 0], sizes = [1, 8, 8, 16], strides = [1, 1, 1, 1]} : vector<1x11x11x16xbf16> to vector<1x8x8x16xbf16>
    %87 = vector.shape_cast %86 : vector<1x8x8x16xbf16> to vector<8x8x16xbf16>
    %88 = vector.shape_cast %87 : vector<8x8x16xbf16> to vector<64x16xbf16>
    %c12 = arith.constant 12 : index
    %c0_40 = arith.constant 0 : index
    %c0_41 = arith.constant 0 : index
    %89 = vector.load %arg2[%c12, %c0_40, %c0_41] : memref<16x16x128xbf16, #tpu.memory_space<vmem>>, vector<1x16x128xbf16>
    %90 = vector.shape_cast %89 : vector<1x16x128xbf16> to vector<16x128xbf16>
    %cst_42 = arith.constant dense<0.000000e+00> : vector<64x128xf32>
    %91 = tpu.matmul %88, %90, %cst_42 {dimension_numbers = #tpu.dot_dimension_numbers<[1], [0], [0], [1], [0, 0, 1, 1], [], []>} : vector<64x16xbf16>, vector<16x128xbf16>, vector<64x128xf32> -> vector<64x128xf32>
    %92 = arith.addf %85, %91 : vector<64x128xf32>
    %93 = vector.extract_strided_slice %0 {offsets = [0, 3, 1, 0], sizes = [1, 8, 8, 16], strides = [1, 1, 1, 1]} : vector<1x11x11x16xbf16> to vector<1x8x8x16xbf16>
    %94 = vector.shape_cast %93 : vector<1x8x8x16xbf16> to vector<8x8x16xbf16>
    %95 = vector.shape_cast %94 : vector<8x8x16xbf16> to vector<64x16xbf16>
    %c13 = arith.constant 13 : index
    %c0_43 = arith.constant 0 : index
    %c0_44 = arith.constant 0 : index
    %96 = vector.load %arg2[%c13, %c0_43, %c0_44] : memref<16x16x128xbf16, #tpu.memory_space<vmem>>, vector<1x16x128xbf16>
    %97 = vector.shape_cast %96 : vector<1x16x128xbf16> to vector<16x128xbf16>
    %cst_45 = arith.constant dense<0.000000e+00> : vector<64x128xf32>
    %98 = tpu.matmul %95, %97, %cst_45 {dimension_numbers = #tpu.dot_dimension_numbers<[1], [0], [0], [1], [0, 0, 1, 1], [], []>} : vector<64x16xbf16>, vector<16x128xbf16>, vector<64x128xf32> -> vector<64x128xf32>
    %99 = arith.addf %92, %98 : vector<64x128xf32>
    %100 = vector.extract_strided_slice %0 {offsets = [0, 3, 2, 0], sizes = [1, 8, 8, 16], strides = [1, 1, 1, 1]} : vector<1x11x11x16xbf16> to vector<1x8x8x16xbf16>
    %101 = vector.shape_cast %100 : vector<1x8x8x16xbf16> to vector<8x8x16xbf16>
    %102 = vector.shape_cast %101 : vector<8x8x16xbf16> to vector<64x16xbf16>
    %c14 = arith.constant 14 : index
    %c0_46 = arith.constant 0 : index
    %c0_47 = arith.constant 0 : index
    %103 = vector.load %arg2[%c14, %c0_46, %c0_47] : memref<16x16x128xbf16, #tpu.memory_space<vmem>>, vector<1x16x128xbf16>
    %104 = vector.shape_cast %103 : vector<1x16x128xbf16> to vector<16x128xbf16>
    %cst_48 = arith.constant dense<0.000000e+00> : vector<64x128xf32>
    %105 = tpu.matmul %102, %104, %cst_48 {dimension_numbers = #tpu.dot_dimension_numbers<[1], [0], [0], [1], [0, 0, 1, 1], [], []>} : vector<64x16xbf16>, vector<16x128xbf16>, vector<64x128xf32> -> vector<64x128xf32>
    %106 = arith.addf %99, %105 : vector<64x128xf32>
    %107 = vector.extract_strided_slice %0 {offsets = [0, 3, 3, 0], sizes = [1, 8, 8, 16], strides = [1, 1, 1, 1]} : vector<1x11x11x16xbf16> to vector<1x8x8x16xbf16>
    %108 = vector.shape_cast %107 : vector<1x8x8x16xbf16> to vector<8x8x16xbf16>
    %109 = vector.shape_cast %108 : vector<8x8x16xbf16> to vector<64x16xbf16>
    %c15 = arith.constant 15 : index
    %c0_49 = arith.constant 0 : index
    %c0_50 = arith.constant 0 : index
    %110 = vector.load %arg2[%c15, %c0_49, %c0_50] : memref<16x16x128xbf16, #tpu.memory_space<vmem>>, vector<1x16x128xbf16>
    %111 = vector.shape_cast %110 : vector<1x16x128xbf16> to vector<16x128xbf16>
    %cst_51 = arith.constant dense<0.000000e+00> : vector<64x128xf32>
    %112 = tpu.matmul %109, %111, %cst_51 {dimension_numbers = #tpu.dot_dimension_numbers<[1], [0], [0], [1], [0, 0, 1, 1], [], []>} : vector<64x16xbf16>, vector<16x128xbf16>, vector<64x128xf32> -> vector<64x128xf32>
    %113 = arith.addf %106, %112 : vector<64x128xf32>
    %114 = vector.shape_cast %113 : vector<64x128xf32> to vector<1x64x128xf32>
    %115 = arith.truncf %114 : vector<1x64x128xf32> to vector<1x64x128xbf16>
    %c0_52 = arith.constant 0 : index
    %c0_53 = arith.constant 0 : index
    %c0_54 = arith.constant 0 : index
    %116 = vector.load %arg3[%c0_52, %c0_53, %c0_54] : memref<1x64x128xbf16, #tpu.memory_space<vmem>>, vector<1x64x128xbf16>
    tpu.vector_store %arg3[%c0_52, %c0_53, %c0_54], %115 {strides = array<i32>} : memref<1x64x128xbf16, #tpu.memory_space<vmem>>, vector<1x64x128xbf16>,
    %cst_55 = arith.constant dense<0.000000e+00> : vector<128xf32>
    %117 = vector.multi_reduction <add>, %113, %cst_55 [0] : vector<64x128xf32> to vector<128xf32>
    %118 = vector.shape_cast %117 : vector<128xf32> to vector<1x128xf32>
    %119 = arith.mulf %113, %113 : vector<64x128xf32>
    %cst_56 = arith.constant dense<0.000000e+00> : vector<128xf32>
    %120 = vector.multi_reduction <add>, %119, %cst_56 [0] : vector<64x128xf32> to vector<128xf32>
    %121 = vector.shape_cast %120 : vector<128xf32> to vector<1x128xf32>
    %cst_57 = arith.constant 0.000000e+00 : f32
    %122 = vector.broadcast %cst_57 : f32 to vector<6x128xf32>
    %123 = tpu.concatenate %118, %121, %122 in 0 : vector<1x128xf32>, vector<1x128xf32>, vector<6x128xf32> -> vector<8x128xf32>
    %124 = vector.shape_cast %123 : vector<8x128xf32> to vector<1x8x128xf32>
    %c0_58 = arith.constant 0 : index
    %c0_59 = arith.constant 0 : index
    %c0_60 = arith.constant 0 : index
    %125 = vector.load %arg4[%c0_58, %c0_59, %c0_60] : memref<1x8x128xf32, #tpu.memory_space<vmem>>, vector<1x8x128xf32>
    tpu.vector_store %arg4[%c0_58, %c0_59, %c0_60], %124 {strides = array<i32>} : memref<1x8x128xf32, #tpu.memory_space<vmem>>, vector<1x8x128xf32>,
    return
  }
  func.func @transform_0(%arg0: i32) -> (i32, i32, i32, i32) {
    %c0_i32 = arith.constant 0 : i32
    %c0_i32_0 = arith.constant 0 : i32
    %c0_i32_1 = arith.constant 0 : i32
    %c0_i32_2 = arith.constant 0 : i32
    return %arg0, %c0_i32, %c0_i32_0, %c0_i32_1 : i32, i32, i32, i32
  }
  func.func @transform_1(%arg0: i32) -> (i32, i32, i32) {
    %c0_i32 = arith.constant 0 : i32
    %c0_i32_0 = arith.constant 0 : i32
    %c0_i32_1 = arith.constant 0 : i32
    %c0_i32_2 = arith.constant 0 : i32
    return %c0_i32, %c0_i32_0, %c0_i32_1 : i32, i32, i32
  }
  func.func @transform_2(%arg0: i32) -> (i32, i32, i32) {
    %c0_i32 = arith.constant 0 : i32
    %c0_i32_0 = arith.constant 0 : i32
    %c0_i32_1 = arith.constant 0 : i32
    return %arg0, %c0_i32, %c0_i32_0 : i32, i32, i32
  }
  func.func @transform_3(%arg0: i32) -> (i32, i32, i32) {
    %c0_i32 = arith.constant 0 : i32
    %c0_i32_0 = arith.constant 0 : i32
    %c0_i32_1 = arith.constant 0 : i32
    return %arg0, %c0_i32, %c0_i32_0 : i32, i32, i32
  }
}

module attributes {stable_mosaic.version = 11 : i64} {
  func.func @_bn_relu_kernel(%arg0: i32, %arg1: memref<32x128xbf16, #tpu.memory_space<vmem>>, %arg2: memref<1x128xf32, #tpu.memory_space<vmem>>, %arg3: memref<1x128xf32, #tpu.memory_space<vmem>>, %arg4: memref<32x128xbf16, #tpu.memory_space<vmem>>) attributes {dimension_semantics = [#tpu.dimension_semantics<parallel>], iteration_bounds = array<i64: 4>, scalar_prefetch = 0 : i64, scratch_operands = 0 : i64, tpu.core_type = #tpu.core_type<tc>, window_params = [{transform_indices = @transform_0, window_bounds = array<i64: 32, 128>}, {pipeline_mode = #tpu.pipeline_mode<synchronous>, transform_indices = @transform_1, window_bounds = array<i64: 1, 128>}, {pipeline_mode = #tpu.pipeline_mode<synchronous>, transform_indices = @transform_2, window_bounds = array<i64: 1, 128>}, {transform_indices = @transform_3, window_bounds = array<i64: 32, 128>}]} {
    %c0 = arith.constant 0 : index
    %c0_0 = arith.constant 0 : index
    %0 = vector.load %arg1[%c0, %c0_0] : memref<32x128xbf16, #tpu.memory_space<vmem>>, vector<32x128xbf16>
    %1 = arith.extf %0 : vector<32x128xbf16> to vector<32x128xf32>
    %c0_1 = arith.constant 0 : index
    %c0_2 = arith.constant 0 : index
    %2 = vector.load %arg2[%c0_1, %c0_2] : memref<1x128xf32, #tpu.memory_space<vmem>>, vector<1x128xf32>
    %3 = vector.broadcast %2 : vector<1x128xf32> to vector<32x128xf32>
    %4 = arith.mulf %1, %3 : vector<32x128xf32>
    %c0_3 = arith.constant 0 : index
    %c0_4 = arith.constant 0 : index
    %5 = vector.load %arg3[%c0_3, %c0_4] : memref<1x128xf32, #tpu.memory_space<vmem>>, vector<1x128xf32>
    %6 = vector.broadcast %5 : vector<1x128xf32> to vector<32x128xf32>
    %7 = arith.addf %4, %6 : vector<32x128xf32>
    %cst = arith.constant 0.000000e+00 : f32
    %8 = vector.broadcast %cst : f32 to vector<32x128xf32>
    %9 = arith.maximumf %7, %8 : vector<32x128xf32>
    %10 = arith.truncf %9 : vector<32x128xf32> to vector<32x128xbf16>
    %c0_5 = arith.constant 0 : index
    %c0_6 = arith.constant 0 : index
    %11 = vector.load %arg4[%c0_5, %c0_6] : memref<32x128xbf16, #tpu.memory_space<vmem>>, vector<32x128xbf16>
    tpu.vector_store %arg4[%c0_5, %c0_6], %10 {strides = array<i32>} : memref<32x128xbf16, #tpu.memory_space<vmem>>, vector<32x128xbf16>,
    return
  }
  func.func @transform_0(%arg0: i32) -> (i32, i32) {
    %c0_i32 = arith.constant 0 : i32
    %c0_i32_0 = arith.constant 0 : i32
    return %arg0, %c0_i32 : i32, i32
  }
  func.func @transform_1(%arg0: i32) -> (i32, i32) {
    %c0_i32 = arith.constant 0 : i32
    %c0_i32_0 = arith.constant 0 : i32
    %c0_i32_1 = arith.constant 0 : i32
    return %c0_i32, %c0_i32_0 : i32, i32
  }
  func.func @transform_2(%arg0: i32) -> (i32, i32) {
    %c0_i32 = arith.constant 0 : i32
    %c0_i32_0 = arith.constant 0 : i32
    %c0_i32_1 = arith.constant 0 : i32
    return %c0_i32, %c0_i32_0 : i32, i32
  }
  func.func @transform_3(%arg0: i32) -> (i32, i32) {
    %c0_i32 = arith.constant 0 : i32
    %c0_i32_0 = arith.constant 0 : i32
    return %arg0, %c0_i32 : i32, i32
  }
}

module attributes {stable_mosaic.version = 11 : i64} {
  func.func @_conv_stats_kernel(%arg0: i32, %arg1: memref<1x10x10x128xbf16, #tpu.memory_space<vmem>>, %arg2: memref<9x128x128xbf16, #tpu.memory_space<vmem>>, %arg3: memref<1x64x128xbf16, #tpu.memory_space<vmem>>, %arg4: memref<1x8x128xf32, #tpu.memory_space<vmem>>) attributes {dimension_semantics = [#tpu.dimension_semantics<parallel>], iteration_bounds = array<i64: 2>, scalar_prefetch = 0 : i64, scratch_operands = 0 : i64, tpu.core_type = #tpu.core_type<tc>, window_params = [{transform_indices = @transform_0, window_bounds = array<i64: 1, 10, 10, 128>}, {pipeline_mode = #tpu.pipeline_mode<synchronous>, transform_indices = @transform_1, window_bounds = array<i64: 9, 128, 128>}, {transform_indices = @transform_2, window_bounds = array<i64: 1, 64, 128>}, {transform_indices = @transform_3, window_bounds = array<i64: 1, 8, 128>}]} {
    %c0 = arith.constant 0 : index
    %c0_0 = arith.constant 0 : index
    %c0_1 = arith.constant 0 : index
    %c0_2 = arith.constant 0 : index
    %0 = vector.load %arg1[%c0, %c0_0, %c0_1, %c0_2] : memref<1x10x10x128xbf16, #tpu.memory_space<vmem>>, vector<1x10x10x128xbf16>
    %cst = arith.constant 0.000000e+00 : f32
    %1 = vector.broadcast %cst : f32 to vector<64x128xf32>
    %2 = vector.extract_strided_slice %0 {offsets = [0, 0, 0, 0], sizes = [1, 8, 8, 128], strides = [1, 1, 1, 1]} : vector<1x10x10x128xbf16> to vector<1x8x8x128xbf16>
    %3 = vector.shape_cast %2 : vector<1x8x8x128xbf16> to vector<8x8x128xbf16>
    %4 = vector.shape_cast %3 : vector<8x8x128xbf16> to vector<64x128xbf16>
    %c0_3 = arith.constant 0 : index
    %c0_4 = arith.constant 0 : index
    %c0_5 = arith.constant 0 : index
    %5 = vector.load %arg2[%c0_3, %c0_4, %c0_5] : memref<9x128x128xbf16, #tpu.memory_space<vmem>>, vector<1x128x128xbf16>
    %6 = vector.shape_cast %5 : vector<1x128x128xbf16> to vector<128x128xbf16>
    %cst_6 = arith.constant dense<0.000000e+00> : vector<64x128xf32>
    %7 = tpu.matmul %4, %6, %cst_6 {dimension_numbers = #tpu.dot_dimension_numbers<[1], [0], [0], [1], [0, 0, 1, 1], [], []>} : vector<64x128xbf16>, vector<128x128xbf16>, vector<64x128xf32> -> vector<64x128xf32>
    %8 = arith.addf %1, %7 : vector<64x128xf32>
    %9 = vector.extract_strided_slice %0 {offsets = [0, 0, 1, 0], sizes = [1, 8, 8, 128], strides = [1, 1, 1, 1]} : vector<1x10x10x128xbf16> to vector<1x8x8x128xbf16>
    %10 = vector.shape_cast %9 : vector<1x8x8x128xbf16> to vector<8x8x128xbf16>
    %11 = vector.shape_cast %10 : vector<8x8x128xbf16> to vector<64x128xbf16>
    %c1 = arith.constant 1 : index
    %c0_7 = arith.constant 0 : index
    %c0_8 = arith.constant 0 : index
    %12 = vector.load %arg2[%c1, %c0_7, %c0_8] : memref<9x128x128xbf16, #tpu.memory_space<vmem>>, vector<1x128x128xbf16>
    %13 = vector.shape_cast %12 : vector<1x128x128xbf16> to vector<128x128xbf16>
    %cst_9 = arith.constant dense<0.000000e+00> : vector<64x128xf32>
    %14 = tpu.matmul %11, %13, %cst_9 {dimension_numbers = #tpu.dot_dimension_numbers<[1], [0], [0], [1], [0, 0, 1, 1], [], []>} : vector<64x128xbf16>, vector<128x128xbf16>, vector<64x128xf32> -> vector<64x128xf32>
    %15 = arith.addf %8, %14 : vector<64x128xf32>
    %16 = vector.extract_strided_slice %0 {offsets = [0, 0, 2, 0], sizes = [1, 8, 8, 128], strides = [1, 1, 1, 1]} : vector<1x10x10x128xbf16> to vector<1x8x8x128xbf16>
    %17 = vector.shape_cast %16 : vector<1x8x8x128xbf16> to vector<8x8x128xbf16>
    %18 = vector.shape_cast %17 : vector<8x8x128xbf16> to vector<64x128xbf16>
    %c2 = arith.constant 2 : index
    %c0_10 = arith.constant 0 : index
    %c0_11 = arith.constant 0 : index
    %19 = vector.load %arg2[%c2, %c0_10, %c0_11] : memref<9x128x128xbf16, #tpu.memory_space<vmem>>, vector<1x128x128xbf16>
    %20 = vector.shape_cast %19 : vector<1x128x128xbf16> to vector<128x128xbf16>
    %cst_12 = arith.constant dense<0.000000e+00> : vector<64x128xf32>
    %21 = tpu.matmul %18, %20, %cst_12 {dimension_numbers = #tpu.dot_dimension_numbers<[1], [0], [0], [1], [0, 0, 1, 1], [], []>} : vector<64x128xbf16>, vector<128x128xbf16>, vector<64x128xf32> -> vector<64x128xf32>
    %22 = arith.addf %15, %21 : vector<64x128xf32>
    %23 = vector.extract_strided_slice %0 {offsets = [0, 1, 0, 0], sizes = [1, 8, 8, 128], strides = [1, 1, 1, 1]} : vector<1x10x10x128xbf16> to vector<1x8x8x128xbf16>
    %24 = vector.shape_cast %23 : vector<1x8x8x128xbf16> to vector<8x8x128xbf16>
    %25 = vector.shape_cast %24 : vector<8x8x128xbf16> to vector<64x128xbf16>
    %c3 = arith.constant 3 : index
    %c0_13 = arith.constant 0 : index
    %c0_14 = arith.constant 0 : index
    %26 = vector.load %arg2[%c3, %c0_13, %c0_14] : memref<9x128x128xbf16, #tpu.memory_space<vmem>>, vector<1x128x128xbf16>
    %27 = vector.shape_cast %26 : vector<1x128x128xbf16> to vector<128x128xbf16>
    %cst_15 = arith.constant dense<0.000000e+00> : vector<64x128xf32>
    %28 = tpu.matmul %25, %27, %cst_15 {dimension_numbers = #tpu.dot_dimension_numbers<[1], [0], [0], [1], [0, 0, 1, 1], [], []>} : vector<64x128xbf16>, vector<128x128xbf16>, vector<64x128xf32> -> vector<64x128xf32>
    %29 = arith.addf %22, %28 : vector<64x128xf32>
    %30 = vector.extract_strided_slice %0 {offsets = [0, 1, 1, 0], sizes = [1, 8, 8, 128], strides = [1, 1, 1, 1]} : vector<1x10x10x128xbf16> to vector<1x8x8x128xbf16>
    %31 = vector.shape_cast %30 : vector<1x8x8x128xbf16> to vector<8x8x128xbf16>
    %32 = vector.shape_cast %31 : vector<8x8x128xbf16> to vector<64x128xbf16>
    %c4 = arith.constant 4 : index
    %c0_16 = arith.constant 0 : index
    %c0_17 = arith.constant 0 : index
    %33 = vector.load %arg2[%c4, %c0_16, %c0_17] : memref<9x128x128xbf16, #tpu.memory_space<vmem>>, vector<1x128x128xbf16>
    %34 = vector.shape_cast %33 : vector<1x128x128xbf16> to vector<128x128xbf16>
    %cst_18 = arith.constant dense<0.000000e+00> : vector<64x128xf32>
    %35 = tpu.matmul %32, %34, %cst_18 {dimension_numbers = #tpu.dot_dimension_numbers<[1], [0], [0], [1], [0, 0, 1, 1], [], []>} : vector<64x128xbf16>, vector<128x128xbf16>, vector<64x128xf32> -> vector<64x128xf32>
    %36 = arith.addf %29, %35 : vector<64x128xf32>
    %37 = vector.extract_strided_slice %0 {offsets = [0, 1, 2, 0], sizes = [1, 8, 8, 128], strides = [1, 1, 1, 1]} : vector<1x10x10x128xbf16> to vector<1x8x8x128xbf16>
    %38 = vector.shape_cast %37 : vector<1x8x8x128xbf16> to vector<8x8x128xbf16>
    %39 = vector.shape_cast %38 : vector<8x8x128xbf16> to vector<64x128xbf16>
    %c5 = arith.constant 5 : index
    %c0_19 = arith.constant 0 : index
    %c0_20 = arith.constant 0 : index
    %40 = vector.load %arg2[%c5, %c0_19, %c0_20] : memref<9x128x128xbf16, #tpu.memory_space<vmem>>, vector<1x128x128xbf16>
    %41 = vector.shape_cast %40 : vector<1x128x128xbf16> to vector<128x128xbf16>
    %cst_21 = arith.constant dense<0.000000e+00> : vector<64x128xf32>
    %42 = tpu.matmul %39, %41, %cst_21 {dimension_numbers = #tpu.dot_dimension_numbers<[1], [0], [0], [1], [0, 0, 1, 1], [], []>} : vector<64x128xbf16>, vector<128x128xbf16>, vector<64x128xf32> -> vector<64x128xf32>
    %43 = arith.addf %36, %42 : vector<64x128xf32>
    %44 = vector.extract_strided_slice %0 {offsets = [0, 2, 0, 0], sizes = [1, 8, 8, 128], strides = [1, 1, 1, 1]} : vector<1x10x10x128xbf16> to vector<1x8x8x128xbf16>
    %45 = vector.shape_cast %44 : vector<1x8x8x128xbf16> to vector<8x8x128xbf16>
    %46 = vector.shape_cast %45 : vector<8x8x128xbf16> to vector<64x128xbf16>
    %c6 = arith.constant 6 : index
    %c0_22 = arith.constant 0 : index
    %c0_23 = arith.constant 0 : index
    %47 = vector.load %arg2[%c6, %c0_22, %c0_23] : memref<9x128x128xbf16, #tpu.memory_space<vmem>>, vector<1x128x128xbf16>
    %48 = vector.shape_cast %47 : vector<1x128x128xbf16> to vector<128x128xbf16>
    %cst_24 = arith.constant dense<0.000000e+00> : vector<64x128xf32>
    %49 = tpu.matmul %46, %48, %cst_24 {dimension_numbers = #tpu.dot_dimension_numbers<[1], [0], [0], [1], [0, 0, 1, 1], [], []>} : vector<64x128xbf16>, vector<128x128xbf16>, vector<64x128xf32> -> vector<64x128xf32>
    %50 = arith.addf %43, %49 : vector<64x128xf32>
    %51 = vector.extract_strided_slice %0 {offsets = [0, 2, 1, 0], sizes = [1, 8, 8, 128], strides = [1, 1, 1, 1]} : vector<1x10x10x128xbf16> to vector<1x8x8x128xbf16>
    %52 = vector.shape_cast %51 : vector<1x8x8x128xbf16> to vector<8x8x128xbf16>
    %53 = vector.shape_cast %52 : vector<8x8x128xbf16> to vector<64x128xbf16>
    %c7 = arith.constant 7 : index
    %c0_25 = arith.constant 0 : index
    %c0_26 = arith.constant 0 : index
    %54 = vector.load %arg2[%c7, %c0_25, %c0_26] : memref<9x128x128xbf16, #tpu.memory_space<vmem>>, vector<1x128x128xbf16>
    %55 = vector.shape_cast %54 : vector<1x128x128xbf16> to vector<128x128xbf16>
    %cst_27 = arith.constant dense<0.000000e+00> : vector<64x128xf32>
    %56 = tpu.matmul %53, %55, %cst_27 {dimension_numbers = #tpu.dot_dimension_numbers<[1], [0], [0], [1], [0, 0, 1, 1], [], []>} : vector<64x128xbf16>, vector<128x128xbf16>, vector<64x128xf32> -> vector<64x128xf32>
    %57 = arith.addf %50, %56 : vector<64x128xf32>
    %58 = vector.extract_strided_slice %0 {offsets = [0, 2, 2, 0], sizes = [1, 8, 8, 128], strides = [1, 1, 1, 1]} : vector<1x10x10x128xbf16> to vector<1x8x8x128xbf16>
    %59 = vector.shape_cast %58 : vector<1x8x8x128xbf16> to vector<8x8x128xbf16>
    %60 = vector.shape_cast %59 : vector<8x8x128xbf16> to vector<64x128xbf16>
    %c8 = arith.constant 8 : index
    %c0_28 = arith.constant 0 : index
    %c0_29 = arith.constant 0 : index
    %61 = vector.load %arg2[%c8, %c0_28, %c0_29] : memref<9x128x128xbf16, #tpu.memory_space<vmem>>, vector<1x128x128xbf16>
    %62 = vector.shape_cast %61 : vector<1x128x128xbf16> to vector<128x128xbf16>
    %cst_30 = arith.constant dense<0.000000e+00> : vector<64x128xf32>
    %63 = tpu.matmul %60, %62, %cst_30 {dimension_numbers = #tpu.dot_dimension_numbers<[1], [0], [0], [1], [0, 0, 1, 1], [], []>} : vector<64x128xbf16>, vector<128x128xbf16>, vector<64x128xf32> -> vector<64x128xf32>
    %64 = arith.addf %57, %63 : vector<64x128xf32>
    %65 = vector.shape_cast %64 : vector<64x128xf32> to vector<1x64x128xf32>
    %66 = arith.truncf %65 : vector<1x64x128xf32> to vector<1x64x128xbf16>
    %c0_31 = arith.constant 0 : index
    %c0_32 = arith.constant 0 : index
    %c0_33 = arith.constant 0 : index
    %67 = vector.load %arg3[%c0_31, %c0_32, %c0_33] : memref<1x64x128xbf16, #tpu.memory_space<vmem>>, vector<1x64x128xbf16>
    tpu.vector_store %arg3[%c0_31, %c0_32, %c0_33], %66 {strides = array<i32>} : memref<1x64x128xbf16, #tpu.memory_space<vmem>>, vector<1x64x128xbf16>,
    %cst_34 = arith.constant dense<0.000000e+00> : vector<128xf32>
    %68 = vector.multi_reduction <add>, %64, %cst_34 [0] : vector<64x128xf32> to vector<128xf32>
    %69 = vector.shape_cast %68 : vector<128xf32> to vector<1x128xf32>
    %70 = arith.mulf %64, %64 : vector<64x128xf32>
    %cst_35 = arith.constant dense<0.000000e+00> : vector<128xf32>
    %71 = vector.multi_reduction <add>, %70, %cst_35 [0] : vector<64x128xf32> to vector<128xf32>
    %72 = vector.shape_cast %71 : vector<128xf32> to vector<1x128xf32>
    %cst_36 = arith.constant 0.000000e+00 : f32
    %73 = vector.broadcast %cst_36 : f32 to vector<6x128xf32>
    %74 = tpu.concatenate %69, %72, %73 in 0 : vector<1x128xf32>, vector<1x128xf32>, vector<6x128xf32> -> vector<8x128xf32>
    %75 = vector.shape_cast %74 : vector<8x128xf32> to vector<1x8x128xf32>
    %c0_37 = arith.constant 0 : index
    %c0_38 = arith.constant 0 : index
    %c0_39 = arith.constant 0 : index
    %76 = vector.load %arg4[%c0_37, %c0_38, %c0_39] : memref<1x8x128xf32, #tpu.memory_space<vmem>>, vector<1x8x128xf32>
    tpu.vector_store %arg4[%c0_37, %c0_38, %c0_39], %75 {strides = array<i32>} : memref<1x8x128xf32, #tpu.memory_space<vmem>>, vector<1x8x128xf32>,
    return
  }
  func.func @transform_0(%arg0: i32) -> (i32, i32, i32, i32) {
    %c0_i32 = arith.constant 0 : i32
    %c0_i32_0 = arith.constant 0 : i32
    %c0_i32_1 = arith.constant 0 : i32
    %c0_i32_2 = arith.constant 0 : i32
    return %arg0, %c0_i32, %c0_i32_0, %c0_i32_1 : i32, i32, i32, i32
  }
  func.func @transform_1(%arg0: i32) -> (i32, i32, i32) {
    %c0_i32 = arith.constant 0 : i32
    %c0_i32_0 = arith.constant 0 : i32
    %c0_i32_1 = arith.constant 0 : i32
    %c0_i32_2 = arith.constant 0 : i32
    return %c0_i32, %c0_i32_0, %c0_i32_1 : i32, i32, i32
  }
  func.func @transform_2(%arg0: i32) -> (i32, i32, i32) {
    %c0_i32 = arith.constant 0 : i32
    %c0_i32_0 = arith.constant 0 : i32
    %c0_i32_1 = arith.constant 0 : i32
    return %arg0, %c0_i32, %c0_i32_0 : i32, i32, i32
  }
  func.func @transform_3(%arg0: i32) -> (i32, i32, i32) {
    %c0_i32 = arith.constant 0 : i32
    %c0_i32_0 = arith.constant 0 : i32
    %c0_i32_1 = arith.constant 0 : i32
    return %arg0, %c0_i32, %c0_i32_0 : i32, i32, i32
  }
}

module attributes {stable_mosaic.version = 11 : i64} {
  func.func @_bn_relu_pool_kernel(%arg0: i32, %arg1: memref<4x4x256xbf16, #tpu.memory_space<vmem>>, %arg2: memref<1x1x128xf32, #tpu.memory_space<vmem>>, %arg3: memref<1x1x128xf32, #tpu.memory_space<vmem>>, %arg4: memref<2x4x128xbf16, #tpu.memory_space<vmem>>) attributes {dimension_semantics = [#tpu.dimension_semantics<parallel>], iteration_bounds = array<i64: 4>, scalar_prefetch = 0 : i64, scratch_operands = 0 : i64, tpu.core_type = #tpu.core_type<tc>, window_params = [{transform_indices = @transform_0, window_bounds = array<i64: 4, 4, 256>}, {pipeline_mode = #tpu.pipeline_mode<synchronous>, transform_indices = @transform_1, window_bounds = array<i64: 1, 1, 128>}, {pipeline_mode = #tpu.pipeline_mode<synchronous>, transform_indices = @transform_2, window_bounds = array<i64: 1, 1, 128>}, {transform_indices = @transform_3, window_bounds = array<i64: 2, 4, 128>}]} {
    %c0 = arith.constant 0 : index
    %c0_0 = arith.constant 0 : index
    %c0_1 = arith.constant 0 : index
    %0 = vector.load %arg1[%c0, %c0_0, %c0_1] : memref<4x4x256xbf16, #tpu.memory_space<vmem>>, vector<4x4x256xbf16>
    %1 = arith.extf %0 : vector<4x4x256xbf16> to vector<4x4x256xf32>
    %c0_2 = arith.constant 0 : index
    %c0_3 = arith.constant 0 : index
    %c0_4 = arith.constant 0 : index
    %2 = vector.load %arg2[%c0_2, %c0_3, %c0_4] : memref<1x1x128xf32, #tpu.memory_space<vmem>>, vector<1x1x128xf32>
    %c0_5 = arith.constant 0 : index
    %c0_6 = arith.constant 0 : index
    %c0_7 = arith.constant 0 : index
    %3 = vector.load %arg3[%c0_5, %c0_6, %c0_7] : memref<1x1x128xf32, #tpu.memory_space<vmem>>, vector<1x1x128xf32>
    %4 = vector.extract_strided_slice %1 {offsets = [0, 0, 0], sizes = [4, 4, 128], strides = [1, 1, 1]} : vector<4x4x256xf32> to vector<4x4x128xf32>
    %5 = vector.broadcast %2 : vector<1x1x128xf32> to vector<4x4x128xf32>
    %6 = arith.mulf %4, %5 : vector<4x4x128xf32>
    %7 = vector.broadcast %3 : vector<1x1x128xf32> to vector<4x4x128xf32>
    %8 = arith.addf %6, %7 : vector<4x4x128xf32>
    %cst = arith.constant 0.000000e+00 : f32
    %9 = vector.broadcast %cst : f32 to vector<4x4x128xf32>
    %10 = arith.maximumf %8, %9 : vector<4x4x128xf32>
    %11 = vector.extract_strided_slice %1 {offsets = [0, 0, 128], sizes = [4, 4, 128], strides = [1, 1, 1]} : vector<4x4x256xf32> to vector<4x4x128xf32>
    %12 = vector.broadcast %2 : vector<1x1x128xf32> to vector<4x4x128xf32>
    %13 = arith.mulf %11, %12 : vector<4x4x128xf32>
    %14 = vector.broadcast %3 : vector<1x1x128xf32> to vector<4x4x128xf32>
    %15 = arith.addf %13, %14 : vector<4x4x128xf32>
    %cst_8 = arith.constant 0.000000e+00 : f32
    %16 = vector.broadcast %cst_8 : f32 to vector<4x4x128xf32>
    %17 = arith.maximumf %15, %16 : vector<4x4x128xf32>
    %18 = arith.maximumf %10, %17 : vector<4x4x128xf32>
    %19 = vector.shape_cast %18 : vector<4x4x128xf32> to vector<2x2x4x128xf32>
    %20 = vector.extract_strided_slice %19 {offsets = [0, 0, 0, 0], sizes = [2, 1, 4, 128], strides = [1, 1, 1, 1]} : vector<2x2x4x128xf32> to vector<2x1x4x128xf32>
    %21 = vector.shape_cast %20 : vector<2x1x4x128xf32> to vector<2x4x128xf32>
    %22 = vector.extract_strided_slice %19 {offsets = [0, 1, 0, 0], sizes = [2, 1, 4, 128], strides = [1, 1, 1, 1]} : vector<2x2x4x128xf32> to vector<2x1x4x128xf32>
    %23 = vector.shape_cast %22 : vector<2x1x4x128xf32> to vector<2x4x128xf32>
    %24 = arith.maximumf %21, %23 : vector<2x4x128xf32>
    %25 = arith.truncf %24 : vector<2x4x128xf32> to vector<2x4x128xbf16>
    %c0_9 = arith.constant 0 : index
    %c0_10 = arith.constant 0 : index
    %c0_11 = arith.constant 0 : index
    %26 = vector.load %arg4[%c0_9, %c0_10, %c0_11] : memref<2x4x128xbf16, #tpu.memory_space<vmem>>, vector<2x4x128xbf16>
    tpu.vector_store %arg4[%c0_9, %c0_10, %c0_11], %25 {strides = array<i32>} : memref<2x4x128xbf16, #tpu.memory_space<vmem>>, vector<2x4x128xbf16>,
    return
  }
  func.func @transform_0(%arg0: i32) -> (i32, i32, i32) {
    %c0_i32 = arith.constant 0 : i32
    %c0_i32_0 = arith.constant 0 : i32
    %c0_i32_1 = arith.constant 0 : i32
    return %arg0, %c0_i32, %c0_i32_0 : i32, i32, i32
  }
  func.func @transform_1(%arg0: i32) -> (i32, i32, i32) {
    %c0_i32 = arith.constant 0 : i32
    %c0_i32_0 = arith.constant 0 : i32
    %c0_i32_1 = arith.constant 0 : i32
    %c0_i32_2 = arith.constant 0 : i32
    return %c0_i32, %c0_i32_0, %c0_i32_1 : i32, i32, i32
  }
  func.func @transform_2(%arg0: i32) -> (i32, i32, i32) {
    %c0_i32 = arith.constant 0 : i32
    %c0_i32_0 = arith.constant 0 : i32
    %c0_i32_1 = arith.constant 0 : i32
    %c0_i32_2 = arith.constant 0 : i32
    return %c0_i32, %c0_i32_0, %c0_i32_1 : i32, i32, i32
  }
  func.func @transform_3(%arg0: i32) -> (i32, i32, i32) {
    %c0_i32 = arith.constant 0 : i32
    %c0_i32_0 = arith.constant 0 : i32
    %c0_i32_1 = arith.constant 0 : i32
    return %arg0, %c0_i32, %c0_i32_0 : i32, i32, i32
  }
}

module attributes {stable_mosaic.version = 11 : i64} {
  func.func @_conv_stats_kernel(%arg0: i32, %arg1: memref<1x6x6x128xbf16, #tpu.memory_space<vmem>>, %arg2: memref<9x128x128xbf16, #tpu.memory_space<vmem>>, %arg3: memref<1x16x128xbf16, #tpu.memory_space<vmem>>, %arg4: memref<1x8x128xf32, #tpu.memory_space<vmem>>) attributes {dimension_semantics = [#tpu.dimension_semantics<parallel>], iteration_bounds = array<i64: 2>, scalar_prefetch = 0 : i64, scratch_operands = 0 : i64, tpu.core_type = #tpu.core_type<tc>, window_params = [{transform_indices = @transform_0, window_bounds = array<i64: 1, 6, 6, 128>}, {pipeline_mode = #tpu.pipeline_mode<synchronous>, transform_indices = @transform_1, window_bounds = array<i64: 9, 128, 128>}, {transform_indices = @transform_2, window_bounds = array<i64: 1, 16, 128>}, {transform_indices = @transform_3, window_bounds = array<i64: 1, 8, 128>}]} {
    %c0 = arith.constant 0 : index
    %c0_0 = arith.constant 0 : index
    %c0_1 = arith.constant 0 : index
    %c0_2 = arith.constant 0 : index
    %0 = vector.load %arg1[%c0, %c0_0, %c0_1, %c0_2] : memref<1x6x6x128xbf16, #tpu.memory_space<vmem>>, vector<1x6x6x128xbf16>
    %cst = arith.constant 0.000000e+00 : f32
    %1 = vector.broadcast %cst : f32 to vector<16x128xf32>
    %2 = vector.extract_strided_slice %0 {offsets = [0, 0, 0, 0], sizes = [1, 4, 4, 128], strides = [1, 1, 1, 1]} : vector<1x6x6x128xbf16> to vector<1x4x4x128xbf16>
    %3 = vector.shape_cast %2 : vector<1x4x4x128xbf16> to vector<4x4x128xbf16>
    %4 = vector.shape_cast %3 : vector<4x4x128xbf16> to vector<16x128xbf16>
    %c0_3 = arith.constant 0 : index
    %c0_4 = arith.constant 0 : index
    %c0_5 = arith.constant 0 : index
    %5 = vector.load %arg2[%c0_3, %c0_4, %c0_5] : memref<9x128x128xbf16, #tpu.memory_space<vmem>>, vector<1x128x128xbf16>
    %6 = vector.shape_cast %5 : vector<1x128x128xbf16> to vector<128x128xbf16>
    %cst_6 = arith.constant dense<0.000000e+00> : vector<16x128xf32>
    %7 = tpu.matmul %4, %6, %cst_6 {dimension_numbers = #tpu.dot_dimension_numbers<[1], [0], [0], [1], [0, 0, 1, 1], [], []>} : vector<16x128xbf16>, vector<128x128xbf16>, vector<16x128xf32> -> vector<16x128xf32>
    %8 = arith.addf %1, %7 : vector<16x128xf32>
    %9 = vector.extract_strided_slice %0 {offsets = [0, 0, 1, 0], sizes = [1, 4, 4, 128], strides = [1, 1, 1, 1]} : vector<1x6x6x128xbf16> to vector<1x4x4x128xbf16>
    %10 = vector.shape_cast %9 : vector<1x4x4x128xbf16> to vector<4x4x128xbf16>
    %11 = vector.shape_cast %10 : vector<4x4x128xbf16> to vector<16x128xbf16>
    %c1 = arith.constant 1 : index
    %c0_7 = arith.constant 0 : index
    %c0_8 = arith.constant 0 : index
    %12 = vector.load %arg2[%c1, %c0_7, %c0_8] : memref<9x128x128xbf16, #tpu.memory_space<vmem>>, vector<1x128x128xbf16>
    %13 = vector.shape_cast %12 : vector<1x128x128xbf16> to vector<128x128xbf16>
    %cst_9 = arith.constant dense<0.000000e+00> : vector<16x128xf32>
    %14 = tpu.matmul %11, %13, %cst_9 {dimension_numbers = #tpu.dot_dimension_numbers<[1], [0], [0], [1], [0, 0, 1, 1], [], []>} : vector<16x128xbf16>, vector<128x128xbf16>, vector<16x128xf32> -> vector<16x128xf32>
    %15 = arith.addf %8, %14 : vector<16x128xf32>
    %16 = vector.extract_strided_slice %0 {offsets = [0, 0, 2, 0], sizes = [1, 4, 4, 128], strides = [1, 1, 1, 1]} : vector<1x6x6x128xbf16> to vector<1x4x4x128xbf16>
    %17 = vector.shape_cast %16 : vector<1x4x4x128xbf16> to vector<4x4x128xbf16>
    %18 = vector.shape_cast %17 : vector<4x4x128xbf16> to vector<16x128xbf16>
    %c2 = arith.constant 2 : index
    %c0_10 = arith.constant 0 : index
    %c0_11 = arith.constant 0 : index
    %19 = vector.load %arg2[%c2, %c0_10, %c0_11] : memref<9x128x128xbf16, #tpu.memory_space<vmem>>, vector<1x128x128xbf16>
    %20 = vector.shape_cast %19 : vector<1x128x128xbf16> to vector<128x128xbf16>
    %cst_12 = arith.constant dense<0.000000e+00> : vector<16x128xf32>
    %21 = tpu.matmul %18, %20, %cst_12 {dimension_numbers = #tpu.dot_dimension_numbers<[1], [0], [0], [1], [0, 0, 1, 1], [], []>} : vector<16x128xbf16>, vector<128x128xbf16>, vector<16x128xf32> -> vector<16x128xf32>
    %22 = arith.addf %15, %21 : vector<16x128xf32>
    %23 = vector.extract_strided_slice %0 {offsets = [0, 1, 0, 0], sizes = [1, 4, 4, 128], strides = [1, 1, 1, 1]} : vector<1x6x6x128xbf16> to vector<1x4x4x128xbf16>
    %24 = vector.shape_cast %23 : vector<1x4x4x128xbf16> to vector<4x4x128xbf16>
    %25 = vector.shape_cast %24 : vector<4x4x128xbf16> to vector<16x128xbf16>
    %c3 = arith.constant 3 : index
    %c0_13 = arith.constant 0 : index
    %c0_14 = arith.constant 0 : index
    %26 = vector.load %arg2[%c3, %c0_13, %c0_14] : memref<9x128x128xbf16, #tpu.memory_space<vmem>>, vector<1x128x128xbf16>
    %27 = vector.shape_cast %26 : vector<1x128x128xbf16> to vector<128x128xbf16>
    %cst_15 = arith.constant dense<0.000000e+00> : vector<16x128xf32>
    %28 = tpu.matmul %25, %27, %cst_15 {dimension_numbers = #tpu.dot_dimension_numbers<[1], [0], [0], [1], [0, 0, 1, 1], [], []>} : vector<16x128xbf16>, vector<128x128xbf16>, vector<16x128xf32> -> vector<16x128xf32>
    %29 = arith.addf %22, %28 : vector<16x128xf32>
    %30 = vector.extract_strided_slice %0 {offsets = [0, 1, 1, 0], sizes = [1, 4, 4, 128], strides = [1, 1, 1, 1]} : vector<1x6x6x128xbf16> to vector<1x4x4x128xbf16>
    %31 = vector.shape_cast %30 : vector<1x4x4x128xbf16> to vector<4x4x128xbf16>
    %32 = vector.shape_cast %31 : vector<4x4x128xbf16> to vector<16x128xbf16>
    %c4 = arith.constant 4 : index
    %c0_16 = arith.constant 0 : index
    %c0_17 = arith.constant 0 : index
    %33 = vector.load %arg2[%c4, %c0_16, %c0_17] : memref<9x128x128xbf16, #tpu.memory_space<vmem>>, vector<1x128x128xbf16>
    %34 = vector.shape_cast %33 : vector<1x128x128xbf16> to vector<128x128xbf16>
    %cst_18 = arith.constant dense<0.000000e+00> : vector<16x128xf32>
    %35 = tpu.matmul %32, %34, %cst_18 {dimension_numbers = #tpu.dot_dimension_numbers<[1], [0], [0], [1], [0, 0, 1, 1], [], []>} : vector<16x128xbf16>, vector<128x128xbf16>, vector<16x128xf32> -> vector<16x128xf32>
    %36 = arith.addf %29, %35 : vector<16x128xf32>
    %37 = vector.extract_strided_slice %0 {offsets = [0, 1, 2, 0], sizes = [1, 4, 4, 128], strides = [1, 1, 1, 1]} : vector<1x6x6x128xbf16> to vector<1x4x4x128xbf16>
    %38 = vector.shape_cast %37 : vector<1x4x4x128xbf16> to vector<4x4x128xbf16>
    %39 = vector.shape_cast %38 : vector<4x4x128xbf16> to vector<16x128xbf16>
    %c5 = arith.constant 5 : index
    %c0_19 = arith.constant 0 : index
    %c0_20 = arith.constant 0 : index
    %40 = vector.load %arg2[%c5, %c0_19, %c0_20] : memref<9x128x128xbf16, #tpu.memory_space<vmem>>, vector<1x128x128xbf16>
    %41 = vector.shape_cast %40 : vector<1x128x128xbf16> to vector<128x128xbf16>
    %cst_21 = arith.constant dense<0.000000e+00> : vector<16x128xf32>
    %42 = tpu.matmul %39, %41, %cst_21 {dimension_numbers = #tpu.dot_dimension_numbers<[1], [0], [0], [1], [0, 0, 1, 1], [], []>} : vector<16x128xbf16>, vector<128x128xbf16>, vector<16x128xf32> -> vector<16x128xf32>
    %43 = arith.addf %36, %42 : vector<16x128xf32>
    %44 = vector.extract_strided_slice %0 {offsets = [0, 2, 0, 0], sizes = [1, 4, 4, 128], strides = [1, 1, 1, 1]} : vector<1x6x6x128xbf16> to vector<1x4x4x128xbf16>
    %45 = vector.shape_cast %44 : vector<1x4x4x128xbf16> to vector<4x4x128xbf16>
    %46 = vector.shape_cast %45 : vector<4x4x128xbf16> to vector<16x128xbf16>
    %c6 = arith.constant 6 : index
    %c0_22 = arith.constant 0 : index
    %c0_23 = arith.constant 0 : index
    %47 = vector.load %arg2[%c6, %c0_22, %c0_23] : memref<9x128x128xbf16, #tpu.memory_space<vmem>>, vector<1x128x128xbf16>
    %48 = vector.shape_cast %47 : vector<1x128x128xbf16> to vector<128x128xbf16>
    %cst_24 = arith.constant dense<0.000000e+00> : vector<16x128xf32>
    %49 = tpu.matmul %46, %48, %cst_24 {dimension_numbers = #tpu.dot_dimension_numbers<[1], [0], [0], [1], [0, 0, 1, 1], [], []>} : vector<16x128xbf16>, vector<128x128xbf16>, vector<16x128xf32> -> vector<16x128xf32>
    %50 = arith.addf %43, %49 : vector<16x128xf32>
    %51 = vector.extract_strided_slice %0 {offsets = [0, 2, 1, 0], sizes = [1, 4, 4, 128], strides = [1, 1, 1, 1]} : vector<1x6x6x128xbf16> to vector<1x4x4x128xbf16>
    %52 = vector.shape_cast %51 : vector<1x4x4x128xbf16> to vector<4x4x128xbf16>
    %53 = vector.shape_cast %52 : vector<4x4x128xbf16> to vector<16x128xbf16>
    %c7 = arith.constant 7 : index
    %c0_25 = arith.constant 0 : index
    %c0_26 = arith.constant 0 : index
    %54 = vector.load %arg2[%c7, %c0_25, %c0_26] : memref<9x128x128xbf16, #tpu.memory_space<vmem>>, vector<1x128x128xbf16>
    %55 = vector.shape_cast %54 : vector<1x128x128xbf16> to vector<128x128xbf16>
    %cst_27 = arith.constant dense<0.000000e+00> : vector<16x128xf32>
    %56 = tpu.matmul %53, %55, %cst_27 {dimension_numbers = #tpu.dot_dimension_numbers<[1], [0], [0], [1], [0, 0, 1, 1], [], []>} : vector<16x128xbf16>, vector<128x128xbf16>, vector<16x128xf32> -> vector<16x128xf32>
    %57 = arith.addf %50, %56 : vector<16x128xf32>
    %58 = vector.extract_strided_slice %0 {offsets = [0, 2, 2, 0], sizes = [1, 4, 4, 128], strides = [1, 1, 1, 1]} : vector<1x6x6x128xbf16> to vector<1x4x4x128xbf16>
    %59 = vector.shape_cast %58 : vector<1x4x4x128xbf16> to vector<4x4x128xbf16>
    %60 = vector.shape_cast %59 : vector<4x4x128xbf16> to vector<16x128xbf16>
    %c8 = arith.constant 8 : index
    %c0_28 = arith.constant 0 : index
    %c0_29 = arith.constant 0 : index
    %61 = vector.load %arg2[%c8, %c0_28, %c0_29] : memref<9x128x128xbf16, #tpu.memory_space<vmem>>, vector<1x128x128xbf16>
    %62 = vector.shape_cast %61 : vector<1x128x128xbf16> to vector<128x128xbf16>
    %cst_30 = arith.constant dense<0.000000e+00> : vector<16x128xf32>
    %63 = tpu.matmul %60, %62, %cst_30 {dimension_numbers = #tpu.dot_dimension_numbers<[1], [0], [0], [1], [0, 0, 1, 1], [], []>} : vector<16x128xbf16>, vector<128x128xbf16>, vector<16x128xf32> -> vector<16x128xf32>
    %64 = arith.addf %57, %63 : vector<16x128xf32>
    %65 = vector.shape_cast %64 : vector<16x128xf32> to vector<1x16x128xf32>
    %66 = arith.truncf %65 : vector<1x16x128xf32> to vector<1x16x128xbf16>
    %c0_31 = arith.constant 0 : index
    %c0_32 = arith.constant 0 : index
    %c0_33 = arith.constant 0 : index
    %67 = vector.load %arg3[%c0_31, %c0_32, %c0_33] : memref<1x16x128xbf16, #tpu.memory_space<vmem>>, vector<1x16x128xbf16>
    tpu.vector_store %arg3[%c0_31, %c0_32, %c0_33], %66 {strides = array<i32>} : memref<1x16x128xbf16, #tpu.memory_space<vmem>>, vector<1x16x128xbf16>,
    %cst_34 = arith.constant dense<0.000000e+00> : vector<128xf32>
    %68 = vector.multi_reduction <add>, %64, %cst_34 [0] : vector<16x128xf32> to vector<128xf32>
    %69 = vector.shape_cast %68 : vector<128xf32> to vector<1x128xf32>
    %70 = arith.mulf %64, %64 : vector<16x128xf32>
    %cst_35 = arith.constant dense<0.000000e+00> : vector<128xf32>
    %71 = vector.multi_reduction <add>, %70, %cst_35 [0] : vector<16x128xf32> to vector<128xf32>
    %72 = vector.shape_cast %71 : vector<128xf32> to vector<1x128xf32>
    %cst_36 = arith.constant 0.000000e+00 : f32
    %73 = vector.broadcast %cst_36 : f32 to vector<6x128xf32>
    %74 = tpu.concatenate %69, %72, %73 in 0 : vector<1x128xf32>, vector<1x128xf32>, vector<6x128xf32> -> vector<8x128xf32>
    %75 = vector.shape_cast %74 : vector<8x128xf32> to vector<1x8x128xf32>
    %c0_37 = arith.constant 0 : index
    %c0_38 = arith.constant 0 : index
    %c0_39 = arith.constant 0 : index
    %76 = vector.load %arg4[%c0_37, %c0_38, %c0_39] : memref<1x8x128xf32, #tpu.memory_space<vmem>>, vector<1x8x128xf32>
    tpu.vector_store %arg4[%c0_37, %c0_38, %c0_39], %75 {strides = array<i32>} : memref<1x8x128xf32, #tpu.memory_space<vmem>>, vector<1x8x128xf32>,
    return
  }
  func.func @transform_0(%arg0: i32) -> (i32, i32, i32, i32) {
    %c0_i32 = arith.constant 0 : i32
    %c0_i32_0 = arith.constant 0 : i32
    %c0_i32_1 = arith.constant 0 : i32
    %c0_i32_2 = arith.constant 0 : i32
    return %arg0, %c0_i32, %c0_i32_0, %c0_i32_1 : i32, i32, i32, i32
  }
  func.func @transform_1(%arg0: i32) -> (i32, i32, i32) {
    %c0_i32 = arith.constant 0 : i32
    %c0_i32_0 = arith.constant 0 : i32
    %c0_i32_1 = arith.constant 0 : i32
    %c0_i32_2 = arith.constant 0 : i32
    return %c0_i32, %c0_i32_0, %c0_i32_1 : i32, i32, i32
  }
  func.func @transform_2(%arg0: i32) -> (i32, i32, i32) {
    %c0_i32 = arith.constant 0 : i32
    %c0_i32_0 = arith.constant 0 : i32
    %c0_i32_1 = arith.constant 0 : i32
    return %arg0, %c0_i32, %c0_i32_0 : i32, i32, i32
  }
  func.func @transform_3(%arg0: i32) -> (i32, i32, i32) {
    %c0_i32 = arith.constant 0 : i32
    %c0_i32_0 = arith.constant 0 : i32
    %c0_i32_1 = arith.constant 0 : i32
    return %arg0, %c0_i32, %c0_i32_0 : i32, i32, i32
  }
}

module attributes {stable_mosaic.version = 11 : i64} {
  func.func @_bn_relu_pool_kernel(%arg0: i32, %arg1: memref<2x2x256xbf16, #tpu.memory_space<vmem>>, %arg2: memref<1x1x128xf32, #tpu.memory_space<vmem>>, %arg3: memref<1x1x128xf32, #tpu.memory_space<vmem>>, %arg4: memref<1x2x128xbf16, #tpu.memory_space<vmem>>) attributes {dimension_semantics = [#tpu.dimension_semantics<parallel>], iteration_bounds = array<i64: 4>, scalar_prefetch = 0 : i64, scratch_operands = 0 : i64, tpu.core_type = #tpu.core_type<tc>, window_params = [{transform_indices = @transform_0, window_bounds = array<i64: 2, 2, 256>}, {pipeline_mode = #tpu.pipeline_mode<synchronous>, transform_indices = @transform_1, window_bounds = array<i64: 1, 1, 128>}, {pipeline_mode = #tpu.pipeline_mode<synchronous>, transform_indices = @transform_2, window_bounds = array<i64: 1, 1, 128>}, {transform_indices = @transform_3, window_bounds = array<i64: 1, 2, 128>}]} {
    %c0 = arith.constant 0 : index
    %c0_0 = arith.constant 0 : index
    %c0_1 = arith.constant 0 : index
    %0 = vector.load %arg1[%c0, %c0_0, %c0_1] : memref<2x2x256xbf16, #tpu.memory_space<vmem>>, vector<2x2x256xbf16>
    %1 = arith.extf %0 : vector<2x2x256xbf16> to vector<2x2x256xf32>
    %c0_2 = arith.constant 0 : index
    %c0_3 = arith.constant 0 : index
    %c0_4 = arith.constant 0 : index
    %2 = vector.load %arg2[%c0_2, %c0_3, %c0_4] : memref<1x1x128xf32, #tpu.memory_space<vmem>>, vector<1x1x128xf32>
    %c0_5 = arith.constant 0 : index
    %c0_6 = arith.constant 0 : index
    %c0_7 = arith.constant 0 : index
    %3 = vector.load %arg3[%c0_5, %c0_6, %c0_7] : memref<1x1x128xf32, #tpu.memory_space<vmem>>, vector<1x1x128xf32>
    %4 = vector.extract_strided_slice %1 {offsets = [0, 0, 0], sizes = [2, 2, 128], strides = [1, 1, 1]} : vector<2x2x256xf32> to vector<2x2x128xf32>
    %5 = vector.broadcast %2 : vector<1x1x128xf32> to vector<2x2x128xf32>
    %6 = arith.mulf %4, %5 : vector<2x2x128xf32>
    %7 = vector.broadcast %3 : vector<1x1x128xf32> to vector<2x2x128xf32>
    %8 = arith.addf %6, %7 : vector<2x2x128xf32>
    %cst = arith.constant 0.000000e+00 : f32
    %9 = vector.broadcast %cst : f32 to vector<2x2x128xf32>
    %10 = arith.maximumf %8, %9 : vector<2x2x128xf32>
    %11 = vector.extract_strided_slice %1 {offsets = [0, 0, 128], sizes = [2, 2, 128], strides = [1, 1, 1]} : vector<2x2x256xf32> to vector<2x2x128xf32>
    %12 = vector.broadcast %2 : vector<1x1x128xf32> to vector<2x2x128xf32>
    %13 = arith.mulf %11, %12 : vector<2x2x128xf32>
    %14 = vector.broadcast %3 : vector<1x1x128xf32> to vector<2x2x128xf32>
    %15 = arith.addf %13, %14 : vector<2x2x128xf32>
    %cst_8 = arith.constant 0.000000e+00 : f32
    %16 = vector.broadcast %cst_8 : f32 to vector<2x2x128xf32>
    %17 = arith.maximumf %15, %16 : vector<2x2x128xf32>
    %18 = arith.maximumf %10, %17 : vector<2x2x128xf32>
    %19 = vector.shape_cast %18 : vector<2x2x128xf32> to vector<1x2x2x128xf32>
    %20 = vector.extract_strided_slice %19 {offsets = [0, 0, 0, 0], sizes = [1, 1, 2, 128], strides = [1, 1, 1, 1]} : vector<1x2x2x128xf32> to vector<1x1x2x128xf32>
    %21 = vector.shape_cast %20 : vector<1x1x2x128xf32> to vector<1x2x128xf32>
    %22 = vector.extract_strided_slice %19 {offsets = [0, 1, 0, 0], sizes = [1, 1, 2, 128], strides = [1, 1, 1, 1]} : vector<1x2x2x128xf32> to vector<1x1x2x128xf32>
    %23 = vector.shape_cast %22 : vector<1x1x2x128xf32> to vector<1x2x128xf32>
    %24 = arith.maximumf %21, %23 : vector<1x2x128xf32>
    %25 = arith.truncf %24 : vector<1x2x128xf32> to vector<1x2x128xbf16>
    %c0_9 = arith.constant 0 : index
    %c0_10 = arith.constant 0 : index
    %c0_11 = arith.constant 0 : index
    %26 = vector.load %arg4[%c0_9, %c0_10, %c0_11] : memref<1x2x128xbf16, #tpu.memory_space<vmem>>, vector<1x2x128xbf16>
    tpu.vector_store %arg4[%c0_9, %c0_10, %c0_11], %25 {strides = array<i32>} : memref<1x2x128xbf16, #tpu.memory_space<vmem>>, vector<1x2x128xbf16>,
    return
  }
  func.func @transform_0(%arg0: i32) -> (i32, i32, i32) {
    %c0_i32 = arith.constant 0 : i32
    %c0_i32_0 = arith.constant 0 : i32
    %c0_i32_1 = arith.constant 0 : i32
    return %arg0, %c0_i32, %c0_i32_0 : i32, i32, i32
  }
  func.func @transform_1(%arg0: i32) -> (i32, i32, i32) {
    %c0_i32 = arith.constant 0 : i32
    %c0_i32_0 = arith.constant 0 : i32
    %c0_i32_1 = arith.constant 0 : i32
    %c0_i32_2 = arith.constant 0 : i32
    return %c0_i32, %c0_i32_0, %c0_i32_1 : i32, i32, i32
  }
  func.func @transform_2(%arg0: i32) -> (i32, i32, i32) {
    %c0_i32 = arith.constant 0 : i32
    %c0_i32_0 = arith.constant 0 : i32
    %c0_i32_1 = arith.constant 0 : i32
    %c0_i32_2 = arith.constant 0 : i32
    return %c0_i32, %c0_i32_0, %c0_i32_1 : i32, i32, i32
  }
  func.func @transform_3(%arg0: i32) -> (i32, i32, i32) {
    %c0_i32 = arith.constant 0 : i32
    %c0_i32_0 = arith.constant 0 : i32
    %c0_i32_1 = arith.constant 0 : i32
    return %arg0, %c0_i32, %c0_i32_0 : i32, i32, i32
  }
}

</mosaic_0001>

<llo_original>
// kernel: convnet_forward.7
$region0: #{convnet_forward.7}
  #allocation0 [shape = 'u32[]', space=smem, size = 0x4, offset = 0x4, fixed_abs, tag = 'smem constant byte address 0x4 - core index']
  #allocation1 [shape = 'u32[144,128]{1,0:T(1,128)}', space=vmem, size = 0x12000, scoped, tag = 'internal scratch']
  %s0 = inlined_call_operand.vmem [shape: bf16[128,128], index: 0, kind: input, shape index: {}]
  %s1 = inlined_call_operand.vmem [shape: f32[1,128], index: 1, kind: input, shape index: {}]
  %s2 = inlined_call_operand.vmem [shape: f32[1,128], index: 2, kind: input, shape index: {}]
  %s3 = inlined_call_operand.vmem [shape: bf16[128,128], index: 3, kind: output, shape index: {}]
  %s4 = sld [smem:[#allocation0]]
  $region45: #{convnet_forward.7} parent=0
    _
  %s6 = ssub.s32 1, %s4
  %s7 = scalar_select 0, %s6, %s4
  loop: start=0, step=1, limit=6
  $region2: #{convnet_forward.7} parent=0 // loop_pre_header
    _
  $region3: #{convnet_forward.7} parent=0 // loop_header
    %s9 = sphi 0, %s13
    %p10 = scmp.ge.s32.totalorder %s9, 6
    %s19 = sphi 0, %s21
    %s22 = sphi 0, %s19
    %s23 = sphi 0, %s22
    %s39 = sphi 0, %s23
    %s43 = sphi 0, %s43
    %s45 = sphi 0, %s43
    %s46 = sphi 0, %s45
    %s60 = sphi 0, %s46
    %s64 = sphi 0, %s64
    %s66 = sphi 0, %s64
    %s67 = sphi 0, %s66
    %s81 = sphi 0, %s67
    %s87 = sphi 0, %s89
    %s90 = sphi 0, %s87
    %s91 = sphi 0, %s90
    %s107 = sphi 0, %s91
  $region4: #{convnet_forward.7} parent=0 // loop_header_branch
    %12 = sbr.rel (%p10) target = $region8
  $region5: #{convnet_forward.7} parent=0 // loop_body
    %s14 = ssub.s32 %s9, 1
    %s15 = ssub.s32 %s9, 2
    %s16 = sadd.s32 %s9, 1
    %s17 = ssub.s32 %s9, %s16
    %p18 = scmp.eq.s32.totalorder %s17, 0
    %s20 = sadd.s32 %s19, 1
    %s21 = scalar_select %p18, %s19, %s20
    %p24 = pneg %p18
    %p25 = scmp.eq.s32.totalorder %s9, 3
    %p26 = por %p24, %p25
    %p27 = scmp.ne.s32.totalorder %s19, %s22
    %p28 = scmp.eq.s32.totalorder %s9, 0
    %p29 = por %p27, %p28
    %p30 = scmp.ne.s32.totalorder %s19, %s22
    %p31 = scmp.eq.s32.totalorder %s14, 3
    %p32 = por %p30, %p31
    %p33 = scmp.ne.s32.totalorder %s22, %s23
    %p34 = scmp.eq.s32.totalorder %s14, 0
    %p35 = por %p33, %p34
    %p36 = scmp.ne.s32.totalorder %s22, %s23
    %p37 = scmp.eq.s32.totalorder %s15, 3
    %p38 = por %p36, %p37
    %p40 = scmp.ne.s32.totalorder %s23, %s39
    %p41 = scmp.eq.s32.totalorder %s15, 0
    %p42 = por %p40, %p41
    %s44 = sadd.s32 %s43, 1
    %p47 = scmp.eq.s32.totalorder %s9, 3
    %p48 = scmp.ne.s32.totalorder %s43, %s45
    %p49 = scmp.eq.s32.totalorder %s9, 0
    %p50 = por %p48, %p49
    %p51 = scmp.ne.s32.totalorder %s43, %s45
    %p52 = scmp.eq.s32.totalorder %s14, 3
    %p53 = por %p51, %p52
    %p54 = scmp.ne.s32.totalorder %s45, %s46
    %p55 = scmp.eq.s32.totalorder %s14, 0
    %p56 = por %p54, %p55
    %p57 = scmp.ne.s32.totalorder %s45, %s46
    %p58 = scmp.eq.s32.totalorder %s15, 3
    %p59 = por %p57, %p58
    %p61 = scmp.ne.s32.totalorder %s46, %s60
    %p62 = scmp.eq.s32.totalorder %s15, 0
    %p63 = por %p61, %p62
    %s65 = sadd.s32 %s64, 1
    %p68 = scmp.eq.s32.totalorder %s9, 3
    %p69 = scmp.ne.s32.totalorder %s64, %s66
    %p70 = scmp.eq.s32.totalorder %s9, 0
    %p71 = por %p69, %p70
    %p72 = scmp.ne.s32.totalorder %s64, %s66
    %p73 = scmp.eq.s32.totalorder %s14, 3
    %p74 = por %p72, %p73
    %p75 = scmp.ne.s32.totalorder %s66, %s67
    %p76 = scmp.eq.s32.totalorder %s14, 0
    %p77 = por %p75, %p76
    %p78 = scmp.ne.s32.totalorder %s66, %s67
    %p79 = scmp.eq.s32.totalorder %s15, 3
    %p80 = por %p78, %p79
    %p82 = scmp.ne.s32.totalorder %s67, %s81
    %p83 = scmp.eq.s32.totalorder %s15, 0
    %p84 = por %p82, %p83
    %s85 = ssub.s32 %s9, %s16
    %p86 = scmp.eq.s32.totalorder %s85, 0
    %s88 = sadd.s32 %s87, 1
    %s89 = scalar_select %p86, %s87, %s88
    %p92 = pneg %p86
    %p93 = scmp.eq.s32.totalorder %s9, 3
    %p94 = por %p92, %p93
    %p95 = scmp.ne.s32.totalorder %s87, %s90
    %p96 = scmp.eq.s32.totalorder %s9, 0
    %p97 = por %p95, %p96
    %p98 = scmp.ne.s32.totalorder %s87, %s90
    %p99 = scmp.eq.s32.totalorder %s14, 3
    %p100 = por %p98, %p99
    %p101 = scmp.ne.s32.totalorder %s90, %s91
    %p102 = scmp.eq.s32.totalorder %s14, 0
    %p103 = por %p101, %p102
    %p104 = scmp.ne.s32.totalorder %s90, %s91
    %p105 = scmp.eq.s32.totalorder %s15, 3
    %p106 = por %p104, %p105
    %p108 = scmp.ne.s32.totalorder %s91, %s107
    %p109 = scmp.eq.s32.totalorder %s15, 0
    %p110 = por %p108, %p109
    %p111 = scmp.le.s32.totalorder 1, %s9
    %p112 = scmp.lt.s32.totalorder %s9, 5
    %p113 = pnand %p111, %p112
    %p114 = pneg %p113
    // Predicated region
    $region9: #{convnet_forward.7} parent=5 // pred_check
      _
    $region10: #{convnet_forward.7} parent=5 // pred_check_branch
      %116 = sbr.rel (%p113) target = $region12
    $region11: #{convnet_forward.7} parent=5 // pred_region
      %s117 = ssub.s32 %s9, 1
      // Predicated region
      $region13: #{convnet_forward.7} parent=11 // pred_check
        %p118 = pneg %p56
      $region14: #{convnet_forward.7} parent=11 // pred_check_branch
        %120 = sbr.rel (%p118) target = $region16
      $region15: #{convnet_forward.7} parent=11 // pred_region
        _
      $region16: #{convnet_forward.7} parent=11 // pred_fallthru
        _
      // Predicated region
      $region17: #{convnet_forward.7} parent=11 // pred_check
        %p121 = pneg %p77
      $region18: #{convnet_forward.7} parent=11 // pred_check_branch
        %123 = sbr.rel (%p121) target = $region20
      $region19: #{convnet_forward.7} parent=11 // pred_region
        _
      $region20: #{convnet_forward.7} parent=11 // pred_fallthru
        _
    $region12: #{convnet_forward.7} parent=5 // pred_fallthru
      _
    %p124 = scmp.lt.s32.totalorder %s9, 4
    // Predicated region
    $region21: #{convnet_forward.7} parent=5 // pred_check
      %p125 = pneg %p124
    $region22: #{convnet_forward.7} parent=5 // pred_check_branch
      %127 = sbr.rel (%p125) target = $region24
    $region23: #{convnet_forward.7} parent=5 // pred_region
      // Predicated region
      $region25: #{convnet_forward.7} parent=23 // pred_check
        %p128 = pneg %p29
      $region26: #{convnet_forward.7} parent=23 // pred_check_branch
        %130 = sbr.rel (%p128) target = $region28
      $region27: #{convnet_forward.7} parent=23 // pred_region
        %s131 = smul.u32 4, %s9
        %p132 = scmp.lt.s32.totalorder %s131, 15
        %s133 = scalar_select %p132, %s131, 15
        %s134 = smul.addr %s133, 4
        %s135 = scalar_lea.vmem %s0, %s134
        %s136 = smul.u32 4, %s9
      $region28: #{convnet_forward.7} parent=23 // pred_fallthru
        _
    $region24: #{convnet_forward.7} parent=5 // pred_fallthru
      _
    %p137 = scmp.le.s32.totalorder 1, %s9
    %p138 = scmp.lt.s32.totalorder %s9, 5
    %p139 = pnand %p137, %p138
    %p140 = pneg %p139
    // Predicated region
    $region29: #{convnet_forward.7} parent=5 // pred_check
      _
    $region30: #{convnet_forward.7} parent=5 // pred_check_branch
      %142 = sbr.rel (%p139) target = $region32
    $region31: #{convnet_forward.7} parent=5 // pred_region
      %s143 = ssub.s32 %s9, 1
      %s144 = smul.u32 4, %s14
      %p145 = scmp.lt.s32.totalorder %s144, 15
      %s146 = scalar_select %p145, %s144, 15
      %s147 = smul.addr %s146, 4
      %s148 = scalar_lea.vmem %s0, %s147
      %p149 = pneg %p35
      %p150 = pneg %p32
      %p151 = pneg %p56
      %p152 = pneg %p53
      %p153 = pneg %p77
      %p154 = pneg %p74
      %p155 = pneg %p103
      %p156 = pneg %p100
      %s157 = smul.u32 4, %s14
      %p158 = scmp.lt.s32.totalorder %s157, 15
      %s159 = scalar_select %p158, %s157, 15
      %s160 = smul.addr %s159, 4
      %s161 = scalar_lea.vmem %s3, %s160
      %s162 = smul.u32 4, %s14
      %p163 = scmp.lt.s32.totalorder %s162, 15
      %s164 = scalar_select %p163, %s162, 15
      %s165 = smul.addr %s164, 4
      %s166 = scalar_lea.vmem %s0, %s165
      %s167 = smul.u32 4, %s14
      %s168 = smul.u32 4, %s14
      %p169 = scmp.lt.s32.totalorder %s168, 15
      %s170 = scalar_select %p169, %s168, 15
      %s171 = smul.addr %s170, 4
      %s172 = scalar_lea.vmem %s3, %s171
      %s173 = smul.u32 4, %s14
      %v174 = vld [vmem:[%s166] sm:$0xf]
      %v175 = vld [vmem:[%s166 + $0x4] sm:$0xf]
      %v176 = vld [vmem:[%s166 + $0x8] sm:$0xf]
      %v177 = vld [vmem:[%s166 + $0xc] sm:$0xf]
      %v178 = vunpack.c.l.bf16 %v174
      %v179 = vunpack.c.l.bf16 %v175
      %v180 = vunpack.c.l.bf16 %v176
      %v181 = vunpack.c.l.bf16 %v177
      %v182 = vld [vmem:[%s1] sm:$0x1]
      %v184 = vlaneseq
      %v185 = vshrl.u32 %v184, 7
      %v186 = vsub.s32 0, %v185
      %v187 = vrot.slane %v182, %v186
      %v189 = vmul.f32 %v178, %v187
      %v190 = vmul.f32 %v179, %v187
      %v191 = vmul.f32 %v180, %v187
      %v192 = vmul.f32 %v181, %v187
      %v193 = vld [vmem:[%s2] sm:$0x1]
      %v195 = vlaneseq
      %v196 = vshrl.u32 %v195, 7
      %v197 = vsub.s32 0, %v196
      %v198 = vrot.slane %v193, %v197
      %v200 = vadd.f32 %v189, %v198
      %v201 = vadd.f32 %v190, %v198
      %v202 = vadd.f32 %v191, %v198
      %v203 = vadd.f32 %v192, %v198
      %v204 = vmax.f32 %v200, 0.0
      %v205 = vmax.f32 %v201, 0.0
      %v206 = vmax.f32 %v202, 0.0
      %v207 = vmax.f32 %v203, 0.0
      %v208 = vpack.c.bf16 %v205, %v204
      %v209 = vpack.c.bf16 %v207, %v206
      %v212 = vunpack.c.l.b16 %v208
      %v213 = vunpack.c.h.b16 %v208
      %v214 = vunpack.c.l.b16 %v209
      %v215 = vunpack.c.h.b16 %v209
      %v216 = vpack.c.b16 %v212, %v212
      %v217 = vpack.c.b16 %v213, %v213
      %v218 = vpack.c.b16 %v214, %v214
      %v219 = vpack.c.b16 %v215, %v215
      %224 = vst [vmem:[%s172] sm:$0xf] %v216
      %225 = vst [vmem:[%s172 + $0x4] sm:$0xf] %v217
      %226 = vst [vmem:[%s172 + $0x8] sm:$0xf] %v218
      %227 = vst [vmem:[%s172 + $0xc] sm:$0xf] %v219
      %s228 = smul.u32 4, %s14
      %p229 = scmp.lt.s32.totalorder %s228, 15
      %s230 = scalar_select %p229, %s228, 15
      %s231 = smul.addr %s230, 4
      %s232 = scalar_lea.vmem %s3, %s231
      // Predicated region
      $region33: #{convnet_forward.7} parent=31 // pred_check
        %p233 = pneg %p100
      $region34: #{convnet_forward.7} parent=31 // pred_check_branch
        %235 = sbr.rel (%p233) target = $region36
      $region35: #{convnet_forward.7} parent=31 // pred_region
        %s236 = smul.u32 4, %s14
      $region36: #{convnet_forward.7} parent=31 // pred_fallthru
        _
    $region32: #{convnet_forward.7} parent=5 // pred_fallthru
      _
    %p237 = scmp.le.s32.totalorder 2, %s9
    // Predicated region
    $region37: #{convnet_forward.7} parent=5 // pred_check
      %p238 = pneg %p237
    $region38: #{convnet_forward.7} parent=5 // pred_check_branch
      %240 = sbr.rel (%p238) target = $region40
    $region39: #{convnet_forward.7} parent=5 // pred_region
      %s241 = ssub.s32 %s9, 2
      // Predicated region
      $region41: #{convnet_forward.7} parent=39 // pred_check
        %p242 = pneg %p106
      $region42: #{convnet_forward.7} parent=39 // pred_check_branch
        %244 = sbr.rel (%p242) target = $region44
      $region43: #{convnet_forward.7} parent=39 // pred_region
        %s245 = smul.u32 4, %s15
        %p246 = scmp.lt.s32.totalorder %s245, 15
        %s247 = scalar_select %p246, %s245, 15
        %s248 = smul.addr %s247, 4
        %s249 = scalar_lea.vmem %s3, %s248
      $region44: #{convnet_forward.7} parent=39 // pred_fallthru
        _
    $region40: #{convnet_forward.7} parent=5 // pred_fallthru
      _
  $region6: #{convnet_forward.7} parent=0 // loop_footer
    %s13 = sadd.s32 1, %s9
  $region7: #{convnet_forward.7} parent=0 // loop_footer_branch
    %8 = sbr.rel target = $region3
  $region8: #{convnet_forward.7} parent=0 // loop_exit
    _

// kernel: convnet_forward.9
$region0: #{convnet_forward.9}
  #allocation0 [shape = 'u32[]', space=smem, size = 0x4, offset = 0x4, fixed_abs, tag = 'smem constant byte address 0x4 - core index']
  #allocation1 [shape = 'u32[144,128]{1,0:T(1,128)}', space=vmem, size = 0x12000, scoped, tag = 'internal scratch']
  %s0 = inlined_call_operand.vmem [shape: bf16[16,4,256], index: 0, kind: input, shape index: {}]
  %s1 = inlined_call_operand.vmem [shape: f32[1,1,128], index: 1, kind: input, shape index: {}]
  %s2 = inlined_call_operand.vmem [shape: f32[1,1,128], index: 2, kind: input, shape index: {}]
  %s3 = inlined_call_operand.vmem [shape: bf16[8,4,128], index: 3, kind: output, shape index: {}]
  %s4 = sld [smem:[#allocation0]]
  $region45: #{convnet_forward.9} parent=0
    _
  %s6 = ssub.s32 1, %s4
  %s7 = scalar_select 0, %s6, %s4
  loop: start=0, step=1, limit=6
  $region2: #{convnet_forward.9} parent=0 // loop_pre_header
    _
  $region3: #{convnet_forward.9} parent=0 // loop_header
    %s9 = sphi 0, %s13
    %p10 = scmp.ge.s32.totalorder %s9, 6
    %s19 = sphi 0, %s21
    %s22 = sphi 0, %s19
    %s23 = sphi 0, %s22
    %s39 = sphi 0, %s23
    %s43 = sphi 0, %s43
    %s45 = sphi 0, %s43
    %s46 = sphi 0, %s45
    %s60 = sphi 0, %s46
    %s64 = sphi 0, %s64
    %s66 = sphi 0, %s64
    %s67 = sphi 0, %s66
    %s81 = sphi 0, %s67
    %s87 = sphi 0, %s89
    %s90 = sphi 0, %s87
    %s91 = sphi 0, %s90
    %s107 = sphi 0, %s91
  $region4: #{convnet_forward.9} parent=0 // loop_header_branch
    %12 = sbr.rel (%p10) target = $region8
  $region5: #{convnet_forward.9} parent=0 // loop_body
    %s14 = ssub.s32 %s9, 1
    %s15 = ssub.s32 %s9, 2
    %s16 = sadd.s32 %s9, 1
    %s17 = ssub.s32 %s9, %s16
    %p18 = scmp.eq.s32.totalorder %s17, 0
    %s20 = sadd.s32 %s19, 1
    %s21 = scalar_select %p18, %s19, %s20
    %p24 = pneg %p18
    %p25 = scmp.eq.s32.totalorder %s9, 3
    %p26 = por %p24, %p25
    %p27 = scmp.ne.s32.totalorder %s19, %s22
    %p28 = scmp.eq.s32.totalorder %s9, 0
    %p29 = por %p27, %p28
    %p30 = scmp.ne.s32.totalorder %s19, %s22
    %p31 = scmp.eq.s32.totalorder %s14, 3
    %p32 = por %p30, %p31
    %p33 = scmp.ne.s32.totalorder %s22, %s23
    %p34 = scmp.eq.s32.totalorder %s14, 0
    %p35 = por %p33, %p34
    %p36 = scmp.ne.s32.totalorder %s22, %s23
    %p37 = scmp.eq.s32.totalorder %s15, 3
    %p38 = por %p36, %p37
    %p40 = scmp.ne.s32.totalorder %s23, %s39
    %p41 = scmp.eq.s32.totalorder %s15, 0
    %p42 = por %p40, %p41
    %s44 = sadd.s32 %s43, 1
    %p47 = scmp.eq.s32.totalorder %s9, 3
    %p48 = scmp.ne.s32.totalorder %s43, %s45
    %p49 = scmp.eq.s32.totalorder %s9, 0
    %p50 = por %p48, %p49
    %p51 = scmp.ne.s32.totalorder %s43, %s45
    %p52 = scmp.eq.s32.totalorder %s14, 3
    %p53 = por %p51, %p52
    %p54 = scmp.ne.s32.totalorder %s45, %s46
    %p55 = scmp.eq.s32.totalorder %s14, 0
    %p56 = por %p54, %p55
    %p57 = scmp.ne.s32.totalorder %s45, %s46
    %p58 = scmp.eq.s32.totalorder %s15, 3
    %p59 = por %p57, %p58
    %p61 = scmp.ne.s32.totalorder %s46, %s60
    %p62 = scmp.eq.s32.totalorder %s15, 0
    %p63 = por %p61, %p62
    %s65 = sadd.s32 %s64, 1
    %p68 = scmp.eq.s32.totalorder %s9, 3
    %p69 = scmp.ne.s32.totalorder %s64, %s66
    %p70 = scmp.eq.s32.totalorder %s9, 0
    %p71 = por %p69, %p70
    %p72 = scmp.ne.s32.totalorder %s64, %s66
    %p73 = scmp.eq.s32.totalorder %s14, 3
    %p74 = por %p72, %p73
    %p75 = scmp.ne.s32.totalorder %s66, %s67
    %p76 = scmp.eq.s32.totalorder %s14, 0
    %p77 = por %p75, %p76
    %p78 = scmp.ne.s32.totalorder %s66, %s67
    %p79 = scmp.eq.s32.totalorder %s15, 3
    %p80 = por %p78, %p79
    %p82 = scmp.ne.s32.totalorder %s67, %s81
    %p83 = scmp.eq.s32.totalorder %s15, 0
    %p84 = por %p82, %p83
    %s85 = ssub.s32 %s9, %s16
    %p86 = scmp.eq.s32.totalorder %s85, 0
    %s88 = sadd.s32 %s87, 1
    %s89 = scalar_select %p86, %s87, %s88
    %p92 = pneg %p86
    %p93 = scmp.eq.s32.totalorder %s9, 3
    %p94 = por %p92, %p93
    %p95 = scmp.ne.s32.totalorder %s87, %s90
    %p96 = scmp.eq.s32.totalorder %s9, 0
    %p97 = por %p95, %p96
    %p98 = scmp.ne.s32.totalorder %s87, %s90
    %p99 = scmp.eq.s32.totalorder %s14, 3
    %p100 = por %p98, %p99
    %p101 = scmp.ne.s32.totalorder %s90, %s91
    %p102 = scmp.eq.s32.totalorder %s14, 0
    %p103 = por %p101, %p102
    %p104 = scmp.ne.s32.totalorder %s90, %s91
    %p105 = scmp.eq.s32.totalorder %s15, 3
    %p106 = por %p104, %p105
    %p108 = scmp.ne.s32.totalorder %s91, %s107
    %p109 = scmp.eq.s32.totalorder %s15, 0
    %p110 = por %p108, %p109
    %p111 = scmp.le.s32.totalorder 1, %s9
    %p112 = scmp.lt.s32.totalorder %s9, 5
    %p113 = pnand %p111, %p112
    %p114 = pneg %p113
    // Predicated region
    $region9: #{convnet_forward.9} parent=5 // pred_check
      _
    $region10: #{convnet_forward.9} parent=5 // pred_check_branch
      %116 = sbr.rel (%p113) target = $region12
    $region11: #{convnet_forward.9} parent=5 // pred_region
      %s117 = ssub.s32 %s9, 1
      // Predicated region
      $region13: #{convnet_forward.9} parent=11 // pred_check
        %p118 = pneg %p56
      $region14: #{convnet_forward.9} parent=11 // pred_check_branch
        %120 = sbr.rel (%p118) target = $region16
      $region15: #{convnet_forward.9} parent=11 // pred_region
        _
      $region16: #{convnet_forward.9} parent=11 // pred_fallthru
        _
      // Predicated region
      $region17: #{convnet_forward.9} parent=11 // pred_check
        %p121 = pneg %p77
      $region18: #{convnet_forward.9} parent=11 // pred_check_branch
        %123 = sbr.rel (%p121) target = $region20
      $region19: #{convnet_forward.9} parent=11 // pred_region
        _
      $region20: #{convnet_forward.9} parent=11 // pred_fallthru
        _
    $region12: #{convnet_forward.9} parent=5 // pred_fallthru
      _
    %p124 = scmp.lt.s32.totalorder %s9, 4
    // Predicated region
    $region21: #{convnet_forward.9} parent=5 // pred_check
      %p125 = pneg %p124
    $region22: #{convnet_forward.9} parent=5 // pred_check_branch
      %127 = sbr.rel (%p125) target = $region24
    $region23: #{convnet_forward.9} parent=5 // pred_region
      // Predicated region
      $region25: #{convnet_forward.9} parent=23 // pred_check
        %p128 = pneg %p29
      $region26: #{convnet_forward.9} parent=23 // pred_check_branch
        %130 = sbr.rel (%p128) target = $region28
      $region27: #{convnet_forward.9} parent=23 // pred_region
        %s131 = smul.u32 4, %s9
        %p132 = scmp.lt.s32.totalorder %s131, 15
        %s133 = scalar_select %p132, %s131, 15
        %s134 = smul.addr %s133, 2
        %s135 = smul.addr %s134, 2
        %s136 = scalar_lea.vmem %s0, %s135
        %s137 = smul.u32 4, %s9
      $region28: #{convnet_forward.9} parent=23 // pred_fallthru
        _
    $region24: #{convnet_forward.9} parent=5 // pred_fallthru
      _
    %p138 = scmp.le.s32.totalorder 1, %s9
    %p139 = scmp.lt.s32.totalorder %s9, 5
    %p140 = pnand %p138, %p139
    %p141 = pneg %p140
    // Predicated region
    $region29: #{convnet_forward.9} parent=5 // pred_check
      _
    $region30: #{convnet_forward.9} parent=5 // pred_check_branch
      %143 = sbr.rel (%p140) target = $region32
    $region31: #{convnet_forward.9} parent=5 // pred_region
      %s144 = ssub.s32 %s9, 1
      %s145 = smul.u32 4, %s14
      %p146 = scmp.lt.s32.totalorder %s145, 15
      %s147 = scalar_select %p146, %s145, 15
      %s148 = smul.addr %s147, 2
      %s149 = smul.addr %s148, 2
      %s150 = scalar_lea.vmem %s0, %s149
      %p151 = pneg %p35
      %p152 = pneg %p32
      %p153 = pneg %p56
      %p154 = pneg %p53
      %p155 = pneg %p77
      %p156 = pneg %p74
      %p157 = pneg %p103
      %p158 = pneg %p100
      %s159 = smul.u32 2, %s14
      %p160 = scmp.lt.s32.totalorder %s159, 7
      %s161 = scalar_select %p160, %s159, 7
      %s162 = smul.addr %s161, 2
      %s163 = scalar_lea.vmem %s3, %s162
      %s164 = smul.u32 4, %s14
      %p165 = scmp.lt.s32.totalorder %s164, 15
      %s166 = scalar_select %p165, %s164, 15
      %s167 = smul.addr %s166, 2
      %s168 = smul.addr %s167, 2
      %s169 = scalar_lea.vmem %s0, %s168
      %s170 = smul.u32 4, %s14
      %s171 = smul.u32 2, %s14
      %p172 = scmp.lt.s32.totalorder %s171, 7
      %s173 = scalar_select %p172, %s171, 7
      %s174 = smul.addr %s173, 2
      %s175 = scalar_lea.vmem %s3, %s174
      %s176 = smul.u32 2, %s14
      %v177 = vld [vmem:[%s169] sm:$0xf]
      %v178 = vld [vmem:[%s169 + $0x4] sm:$0xf]
      %v179 = vld [vmem:[%s169 + $0x8] sm:$0xf]
      %v180 = vld [vmem:[%s169 + $0xc] sm:$0xf]
      %v181 = vunpack.c.l.bf16 %v177
      %v182 = vunpack.c.l.bf16 %v178
      %v183 = vunpack.c.l.bf16 %v179
      %v184 = vunpack.c.l.bf16 %v180
      %v185 = vld [vmem:[%s1] sm:$0x1]
      %v186 = vld [vmem:[%s2] sm:$0x1]
      %v188 = vlaneseq
      %v189 = vshrl.u32 %v188, 7
      %v190 = vsub.s32 0, %v189
      %v191 = vrot.slane %v185, %v190
      %v193 = vmul.f32 %v181, %v191
      %v194 = vmul.f32 %v182, %v191
      %v195 = vmul.f32 %v183, %v191
      %v196 = vmul.f32 %v184, %v191
      %v198 = vlaneseq
      %v199 = vshrl.u32 %v198, 7
      %v200 = vsub.s32 0, %v199
      %v201 = vrot.slane %v186, %v200
      %v203 = vadd.f32 %v193, %v201
      %v204 = vadd.f32 %v194, %v201
      %v205 = vadd.f32 %v195, %v201
      %v206 = vadd.f32 %v196, %v201
      %v207 = vmax.f32 %v203, 0.0
      %v208 = vmax.f32 %v204, 0.0
      %v209 = vmax.f32 %v205, 0.0
      %v210 = vmax.f32 %v206, 0.0
      %v215 = vrot.slane %v181, 4
      %v216 = vrot.slane %v182, 4
      %v217 = vrot.slane %v183, 4
      %v218 = vrot.slane %v184, 4
      %v223 = vmul.f32 %v215, %v191
      %v224 = vmul.f32 %v216, %v191
      %v225 = vmul.f32 %v217, %v191
      %v226 = vmul.f32 %v218, %v191
      %v227 = vadd.f32 %v223, %v201
      %v228 = vadd.f32 %v224, %v201
      %v229 = vadd.f32 %v225, %v201
      %v230 = vadd.f32 %v226, %v201
      %v231 = vmax.f32 %v227, 0.0
      %v232 = vmax.f32 %v228, 0.0
      %v233 = vmax.f32 %v229, 0.0
      %v234 = vmax.f32 %v230, 0.0
      %v235 = vmax.f32 %v207, %v231
      %v236 = vmax.f32 %v208, %v232
      %v237 = vmax.f32 %v209, %v233
      %v238 = vmax.f32 %v210, %v234
      %v239 = vmax.f32 %v235, %v236
      %v240 = vmax.f32 %v237, %v238
      %v241 = vpack.c.bf16 %v239, %v239
      %v242 = vpack.c.bf16 %v240, %v240
      %243 = vst [vmem:[%s175] sm:$0x3] %v241
      %244 = vst [vmem:[%s175 + $0x2] sm:$0x3] %v242
      %s245 = smul.u32 2, %s14
      %p246 = scmp.lt.s32.totalorder %s245, 7
      %s247 = scalar_select %p246, %s245, 7
      %s248 = smul.addr %s247, 2
      %s249 = scalar_lea.vmem %s3, %s248
      // Predicated region
      $region33: #{convnet_forward.9} parent=31 // pred_check
        %p250 = pneg %p100
      $region34: #{convnet_forward.9} parent=31 // pred_check_branch
        %252 = sbr.rel (%p250) target = $region36
      $region35: #{convnet_forward.9} parent=31 // pred_region
        %s253 = smul.u32 2, %s14
      $region36: #{convnet_forward.9} parent=31 // pred_fallthru
        _
    $region32: #{convnet_forward.9} parent=5 // pred_fallthru
      _
    %p254 = scmp.le.s32.totalorder 2, %s9
    // Predicated region
    $region37: #{convnet_forward.9} parent=5 // pred_check
      %p255 = pneg %p254
    $region38: #{convnet_forward.9} parent=5 // pred_check_branch
      %257 = sbr.rel (%p255) target = $region40
    $region39: #{convnet_forward.9} parent=5 // pred_region
      %s258 = ssub.s32 %s9, 2
      // Predicated region
      $region41: #{convnet_forward.9} parent=39 // pred_check
        %p259 = pneg %p106
      $region42: #{convnet_forward.9} parent=39 // pred_check_branch
        %261 = sbr.rel (%p259) target = $region44
      $region43: #{convnet_forward.9} parent=39 // pred_region
        %s262 = smul.u32 2, %s15
        %p263 = scmp.lt.s32.totalorder %s262, 7
        %s264 = scalar_select %p263, %s262, 7
        %s265 = smul.addr %s264, 2
        %s266 = scalar_lea.vmem %s3, %s265
      $region44: #{convnet_forward.9} parent=39 // pred_fallthru
        _
    $region40: #{convnet_forward.9} parent=5 // pred_fallthru
      _
  $region6: #{convnet_forward.9} parent=0 // loop_footer
    %s13 = sadd.s32 1, %s9
  $region7: #{convnet_forward.9} parent=0 // loop_footer_branch
    %8 = sbr.rel target = $region3
  $region8: #{convnet_forward.9} parent=0 // loop_exit
    _

// kernel: convnet_forward.6
$region0: #{convnet_forward.6}
  #allocation0 [shape = 'u32[]', space=smem, size = 0x4, offset = 0x4, fixed_abs, tag = 'smem constant byte address 0x4 - core index']
  #allocation1 [shape = 'u32[144,128]{1,0:T(1,128)}', space=vmem, size = 0x12000, scoped, tag = 'internal scratch']
  %s0 = inlined_call_operand.vmem [shape: bf16[2,11,11,16], index: 0, kind: input, shape index: {}]
  %s1 = inlined_call_operand.vmem [shape: bf16[16,16,128], index: 1, kind: input, shape index: {}]
  %s2 = inlined_call_operand.vmem [shape: bf16[2,64,128], index: 2, kind: output, shape index: {0}]
  %s3 = inlined_call_operand.vmem [shape: f32[2,8,128], index: 3, kind: output, shape index: {1}]
  %4 = xla_tuple %s2, %s3
  %s5 = sld [smem:[#allocation0]]
  $region49: #{convnet_forward.6} parent=0
    _
  %s7 = ssub.s32 1, %s5
  %s8 = scalar_select 0, %s7, %s5
  loop: start=0, step=1, limit=4
  $region2: #{convnet_forward.6} parent=0 // loop_pre_header
    _
  $region3: #{convnet_forward.6} parent=0 // loop_header
    %s10 = sphi 0, %s14
    %p11 = scmp.ge.s32.totalorder %s10, 4
    %s20 = sphi 0, %s22
    %s23 = sphi 0, %s20
    %s24 = sphi 0, %s23
    %s40 = sphi 0, %s24
    %s44 = sphi 0, %s44
    %s46 = sphi 0, %s44
    %s47 = sphi 0, %s46
    %s61 = sphi 0, %s47
    %s67 = sphi 0, %s69
    %s70 = sphi 0, %s67
    %s71 = sphi 0, %s70
    %s87 = sphi 0, %s71
    %s93 = sphi 0, %s95
    %s96 = sphi 0, %s93
    %s97 = sphi 0, %s96
    %s113 = sphi 0, %s97
  $region4: #{convnet_forward.6} parent=0 // loop_header_branch
    %13 = sbr.rel (%p11) target = $region8
  $region5: #{convnet_forward.6} parent=0 // loop_body
    %s15 = ssub.s32 %s10, 1
    %s16 = ssub.s32 %s10, 2
    %s17 = sadd.s32 %s10, 1
    %s18 = ssub.s32 %s10, %s17
    %p19 = scmp.eq.s32.totalorder %s18, 0
    %s21 = sadd.s32 %s20, 1
    %s22 = scalar_select %p19, %s20, %s21
    %p25 = pneg %p19
    %p26 = scmp.eq.s32.totalorder %s10, 1
    %p27 = por %p25, %p26
    %p28 = scmp.ne.s32.totalorder %s20, %s23
    %p29 = scmp.eq.s32.totalorder %s10, 0
    %p30 = por %p28, %p29
    %p31 = scmp.ne.s32.totalorder %s20, %s23
    %p32 = scmp.eq.s32.totalorder %s15, 1
    %p33 = por %p31, %p32
    %p34 = scmp.ne.s32.totalorder %s23, %s24
    %p35 = scmp.eq.s32.totalorder %s15, 0
    %p36 = por %p34, %p35
    %p37 = scmp.ne.s32.totalorder %s23, %s24
    %p38 = scmp.eq.s32.totalorder %s16, 1
    %p39 = por %p37, %p38
    %p41 = scmp.ne.s32.totalorder %s24, %s40
    %p42 = scmp.eq.s32.totalorder %s16, 0
    %p43 = por %p41, %p42
    %s45 = sadd.s32 %s44, 1
    %p48 = scmp.eq.s32.totalorder %s10, 1
    %p49 = scmp.ne.s32.totalorder %s44, %s46
    %p50 = scmp.eq.s32.totalorder %s10, 0
    %p51 = por %p49, %p50
    %p52 = scmp.ne.s32.totalorder %s44, %s46
    %p53 = scmp.eq.s32.totalorder %s15, 1
    %p54 = por %p52, %p53
    %p55 = scmp.ne.s32.totalorder %s46, %s47
    %p56 = scmp.eq.s32.totalorder %s15, 0
    %p57 = por %p55, %p56
    %p58 = scmp.ne.s32.totalorder %s46, %s47
    %p59 = scmp.eq.s32.totalorder %s16, 1
    %p60 = por %p58, %p59
    %p62 = scmp.ne.s32.totalorder %s47, %s61
    %p63 = scmp.eq.s32.totalorder %s16, 0
    %p64 = por %p62, %p63
    %s65 = ssub.s32 %s10, %s17
    %p66 = scmp.eq.s32.totalorder %s65, 0
    %s68 = sadd.s32 %s67, 1
    %s69 = scalar_select %p66, %s67, %s68
    %p72 = pneg %p66
    %p73 = scmp.eq.s32.totalorder %s10, 1
    %p74 = por %p72, %p73
    %p75 = scmp.ne.s32.totalorder %s67, %s70
    %p76 = scmp.eq.s32.totalorder %s10, 0
    %p77 = por %p75, %p76
    %p78 = scmp.ne.s32.totalorder %s67, %s70
    %p79 = scmp.eq.s32.totalorder %s15, 1
    %p80 = por %p78, %p79
    %p81 = scmp.ne.s32.totalorder %s70, %s71
    %p82 = scmp.eq.s32.totalorder %s15, 0
    %p83 = por %p81, %p82
    %p84 = scmp.ne.s32.totalorder %s70, %s71
    %p85 = scmp.eq.s32.totalorder %s16, 1
    %p86 = por %p84, %p85
    %p88 = scmp.ne.s32.totalorder %s71, %s87
    %p89 = scmp.eq.s32.totalorder %s16, 0
    %p90 = por %p88, %p89
    %s91 = ssub.s32 %s10, %s17
    %p92 = scmp.eq.s32.totalorder %s91, 0
    %s94 = sadd.s32 %s93, 1
    %s95 = scalar_select %p92, %s93, %s94
    %p98 = pneg %p92
    %p99 = scmp.eq.s32.totalorder %s10, 1
    %p100 = por %p98, %p99
    %p101 = scmp.ne.s32.totalorder %s93, %s96
    %p102 = scmp.eq.s32.totalorder %s10, 0
    %p103 = por %p101, %p102
    %p104 = scmp.ne.s32.totalorder %s93, %s96
    %p105 = scmp.eq.s32.totalorder %s15, 1
    %p106 = por %p104, %p105
    %p107 = scmp.ne.s32.totalorder %s96, %s97
    %p108 = scmp.eq.s32.totalorder %s15, 0
    %p109 = por %p107, %p108
    %p110 = scmp.ne.s32.totalorder %s96, %s97
    %p111 = scmp.eq.s32.totalorder %s16, 1
    %p112 = por %p110, %p111
    %p114 = scmp.ne.s32.totalorder %s97, %s113
    %p115 = scmp.eq.s32.totalorder %s16, 0
    %p116 = por %p114, %p115
    %p117 = scmp.le.s32.totalorder 1, %s10
    %p118 = scmp.lt.s32.totalorder %s10, 3
    %p119 = pnand %p117, %p118
    %p120 = pneg %p119
    // Predicated region
    $region9: #{convnet_forward.6} parent=5 // pred_check
      _
    $region10: #{convnet_forward.6} parent=5 // pred_check_branch
      %122 = sbr.rel (%p119) target = $region12
    $region11: #{convnet_forward.6} parent=5 // pred_region
      %s123 = ssub.s32 %s10, 1
      // Predicated region
      $region13: #{convnet_forward.6} parent=11 // pred_check
        %p124 = pneg %p57
      $region14: #{convnet_forward.6} parent=11 // pred_check_branch
        %126 = sbr.rel (%p124) target = $region16
      $region15: #{convnet_forward.6} parent=11 // pred_region
        _
      $region16: #{convnet_forward.6} parent=11 // pred_fallthru
        _
    $region12: #{convnet_forward.6} parent=5 // pred_fallthru
      _
    %p127 = scmp.lt.s32.totalorder %s10, 2
    // Predicated region
    $region17: #{convnet_forward.6} parent=5 // pred_check
      %p128 = pneg %p127
    $region18: #{convnet_forward.6} parent=5 // pred_check_branch
      %130 = sbr.rel (%p128) target = $region20
    $region19: #{convnet_forward.6} parent=5 // pred_region
      // Predicated region
      $region21: #{convnet_forward.6} parent=19 // pred_check
        %p131 = pneg %p30
      $region22: #{convnet_forward.6} parent=19 // pred_check_branch
        %133 = sbr.rel (%p131) target = $region24
      $region23: #{convnet_forward.6} parent=19 // pred_region
        %p134 = scmp.lt.s32.totalorder %s10, 1
        %s135 = scalar_select %p134, %s10, 1
        %s136 = smul.addr %s135, 22
        %s137 = smul.addr %s136, 4
        %s138 = scalar_lea.vmem %s0, %s137
      $region24: #{convnet_forward.6} parent=19 // pred_fallthru
        _
    $region20: #{convnet_forward.6} parent=5 // pred_fallthru
      _
    %p139 = scmp.le.s32.totalorder 1, %s10
    %p140 = scmp.lt.s32.totalorder %s10, 3
    %p141 = pnand %p139, %p140
    %p142 = pneg %p141
    // Predicated region
    $region25: #{convnet_forward.6} parent=5 // pred_check
      _
    $region26: #{convnet_forward.6} parent=5 // pred_check_branch
      %144 = sbr.rel (%p141) target = $region28
    $region27: #{convnet_forward.6} parent=5 // pred_region
      %s145 = ssub.s32 %s10, 1
      %p146 = scmp.lt.s32.totalorder %s15, 1
      %s147 = scalar_select %p146, %s15, 1
      %s148 = smul.addr %s147, 22
      %s149 = smul.addr %s148, 4
      %s150 = scalar_lea.vmem %s0, %s149
      %p151 = pneg %p36
      %p152 = pneg %p33
      %p153 = pneg %p57
      %p154 = pneg %p54
      %p155 = pneg %p83
      %p156 = pneg %p80
      %p157 = scmp.lt.s32.totalorder %s15, 1
      %s158 = scalar_select %p157, %s15, 1
      %s159 = smul.addr %s158, 8
      %s160 = smul.addr %s159, 4
      %s161 = scalar_lea.vmem %s2, %s160
      %p162 = pneg %p109
      %p163 = pneg %p106
      %p164 = scmp.lt.s32.totalorder %s15, 1
      %s165 = scalar_select %p164, %s15, 1
      %s166 = smul.addr %s165, 8
      %s167 = scalar_lea.vmem %s3, %s166
      %p168 = scmp.lt.s32.totalorder %s15, 1
      %s169 = scalar_select %p168, %s15, 1
      %s170 = smul.addr %s169, 22
      %s171 = smul.addr %s170, 4
      %s172 = scalar_lea.vmem %s0, %s171
      %p173 = scmp.lt.s32.totalorder %s15, 1
      %s174 = scalar_select %p173, %s15, 1
      %s175 = smul.addr %s174, 8
      %s176 = smul.addr %s175, 4
      %s177 = scalar_lea.vmem %s2, %s176
      %p178 = scmp.lt.s32.totalorder %s15, 1
      %s179 = scalar_select %p178, %s15, 1
      %s180 = smul.addr %s179, 8
      %s181 = scalar_lea.vmem %s3, %s180
      %v183 = vld [vmem:[%s172] sm:$0xf]
      %v184 = vld [vmem:[%s172 + $0x4] sm:$0x3]
      %v185 = vld [vmem:[%s172 + $0x8] sm:$0xf]
      %v186 = vld [vmem:[%s172 + $0xc] sm:$0x3]
      %v187 = vld [vmem:[%s172 + $0x10] sm:$0xf]
      %v188 = vld [vmem:[%s172 + $0x14] sm:$0x3]
      %v189 = vld [vmem:[%s172 + $0x18] sm:$0xf]
      %v190 = vld [vmem:[%s172 + $0x1c] sm:$0x3]
      %v191 = vld [vmem:[%s172 + $0x20] sm:$0xf]
      %v192 = vld [vmem:[%s172 + $0x24] sm:$0x3]
      %v193 = vld [vmem:[%s172 + $0x28] sm:$0xf]
      %v194 = vld [vmem:[%s172 + $0x2c] sm:$0x3]
      %v195 = vld [vmem:[%s172 + $0x30] sm:$0xf]
      %v196 = vld [vmem:[%s172 + $0x34] sm:$0x3]
      %v197 = vld [vmem:[%s172 + $0x38] sm:$0xf]
      %v198 = vld [vmem:[%s172 + $0x3c] sm:$0x3]
      %v199 = vld [vmem:[%s172 + $0x40] sm:$0xf]
      %v200 = vld [vmem:[%s172 + $0x44] sm:$0x3]
      %v201 = vld [vmem:[%s172 + $0x48] sm:$0xf]
      %v202 = vld [vmem:[%s172 + $0x4c] sm:$0x3]
      %v203 = vld [vmem:[%s172 + $0x50] sm:$0xf]
      %v204 = vld [vmem:[%s172 + $0x54] sm:$0x3]
      %v205 = vld [vmem:[%s1] sm:$0xf]
      %v206 = vld [vmem:[%s1 + $0x4] sm:$0xf]
      %vm207 = vsmask.f32 3328
      %vm208 = vsmask.f32 7440
      %vm209 = vmor %vm207, %vm208
      %v211 = vshrl.u32 %v183, 16
      %v213 = vrot.slane %v211, 4
      %v214 = vshll.u32 %v183, 16
      %v216 = vrot.slane %v214, 5
      %v217 = vor.u32 %v213, %v216
      %v218 = vrot.slane %v217, 4
      %v220 = vshll.u32 %v184, 16
      %v222 = vrot.slane %v220, 5
      %v223 = vsel %vm209, %v218, %v222
      %v225 = vshrl.u32 %v185, 16
      %v227 = vrot.slane %v225, 4
      %v228 = vshll.u32 %v185, 16
      %v230 = vrot.slane %v228, 5
      %v231 = vor.u32 %v227, %v230
      %v232 = vrot.slane %v231, 4
      %v234 = vshll.u32 %v186, 16
      %v236 = vrot.slane %v234, 5
      %v237 = vsel %vm209, %v232, %v236
      %v239 = vshrl.u32 %v187, 16
      %v241 = vrot.slane %v239, 4
      %v242 = vshll.u32 %v187, 16
      %v244 = vrot.slane %v242, 5
      %v245 = vor.u32 %v241, %v244
      %v246 = vrot.slane %v245, 4
      %v248 = vshll.u32 %v188, 16
      %v250 = vrot.slane %v248, 5
      %v251 = vsel %vm209, %v246, %v250
      %v253 = vshrl.u32 %v189, 16
      %v255 = vrot.slane %v253, 4
      %v256 = vshll.u32 %v189, 16
      %v258 = vrot.slane %v256, 5
      %v259 = vor.u32 %v255, %v258
      %v260 = vrot.slane %v259, 4
      %v262 = vshll.u32 %v190, 16
      %v264 = vrot.slane %v262, 5
      %v265 = vsel %vm209, %v260, %v264
      %v267 = vshrl.u32 %v191, 16
      %v269 = vrot.slane %v267, 4
      %v270 = vshll.u32 %v191, 16
      %v272 = vrot.slane %v270, 5
      %v273 = vor.u32 %v269, %v272
      %v274 = vrot.slane %v273, 4
      %v276 = vshll.u32 %v192, 16
      %v278 = vrot.slane %v276, 5
      %v279 = vsel %vm209, %v274, %v278
      %v281 = vshrl.u32 %v193, 16
      %v283 = vrot.slane %v281, 4
      %v284 = vshll.u32 %v193, 16
      %v286 = vrot.slane %v284, 5
      %v287 = vor.u32 %v283, %v286
      %v288 = vrot.slane %v287, 4
      %v290 = vshll.u32 %v194, 16
      %v292 = vrot.slane %v290, 5
      %v293 = vsel %vm209, %v288, %v292
      %v295 = vshrl.u32 %v195, 16
      %v297 = vrot.slane %v295, 4
      %v298 = vshll.u32 %v195, 16
      %v300 = vrot.slane %v298, 5
      %v301 = vor.u32 %v297, %v300
      %v302 = vrot.slane %v301, 4
      %v304 = vshll.u32 %v196, 16
      %v306 = vrot.slane %v304, 5
      %v307 = vsel %vm209, %v302, %v306
      %v309 = vshrl.u32 %v197, 16
      %v311 = vrot.slane %v309, 4
      %v312 = vshll.u32 %v197, 16
      %v314 = vrot.slane %v312, 5
      %v315 = vor.u32 %v311, %v314
      %v316 = vrot.slane %v315, 4
      %v318 = vshll.u32 %v198, 16
      %v320 = vrot.slane %v318, 5
      %v321 = vsel %vm209, %v316, %v320
      %s322 = scalar_lea.vmem %s1, 8
      %v323 = vld [vmem:[%s322] sm:$0xf]
      %v324 = vld [vmem:[%s322 + $0x4] sm:$0xf]
      %v325 = vunpack.c.l.b16 %v223
      %v326 = vunpack.c.l.b16 %v237
      %v327 = vunpack.c.l.b16 %v251
      %v328 = vunpack.c.l.b16 %v265
      %v329 = vunpack.c.l.b16 %v279
      %v330 = vunpack.c.l.b16 %v293
      %v331 = vunpack.c.l.b16 %v307
      %v332 = vunpack.c.l.b16 %v321
      %v333 = vpack.c.b16 %v326, %v325
      %v334 = vpack.c.b16 %v328, %v327
      %v335 = vpack.c.b16 %v330, %v329
      %v336 = vpack.c.b16 %v332, %v331
      %v339 = vunpack.c.l.b16 %v323
      %v340 = vunpack.c.l.b16 %v324
      %v341 = vpack.c.b16 %v340, %v339
      %vm343 = vcmask 130048
      %v345 = vsel %vm343, %v333, 0
      %v348 = vsel %vm343, %v334, 0
      %v351 = vsel %vm343, %v335, 0
      %v354 = vsel %vm343, %v336, 0
      %356 = vmatprep.subr.bf16.mxu0 0
      %357 = vmatpush1.bf16.msra.mxu0 %v341
      %358 = vmatprep.subr.bf16.mxu0 0
      %359 = vmatpush1.bf16.msra.mxu0 0
      %360 = vmatprep.subr.bf16.mxu0 0
      %361 = vmatpush1.bf16.msra.mxu0 0
      %362 = vmatprep.subr.bf16.mxu0 0
      %363 = vmatpush1.bf16.msra.mxu0 0
      %364 = vmatprep.subr.bf16.mxu0 0
      %365 = vmatpush1.bf16.msra.mxu0 0
      %366 = vmatprep.subr.bf16.mxu0 0
      %367 = vmatpush1.bf16.msra.mxu0 0
      %368 = vmatprep.subr.bf16.mxu0 0
      %369 = vmatpush1.bf16.msra.mxu0 0
      %370 = vmatprep.subr.bf16.mxu0 0
      %371 = vmatpush1.bf16.msra.mxu0 0
      %372 = vmatprep.subr.bf16.mxu0 0
      %373 = vmatpush1.bf16.msra.mxu0 0
      %374 = vmatprep.subr.bf16.mxu0 0
      %375 = vmatpush1.bf16.msra.mxu0 0
      %376 = vmatprep.subr.bf16.mxu0 0
      %377 = vmatpush1.bf16.msra.mxu0 0
      %378 = vmatprep.subr.bf16.mxu0 0
      %379 = vmatpush1.bf16.msra.mxu0 0
      %380 = vmatprep.subr.bf16.mxu0 0
      %381 = vmatpush1.bf16.msra.mxu0 0
      %382 = vmatprep.subr.bf16.mxu0 0
      %383 = vmatpush1.bf16.msra.mxu0 0
      %384 = vmatprep.subr.bf16.mxu0 0
      %385 = vmatpush1.bf16.msra.mxu0 0
      %386 = vmatprep.subr.bf16.mxu0 0
      %387 = vmatpush1.bf16.msra.mxu0 0
      %388 = vmatprep.mubr.bf16.mxu0 0
      %389 = vmatmul.mubr.bf16.gmra.mrb[0].mxu0 %v345
      %v390 = vpop.f32.mrb[0].mxu0
      %v391 = vadd.f32 0.0, %v390
      %v392 = vpop.f32.mrb[0].mxu0
      %v393 = vpop.f32.mrb[0].mxu0
      %v394 = vadd.f32 0.0, %v393
      %v395 = vpop.f32.mrb[0].mxu0
      %396 = vmatprep.mubr.bf16.mxu0 0
      %397 = vmatmul.mubr.bf16.gmra.mrb[0].mxu0 %v348
      %v398 = vpop.f32.mrb[0].mxu0
      %v399 = vadd.f32 0.0, %v398
      %v400 = vpop.f32.mrb[0].mxu0
      %v401 = vpop.f32.mrb[0].mxu0
      %v402 = vadd.f32 0.0, %v401
      %v403 = vpop.f32.mrb[0].mxu0
      %404 = vmatprep.mubr.bf16.mxu0 0
      %405 = vmatmul.mubr.bf16.gmra.mrb[0].mxu0 %v351
      %v406 = vpop.f32.mrb[0].mxu0
      %v407 = vadd.f32 0.0, %v406
      %v408 = vpop.f32.mrb[0].mxu0
      %v409 = vpop.f32.mrb[0].mxu0
      %v410 = vadd.f32 0.0, %v409
      %v411 = vpop.f32.mrb[0].mxu0
      %412 = vmatprep.mubr.bf16.mxu0 0
      %413 = vmatmul.mubr.bf16.gmra.mrb[0].mxu0 %v354
      %v414 = vpop.f32.mrb[0].mxu0
      %v415 = vadd.f32 0.0, %v414
      %v416 = vpop.f32.mrb[0].mxu0
      %v417 = vpop.f32.mrb[0].mxu0
      %v418 = vadd.f32 0.0, %v417
      %v419 = vpop.f32.mrb[0].mxu0
      %420 = vdwg.mxu0
      %v429 = vunpack.c.l.b16 %v183
      %v430 = vunpack.c.l.b16 %v185
      %v431 = vunpack.c.l.b16 %v187
      %v432 = vunpack.c.l.b16 %v189
      %v433 = vunpack.c.l.b16 %v191
      %v434 = vunpack.c.l.b16 %v193
      %v435 = vunpack.c.l.b16 %v195
      %v436 = vunpack.c.l.b16 %v197
      %v437 = vpack.c.b16 %v430, %v429
      %v438 = vpack.c.b16 %v432, %v431
      %v439 = vpack.c.b16 %v434, %v433
      %v440 = vpack.c.b16 %v436, %v435
      %v443 = vunpack.c.l.b16 %v205
      %v444 = vunpack.c.l.b16 %v206
      %v445 = vpack.c.b16 %v444, %v443
      %v448 = vsel %vm343, %v437, 0
      %v451 = vsel %vm343, %v438, 0
      %v454 = vsel %vm343, %v439, 0
      %v457 = vsel %vm343, %v440, 0
      %459 = vmatprep.subr.bf16.mxu0 0
      %460 = vmatpush1.bf16.msra.mxu0 %v445
      %461 = vmatprep.subr.bf16.mxu0 0
      %462 = vmatpush1.bf16.msra.mxu0 0
      %463 = vmatprep.subr.bf16.mxu0 0
      %464 = vmatpush1.bf16.msra.mxu0 0
      %465 = vmatprep.subr.bf16.mxu0 0
      %466 = vmatpush1.bf16.msra.mxu0 0
      %467 = vmatprep.subr.bf16.mxu0 0
      %468 = vmatpush1.bf16.msra.mxu0 0
      %469 = vmatprep.subr.bf16.mxu0 0
      %470 = vmatpush1.bf16.msra.mxu0 0
      %471 = vmatprep.subr.bf16.mxu0 0
      %472 = vmatpush1.bf16.msra.mxu0 0
      %473 = vmatprep.subr.bf16.mxu0 0
      %474 = vmatpush1.bf16.msra.mxu0 0
      %475 = vmatprep.subr.bf16.mxu0 0
      %476 = vmatpush1.bf16.msra.mxu0 0
      %477 = vmatprep.subr.bf16.mxu0 0
      %478 = vmatpush1.bf16.msra.mxu0 0
      %479 = vmatprep.subr.bf16.mxu0 0
      %480 = vmatpush1.bf16.msra.mxu0 0
      %481 = vmatprep.subr.bf16.mxu0 0
      %482 = vmatpush1.bf16.msra.mxu0 0
      %483 = vmatprep.subr.bf16.mxu0 0
      %484 = vmatpush1.bf16.msra.mxu0 0
      %485 = vmatprep.subr.bf16.mxu0 0
      %486 = vmatpush1.bf16.msra.mxu0 0
      %487 = vmatprep.subr.bf16.mxu0 0
      %488 = vmatpush1.bf16.msra.mxu0 0
      %489 = vmatprep.subr.bf16.mxu0 0
      %490 = vmatpush1.bf16.msra.mxu0 0
      %491 = vmatprep.mubr.bf16.mxu0 0
      %492 = vmatmul.mubr.bf16.gmra.mrb[0].mxu0 %v448
      %v493 = vpop.f32.mrb[0].mxu0
      %v494 = vadd.f32 %v391, %v493
      %v495 = vpop.f32.mrb[0].mxu0
      %v496 = vpop.f32.mrb[0].mxu0
      %v497 = vadd.f32 %v394, %v496
      %v498 = vpop.f32.mrb[0].mxu0
      %499 = vmatprep.mubr.bf16.mxu0 0
      %500 = vmatmul.mubr.bf16.gmra.mrb[0].mxu0 %v451
      %v501 = vpop.f32.mrb[0].mxu0
      %v502 = vadd.f32 %v399, %v501
      %v503 = vpop.f32.mrb[0].mxu0
      %v504 = vpop.f32.mrb[0].mxu0
      %v505 = vadd.f32 %v402, %v504
      %v506 = vpop.f32.mrb[0].mxu0
      %507 = vmatprep.mubr.bf16.mxu0 0
      %508 = vmatmul.mubr.bf16.gmra.mrb[0].mxu0 %v454
      %v509 = vpop.f32.mrb[0].mxu0
      %v510 = vadd.f32 %v407, %v509
      %v511 = vpop.f32.mrb[0].mxu0
      %v512 = vpop.f32.mrb[0].mxu0
      %v513 = vadd.f32 %v410, %v512
      %v514 = vpop.f32.mrb[0].mxu0
      %515 = vmatprep.mubr.bf16.mxu0 0
      %516 = vmatmul.mubr.bf16.gmra.mrb[0].mxu0 %v457
      %v517 = vpop.f32.mrb[0].mxu0
      %v518 = vadd.f32 %v415, %v517
      %v519 = vpop.f32.mrb[0].mxu0
      %v520 = vpop.f32.mrb[0].mxu0
      %v521 = vadd.f32 %v418, %v520
      %v522 = vpop.f32.mrb[0].mxu0
      %523 = vdwg.mxu0
      %vm532 = vcmask 1042432
      %vm533 = vcmask 1046532
      %vm534 = vmor %vm532, %vm533
      %v535 = vrot.slane %v183, 5
      %v536 = vrot.slane %v535, 4
      %v537 = vrot.slane %v184, 5
      %v538 = vsel %vm534, %v536, %v537
      %v539 = vrot.slane %v185, 5
      %v540 = vrot.slane %v539, 4
      %v541 = vrot.slane %v186, 5
      %v542 = vsel %vm534, %v540, %v541
      %v543 = vrot.slane %v187, 5
      %v544 = vrot.slane %v543, 4
      %v545 = vrot.slane %v188, 5
      %v546 = vsel %vm534, %v544, %v545
      %v547 = vrot.slane %v189, 5
      %v548 = vrot.slane %v547, 4
      %v549 = vrot.slane %v190, 5
      %v550 = vsel %vm534, %v548, %v549
      %v551 = vrot.slane %v191, 5
      %v552 = vrot.slane %v551, 4
      %v553 = vrot.slane %v192, 5
      %v554 = vsel %vm534, %v552, %v553
      %v555 = vrot.slane %v193, 5
      %v556 = vrot.slane %v555, 4
      %v557 = vrot.slane %v194, 5
      %v558 = vsel %vm534, %v556, %v557
      %v559 = vrot.slane %v195, 5
      %v560 = vrot.slane %v559, 4
      %v561 = vrot.slane %v196, 5
      %v562 = vsel %vm534, %v560, %v561
      %v563 = vrot.slane %v197, 5
      %v564 = vrot.slane %v563, 4
      %v565 = vrot.slane %v198, 5
      %v566 = vsel %vm534, %v564, %v565
      %s567 = scalar_lea.vmem %s1, 16
      %v568 = vld [vmem:[%s567] sm:$0xf]
      %v569 = vld [vmem:[%s567 + $0x4] sm:$0xf]
      %v570 = vunpack.c.l.b16 %v538
      %v571 = vunpack.c.l.b16 %v542
      %v572 = vunpack.c.l.b16 %v546
      %v573 = vunpack.c.l.b16 %v550
      %v574 = vunpack.c.l.b16 %v554
      %v575 = vunpack.c.l.b16 %v558
      %v576 = vunpack.c.l.b16 %v562
      %v577 = vunpack.c.l.b16 %v566
      %v578 = vpack.c.b16 %v571, %v570
      %v579 = vpack.c.b16 %v573, %v572
      %v580 = vpack.c.b16 %v575, %v574
      %v581 = vpack.c.b16 %v577, %v576
      %v584 = vunpack.c.l.b16 %v568
      %v585 = vunpack.c.l.b16 %v569
      %v586 = vpack.c.b16 %v585, %v584
      %v589 = vsel %vm343, %v578, 0
      %v592 = vsel %vm343, %v579, 0
      %v595 = vsel %vm343, %v580, 0
      %v598 = vsel %vm343, %v581, 0
      %600 = vmatprep.subr.bf16.mxu0 0
      %601 = vmatpush1.bf16.msra.mxu0 %v586
      %602 = vmatprep.subr.bf16.mxu0 0
      %603 = vmatpush1.bf16.msra.mxu0 0
      %604 = vmatprep.subr.bf16.mxu0 0
      %605 = vmatpush1.bf16.msra.mxu0 0
      %606 = vmatprep.subr.bf16.mxu0 0
      %607 = vmatpush1.bf16.msra.mxu0 0
      %608 = vmatprep.subr.bf16.mxu0 0
      %609 = vmatpush1.bf16.msra.mxu0 0
      %610 = vmatprep.subr.bf16.mxu0 0
      %611 = vmatpush1.bf16.msra.mxu0 0
      %612 = vmatprep.subr.bf16.mxu0 0
      %613 = vmatpush1.bf16.msra.mxu0 0
      %614 = vmatprep.subr.bf16.mxu0 0
      %615 = vmatpush1.bf16.msra.mxu0 0
      %616 = vmatprep.subr.bf16.mxu0 0
      %617 = vmatpush1.bf16.msra.mxu0 0
      %618 = vmatprep.subr.bf16.mxu0 0
      %619 = vmatpush1.bf16.msra.mxu0 0
      %620 = vmatprep.subr.bf16.mxu0 0
      %621 = vmatpush1.bf16.msra.mxu0 0
      %622 = vmatprep.subr.bf16.mxu0 0
      %623 = vmatpush1.bf16.msra.mxu0 0
      %624 = vmatprep.subr.bf16.mxu0 0
      %625 = vmatpush1.bf16.msra.mxu0 0
      %626 = vmatprep.subr.bf16.mxu0 0
      %627 = vmatpush1.bf16.msra.mxu0 0
      %628 = vmatprep.subr.bf16.mxu0 0
      %629 = vmatpush1.bf16.msra.mxu0 0
      %630 = vmatprep.subr.bf16.mxu0 0
      %631 = vmatpush1.bf16.msra.mxu0 0
      %632 = vmatprep.mubr.bf16.mxu0 0
      %633 = vmatmul.mubr.bf16.gmra.mrb[0].mxu0 %v589
      %v634 = vpop.f32.mrb[0].mxu0
      %v635 = vadd.f32 0.0, %v634
      %v636 = vpop.f32.mrb[0].mxu0
      %v637 = vpop.f32.mrb[0].mxu0
      %v638 = vadd.f32 0.0, %v637
      %v639 = vpop.f32.mrb[0].mxu0
      %640 = vmatprep.mubr.bf16.mxu0 0
      %641 = vmatmul.mubr.bf16.gmra.mrb[0].mxu0 %v592
      %v642 = vpop.f32.mrb[0].mxu0
      %v643 = vadd.f32 0.0, %v642
      %v644 = vpop.f32.mrb[0].mxu0
      %v645 = vpop.f32.mrb[0].mxu0
      %v646 = vadd.f32 0.0, %v645
      %v647 = vpop.f32.mrb[0].mxu0
      %648 = vmatprep.mubr.bf16.mxu0 0
      %649 = vmatmul.mubr.bf16.gmra.mrb[0].mxu0 %v595
      %v650 = vpop.f32.mrb[0].mxu0
      %v651 = vadd.f32 0.0, %v650
      %v652 = vpop.f32.mrb[0].mxu0
      %v653 = vpop.f32.mrb[0].mxu0
      %v654 = vadd.f32 0.0, %v653
      %v655 = vpop.f32.mrb[0].mxu0
      %656 = vmatprep.mubr.bf16.mxu0 0
      %657 = vmatmul.mubr.bf16.gmra.mrb[0].mxu0 %v598
      %v658 = vpop.f32.mrb[0].mxu0
      %v659 = vadd.f32 0.0, %v658
      %v660 = vpop.f32.mrb[0].mxu0
      %v661 = vpop.f32.mrb[0].mxu0
      %v662 = vadd.f32 0.0, %v661
      %v663 = vpop.f32.mrb[0].mxu0
      %664 = vdwg.mxu0
      %v665 = vadd.f32 %v494, %v635
      %v666 = vadd.f32 %v497, %v638
      %v667 = vadd.f32 %v502, %v643
      %v668 = vadd.f32 %v505, %v646
      %v669 = vadd.f32 %v510, %v651
      %v670 = vadd.f32 %v513, %v654
      %v671 = vadd.f32 %v518, %v659
      %v672 = vadd.f32 %v521, %v662
      %vm673 = vsmask.f32 2304
      %vm674 = vsmask.f32 6416
      %vm675 = vmor %vm673, %vm674
      %v676 = vrot.slane %v211, 5
      %v677 = vrot.slane %v214, 6
      %v678 = vor.u32 %v676, %v677
      %v679 = vrot.slane %v678, 4
      %v680 = vshrl.u32 %v184, 16
      %v682 = vrot.slane %v680, 5
      %v683 = vrot.slane %v220, 6
      %v684 = vor.u32 %v682, %v683
      %v685 = vsel %vm675, %v679, %v684
      %v686 = vrot.slane %v225, 5
      %v687 = vrot.slane %v228, 6
      %v688 = vor.u32 %v686, %v687
      %v689 = vrot.slane %v688, 4
      %v690 = vshrl.u32 %v186, 16
      %v692 = vrot.slane %v690, 5
      %v693 = vrot.slane %v234, 6
      %v694 = vor.u32 %v692, %v693
      %v695 = vsel %vm675, %v689, %v694
      %v696 = vrot.slane %v239, 5
      %v697 = vrot.slane %v242, 6
      %v698 = vor.u32 %v696, %v697
      %v699 = vrot.slane %v698, 4
      %v700 = vshrl.u32 %v188, 16
      %v702 = vrot.slane %v700, 5
      %v703 = vrot.slane %v248, 6
      %v704 = vor.u32 %v702, %v703
      %v705 = vsel %vm675, %v699, %v704
      %v706 = vrot.slane %v253, 5
      %v707 = vrot.slane %v256, 6
      %v708 = vor.u32 %v706, %v707
      %v709 = vrot.slane %v708, 4
      %v710 = vshrl.u32 %v190, 16
      %v712 = vrot.slane %v710, 5
      %v713 = vrot.slane %v262, 6
      %v714 = vor.u32 %v712, %v713
      %v715 = vsel %vm675, %v709, %v714
      %v716 = vrot.slane %v267, 5
      %v717 = vrot.slane %v270, 6
      %v718 = vor.u32 %v716, %v717
      %v719 = vrot.slane %v718, 4
      %v720 = vshrl.u32 %v192, 16
      %v722 = vrot.slane %v720, 5
      %v723 = vrot.slane %v276, 6
      %v724 = vor.u32 %v722, %v723
      %v725 = vsel %vm675, %v719, %v724
      %v726 = vrot.slane %v281, 5
      %v727 = vrot.slane %v284, 6
      %v728 = vor.u32 %v726, %v727
      %v729 = vrot.slane %v728, 4
      %v730 = vshrl.u32 %v194, 16
      %v732 = vrot.slane %v730, 5
      %v733 = vrot.slane %v290, 6
      %v734 = vor.u32 %v732, %v733
      %v735 = vsel %vm675, %v729, %v734
      %v736 = vrot.slane %v295, 5
      %v737 = vrot.slane %v298, 6
      %v738 = vor.u32 %v736, %v737
      %v739 = vrot.slane %v738, 4
      %v740 = vshrl.u32 %v196, 16
      %v742 = vrot.slane %v740, 5
      %v743 = vrot.slane %v304, 6
      %v744 = vor.u32 %v742, %v743
      %v745 = vsel %vm675, %v739, %v744
      %v746 = vrot.slane %v309, 5
      %v747 = vrot.slane %v312, 6
      %v748 = vor.u32 %v746, %v747
      %v749 = vrot.slane %v748, 4
      %v750 = vshrl.u32 %v198, 16
      %v752 = vrot.slane %v750, 5
      %v753 = vrot.slane %v318, 6
      %v754 = vor.u32 %v752, %v753
      %v755 = vsel %vm675, %v749, %v754
      %s756 = scalar_lea.vmem %s1, 24
      %v757 = vld [vmem:[%s756] sm:$0xf]
      %v758 = vld [vmem:[%s756 + $0x4] sm:$0xf]
      %v759 = vunpack.c.l.b16 %v685
      %v760 = vunpack.c.l.b16 %v695
      %v761 = vunpack.c.l.b16 %v705
      %v762 = vunpack.c.l.b16 %v715
      %v763 = vunpack.c.l.b16 %v725
      %v764 = vunpack.c.l.b16 %v735
      %v765 = vunpack.c.l.b16 %v745
      %v766 = vunpack.c.l.b16 %v755
      %v767 = vpack.c.b16 %v760, %v759
      %v768 = vpack.c.b16 %v762, %v761
      %v769 = vpack.c.b16 %v764, %v763
      %v770 = vpack.c.b16 %v766, %v765
      %v773 = vunpack.c.l.b16 %v757
      %v774 = vunpack.c.l.b16 %v758
      %v775 = vpack.c.b16 %v774, %v773
      %v778 = vsel %vm343, %v767, 0
      %v781 = vsel %vm343, %v768, 0
      %v784 = vsel %vm343, %v769, 0
      %v787 = vsel %vm343, %v770, 0
      %789 = vmatprep.subr.bf16.mxu0 0
      %790 = vmatpush1.bf16.msra.mxu0 %v775
      %791 = vmatprep.subr.bf16.mxu0 0
      %792 = vmatpush1.bf16.msra.mxu0 0
      %793 = vmatprep.subr.bf16.mxu0 0
      %794 = vmatpush1.bf16.msra.mxu0 0
      %795 = vmatprep.subr.bf16.mxu0 0
      %796 = vmatpush1.bf16.msra.mxu0 0
      %797 = vmatprep.subr.bf16.mxu0 0
      %798 = vmatpush1.bf16.msra.mxu0 0
      %799 = vmatprep.subr.bf16.mxu0 0
      %800 = vmatpush1.bf16.msra.mxu0 0
      %801 = vmatprep.subr.bf16.mxu0 0
      %802 = vmatpush1.bf16.msra.mxu0 0
      %803 = vmatprep.subr.bf16.mxu0 0
      %804 = vmatpush1.bf16.msra.mxu0 0
      %805 = vmatprep.subr.bf16.mxu0 0
      %806 = vmatpush1.bf16.msra.mxu0 0
      %807 = vmatprep.subr.bf16.mxu0 0
      %808 = vmatpush1.bf16.msra.mxu0 0
      %809 = vmatprep.subr.bf16.mxu0 0
      %810 = vmatpush1.bf16.msra.mxu0 0
      %811 = vmatprep.subr.bf16.mxu0 0
      %812 = vmatpush1.bf16.msra.mxu0 0
      %813 = vmatprep.subr.bf16.mxu0 0
      %814 = vmatpush1.bf16.msra.mxu0 0
      %815 = vmatprep.subr.bf16.mxu0 0
      %816 = vmatpush1.bf16.msra.mxu0 0
      %817 = vmatprep.subr.bf16.mxu0 0
      %818 = vmatpush1.bf16.msra.mxu0 0
      %819 = vmatprep.subr.bf16.mxu0 0
      %820 = vmatpush1.bf16.msra.mxu0 0
      %821 = vmatprep.mubr.bf16.mxu0 0
      %822 = vmatmul.mubr.bf16.gmra.mrb[0].mxu0 %v778
      %v823 = vpop.f32.mrb[0].mxu0
      %v824 = vadd.f32 0.0, %v823
      %v825 = vpop.f32.mrb[0].mxu0
      %v826 = vpop.f32.mrb[0].mxu0
      %v827 = vadd.f32 0.0, %v826
      %v828 = vpop.f32.mrb[0].mxu0
      %829 = vmatprep.mubr.bf16.mxu0 0
      %830 = vmatmul.mubr.bf16.gmra.mrb[0].mxu0 %v781
      %v831 = vpop.f32.mrb[0].mxu0
      %v832 = vadd.f32 0.0, %v831
      %v833 = vpop.f32.mrb[0].mxu0
      %v834 = vpop.f32.mrb[0].mxu0
      %v835 = vadd.f32 0.0, %v834
      %v836 = vpop.f32.mrb[0].mxu0
      %837 = vmatprep.mubr.bf16.mxu0 0
      %838 = vmatmul.mubr.bf16.gmra.mrb[0].mxu0 %v784
      %v839 = vpop.f32.mrb[0].mxu0
      %v840 = vadd.f32 0.0, %v839
      %v841 = vpop.f32.mrb[0].mxu0
      %v842 = vpop.f32.mrb[0].mxu0
      %v843 = vadd.f32 0.0, %v842
      %v844 = vpop.f32.mrb[0].mxu0
      %845 = vmatprep.mubr.bf16.mxu0 0
      %846 = vmatmul.mubr.bf16.gmra.mrb[0].mxu0 %v787
      %v847 = vpop.f32.mrb[0].mxu0
      %v848 = vadd.f32 0.0, %v847
      %v849 = vpop.f32.mrb[0].mxu0
      %v850 = vpop.f32.mrb[0].mxu0
      %v851 = vadd.f32 0.0, %v850
      %v852 = vpop.f32.mrb[0].mxu0
      %853 = vdwg.mxu0
      %v854 = vadd.f32 %v665, %v824
      %v855 = vadd.f32 %v666, %v827
      %v856 = vadd.f32 %v667, %v832
      %v857 = vadd.f32 %v668, %v835
      %v858 = vadd.f32 %v669, %v840
      %v859 = vadd.f32 %v670, %v843
      %v860 = vadd.f32 %v671, %v848
      %v861 = vadd.f32 %v672, %v851
      %s862 = scalar_lea.vmem %s1, 32
      %v863 = vld [vmem:[%s862] sm:$0xf]
      %v864 = vld [vmem:[%s862 + $0x4] sm:$0xf]
      %v866 = vunpack.c.l.b16 %v199
      %v867 = vpack.c.b16 %v431, %v430
      %v868 = vpack.c.b16 %v433, %v432
      %v869 = vpack.c.b16 %v435, %v434
      %v870 = vpack.c.b16 %v866, %v436
      %v873 = vunpack.c.l.b16 %v863
      %v874 = vunpack.c.l.b16 %v864
      %v875 = vpack.c.b16 %v874, %v873
      %v878 = vsel %vm343, %v867, 0
      %v881 = vsel %vm343, %v868, 0
      %v884 = vsel %vm343, %v869, 0
      %v887 = vsel %vm343, %v870, 0
      %889 = vmatprep.subr.bf16.mxu0 0
      %890 = vmatpush1.bf16.msra.mxu0 %v875
      %891 = vmatprep.subr.bf16.mxu0 0
      %892 = vmatpush1.bf16.msra.mxu0 0
      %893 = vmatprep.subr.bf16.mxu0 0
      %894 = vmatpush1.bf16.msra.mxu0 0
      %895 = vmatprep.subr.bf16.mxu0 0
      %896 = vmatpush1.bf16.msra.mxu0 0
      %897 = vmatprep.subr.bf16.mxu0 0
      %898 = vmatpush1.bf16.msra.mxu0 0
      %899 = vmatprep.subr.bf16.mxu0 0
      %900 = vmatpush1.bf16.msra.mxu0 0
      %901 = vmatprep.subr.bf16.mxu0 0
      %902 = vmatpush1.bf16.msra.mxu0 0
      %903 = vmatprep.subr.bf16.mxu0 0
      %904 = vmatpush1.bf16.msra.mxu0 0
      %905 = vmatprep.subr.bf16.mxu0 0
      %906 = vmatpush1.bf16.msra.mxu0 0
      %907 = vmatprep.subr.bf16.mxu0 0
      %908 = vmatpush1.bf16.msra.mxu0 0
      %909 = vmatprep.subr.bf16.mxu0 0
      %910 = vmatpush1.bf16.msra.mxu0 0
      %911 = vmatprep.subr.bf16.mxu0 0
      %912 = vmatpush1.bf16.msra.mxu0 0
      %913 = vmatprep.subr.bf16.mxu0 0
      %914 = vmatpush1.bf16.msra.mxu0 0
      %915 = vmatprep.subr.bf16.mxu0 0
      %916 = vmatpush1.bf16.msra.mxu0 0
      %917 = vmatprep.subr.bf16.mxu0 0
      %918 = vmatpush1.bf16.msra.mxu0 0
      %919 = vmatprep.subr.bf16.mxu0 0
      %920 = vmatpush1.bf16.msra.mxu0 0
      %921 = vmatprep.mubr.bf16.mxu0 0
      %922 = vmatmul.mubr.bf16.gmra.mrb[0].mxu0 %v878
      %v923 = vpop.f32.mrb[0].mxu0
      %v924 = vadd.f32 0.0, %v923
      %v925 = vpop.f32.mrb[0].mxu0
      %v926 = vpop.f32.mrb[0].mxu0
      %v927 = vadd.f32 0.0, %v926
      %v928 = vpop.f32.mrb[0].mxu0
      %929 = vmatprep.mubr.bf16.mxu0 0
      %930 = vmatmul.mubr.bf16.gmra.mrb[0].mxu0 %v881
      %v931 = vpop.f32.mrb[0].mxu0
      %v932 = vadd.f32 0.0, %v931
      %v933 = vpop.f32.mrb[0].mxu0
      %v934 = vpop.f32.mrb[0].mxu0
      %v935 = vadd.f32 0.0, %v934
      %v936 = vpop.f32.mrb[0].mxu0
      %937 = vmatprep.mubr.bf16.mxu0 0
      %938 = vmatmul.mubr.bf16.gmra.mrb[0].mxu0 %v884
      %v939 = vpop.f32.mrb[0].mxu0
      %v940 = vadd.f32 0.0, %v939
      %v941 = vpop.f32.mrb[0].mxu0
      %v942 = vpop.f32.mrb[0].mxu0
      %v943 = vadd.f32 0.0, %v942
      %v944 = vpop.f32.mrb[0].mxu0
      %945 = vmatprep.mubr.bf16.mxu0 0
      %946 = vmatmul.mubr.bf16.gmra.mrb[0].mxu0 %v887
      %v947 = vpop.f32.mrb[0].mxu0
      %v948 = vadd.f32 0.0, %v947
      %v949 = vpop.f32.mrb[0].mxu0
      %v950 = vpop.f32.mrb[0].mxu0
      %v951 = vadd.f32 0.0, %v950
      %v952 = vpop.f32.mrb[0].mxu0
      %953 = vdwg.mxu0
      %v954 = vadd.f32 %v854, %v924
      %v955 = vadd.f32 %v855, %v927
      %v956 = vadd.f32 %v856, %v932
      %v957 = vadd.f32 %v857, %v935
      %v958 = vadd.f32 %v858, %v940
      %v959 = vadd.f32 %v859, %v943
      %v960 = vadd.f32 %v860, %v948
      %v961 = vadd.f32 %v861, %v951
      %v963 = vshrl.u32 %v199, 16
      %v965 = vrot.slane %v963, 4
      %v966 = vshll.u32 %v199, 16
      %v968 = vrot.slane %v966, 5
      %v969 = vor.u32 %v965, %v968
      %v970 = vrot.slane %v969, 4
      %v972 = vshll.u32 %v200, 16
      %v974 = vrot.slane %v972, 5
      %v975 = vsel %vm209, %v970, %v974
      %s976 = scalar_lea.vmem %s1, 40
      %v977 = vld [vmem:[%s976] sm:$0xf]
      %v978 = vld [vmem:[%s976 + $0x4] sm:$0xf]
      %v979 = vunpack.c.l.b16 %v975
      %v980 = vpack.c.b16 %v327, %v326
      %v981 = vpack.c.b16 %v329, %v328
      %v982 = vpack.c.b16 %v331, %v330
      %v983 = vpack.c.b16 %v979, %v332
      %v986 = vunpack.c.l.b16 %v977
      %v987 = vunpack.c.l.b16 %v978
      %v988 = vpack.c.b16 %v987, %v986
      %v991 = vsel %vm343, %v980, 0
      %v994 = vsel %vm343, %v981, 0
      %v997 = vsel %vm343, %v982, 0
      %v1000 = vsel %vm343, %v983, 0
      %1002 = vmatprep.subr.bf16.mxu0 0
      %1003 = vmatpush1.bf16.msra.mxu0 %v988
      %1004 = vmatprep.subr.bf16.mxu0 0
      %1005 = vmatpush1.bf16.msra.mxu0 0
      %1006 = vmatprep.subr.bf16.mxu0 0
      %1007 = vmatpush1.bf16.msra.mxu0 0
      %1008 = vmatprep.subr.bf16.mxu0 0
      %1009 = vmatpush1.bf16.msra.mxu0 0
      %1010 = vmatprep.subr.bf16.mxu0 0
      %1011 = vmatpush1.bf16.msra.mxu0 0
      %1012 = vmatprep.subr.bf16.mxu0 0
      %1013 = vmatpush1.bf16.msra.mxu0 0
      %1014 = vmatprep.subr.bf16.mxu0 0
      %1015 = vmatpush1.bf16.msra.mxu0 0
      %1016 = vmatprep.subr.bf16.mxu0 0
      %1017 = vmatpush1.bf16.msra.mxu0 0
      %1018 = vmatprep.subr.bf16.mxu0 0
      %1019 = vmatpush1.bf16.msra.mxu0 0
      %1020 = vmatprep.subr.bf16.mxu0 0
      %1021 = vmatpush1.bf16.msra.mxu0 0
      %1022 = vmatprep.subr.bf16.mxu0 0
      %1023 = vmatpush1.bf16.msra.mxu0 0
      %1024 = vmatprep.subr.bf16.mxu0 0
      %1025 = vmatpush1.bf16.msra.mxu0 0
      %1026 = vmatprep.subr.bf16.mxu0 0
      %1027 = vmatpush1.bf16.msra.mxu0 0
      %1028 = vmatprep.subr.bf16.mxu0 0
      %1029 = vmatpush1.bf16.msra.mxu0 0
      %1030 = vmatprep.subr.bf16.mxu0 0
      %1031 = vmatpush1.bf16.msra.mxu0 0
      %1032 = vmatprep.subr.bf16.mxu0 0
      %1033 = vmatpush1.bf16.msra.mxu0 0
      %1034 = vmatprep.mubr.bf16.mxu0 0
      %1035 = vmatmul.mubr.bf16.gmra.mrb[0].mxu0 %v991
      %v1036 = vpop.f32.mrb[0].mxu0
      %v1037 = vadd.f32 0.0, %v1036
      %v1038 = vpop.f32.mrb[0].mxu0
      %v1039 = vpop.f32.mrb[0].mxu0
      %v1040 = vadd.f32 0.0, %v1039
      %v1041 = vpop.f32.mrb[0].mxu0
      %1042 = vmatprep.mubr.bf16.mxu0 0
      %1043 = vmatmul.mubr.bf16.gmra.mrb[0].mxu0 %v994
      %v1044 = vpop.f32.mrb[0].mxu0
      %v1045 = vadd.f32 0.0, %v1044
      %v1046 = vpop.f32.mrb[0].mxu0
      %v1047 = vpop.f32.mrb[0].mxu0
      %v1048 = vadd.f32 0.0, %v1047
      %v1049 = vpop.f32.mrb[0].mxu0
      %1050 = vmatprep.mubr.bf16.mxu0 0
      %1051 = vmatmul.mubr.bf16.gmra.mrb[0].mxu0 %v997
      %v1052 = vpop.f32.mrb[0].mxu0
      %v1053 = vadd.f32 0.0, %v1052
      %v1054 = vpop.f32.mrb[0].mxu0
      %v1055 = vpop.f32.mrb[0].mxu0
      %v1056 = vadd.f32 0.0, %v1055
      %v1057 = vpop.f32.mrb[0].mxu0
      %1058 = vmatprep.mubr.bf16.mxu0 0
      %1059 = vmatmul.mubr.bf16.gmra.mrb[0].mxu0 %v1000
      %v1060 = vpop.f32.mrb[0].mxu0
      %v1061 = vadd.f32 0.0, %v1060
      %v1062 = vpop.f32.mrb[0].mxu0
      %v1063 = vpop.f32.mrb[0].mxu0
      %v1064 = vadd.f32 0.0, %v1063
      %v1065 = vpop.f32.mrb[0].mxu0
      %1066 = vdwg.mxu0
      %v1067 = vadd.f32 %v954, %v1037
      %v1068 = vadd.f32 %v955, %v1040
      %v1069 = vadd.f32 %v956, %v1045
      %v1070 = vadd.f32 %v957, %v1048
      %v1071 = vadd.f32 %v958, %v1053
      %v1072 = vadd.f32 %v959, %v1056
      %v1073 = vadd.f32 %v960, %v1061
      %v1074 = vadd.f32 %v961, %v1064
      %v1076 = vrot.slane %v199, 5
      %v1077 = vrot.slane %v1076, 4
      %v1078 = vrot.slane %v200, 5
      %v1079 = vsel %vm534, %v1077, %v1078
      %s1080 = scalar_lea.vmem %s1, 48
      %v1081 = vld [vmem:[%s1080] sm:$0xf]
      %v1082 = vld [vmem:[%s1080 + $0x4] sm:$0xf]
      %v1083 = vunpack.c.l.b16 %v1079
      %v1084 = vpack.c.b16 %v572, %v571
      %v1085 = vpack.c.b16 %v574, %v573
      %v1086 = vpack.c.b16 %v576, %v575
      %v1087 = vpack.c.b16 %v1083, %v577
      %v1090 = vunpack.c.l.b16 %v1081
      %v1091 = vunpack.c.l.b16 %v1082
      %v1092 = vpack.c.b16 %v1091, %v1090
      %v1095 = vsel %vm343, %v1084, 0
      %v1098 = vsel %vm343, %v1085, 0
      %v1101 = vsel %vm343, %v1086, 0
      %v1104 = vsel %vm343, %v1087, 0
      %1106 = vmatprep.subr.bf16.mxu0 0
      %1107 = vmatpush1.bf16.msra.mxu0 %v1092
      %1108 = vmatprep.subr.bf16.mxu0 0
      %1109 = vmatpush1.bf16.msra.mxu0 0
      %1110 = vmatprep.subr.bf16.mxu0 0
      %1111 = vmatpush1.bf16.msra.mxu0 0
      %1112 = vmatprep.subr.bf16.mxu0 0
      %1113 = vmatpush1.bf16.msra.mxu0 0
      %1114 = vmatprep.subr.bf16.mxu0 0
      %1115 = vmatpush1.bf16.msra.mxu0 0
      %1116 = vmatprep.subr.bf16.mxu0 0
      %1117 = vmatpush1.bf16.msra.mxu0 0
      %1118 = vmatprep.subr.bf16.mxu0 0
      %1119 = vmatpush1.bf16.msra.mxu0 0
      %1120 = vmatprep.subr.bf16.mxu0 0
      %1121 = vmatpush1.bf16.msra.mxu0 0
      %1122 = vmatprep.subr.bf16.mxu0 0
      %1123 = vmatpush1.bf16.msra.mxu0 0
      %1124 = vmatprep.subr.bf16.mxu0 0
      %1125 = vmatpush1.bf16.msra.mxu0 0
      %1126 = vmatprep.subr.bf16.mxu0 0
      %1127 = vmatpush1.bf16.msra.mxu0 0
      %1128 = vmatprep.subr.bf16.mxu0 0
      %1129 = vmatpush1.bf16.msra.mxu0 0
      %1130 = vmatprep.subr.bf16.mxu0 0
      %1131 = vmatpush1.bf16.msra.mxu0 0
      %1132 = vmatprep.subr.bf16.mxu0 0
      %1133 = vmatpush1.bf16.msra.mxu0 0
      %1134 = vmatprep.subr.bf16.mxu0 0
      %1135 = vmatpush1.bf16.msra.mxu0 0
      %1136 = vmatprep.subr.bf16.mxu0 0
      %1137 = vmatpush1.bf16.msra.mxu0 0
      %1138 = vmatprep.mubr.bf16.mxu0 0
      %1139 = vmatmul.mubr.bf16.gmra.mrb[0].mxu0 %v1095
      %v1140 = vpop.f32.mrb[0].mxu0
      %v1141 = vadd.f32 0.0, %v1140
      %v1142 = vpop.f32.mrb[0].mxu0
      %v1143 = vpop.f32.mrb[0].mxu0
      %v1144 = vadd.f32 0.0, %v1143
      %v1145 = vpop.f32.mrb[0].mxu0
      %1146 = vmatprep.mubr.bf16.mxu0 0
      %1147 = vmatmul.mubr.bf16.gmra.mrb[0].mxu0 %v1098
      %v1148 = vpop.f32.mrb[0].mxu0
      %v1149 = vadd.f32 0.0, %v1148
      %v1150 = vpop.f32.mrb[0].mxu0
      %v1151 = vpop.f32.mrb[0].mxu0
      %v1152 = vadd.f32 0.0, %v1151
      %v1153 = vpop.f32.mrb[0].mxu0
      %1154 = vmatprep.mubr.bf16.mxu0 0
      %1155 = vmatmul.mubr.bf16.gmra.mrb[0].mxu0 %v1101
      %v1156 = vpop.f32.mrb[0].mxu0
      %v1157 = vadd.f32 0.0, %v1156
      %v1158 = vpop.f32.mrb[0].mxu0
      %v1159 = vpop.f32.mrb[0].mxu0
      %v1160 = vadd.f32 0.0, %v1159
      %v1161 = vpop.f32.mrb[0].mxu0
      %1162 = vmatprep.mubr.bf16.mxu0 0
      %1163 = vmatmul.mubr.bf16.gmra.mrb[0].mxu0 %v1104
      %v1164 = vpop.f32.mrb[0].mxu0
      %v1165 = vadd.f32 0.0, %v1164
      %v1166 = vpop.f32.mrb[0].mxu0
      %v1167 = vpop.f32.mrb[0].mxu0
      %v1168 = vadd.f32 0.0, %v1167
      %v1169 = vpop.f32.mrb[0].mxu0
      %1170 = vdwg.mxu0
      %v1171 = vadd.f32 %v1067, %v1141
      %v1172 = vadd.f32 %v1068, %v1144
      %v1173 = vadd.f32 %v1069, %v1149
      %v1174 = vadd.f32 %v1070, %v1152
      %v1175 = vadd.f32 %v1071, %v1157
      %v1176 = vadd.f32 %v1072, %v1160
      %v1177 = vadd.f32 %v1073, %v1165
      %v1178 = vadd.f32 %v1074, %v1168
      %v1179 = vrot.slane %v963, 5
      %v1180 = vrot.slane %v966, 6
      %v1181 = vor.u32 %v1179, %v1180
      %v1182 = vrot.slane %v1181, 4
      %v1183 = vshrl.u32 %v200, 16
      %v1185 = vrot.slane %v1183, 5
      %v1186 = vrot.slane %v972, 6
      %v1187 = vor.u32 %v1185, %v1186
      %v1188 = vsel %vm675, %v1182, %v1187
      %s1189 = scalar_lea.vmem %s1, 56
      %v1190 = vld [vmem:[%s1189] sm:$0xf]
      %v1191 = vld [vmem:[%s1189 + $0x4] sm:$0xf]
      %v1192 = vunpack.c.l.b16 %v1188
      %v1193 = vpack.c.b16 %v761, %v760
      %v1194 = vpack.c.b16 %v763, %v762
      %v1195 = vpack.c.b16 %v765, %v764
      %v1196 = vpack.c.b16 %v1192, %v766
      %v1199 = vunpack.c.l.b16 %v1190
      %v1200 = vunpack.c.l.b16 %v1191
      %v1201 = vpack.c.b16 %v1200, %v1199
      %v1204 = vsel %vm343, %v1193, 0
      %v1207 = vsel %vm343, %v1194, 0
      %v1210 = vsel %vm343, %v1195, 0
      %v1213 = vsel %vm343, %v1196, 0
      %1215 = vmatprep.subr.bf16.mxu0 0
      %1216 = vmatpush1.bf16.msra.mxu0 %v1201
      %1217 = vmatprep.subr.bf16.mxu0 0
      %1218 = vmatpush1.bf16.msra.mxu0 0
      %1219 = vmatprep.subr.bf16.mxu0 0
      %1220 = vmatpush1.bf16.msra.mxu0 0
      %1221 = vmatprep.subr.bf16.mxu0 0
      %1222 = vmatpush1.bf16.msra.mxu0 0
      %1223 = vmatprep.subr.bf16.mxu0 0
      %1224 = vmatpush1.bf16.msra.mxu0 0
      %1225 = vmatprep.subr.bf16.mxu0 0
      %1226 = vmatpush1.bf16.msra.mxu0 0
      %1227 = vmatprep.subr.bf16.mxu0 0
      %1228 = vmatpush1.bf16.msra.mxu0 0
      %1229 = vmatprep.subr.bf16.mxu0 0
      %1230 = vmatpush1.bf16.msra.mxu0 0
      %1231 = vmatprep.subr.bf16.mxu0 0
      %1232 = vmatpush1.bf16.msra.mxu0 0
      %1233 = vmatprep.subr.bf16.mxu0 0
      %1234 = vmatpush1.bf16.msra.mxu0 0
      %1235 = vmatprep.subr.bf16.mxu0 0
      %1236 = vmatpush1.bf16.msra.mxu0 0
      %1237 = vmatprep.subr.bf16.mxu0 0
      %1238 = vmatpush1.bf16.msra.mxu0 0
      %1239 = vmatprep.subr.bf16.mxu0 0
      %1240 = vmatpush1.bf16.msra.mxu0 0
      %1241 = vmatprep.subr.bf16.mxu0 0
      %1242 = vmatpush1.bf16.msra.mxu0 0
      %1243 = vmatprep.subr.bf16.mxu0 0
      %1244 = vmatpush1.bf16.msra.mxu0 0
      %1245 = vmatprep.subr.bf16.mxu0 0
      %1246 = vmatpush1.bf16.msra.mxu0 0
      %1247 = vmatprep.mubr.bf16.mxu0 0
      %1248 = vmatmul.mubr.bf16.gmra.mrb[0].mxu0 %v1204
      %v1249 = vpop.f32.mrb[0].mxu0
      %v1250 = vadd.f32 0.0, %v1249
      %v1251 = vpop.f32.mrb[0].mxu0
      %v1252 = vpop.f32.mrb[0].mxu0
      %v1253 = vadd.f32 0.0, %v1252
      %v1254 = vpop.f32.mrb[0].mxu0
      %1255 = vmatprep.mubr.bf16.mxu0 0
      %1256 = vmatmul.mubr.bf16.gmra.mrb[0].mxu0 %v1207
      %v1257 = vpop.f32.mrb[0].mxu0
      %v1258 = vadd.f32 0.0, %v1257
      %v1259 = vpop.f32.mrb[0].mxu0
      %v1260 = vpop.f32.mrb[0].mxu0
      %v1261 = vadd.f32 0.0, %v1260
      %v1262 = vpop.f32.mrb[0].mxu0
      %1263 = vmatprep.mubr.bf16.mxu0 0
      %1264 = vmatmul.mubr.bf16.gmra.mrb[0].mxu0 %v1210
      %v1265 = vpop.f32.mrb[0].mxu0
      %v1266 = vadd.f32 0.0, %v1265
      %v1267 = vpop.f32.mrb[0].mxu0
      %v1268 = vpop.f32.mrb[0].mxu0
      %v1269 = vadd.f32 0.0, %v1268
      %v1270 = vpop.f32.mrb[0].mxu0
      %1271 = vmatprep.mubr.bf16.mxu0 0
      %1272 = vmatmul.mubr.bf16.gmra.mrb[0].mxu0 %v1213
      %v1273 = vpop.f32.mrb[0].mxu0
      %v1274 = vadd.f32 0.0, %v1273
      %v1275 = vpop.f32.mrb[0].mxu0
      %v1276 = vpop.f32.mrb[0].mxu0
      %v1277 = vadd.f32 0.0, %v1276
      %v1278 = vpop.f32.mrb[0].mxu0
      %1279 = vdwg.mxu0
      %v1280 = vadd.f32 %v1171, %v1250
      %v1281 = vadd.f32 %v1172, %v1253
      %v1282 = vadd.f32 %v1173, %v1258
      %v1283 = vadd.f32 %v1174, %v1261
      %v1284 = vadd.f32 %v1175, %v1266
      %v1285 = vadd.f32 %v1176, %v1269
      %v1286 = vadd.f32 %v1177, %v1274
      %v1287 = vadd.f32 %v1178, %v1277
      %s1288 = scalar_lea.vmem %s1, 64
      %v1289 = vld [vmem:[%s1288] sm:$0xf]
      %v1290 = vld [vmem:[%s1288 + $0x4] sm:$0xf]
      %v1292 = vunpack.c.l.b16 %v201
      %v1293 = vpack.c.b16 %v1292, %v866
      %v1296 = vunpack.c.l.b16 %v1289
      %v1297 = vunpack.c.l.b16 %v1290
      %v1298 = vpack.c.b16 %v1297, %v1296
      %v1301 = vsel %vm343, %v1293, 0
      %1303 = vmatprep.subr.bf16.mxu0 0
      %1304 = vmatpush1.bf16.msra.mxu0 %v1298
      %1305 = vmatprep.subr.bf16.mxu0 0
      %1306 = vmatpush1.bf16.msra.mxu0 0
      %1307 = vmatprep.subr.bf16.mxu0 0
      %1308 = vmatpush1.bf16.msra.mxu0 0
      %1309 = vmatprep.subr.bf16.mxu0 0
      %1310 = vmatpush1.bf16.msra.mxu0 0
      %1311 = vmatprep.subr.bf16.mxu0 0
      %1312 = vmatpush1.bf16.msra.mxu0 0
      %1313 = vmatprep.subr.bf16.mxu0 0
      %1314 = vmatpush1.bf16.msra.mxu0 0
      %1315 = vmatprep.subr.bf16.mxu0 0
      %1316 = vmatpush1.bf16.msra.mxu0 0
      %1317 = vmatprep.subr.bf16.mxu0 0
      %1318 = vmatpush1.bf16.msra.mxu0 0
      %1319 = vmatprep.subr.bf16.mxu0 0
      %1320 = vmatpush1.bf16.msra.mxu0 0
      %1321 = vmatprep.subr.bf16.mxu0 0
      %1322 = vmatpush1.bf16.msra.mxu0 0
      %1323 = vmatprep.subr.bf16.mxu0 0
      %1324 = vmatpush1.bf16.msra.mxu0 0
      %1325 = vmatprep.subr.bf16.mxu0 0
      %1326 = vmatpush1.bf16.msra.mxu0 0
      %1327 = vmatprep.subr.bf16.mxu0 0
      %1328 = vmatpush1.bf16.msra.mxu0 0
      %1329 = vmatprep.subr.bf16.mxu0 0
      %1330 = vmatpush1.bf16.msra.mxu0 0
      %1331 = vmatprep.subr.bf16.mxu0 0
      %1332 = vmatpush1.bf16.msra.mxu0 0
      %1333 = vmatprep.subr.bf16.mxu0 0
      %1334 = vmatpush1.bf16.msra.mxu0 0
      %1335 = vmatprep.mubr.bf16.mxu0 0
      %1336 = vmatmul.mubr.bf16.gmra.mrb[0].mxu0 %v451
      %v1337 = vpop.f32.mrb[0].mxu0
      %v1338 = vadd.f32 0.0, %v1337
      %v1339 = vpop.f32.mrb[0].mxu0
      %v1340 = vpop.f32.mrb[0].mxu0
      %v1341 = vadd.f32 0.0, %v1340
      %v1342 = vpop.f32.mrb[0].mxu0
      %1343 = vmatprep.mubr.bf16.mxu0 0
      %1344 = vmatmul.mubr.bf16.gmra.mrb[0].mxu0 %v454
      %v1345 = vpop.f32.mrb[0].mxu0
      %v1346 = vadd.f32 0.0, %v1345
      %v1347 = vpop.f32.mrb[0].mxu0
      %v1348 = vpop.f32.mrb[0].mxu0
      %v1349 = vadd.f32 0.0, %v1348
      %v1350 = vpop.f32.mrb[0].mxu0
      %1351 = vmatprep.mubr.bf16.mxu0 0
      %1352 = vmatmul.mubr.bf16.gmra.mrb[0].mxu0 %v457
      %v1353 = vpop.f32.mrb[0].mxu0
      %v1354 = vadd.f32 0.0, %v1353
      %v1355 = vpop.f32.mrb[0].mxu0
      %v1356 = vpop.f32.mrb[0].mxu0
      %v1357 = vadd.f32 0.0, %v1356
      %v1358 = vpop.f32.mrb[0].mxu0
      %1359 = vmatprep.mubr.bf16.mxu0 0
      %1360 = vmatmul.mubr.bf16.gmra.mrb[0].mxu0 %v1301
      %v1361 = vpop.f32.mrb[0].mxu0
      %v1362 = vadd.f32 0.0, %v1361
      %v1363 = vpop.f32.mrb[0].mxu0
      %v1364 = vpop.f32.mrb[0].mxu0
      %v1365 = vadd.f32 0.0, %v1364
      %v1366 = vpop.f32.mrb[0].mxu0
      %1367 = vdwg.mxu0
      %v1368 = vadd.f32 %v1280, %v1338
      %v1369 = vadd.f32 %v1281, %v1341
      %v1370 = vadd.f32 %v1282, %v1346
      %v1371 = vadd.f32 %v1283, %v1349
      %v1372 = vadd.f32 %v1284, %v1354
      %v1373 = vadd.f32 %v1285, %v1357
      %v1374 = vadd.f32 %v1286, %v1362
      %v1375 = vadd.f32 %v1287, %v1365
      %v1377 = vshrl.u32 %v201, 16
      %v1379 = vrot.slane %v1377, 4
      %v1380 = vshll.u32 %v201, 16
      %v1382 = vrot.slane %v1380, 5
      %v1383 = vor.u32 %v1379, %v1382
      %v1384 = vrot.slane %v1383, 4
      %v1386 = vshll.u32 %v202, 16
      %v1388 = vrot.slane %v1386, 5
      %v1389 = vsel %vm209, %v1384, %v1388
      %s1390 = scalar_lea.vmem %s1, 72
      %v1391 = vld [vmem:[%s1390] sm:$0xf]
      %v1392 = vld [vmem:[%s1390 + $0x4] sm:$0xf]
      %v1393 = vunpack.c.l.b16 %v1389
      %v1394 = vpack.c.b16 %v1393, %v979
      %v1397 = vunpack.c.l.b16 %v1391
      %v1398 = vunpack.c.l.b16 %v1392
      %v1399 = vpack.c.b16 %v1398, %v1397
      %v1402 = vsel %vm343, %v1394, 0
      %1404 = vmatprep.subr.bf16.mxu0 0
      %1405 = vmatpush1.bf16.msra.mxu0 %v1399
      %1406 = vmatprep.subr.bf16.mxu0 0
      %1407 = vmatpush1.bf16.msra.mxu0 0
      %1408 = vmatprep.subr.bf16.mxu0 0
      %1409 = vmatpush1.bf16.msra.mxu0 0
      %1410 = vmatprep.subr.bf16.mxu0 0
      %1411 = vmatpush1.bf16.msra.mxu0 0
      %1412 = vmatprep.subr.bf16.mxu0 0
      %1413 = vmatpush1.bf16.msra.mxu0 0
      %1414 = vmatprep.subr.bf16.mxu0 0
      %1415 = vmatpush1.bf16.msra.mxu0 0
      %1416 = vmatprep.subr.bf16.mxu0 0
      %1417 = vmatpush1.bf16.msra.mxu0 0
      %1418 = vmatprep.subr.bf16.mxu0 0
      %1419 = vmatpush1.bf16.msra.mxu0 0
      %1420 = vmatprep.subr.bf16.mxu0 0
      %1421 = vmatpush1.bf16.msra.mxu0 0
      %1422 = vmatprep.subr.bf16.mxu0 0
      %1423 = vmatpush1.bf16.msra.mxu0 0
      %1424 = vmatprep.subr.bf16.mxu0 0
      %1425 = vmatpush1.bf16.msra.mxu0 0
      %1426 = vmatprep.subr.bf16.mxu0 0
      %1427 = vmatpush1.bf16.msra.mxu0 0
      %1428 = vmatprep.subr.bf16.mxu0 0
      %1429 = vmatpush1.bf16.msra.mxu0 0
      %1430 = vmatprep.subr.bf16.mxu0 0
      %1431 = vmatpush1.bf16.msra.mxu0 0
      %1432 = vmatprep.subr.bf16.mxu0 0
      %1433 = vmatpush1.bf16.msra.mxu0 0
      %1434 = vmatprep.subr.bf16.mxu0 0
      %1435 = vmatpush1.bf16.msra.mxu0 0
      %1436 = vmatprep.mubr.bf16.mxu0 0
      %1437 = vmatmul.mubr.bf16.gmra.mrb[0].mxu0 %v348
      %v1438 = vpop.f32.mrb[0].mxu0
      %v1439 = vadd.f32 0.0, %v1438
      %v1440 = vpop.f32.mrb[0].mxu0
      %v1441 = vpop.f32.mrb[0].mxu0
      %v1442 = vadd.f32 0.0, %v1441
      %v1443 = vpop.f32.mrb[0].mxu0
      %1444 = vmatprep.mubr.bf16.mxu0 0
      %1445 = vmatmul.mubr.bf16.gmra.mrb[0].mxu0 %v351
      %v1446 = vpop.f32.mrb[0].mxu0
      %v1447 = vadd.f32 0.0, %v1446
      %v1448 = vpop.f32.mrb[0].mxu0
      %v1449 = vpop.f32.mrb[0].mxu0
      %v1450 = vadd.f32 0.0, %v1449
      %v1451 = vpop.f32.mrb[0].mxu0
      %1452 = vmatprep.mubr.bf16.mxu0 0
      %1453 = vmatmul.mubr.bf16.gmra.mrb[0].mxu0 %v354
      %v1454 = vpop.f32.mrb[0].mxu0
      %v1455 = vadd.f32 0.0, %v1454
      %v1456 = vpop.f32.mrb[0].mxu0
      %v1457 = vpop.f32.mrb[0].mxu0
      %v1458 = vadd.f32 0.0, %v1457
      %v1459 = vpop.f32.mrb[0].mxu0
      %1460 = vmatprep.mubr.bf16.mxu0 0
      %1461 = vmatmul.mubr.bf16.gmra.mrb[0].mxu0 %v1402
      %v1462 = vpop.f32.mrb[0].mxu0
      %v1463 = vadd.f32 0.0, %v1462
      %v1464 = vpop.f32.mrb[0].mxu0
      %v1465 = vpop.f32.mrb[0].mxu0
      %v1466 = vadd.f32 0.0, %v1465
      %v1467 = vpop.f32.mrb[0].mxu0
      %1468 = vdwg.mxu0
      %v1469 = vadd.f32 %v1368, %v1439
      %v1470 = vadd.f32 %v1369, %v1442
      %v1471 = vadd.f32 %v1370, %v1447
      %v1472 = vadd.f32 %v1371, %v1450
      %v1473 = vadd.f32 %v1372, %v1455
      %v1474 = vadd.f32 %v1373, %v1458
      %v1475 = vadd.f32 %v1374, %v1463
      %v1476 = vadd.f32 %v1375, %v1466
      %v1478 = vrot.slane %v201, 5
      %v1479 = vrot.slane %v1478, 4
      %v1480 = vrot.slane %v202, 5
      %v1481 = vsel %vm534, %v1479, %v1480
      %s1482 = scalar_lea.vmem %s1, 80
      %v1483 = vld [vmem:[%s1482] sm:$0xf]
      %v1484 = vld [vmem:[%s1482 + $0x4] sm:$0xf]
      %v1485 = vunpack.c.l.b16 %v1481
      %v1486 = vpack.c.b16 %v1485, %v1083
      %v1489 = vunpack.c.l.b16 %v1483
      %v1490 = vunpack.c.l.b16 %v1484
      %v1491 = vpack.c.b16 %v1490, %v1489
      %v1494 = vsel %vm343, %v1486, 0
      %1496 = vmatprep.subr.bf16.mxu0 0
      %1497 = vmatpush1.bf16.msra.mxu0 %v1491
      %1498 = vmatprep.subr.bf16.mxu0 0
      %1499 = vmatpush1.bf16.msra.mxu0 0
      %1500 = vmatprep.subr.bf16.mxu0 0
      %1501 = vmatpush1.bf16.msra.mxu0 0
      %1502 = vmatprep.subr.bf16.mxu0 0
      %1503 = vmatpush1.bf16.msra.mxu0 0
      %1504 = vmatprep.subr.bf16.mxu0 0
      %1505 = vmatpush1.bf16.msra.mxu0 0
      %1506 = vmatprep.subr.bf16.mxu0 0
      %1507 = vmatpush1.bf16.msra.mxu0 0
      %1508 = vmatprep.subr.bf16.mxu0 0
      %1509 = vmatpush1.bf16.msra.mxu0 0
      %1510 = vmatprep.subr.bf16.mxu0 0
      %1511 = vmatpush1.bf16.msra.mxu0 0
      %1512 = vmatprep.subr.bf16.mxu0 0
      %1513 = vmatpush1.bf16.msra.mxu0 0
      %1514 = vmatprep.subr.bf16.mxu0 0
      %1515 = vmatpush1.bf16.msra.mxu0 0
      %1516 = vmatprep.subr.bf16.mxu0 0
      %1517 = vmatpush1.bf16.msra.mxu0 0
      %1518 = vmatprep.subr.bf16.mxu0 0
      %1519 = vmatpush1.bf16.msra.mxu0 0
      %1520 = vmatprep.subr.bf16.mxu0 0
      %1521 = vmatpush1.bf16.msra.mxu0 0
      %1522 = vmatprep.subr.bf16.mxu0 0
      %1523 = vmatpush1.bf16.msra.mxu0 0
      %1524 = vmatprep.subr.bf16.mxu0 0
      %1525 = vmatpush1.bf16.msra.mxu0 0
      %1526 = vmatprep.subr.bf16.mxu0 0
      %1527 = vmatpush1.bf16.msra.mxu0 0
      %1528 = vmatprep.mubr.bf16.mxu0 0
      %1529 = vmatmul.mubr.bf16.gmra.mrb[0].mxu0 %v592
      %v1530 = vpop.f32.mrb[0].mxu0
      %v1531 = vadd.f32 0.0, %v1530
      %v1532 = vpop.f32.mrb[0].mxu0
      %v1533 = vpop.f32.mrb[0].mxu0
      %v1534 = vadd.f32 0.0, %v1533
      %v1535 = vpop.f32.mrb[0].mxu0
      %1536 = vmatprep.mubr.bf16.mxu0 0
      %1537 = vmatmul.mubr.bf16.gmra.mrb[0].mxu0 %v595
      %v1538 = vpop.f32.mrb[0].mxu0
      %v1539 = vadd.f32 0.0, %v1538
      %v1540 = vpop.f32.mrb[0].mxu0
      %v1541 = vpop.f32.mrb[0].mxu0
      %v1542 = vadd.f32 0.0, %v1541
      %v1543 = vpop.f32.mrb[0].mxu0
      %1544 = vmatprep.mubr.bf16.mxu0 0
      %1545 = vmatmul.mubr.bf16.gmra.mrb[0].mxu0 %v598
      %v1546 = vpop.f32.mrb[0].mxu0
      %v1547 = vadd.f32 0.0, %v1546
      %v1548 = vpop.f32.mrb[0].mxu0
      %v1549 = vpop.f32.mrb[0].mxu0
      %v1550 = vadd.f32 0.0, %v1549
      %v1551 = vpop.f32.mrb[0].mxu0
      %1552 = vmatprep.mubr.bf16.mxu0 0
      %1553 = vmatmul.mubr.bf16.gmra.mrb[0].mxu0 %v1494
      %v1554 = vpop.f32.mrb[0].mxu0
      %v1555 = vadd.f32 0.0, %v1554
      %v1556 = vpop.f32.mrb[0].mxu0
      %v1557 = vpop.f32.mrb[0].mxu0
      %v1558 = vadd.f32 0.0, %v1557
      %v1559 = vpop.f32.mrb[0].mxu0
      %1560 = vdwg.mxu0
      %v1561 = vadd.f32 %v1469, %v1531
      %v1562 = vadd.f32 %v1470, %v1534
      %v1563 = vadd.f32 %v1471, %v1539
      %v1564 = vadd.f32 %v1472, %v1542
      %v1565 = vadd.f32 %v1473, %v1547
      %v1566 = vadd.f32 %v1474, %v1550
      %v1567 = vadd.f32 %v1475, %v1555
      %v1568 = vadd.f32 %v1476, %v1558
      %v1569 = vrot.slane %v1377, 5
      %v1570 = vrot.slane %v1380, 6
      %v1571 = vor.u32 %v1569, %v1570
      %v1572 = vrot.slane %v1571, 4
      %v1573 = vshrl.u32 %v202, 16
      %v1575 = vrot.slane %v1573, 5
      %v1576 = vrot.slane %v1386, 6
      %v1577 = vor.u32 %v1575, %v1576
      %v1578 = vsel %vm675, %v1572, %v1577
      %s1579 = scalar_lea.vmem %s1, 88
      %v1580 = vld [vmem:[%s1579] sm:$0xf]
      %v1581 = vld [vmem:[%s1579 + $0x4] sm:$0xf]
      %v1582 = vunpack.c.l.b16 %v1578
      %v1583 = vpack.c.b16 %v1582, %v1192
      %v1586 = vunpack.c.l.b16 %v1580
      %v1587 = vunpack.c.l.b16 %v1581
      %v1588 = vpack.c.b16 %v1587, %v1586
      %v1591 = vsel %vm343, %v1583, 0
      %1593 = vmatprep.subr.bf16.mxu0 0
      %1594 = vmatpush1.bf16.msra.mxu0 %v1588
      %1595 = vmatprep.subr.bf16.mxu0 0
      %1596 = vmatpush1.bf16.msra.mxu0 0
      %1597 = vmatprep.subr.bf16.mxu0 0
      %1598 = vmatpush1.bf16.msra.mxu0 0
      %1599 = vmatprep.subr.bf16.mxu0 0
      %1600 = vmatpush1.bf16.msra.mxu0 0
      %1601 = vmatprep.subr.bf16.mxu0 0
      %1602 = vmatpush1.bf16.msra.mxu0 0
      %1603 = vmatprep.subr.bf16.mxu0 0
      %1604 = vmatpush1.bf16.msra.mxu0 0
      %1605 = vmatprep.subr.bf16.mxu0 0
      %1606 = vmatpush1.bf16.msra.mxu0 0
      %1607 = vmatprep.subr.bf16.mxu0 0
      %1608 = vmatpush1.bf16.msra.mxu0 0
      %1609 = vmatprep.subr.bf16.mxu0 0
      %1610 = vmatpush1.bf16.msra.mxu0 0
      %1611 = vmatprep.subr.bf16.mxu0 0
      %1612 = vmatpush1.bf16.msra.mxu0 0
      %1613 = vmatprep.subr.bf16.mxu0 0
      %1614 = vmatpush1.bf16.msra.mxu0 0
      %1615 = vmatprep.subr.bf16.mxu0 0
      %1616 = vmatpush1.bf16.msra.mxu0 0
      %1617 = vmatprep.subr.bf16.mxu0 0
      %1618 = vmatpush1.bf16.msra.mxu0 0
      %1619 = vmatprep.subr.bf16.mxu0 0
      %1620 = vmatpush1.bf16.msra.mxu0 0
      %1621 = vmatprep.subr.bf16.mxu0 0
      %1622 = vmatpush1.bf16.msra.mxu0 0
      %1623 = vmatprep.subr.bf16.mxu0 0
      %1624 = vmatpush1.bf16.msra.mxu0 0
      %1625 = vmatprep.mubr.bf16.mxu0 0
      %1626 = vmatmul.mubr.bf16.gmra.mrb[0].mxu0 %v781
      %v1627 = vpop.f32.mrb[0].mxu0
      %v1628 = vadd.f32 0.0, %v1627
      %v1629 = vpop.f32.mrb[0].mxu0
      %v1630 = vpop.f32.mrb[0].mxu0
      %v1631 = vadd.f32 0.0, %v1630
      %v1632 = vpop.f32.mrb[0].mxu0
      %1633 = vmatprep.mubr.bf16.mxu0 0
      %1634 = vmatmul.mubr.bf16.gmra.mrb[0].mxu0 %v784
      %v1635 = vpop.f32.mrb[0].mxu0
      %v1636 = vadd.f32 0.0, %v1635
      %v1637 = vpop.f32.mrb[0].mxu0
      %v1638 = vpop.f32.mrb[0].mxu0
      %v1639 = vadd.f32 0.0, %v1638
      %v1640 = vpop.f32.mrb[0].mxu0
      %1641 = vmatprep.mubr.bf16.mxu0 0
      %1642 = vmatmul.mubr.bf16.gmra.mrb[0].mxu0 %v787
      %v1643 = vpop.f32.mrb[0].mxu0
      %v1644 = vadd.f32 0.0, %v1643
      %v1645 = vpop.f32.mrb[0].mxu0
      %v1646 = vpop.f32.mrb[0].mxu0
      %v1647 = vadd.f32 0.0, %v1646
      %v1648 = vpop.f32.mrb[0].mxu0
      %1649 = vmatprep.mubr.bf16.mxu0 0
      %1650 = vmatmul.mubr.bf16.gmra.mrb[0].mxu0 %v1591
      %v1651 = vpop.f32.mrb[0].mxu0
      %v1652 = vadd.f32 0.0, %v1651
      %v1653 = vpop.f32.mrb[0].mxu0
      %v1654 = vpop.f32.mrb[0].mxu0
      %v1655 = vadd.f32 0.0, %v1654
      %v1656 = vpop.f32.mrb[0].mxu0
      %1657 = vdwg.mxu0
      %v1658 = vadd.f32 %v1561, %v1628
      %v1659 = vadd.f32 %v1562, %v1631
      %v1660 = vadd.f32 %v1563, %v1636
      %v1661 = vadd.f32 %v1564, %v1639
      %v1662 = vadd.f32 %v1565, %v1644
      %v1663 = vadd.f32 %v1566, %v1647
      %v1664 = vadd.f32 %v1567, %v1652
      %v1665 = vadd.f32 %v1568, %v1655
      %s1666 = scalar_lea.vmem %s1, 96
      %v1667 = vld [vmem:[%s1666] sm:$0xf]
      %v1668 = vld [vmem:[%s1666 + $0x4] sm:$0xf]
      %v1670 = vunpack.c.l.b16 %v203
      %v1671 = vpack.c.b16 %v1670, %v1292
      %v1674 = vunpack.c.l.b16 %v1667
      %v1675 = vunpack.c.l.b16 %v1668
      %v1676 = vpack.c.b16 %v1675, %v1674
      %v1679 = vsel %vm343, %v1671, 0
      %1681 = vmatprep.subr.bf16.mxu0 0
      %1682 = vmatpush1.bf16.msra.mxu0 %v1676
      %1683 = vmatprep.subr.bf16.mxu0 0
      %1684 = vmatpush1.bf16.msra.mxu0 0
      %1685 = vmatprep.subr.bf16.mxu0 0
      %1686 = vmatpush1.bf16.msra.mxu0 0
      %1687 = vmatprep.subr.bf16.mxu0 0
      %1688 = vmatpush1.bf16.msra.mxu0 0
      %1689 = vmatprep.subr.bf16.mxu0 0
      %1690 = vmatpush1.bf16.msra.mxu0 0
      %1691 = vmatprep.subr.bf16.mxu0 0
      %1692 = vmatpush1.bf16.msra.mxu0 0
      %1693 = vmatprep.subr.bf16.mxu0 0
      %1694 = vmatpush1.bf16.msra.mxu0 0
      %1695 = vmatprep.subr.bf16.mxu0 0
      %1696 = vmatpush1.bf16.msra.mxu0 0
      %1697 = vmatprep.subr.bf16.mxu0 0
      %1698 = vmatpush1.bf16.msra.mxu0 0
      %1699 = vmatprep.subr.bf16.mxu0 0
      %1700 = vmatpush1.bf16.msra.mxu0 0
      %1701 = vmatprep.subr.bf16.mxu0 0
      %1702 = vmatpush1.bf16.msra.mxu0 0
      %1703 = vmatprep.subr.bf16.mxu0 0
      %1704 = vmatpush1.bf16.msra.mxu0 0
      %1705 = vmatprep.subr.bf16.mxu0 0
      %1706 = vmatpush1.bf16.msra.mxu0 0
      %1707 = vmatprep.subr.bf16.mxu0 0
      %1708 = vmatpush1.bf16.msra.mxu0 0
      %1709 = vmatprep.subr.bf16.mxu0 0
      %1710 = vmatpush1.bf16.msra.mxu0 0
      %1711 = vmatprep.subr.bf16.mxu0 0
      %1712 = vmatpush1.bf16.msra.mxu0 0
      %1713 = vmatprep.mubr.bf16.mxu0 0
      %1714 = vmatmul.mubr.bf16.gmra.mrb[0].mxu0 %v881
      %v1715 = vpop.f32.mrb[0].mxu0
      %v1716 = vadd.f32 0.0, %v1715
      %v1717 = vpop.f32.mrb[0].mxu0
      %v1718 = vpop.f32.mrb[0].mxu0
      %v1719 = vadd.f32 0.0, %v1718
      %v1720 = vpop.f32.mrb[0].mxu0
      %1721 = vmatprep.mubr.bf16.mxu0 0
      %1722 = vmatmul.mubr.bf16.gmra.mrb[0].mxu0 %v884
      %v1723 = vpop.f32.mrb[0].mxu0
      %v1724 = vadd.f32 0.0, %v1723
      %v1725 = vpop.f32.mrb[0].mxu0
      %v1726 = vpop.f32.mrb[0].mxu0
      %v1727 = vadd.f32 0.0, %v1726
      %v1728 = vpop.f32.mrb[0].mxu0
      %1729 = vmatprep.mubr.bf16.mxu0 0
      %1730 = vmatmul.mubr.bf16.gmra.mrb[0].mxu0 %v887
      %v1731 = vpop.f32.mrb[0].mxu0
      %v1732 = vadd.f32 0.0, %v1731
      %v1733 = vpop.f32.mrb[0].mxu0
      %v1734 = vpop.f32.mrb[0].mxu0
      %v1735 = vadd.f32 0.0, %v1734
      %v1736 = vpop.f32.mrb[0].mxu0
      %1737 = vmatprep.mubr.bf16.mxu0 0
      %1738 = vmatmul.mubr.bf16.gmra.mrb[0].mxu0 %v1679
      %v1739 = vpop.f32.mrb[0].mxu0
      %v1740 = vadd.f32 0.0, %v1739
      %v1741 = vpop.f32.mrb[0].mxu0
      %v1742 = vpop.f32.mrb[0].mxu0
      %v1743 = vadd.f32 0.0, %v1742
      %v1744 = vpop.f32.mrb[0].mxu0
      %1745 = vdwg.mxu0
      %v1746 = vadd.f32 %v1658, %v1716
      %v1747 = vadd.f32 %v1659, %v1719
      %v1748 = vadd.f32 %v1660, %v1724
      %v1749 = vadd.f32 %v1661, %v1727
      %v1750 = vadd.f32 %v1662, %v1732
      %v1751 = vadd.f32 %v1663, %v1735
      %v1752 = vadd.f32 %v1664, %v1740
      %v1753 = vadd.f32 %v1665, %v1743
      %v1755 = vshrl.u32 %v203, 16
      %v1757 = vrot.slane %v1755, 4
      %v1758 = vshll.u32 %v203, 16
      %v1760 = vrot.slane %v1758, 5
      %v1761 = vor.u32 %v1757, %v1760
      %v1762 = vrot.slane %v1761, 4
      %v1764 = vshll.u32 %v204, 16
      %v1766 = vrot.slane %v1764, 5
      %v1767 = vsel %vm209, %v1762, %v1766
      %s1768 = scalar_lea.vmem %s1, 104
      %v1769 = vld [vmem:[%s1768] sm:$0xf]
      %v1770 = vld [vmem:[%s1768 + $0x4] sm:$0xf]
      %v1771 = vunpack.c.l.b16 %v1767
      %v1772 = vpack.c.b16 %v1771, %v1393
      %v1775 = vunpack.c.l.b16 %v1769
      %v1776 = vunpack.c.l.b16 %v1770
      %v1777 = vpack.c.b16 %v1776, %v1775
      %v1780 = vsel %vm343, %v1772, 0
      %1782 = vmatprep.subr.bf16.mxu0 0
      %1783 = vmatpush1.bf16.msra.mxu0 %v1777
      %1784 = vmatprep.subr.bf16.mxu0 0
      %1785 = vmatpush1.bf16.msra.mxu0 0
      %1786 = vmatprep.subr.bf16.mxu0 0
      %1787 = vmatpush1.bf16.msra.mxu0 0
      %1788 = vmatprep.subr.bf16.mxu0 0
      %1789 = vmatpush1.bf16.msra.mxu0 0
      %1790 = vmatprep.subr.bf16.mxu0 0
      %1791 = vmatpush1.bf16.msra.mxu0 0
      %1792 = vmatprep.subr.bf16.mxu0 0
      %1793 = vmatpush1.bf16.msra.mxu0 0
      %1794 = vmatprep.subr.bf16.mxu0 0
      %1795 = vmatpush1.bf16.msra.mxu0 0
      %1796 = vmatprep.subr.bf16.mxu0 0
      %1797 = vmatpush1.bf16.msra.mxu0 0
      %1798 = vmatprep.subr.bf16.mxu0 0
      %1799 = vmatpush1.bf16.msra.mxu0 0
      %1800 = vmatprep.subr.bf16.mxu0 0
      %1801 = vmatpush1.bf16.msra.mxu0 0
      %1802 = vmatprep.subr.bf16.mxu0 0
      %1803 = vmatpush1.bf16.msra.mxu0 0
      %1804 = vmatprep.subr.bf16.mxu0 0
      %1805 = vmatpush1.bf16.msra.mxu0 0
      %1806 = vmatprep.subr.bf16.mxu0 0
      %1807 = vmatpush1.bf16.msra.mxu0 0
      %1808 = vmatprep.subr.bf16.mxu0 0
      %1809 = vmatpush1.bf16.msra.mxu0 0
      %1810 = vmatprep.subr.bf16.mxu0 0
      %1811 = vmatpush1.bf16.msra.mxu0 0
      %1812 = vmatprep.subr.bf16.mxu0 0
      %1813 = vmatpush1.bf16.msra.mxu0 0
      %1814 = vmatprep.mubr.bf16.mxu0 0
      %1815 = vmatmul.mubr.bf16.gmra.mrb[0].mxu0 %v994
      %v1816 = vpop.f32.mrb[0].mxu0
      %v1817 = vadd.f32 0.0, %v1816
      %v1818 = vpop.f32.mrb[0].mxu0
      %v1819 = vpop.f32.mrb[0].mxu0
      %v1820 = vadd.f32 0.0, %v1819
      %v1821 = vpop.f32.mrb[0].mxu0
      %1822 = vmatprep.mubr.bf16.mxu0 0
      %1823 = vmatmul.mubr.bf16.gmra.mrb[0].mxu0 %v997
      %v1824 = vpop.f32.mrb[0].mxu0
      %v1825 = vadd.f32 0.0, %v1824
      %v1826 = vpop.f32.mrb[0].mxu0
      %v1827 = vpop.f32.mrb[0].mxu0
      %v1828 = vadd.f32 0.0, %v1827
      %v1829 = vpop.f32.mrb[0].mxu0
      %1830 = vmatprep.mubr.bf16.mxu0 0
      %1831 = vmatmul.mubr.bf16.gmra.mrb[0].mxu0 %v1000
      %v1832 = vpop.f32.mrb[0].mxu0
      %v1833 = vadd.f32 0.0, %v1832
      %v1834 = vpop.f32.mrb[0].mxu0
      %v1835 = vpop.f32.mrb[0].mxu0
      %v1836 = vadd.f32 0.0, %v1835
      %v1837 = vpop.f32.mrb[0].mxu0
      %1838 = vmatprep.mubr.bf16.mxu0 0
      %1839 = vmatmul.mubr.bf16.gmra.mrb[0].mxu0 %v1780
      %v1840 = vpop.f32.mrb[0].mxu0
      %v1841 = vadd.f32 0.0, %v1840
      %v1842 = vpop.f32.mrb[0].mxu0
      %v1843 = vpop.f32.mrb[0].mxu0
      %v1844 = vadd.f32 0.0, %v1843
      %v1845 = vpop.f32.mrb[0].mxu0
      %1846 = vdwg.mxu0
      %v1847 = vadd.f32 %v1746, %v1817
      %v1848 = vadd.f32 %v1747, %v1820
      %v1849 = vadd.f32 %v1748, %v1825
      %v1850 = vadd.f32 %v1749, %v1828
      %v1851 = vadd.f32 %v1750, %v1833
      %v1852 = vadd.f32 %v1751, %v1836
      %v1853 = vadd.f32 %v1752, %v1841
      %v1854 = vadd.f32 %v1753, %v1844
      %v1856 = vrot.slane %v203, 5
      %v1857 = vrot.slane %v1856, 4
      %v1858 = vrot.slane %v204, 5
      %v1859 = vsel %vm534, %v1857, %v1858
      %s1860 = scalar_lea.vmem %s1, 112
      %v1861 = vld [vmem:[%s1860] sm:$0xf]
      %v1862 = vld [vmem:[%s1860 + $0x4] sm:$0xf]
      %v1863 = vunpack.c.l.b16 %v1859
      %v1864 = vpack.c.b16 %v1863, %v1485
      %v1867 = vunpack.c.l.b16 %v1861
      %v1868 = vunpack.c.l.b16 %v1862
      %v1869 = vpack.c.b16 %v1868, %v1867
      %v1872 = vsel %vm343, %v1864, 0
      %1874 = vmatprep.subr.bf16.mxu0 0
      %1875 = vmatpush1.bf16.msra.mxu0 %v1869
      %1876 = vmatprep.subr.bf16.mxu0 0
      %1877 = vmatpush1.bf16.msra.mxu0 0
      %1878 = vmatprep.subr.bf16.mxu0 0
      %1879 = vmatpush1.bf16.msra.mxu0 0
      %1880 = vmatprep.subr.bf16.mxu0 0
      %1881 = vmatpush1.bf16.msra.mxu0 0
      %1882 = vmatprep.subr.bf16.mxu0 0
      %1883 = vmatpush1.bf16.msra.mxu0 0
      %1884 = vmatprep.subr.bf16.mxu0 0
      %1885 = vmatpush1.bf16.msra.mxu0 0
      %1886 = vmatprep.subr.bf16.mxu0 0
      %1887 = vmatpush1.bf16.msra.mxu0 0
      %1888 = vmatprep.subr.bf16.mxu0 0
      %1889 = vmatpush1.bf16.msra.mxu0 0
      %1890 = vmatprep.subr.bf16.mxu0 0
      %1891 = vmatpush1.bf16.msra.mxu0 0
      %1892 = vmatprep.subr.bf16.mxu0 0
      %1893 = vmatpush1.bf16.msra.mxu0 0
      %1894 = vmatprep.subr.bf16.mxu0 0
      %1895 = vmatpush1.bf16.msra.mxu0 0
      %1896 = vmatprep.subr.bf16.mxu0 0
      %1897 = vmatpush1.bf16.msra.mxu0 0
      %1898 = vmatprep.subr.bf16.mxu0 0
      %1899 = vmatpush1.bf16.msra.mxu0 0
      %1900 = vmatprep.subr.bf16.mxu0 0
      %1901 = vmatpush1.bf16.msra.mxu0 0
      %1902 = vmatprep.subr.bf16.mxu0 0
      %1903 = vmatpush1.bf16.msra.mxu0 0
      %1904 = vmatprep.subr.bf16.mxu0 0
      %1905 = vmatpush1.bf16.msra.mxu0 0
      %1906 = vmatprep.mubr.bf16.mxu0 0
      %1907 = vmatmul.mubr.bf16.gmra.mrb[0].mxu0 %v1098
      %v1908 = vpop.f32.mrb[0].mxu0
      %v1909 = vadd.f32 0.0, %v1908
      %v1910 = vpop.f32.mrb[0].mxu0
      %v1911 = vpop.f32.mrb[0].mxu0
      %v1912 = vadd.f32 0.0, %v1911
      %v1913 = vpop.f32.mrb[0].mxu0
      %1914 = vmatprep.mubr.bf16.mxu0 0
      %1915 = vmatmul.mubr.bf16.gmra.mrb[0].mxu0 %v1101
      %v1916 = vpop.f32.mrb[0].mxu0
      %v1917 = vadd.f32 0.0, %v1916
      %v1918 = vpop.f32.mrb[0].mxu0
      %v1919 = vpop.f32.mrb[0].mxu0
      %v1920 = vadd.f32 0.0, %v1919
      %v1921 = vpop.f32.mrb[0].mxu0
      %1922 = vmatprep.mubr.bf16.mxu0 0
      %1923 = vmatmul.mubr.bf16.gmra.mrb[0].mxu0 %v1104
      %v1924 = vpop.f32.mrb[0].mxu0
      %v1925 = vadd.f32 0.0, %v1924
      %v1926 = vpop.f32.mrb[0].mxu0
      %v1927 = vpop.f32.mrb[0].mxu0
      %v1928 = vadd.f32 0.0, %v1927
      %v1929 = vpop.f32.mrb[0].mxu0
      %1930 = vmatprep.mubr.bf16.mxu0 0
      %1931 = vmatmul.mubr.bf16.gmra.mrb[0].mxu0 %v1872
      %v1932 = vpop.f32.mrb[0].mxu0
      %v1933 = vadd.f32 0.0, %v1932
      %v1934 = vpop.f32.mrb[0].mxu0
      %v1935 = vpop.f32.mrb[0].mxu0
      %v1936 = vadd.f32 0.0, %v1935
      %v1937 = vpop.f32.mrb[0].mxu0
      %1938 = vdwg.mxu0
      %v1939 = vadd.f32 %v1847, %v1909
      %v1940 = vadd.f32 %v1848, %v1912
      %v1941 = vadd.f32 %v1849, %v1917
      %v1942 = vadd.f32 %v1850, %v1920
      %v1943 = vadd.f32 %v1851, %v1925
      %v1944 = vadd.f32 %v1852, %v1928
      %v1945 = vadd.f32 %v1853, %v1933
      %v1946 = vadd.f32 %v1854, %v1936
      %v1947 = vrot.slane %v1755, 5
      %v1948 = vrot.slane %v1758, 6
      %v1949 = vor.u32 %v1947, %v1948
      %v1950 = vrot.slane %v1949, 4
      %v1951 = vshrl.u32 %v204, 16
      %v1953 = vrot.slane %v1951, 5
      %v1954 = vrot.slane %v1764, 6
      %v1955 = vor.u32 %v1953, %v1954
      %v1956 = vsel %vm675, %v1950, %v1955
      %s1957 = scalar_lea.vmem %s1, 120
      %v1958 = vld [vmem:[%s1957] sm:$0xf]
      %v1959 = vld [vmem:[%s1957 + $0x4] sm:$0xf]
      %v1960 = vunpack.c.l.b16 %v1956
      %v1961 = vpack.c.b16 %v1960, %v1582
      %v1964 = vunpack.c.l.b16 %v1958
      %v1965 = vunpack.c.l.b16 %v1959
      %v1966 = vpack.c.b16 %v1965, %v1964
      %v1969 = vsel %vm343, %v1961, 0
      %1971 = vmatprep.subr.bf16.mxu0 0
      %1972 = vmatpush1.bf16.msra.mxu0 %v1966
      %1973 = vmatprep.subr.bf16.mxu0 0
      %1974 = vmatpush1.bf16.msra.mxu0 0
      %1975 = vmatprep.subr.bf16.mxu0 0
      %1976 = vmatpush1.bf16.msra.mxu0 0
      %1977 = vmatprep.subr.bf16.mxu0 0
      %1978 = vmatpush1.bf16.msra.mxu0 0
      %1979 = vmatprep.subr.bf16.mxu0 0
      %1980 = vmatpush1.bf16.msra.mxu0 0
      %1981 = vmatprep.subr.bf16.mxu0 0
      %1982 = vmatpush1.bf16.msra.mxu0 0
      %1983 = vmatprep.subr.bf16.mxu0 0
      %1984 = vmatpush1.bf16.msra.mxu0 0
      %1985 = vmatprep.subr.bf16.mxu0 0
      %1986 = vmatpush1.bf16.msra.mxu0 0
      %1987 = vmatprep.subr.bf16.mxu0 0
      %1988 = vmatpush1.bf16.msra.mxu0 0
      %1989 = vmatprep.subr.bf16.mxu0 0
      %1990 = vmatpush1.bf16.msra.mxu0 0
      %1991 = vmatprep.subr.bf16.mxu0 0
      %1992 = vmatpush1.bf16.msra.mxu0 0
      %1993 = vmatprep.subr.bf16.mxu0 0
      %1994 = vmatpush1.bf16.msra.mxu0 0
      %1995 = vmatprep.subr.bf16.mxu0 0
      %1996 = vmatpush1.bf16.msra.mxu0 0
      %1997 = vmatprep.subr.bf16.mxu0 0
      %1998 = vmatpush1.bf16.msra.mxu0 0
      %1999 = vmatprep.subr.bf16.mxu0 0
      %2000 = vmatpush1.bf16.msra.mxu0 0
      %2001 = vmatprep.subr.bf16.mxu0 0
      %2002 = vmatpush1.bf16.msra.mxu0 0
      %2003 = vmatprep.mubr.bf16.mxu0 0
      %2004 = vmatmul.mubr.bf16.gmra.mrb[0].mxu0 %v1207
      %v2005 = vpop.f32.mrb[0].mxu0
      %v2006 = vadd.f32 0.0, %v2005
      %v2007 = vpop.f32.mrb[0].mxu0
      %v2008 = vpop.f32.mrb[0].mxu0
      %v2009 = vadd.f32 0.0, %v2008
      %v2010 = vpop.f32.mrb[0].mxu0
      %2011 = vmatprep.mubr.bf16.mxu0 0
      %2012 = vmatmul.mubr.bf16.gmra.mrb[0].mxu0 %v1210
      %v2013 = vpop.f32.mrb[0].mxu0
      %v2014 = vadd.f32 0.0, %v2013
      %v2015 = vpop.f32.mrb[0].mxu0
      %v2016 = vpop.f32.mrb[0].mxu0
      %v2017 = vadd.f32 0.0, %v2016
      %v2018 = vpop.f32.mrb[0].mxu0
      %2019 = vmatprep.mubr.bf16.mxu0 0
      %2020 = vmatmul.mubr.bf16.gmra.mrb[0].mxu0 %v1213
      %v2021 = vpop.f32.mrb[0].mxu0
      %v2022 = vadd.f32 0.0, %v2021
      %v2023 = vpop.f32.mrb[0].mxu0
      %v2024 = vpop.f32.mrb[0].mxu0
      %v2025 = vadd.f32 0.0, %v2024
      %v2026 = vpop.f32.mrb[0].mxu0
      %2027 = vmatprep.mubr.bf16.mxu0 0
      %2028 = vmatmul.mubr.bf16.gmra.mrb[0].mxu0 %v1969
      %v2029 = vpop.f32.mrb[0].mxu0
      %v2030 = vadd.f32 0.0, %v2029
      %v2031 = vpop.f32.mrb[0].mxu0
      %v2032 = vpop.f32.mrb[0].mxu0
      %v2033 = vadd.f32 0.0, %v2032
      %v2034 = vpop.f32.mrb[0].mxu0
      %2035 = vdwg.mxu0
      %v2036 = vadd.f32 %v1939, %v2006
      %v2037 = vadd.f32 %v1940, %v2009
      %v2038 = vadd.f32 %v1941, %v2014
      %v2039 = vadd.f32 %v1942, %v2017
      %v2040 = vadd.f32 %v1943, %v2022
      %v2041 = vadd.f32 %v1944, %v2025
      %v2042 = vadd.f32 %v1945, %v2030
      %v2043 = vadd.f32 %v1946, %v2033
      %v2044 = vpack.c.bf16 %v2037, %v2036
      %v2045 = vpack.c.bf16 %v2039, %v2038
      %v2046 = vpack.c.bf16 %v2041, %v2040
      %v2047 = vpack.c.bf16 %v2043, %v2042
      %v2052 = vunpack.c.l.b16 %v2044
      %v2053 = vunpack.c.h.b16 %v2044
      %v2054 = vunpack.c.l.b16 %v2045
      %v2055 = vunpack.c.h.b16 %v2045
      %v2056 = vunpack.c.l.b16 %v2046
      %v2057 = vunpack.c.h.b16 %v2046
      %v2058 = vunpack.c.l.b16 %v2047
      %v2059 = vunpack.c.h.b16 %v2047
      %v2060 = vpack.c.b16 %v2052, %v2052
      %v2061 = vpack.c.b16 %v2053, %v2053
      %v2062 = vpack.c.b16 %v2054, %v2054
      %v2063 = vpack.c.b16 %v2055, %v2055
      %v2064 = vpack.c.b16 %v2056, %v2056
      %v2065 = vpack.c.b16 %v2057, %v2057
      %v2066 = vpack.c.b16 %v2058, %v2058
      %v2067 = vpack.c.b16 %v2059, %v2059
      %2076 = vst [vmem:[%s177] sm:$0xf] %v2060
      %2077 = vst [vmem:[%s177 + $0x4] sm:$0xf] %v2061
      %2078 = vst [vmem:[%s177 + $0x8] sm:$0xf] %v2062
      %2079 = vst [vmem:[%s177 + $0xc] sm:$0xf] %v2063
      %2080 = vst [vmem:[%s177 + $0x10] sm:$0xf] %v2064
      %2081 = vst [vmem:[%s177 + $0x14] sm:$0xf] %v2065
      %2082 = vst [vmem:[%s177 + $0x18] sm:$0xf] %v2066
      %2083 = vst [vmem:[%s177 + $0x1c] sm:$0xf] %v2067
      %v2084 = vadd.f32 %v2036, %v2037
      %v2085 = vadd.f32 %v2084, %v2038
      %v2086 = vadd.f32 %v2085, %v2039
      %v2087 = vadd.f32 %v2086, %v2040
      %v2088 = vadd.f32 %v2087, %v2041
      %v2089 = vadd.f32 %v2088, %v2042
      %v2090 = vadd.f32 %v2089, %v2043
      %v2091 = vrot.slane %v2090, 4
      %v2092 = vadd.f32 %v2090, %v2091
      %v2093 = vrot.slane %v2092, 2
      %v2094 = vadd.f32 %v2092, %v2093
      %v2095 = vrot.slane %v2094, 1
      %v2096 = vadd.f32 %v2094, %v2095
      %v2097 = vmul.f32 %v2036, %v2036
      %v2098 = vmul.f32 %v2037, %v2037
      %v2099 = vmul.f32 %v2038, %v2038
      %v2100 = vmul.f32 %v2039, %v2039
      %v2101 = vmul.f32 %v2040, %v2040
      %v2102 = vmul.f32 %v2041, %v2041
      %v2103 = vmul.f32 %v2042, %v2042
      %v2104 = vmul.f32 %v2043, %v2043
      %v2105 = vadd.f32 %v2097, %v2098
      %v2106 = vadd.f32 %v2105, %v2099
      %v2107 = vadd.f32 %v2106, %v2100
      %v2108 = vadd.f32 %v2107, %v2101
      %v2109 = vadd.f32 %v2108, %v2102
      %v2110 = vadd.f32 %v2109, %v2103
      %v2111 = vadd.f32 %v2110, %v2104
      %v2112 = vrot.slane %v2111, 4
      %v2113 = vadd.f32 %v2111, %v2112
      %v2114 = vrot.slane %v2113, 2
      %v2115 = vadd.f32 %v2113, %v2114
      %v2116 = vrot.slane %v2115, 1
      %v2117 = vadd.f32 %v2115, %v2116
      %vm2118 = vcmask 1040384
      %v2119 = vsel %vm2118, %v2096, %v2117
      %vm2120 = vcmask 1041408
      %v2121 = vsel %vm2120, %v2119, 0.0
      %2122 = vst [vmem:[%s181] sm:$0xff] %v2121
      %p2123 = scmp.lt.s32.totalorder %s15, 1
      %s2124 = scalar_select %p2123, %s15, 1
      %s2125 = smul.addr %s2124, 8
      %s2126 = smul.addr %s2125, 4
      %s2127 = scalar_lea.vmem %s2, %s2126
      %p2128 = scmp.lt.s32.totalorder %s15, 1
      %s2129 = scalar_select %p2128, %s15, 1
      %s2130 = smul.addr %s2129, 8
      %s2131 = scalar_lea.vmem %s3, %s2130
      // Predicated region
      $region29: #{convnet_forward.6} parent=27 // pred_check
        %p2132 = pneg %p80
      $region30: #{convnet_forward.6} parent=27 // pred_check_branch
        %2134 = sbr.rel (%p2132) target = $region32
      $region31: #{convnet_forward.6} parent=27 // pred_region
        _
      $region32: #{convnet_forward.6} parent=27 // pred_fallthru
        _
      // Predicated region
      $region33: #{convnet_forward.6} parent=27 // pred_check
        %p2135 = pneg %p106
      $region34: #{convnet_forward.6} parent=27 // pred_check_branch
        %2137 = sbr.rel (%p2135) target = $region36
      $region35: #{convnet_forward.6} parent=27 // pred_region
        _
      $region36: #{convnet_forward.6} parent=27 // pred_fallthru
        _
    $region28: #{convnet_forward.6} parent=5 // pred_fallthru
      _
    %p2138 = scmp.le.s32.totalorder 2, %s10
    // Predicated region
    $region37: #{convnet_forward.6} parent=5 // pred_check
      %p2139 = pneg %p2138
    $region38: #{convnet_forward.6} parent=5 // pred_check_branch
      %2141 = sbr.rel (%p2139) target = $region40
    $region39: #{convnet_forward.6} parent=5 // pred_region
      %s2142 = ssub.s32 %s10, 2
      // Predicated region
      $region41: #{convnet_forward.6} parent=39 // pred_check
        %p2143 = pneg %p86
      $region42: #{convnet_forward.6} parent=39 // pred_check_branch
        %2145 = sbr.rel (%p2143) target = $region44
      $region43: #{convnet_forward.6} parent=39 // pred_region
        %p2146 = scmp.lt.s32.totalorder %s16, 1
        %s2147 = scalar_select %p2146, %s16, 1
        %s2148 = smul.addr %s2147, 8
        %s2149 = smul.addr %s2148, 4
        %s2150 = scalar_lea.vmem %s2, %s2149
      $region44: #{convnet_forward.6} parent=39 // pred_fallthru
        _
      // Predicated region
      $region45: #{convnet_forward.6} parent=39 // pred_check
        %p2151 = pneg %p112
      $region46: #{convnet_forward.6} parent=39 // pred_check_branch
        %2153 = sbr.rel (%p2151) target = $region48
      $region47: #{convnet_forward.6} parent=39 // pred_region
        %p2154 = scmp.lt.s32.totalorder %s16, 1
        %s2155 = scalar_select %p2154, %s16, 1
        %s2156 = smul.addr %s2155, 8
        %s2157 = scalar_lea.vmem %s3, %s2156
      $region48: #{convnet_forward.6} parent=39 // pred_fallthru
        _
    $region40: #{convnet_forward.6} parent=5 // pred_fallthru
      _
  $region6: #{convnet_forward.6} parent=0 // loop_footer
    %s14 = sadd.s32 1, %s10
  $region7: #{convnet_forward.6} parent=0 // loop_footer_branch
    %9 = sbr.rel target = $region3
  $region8: #{convnet_forward.6} parent=0 // loop_exit
    _

// kernel: convnet_forward.8
$region0: #{convnet_forward.8}
  #allocation0 [shape = 'u32[]', space=smem, size = 0x4, offset = 0x4, fixed_abs, tag = 'smem constant byte address 0x4 - core index']
  #allocation1 [shape = 'u32[144,128]{1,0:T(1,128)}', space=vmem, size = 0x12000, scoped, tag = 'internal scratch']
  %s0 = inlined_call_operand.vmem [shape: bf16[2,10,10,128], index: 0, kind: input, shape index: {}]
  %s1 = inlined_call_operand.vmem [shape: bf16[9,128,128], index: 1, kind: input, shape index: {}]
  %s2 = inlined_call_operand.vmem [shape: bf16[2,64,128], index: 2, kind: output, shape index: {0}]
  %s3 = inlined_call_operand.vmem [shape: f32[2,8,128], index: 3, kind: output, shape index: {1}]
  %4 = xla_tuple %s2, %s3
  %s5 = sld [smem:[#allocation0]]
  $region49: #{convnet_forward.8} parent=0
    _
  %s7 = ssub.s32 1, %s5
  %s8 = scalar_select 0, %s7, %s5
  loop: start=0, step=1, limit=4
  $region2: #{convnet_forward.8} parent=0 // loop_pre_header
    _
  $region3: #{convnet_forward.8} parent=0 // loop_header
    %s10 = sphi 0, %s14
    %p11 = scmp.ge.s32.totalorder %s10, 4
    %s20 = sphi 0, %s22
    %s23 = sphi 0, %s20
    %s24 = sphi 0, %s23
    %s40 = sphi 0, %s24
    %s44 = sphi 0, %s44
    %s46 = sphi 0, %s44
    %s47 = sphi 0, %s46
    %s61 = sphi 0, %s47
    %s67 = sphi 0, %s69
    %s70 = sphi 0, %s67
    %s71 = sphi 0, %s70
    %s87 = sphi 0, %s71
    %s93 = sphi 0, %s95
    %s96 = sphi 0, %s93
    %s97 = sphi 0, %s96
    %s113 = sphi 0, %s97
  $region4: #{convnet_forward.8} parent=0 // loop_header_branch
    %13 = sbr.rel (%p11) target = $region8
  $region5: #{convnet_forward.8} parent=0 // loop_body
    %s15 = ssub.s32 %s10, 1
    %s16 = ssub.s32 %s10, 2
    %s17 = sadd.s32 %s10, 1
    %s18 = ssub.s32 %s10, %s17
    %p19 = scmp.eq.s32.totalorder %s18, 0
    %s21 = sadd.s32 %s20, 1
    %s22 = scalar_select %p19, %s20, %s21
    %p25 = pneg %p19
    %p26 = scmp.eq.s32.totalorder %s10, 1
    %p27 = por %p25, %p26
    %p28 = scmp.ne.s32.totalorder %s20, %s23
    %p29 = scmp.eq.s32.totalorder %s10, 0
    %p30 = por %p28, %p29
    %p31 = scmp.ne.s32.totalorder %s20, %s23
    %p32 = scmp.eq.s32.totalorder %s15, 1
    %p33 = por %p31, %p32
    %p34 = scmp.ne.s32.totalorder %s23, %s24
    %p35 = scmp.eq.s32.totalorder %s15, 0
    %p36 = por %p34, %p35
    %p37 = scmp.ne.s32.totalorder %s23, %s24
    %p38 = scmp.eq.s32.totalorder %s16, 1
    %p39 = por %p37, %p38
    %p41 = scmp.ne.s32.totalorder %s24, %s40
    %p42 = scmp.eq.s32.totalorder %s16, 0
    %p43 = por %p41, %p42
    %s45 = sadd.s32 %s44, 1
    %p48 = scmp.eq.s32.totalorder %s10, 1
    %p49 = scmp.ne.s32.totalorder %s44, %s46
    %p50 = scmp.eq.s32.totalorder %s10, 0
    %p51 = por %p49, %p50
    %p52 = scmp.ne.s32.totalorder %s44, %s46
    %p53 = scmp.eq.s32.totalorder %s15, 1
    %p54 = por %p52, %p53
    %p55 = scmp.ne.s32.totalorder %s46, %s47
    %p56 = scmp.eq.s32.totalorder %s15, 0
    %p57 = por %p55, %p56
    %p58 = scmp.ne.s32.totalorder %s46, %s47
    %p59 = scmp.eq.s32.totalorder %s16, 1
    %p60 = por %p58, %p59
    %p62 = scmp.ne.s32.totalorder %s47, %s61
    %p63 = scmp.eq.s32.totalorder %s16, 0
    %p64 = por %p62, %p63
    %s65 = ssub.s32 %s10, %s17
    %p66 = scmp.eq.s32.totalorder %s65, 0
    %s68 = sadd.s32 %s67, 1
    %s69 = scalar_select %p66, %s67, %s68
    %p72 = pneg %p66
    %p73 = scmp.eq.s32.totalorder %s10, 1
    %p74 = por %p72, %p73
    %p75 = scmp.ne.s32.totalorder %s67, %s70
    %p76 = scmp.eq.s32.totalorder %s10, 0
    %p77 = por %p75, %p76
    %p78 = scmp.ne.s32.totalorder %s67, %s70
    %p79 = scmp.eq.s32.totalorder %s15, 1
    %p80 = por %p78, %p79
    %p81 = scmp.ne.s32.totalorder %s70, %s71
    %p82 = scmp.eq.s32.totalorder %s15, 0
    %p83 = por %p81, %p82
    %p84 = scmp.ne.s32.totalorder %s70, %s71
    %p85 = scmp.eq.s32.totalorder %s16, 1
    %p86 = por %p84, %p85
    %p88 = scmp.ne.s32.totalorder %s71, %s87
    %p89 = scmp.eq.s32.totalorder %s16, 0
    %p90 = por %p88, %p89
    %s91 = ssub.s32 %s10, %s17
    %p92 = scmp.eq.s32.totalorder %s91, 0
    %s94 = sadd.s32 %s93, 1
    %s95 = scalar_select %p92, %s93, %s94
    %p98 = pneg %p92
    %p99 = scmp.eq.s32.totalorder %s10, 1
    %p100 = por %p98, %p99
    %p101 = scmp.ne.s32.totalorder %s93, %s96
    %p102 = scmp.eq.s32.totalorder %s10, 0
    %p103 = por %p101, %p102
    %p104 = scmp.ne.s32.totalorder %s93, %s96
    %p105 = scmp.eq.s32.totalorder %s15, 1
    %p106 = por %p104, %p105
    %p107 = scmp.ne.s32.totalorder %s96, %s97
    %p108 = scmp.eq.s32.totalorder %s15, 0
    %p109 = por %p107, %p108
    %p110 = scmp.ne.s32.totalorder %s96, %s97
    %p111 = scmp.eq.s32.totalorder %s16, 1
    %p112 = por %p110, %p111
    %p114 = scmp.ne.s32.totalorder %s97, %s113
    %p115 = scmp.eq.s32.totalorder %s16, 0
    %p116 = por %p114, %p115
    %p117 = scmp.le.s32.totalorder 1, %s10
    %p118 = scmp.lt.s32.totalorder %s10, 3
    %p119 = pnand %p117, %p118
    %p120 = pneg %p119
    // Predicated region
    $region9: #{convnet_forward.8} parent=5 // pred_check
      _
    $region10: #{convnet_forward.8} parent=5 // pred_check_branch
      %122 = sbr.rel (%p119) target = $region12
    $region11: #{convnet_forward.8} parent=5 // pred_region
      %s123 = ssub.s32 %s10, 1
      // Predicated region
      $region13: #{convnet_forward.8} parent=11 // pred_check
        %p124 = pneg %p57
      $region14: #{convnet_forward.8} parent=11 // pred_check_branch
        %126 = sbr.rel (%p124) target = $region16
      $region15: #{convnet_forward.8} parent=11 // pred_region
        _
      $region16: #{convnet_forward.8} parent=11 // pred_fallthru
        _
    $region12: #{convnet_forward.8} parent=5 // pred_fallthru
      _
    %p127 = scmp.lt.s32.totalorder %s10, 2
    // Predicated region
    $region17: #{convnet_forward.8} parent=5 // pred_check
      %p128 = pneg %p127
    $region18: #{convnet_forward.8} parent=5 // pred_check_branch
      %130 = sbr.rel (%p128) target = $region20
    $region19: #{convnet_forward.8} parent=5 // pred_region
      // Predicated region
      $region21: #{convnet_forward.8} parent=19 // pred_check
        %p131 = pneg %p30
      $region22: #{convnet_forward.8} parent=19 // pred_check_branch
        %133 = sbr.rel (%p131) target = $region24
      $region23: #{convnet_forward.8} parent=19 // pred_region
        %p134 = scmp.lt.s32.totalorder %s10, 1
        %s135 = scalar_select %p134, %s10, 1
        %s136 = smul.addr %s135, 20
        %s137 = smul.addr %s136, 4
        %s138 = scalar_lea.vmem %s0, %s137
      $region24: #{convnet_forward.8} parent=19 // pred_fallthru
        _
    $region20: #{convnet_forward.8} parent=5 // pred_fallthru
      _
    %p139 = scmp.le.s32.totalorder 1, %s10
    %p140 = scmp.lt.s32.totalorder %s10, 3
    %p141 = pnand %p139, %p140
    %p142 = pneg %p141
    // Predicated region
    $region25: #{convnet_forward.8} parent=5 // pred_check
      _
    $region26: #{convnet_forward.8} parent=5 // pred_check_branch
      %144 = sbr.rel (%p141) target = $region28
    $region27: #{convnet_forward.8} parent=5 // pred_region
      %s145 = ssub.s32 %s10, 1
      %p146 = scmp.lt.s32.totalorder %s15, 1
      %s147 = scalar_select %p146, %s15, 1
      %s148 = smul.addr %s147, 20
      %s149 = smul.addr %s148, 4
      %s150 = scalar_lea.vmem %s0, %s149
      %p151 = pneg %p36
      %p152 = pneg %p33
      %p153 = pneg %p57
      %p154 = pneg %p54
      %p155 = pneg %p83
      %p156 = pneg %p80
      %p157 = scmp.lt.s32.totalorder %s15, 1
      %s158 = scalar_select %p157, %s15, 1
      %s159 = smul.addr %s158, 8
      %s160 = smul.addr %s159, 4
      %s161 = scalar_lea.vmem %s2, %s160
      %p162 = pneg %p109
      %p163 = pneg %p106
      %p164 = scmp.lt.s32.totalorder %s15, 1
      %s165 = scalar_select %p164, %s15, 1
      %s166 = smul.addr %s165, 8
      %s167 = scalar_lea.vmem %s3, %s166
      %p168 = scmp.lt.s32.totalorder %s15, 1
      %s169 = scalar_select %p168, %s15, 1
      %s170 = smul.addr %s169, 20
      %s171 = smul.addr %s170, 4
      %s172 = scalar_lea.vmem %s0, %s171
      %p173 = scmp.lt.s32.totalorder %s15, 1
      %s174 = scalar_select %p173, %s15, 1
      %s175 = smul.addr %s174, 8
      %s176 = smul.addr %s175, 4
      %s177 = scalar_lea.vmem %s2, %s176
      %p178 = scmp.lt.s32.totalorder %s15, 1
      %s179 = scalar_select %p178, %s15, 1
      %s180 = smul.addr %s179, 8
      %s181 = scalar_lea.vmem %s3, %s180
      %v183 = vld [vmem:[%s172] sm:$0xf]
      %v184 = vld [vmem:[%s172 + $0x4] sm:$0x1]
      %v185 = vld [vmem:[%s172 + $0x8] sm:$0xf]
      %v186 = vld [vmem:[%s172 + $0xc] sm:$0x1]
      %v187 = vld [vmem:[%s172 + $0x10] sm:$0xf]
      %v188 = vld [vmem:[%s172 + $0x14] sm:$0x1]
      %v189 = vld [vmem:[%s172 + $0x18] sm:$0xf]
      %v190 = vld [vmem:[%s172 + $0x1c] sm:$0x1]
      %v191 = vld [vmem:[%s172 + $0x20] sm:$0xf]
      %v192 = vld [vmem:[%s172 + $0x24] sm:$0x1]
      %v193 = vld [vmem:[%s172 + $0x28] sm:$0xf]
      %v194 = vld [vmem:[%s172 + $0x2c] sm:$0x1]
      %v195 = vld [vmem:[%s172 + $0x30] sm:$0xf]
      %v196 = vld [vmem:[%s172 + $0x34] sm:$0x1]
      %v197 = vld [vmem:[%s172 + $0x38] sm:$0xf]
      %v198 = vld [vmem:[%s172 + $0x3c] sm:$0x1]
      %v199 = vld [vmem:[%s172 + $0x40] sm:$0xf]
      %v200 = vld [vmem:[%s172 + $0x44] sm:$0x1]
      %v201 = vld [vmem:[%s172 + $0x48] sm:$0xf]
      %v202 = vld [vmem:[%s172 + $0x4c] sm:$0x1]
      %v203 = vld [vmem:[%s1] sm:$0xf]
      %v204 = vld [vmem:[%s1 + $0x4] sm:$0xf]
      %v205 = vld [vmem:[%s1 + $0x8] sm:$0xf]
      %v206 = vld [vmem:[%s1 + $0xc] sm:$0xf]
      %v207 = vld [vmem:[%s1 + $0x10] sm:$0xf]
      %v208 = vld [vmem:[%s1 + $0x14] sm:$0xf]
      %v209 = vld [vmem:[%s1 + $0x18] sm:$0xf]
      %v210 = vld [vmem:[%s1 + $0x1c] sm:$0xf]
      %v211 = vld [vmem:[%s1 + $0x20] sm:$0xf]
      %v212 = vld [vmem:[%s1 + $0x24] sm:$0xf]
      %v213 = vld [vmem:[%s1 + $0x28] sm:$0xf]
      %v214 = vld [vmem:[%s1 + $0x2c] sm:$0xf]
      %v215 = vld [vmem:[%s1 + $0x30] sm:$0xf]
      %v216 = vld [vmem:[%s1 + $0x34] sm:$0xf]
      %v217 = vld [vmem:[%s1 + $0x38] sm:$0xf]
      %v218 = vld [vmem:[%s1 + $0x3c] sm:$0xf]
      %vm219 = vsmask.f32 3328
      %vm220 = vsmask.f32 7440
      %vm221 = vmor %vm219, %vm220
      %v223 = vshrl.u32 %v183, 16
      %v225 = vrot.slane %v223, 4
      %v226 = vshll.u32 %v183, 16
      %v228 = vrot.slane %v226, 5
      %v229 = vor.u32 %v225, %v228
      %v230 = vrot.slane %v229, 4
      %v232 = vshll.u32 %v184, 16
      %v234 = vrot.slane %v232, 5
      %v235 = vsel %vm221, %v230, %v234
      %v237 = vshrl.u32 %v185, 16
      %v239 = vrot.slane %v237, 4
      %v240 = vshll.u32 %v185, 16
      %v242 = vrot.slane %v240, 5
      %v243 = vor.u32 %v239, %v242
      %v244 = vrot.slane %v243, 4
      %v246 = vshll.u32 %v186, 16
      %v248 = vrot.slane %v246, 5
      %v249 = vsel %vm221, %v244, %v248
      %v251 = vshrl.u32 %v187, 16
      %v253 = vrot.slane %v251, 4
      %v254 = vshll.u32 %v187, 16
      %v256 = vrot.slane %v254, 5
      %v257 = vor.u32 %v253, %v256
      %v258 = vrot.slane %v257, 4
      %v260 = vshll.u32 %v188, 16
      %v262 = vrot.slane %v260, 5
      %v263 = vsel %vm221, %v258, %v262
      %v265 = vshrl.u32 %v189, 16
      %v267 = vrot.slane %v265, 4
      %v268 = vshll.u32 %v189, 16
      %v270 = vrot.slane %v268, 5
      %v271 = vor.u32 %v267, %v270
      %v272 = vrot.slane %v271, 4
      %v274 = vshll.u32 %v190, 16
      %v276 = vrot.slane %v274, 5
      %v277 = vsel %vm221, %v272, %v276
      %v279 = vshrl.u32 %v191, 16
      %v281 = vrot.slane %v279, 4
      %v282 = vshll.u32 %v191, 16
      %v284 = vrot.slane %v282, 5
      %v285 = vor.u32 %v281, %v284
      %v286 = vrot.slane %v285, 4
      %v288 = vshll.u32 %v192, 16
      %v290 = vrot.slane %v288, 5
      %v291 = vsel %vm221, %v286, %v290
      %v293 = vshrl.u32 %v193, 16
      %v295 = vrot.slane %v293, 4
      %v296 = vshll.u32 %v193, 16
      %v298 = vrot.slane %v296, 5
      %v299 = vor.u32 %v295, %v298
      %v300 = vrot.slane %v299, 4
      %v302 = vshll.u32 %v194, 16
      %v304 = vrot.slane %v302, 5
      %v305 = vsel %vm221, %v300, %v304
      %v307 = vshrl.u32 %v195, 16
      %v309 = vrot.slane %v307, 4
      %v310 = vshll.u32 %v195, 16
      %v312 = vrot.slane %v310, 5
      %v313 = vor.u32 %v309, %v312
      %v314 = vrot.slane %v313, 4
      %v316 = vshll.u32 %v196, 16
      %v318 = vrot.slane %v316, 5
      %v319 = vsel %vm221, %v314, %v318
      %v321 = vshrl.u32 %v197, 16
      %v323 = vrot.slane %v321, 4
      %v324 = vshll.u32 %v197, 16
      %v326 = vrot.slane %v324, 5
      %v327 = vor.u32 %v323, %v326
      %v328 = vrot.slane %v327, 4
      %v330 = vshll.u32 %v198, 16
      %v332 = vrot.slane %v330, 5
      %v333 = vsel %vm221, %v328, %v332
      %s334 = scalar_lea.vmem %s1, 64
      %v335 = vld [vmem:[%s334] sm:$0xf]
      %v336 = vld [vmem:[%s334 + $0x4] sm:$0xf]
      %v337 = vld [vmem:[%s334 + $0x8] sm:$0xf]
      %v338 = vld [vmem:[%s334 + $0xc] sm:$0xf]
      %v339 = vld [vmem:[%s334 + $0x10] sm:$0xf]
      %v340 = vld [vmem:[%s334 + $0x14] sm:$0xf]
      %v341 = vld [vmem:[%s334 + $0x18] sm:$0xf]
      %v342 = vld [vmem:[%s334 + $0x1c] sm:$0xf]
      %v343 = vld [vmem:[%s334 + $0x20] sm:$0xf]
      %v344 = vld [vmem:[%s334 + $0x24] sm:$0xf]
      %v345 = vld [vmem:[%s334 + $0x28] sm:$0xf]
      %v346 = vld [vmem:[%s334 + $0x2c] sm:$0xf]
      %v347 = vld [vmem:[%s334 + $0x30] sm:$0xf]
      %v348 = vld [vmem:[%s334 + $0x34] sm:$0xf]
      %v349 = vld [vmem:[%s334 + $0x38] sm:$0xf]
      %v350 = vld [vmem:[%s334 + $0x3c] sm:$0xf]
      %v351 = vunpack.c.l.b16 %v235
      %v352 = vunpack.c.l.b16 %v249
      %v353 = vunpack.c.l.b16 %v263
      %v354 = vunpack.c.l.b16 %v277
      %v355 = vunpack.c.l.b16 %v291
      %v356 = vunpack.c.l.b16 %v305
      %v357 = vunpack.c.l.b16 %v319
      %v358 = vunpack.c.l.b16 %v333
      %v359 = vpack.c.b16 %v352, %v351
      %v360 = vpack.c.b16 %v354, %v353
      %v361 = vpack.c.b16 %v356, %v355
      %v362 = vpack.c.b16 %v358, %v357
      %v383 = vunpack.c.l.b16 %v335
      %v384 = vunpack.c.l.b16 %v336
      %v385 = vunpack.c.l.b16 %v337
      %v386 = vunpack.c.l.b16 %v338
      %v387 = vunpack.c.l.b16 %v339
      %v388 = vunpack.c.l.b16 %v340
      %v389 = vunpack.c.l.b16 %v341
      %v390 = vunpack.c.l.b16 %v342
      %v391 = vunpack.c.l.b16 %v343
      %v392 = vunpack.c.l.b16 %v344
      %v393 = vunpack.c.l.b16 %v345
      %v394 = vunpack.c.l.b16 %v346
      %v395 = vunpack.c.l.b16 %v347
      %v396 = vunpack.c.l.b16 %v348
      %v397 = vunpack.c.l.b16 %v349
      %v398 = vunpack.c.l.b16 %v350
      %v399 = vpack.c.b16 %v384, %v383
      %v400 = vpack.c.b16 %v386, %v385
      %v401 = vpack.c.b16 %v388, %v387
      %v402 = vpack.c.b16 %v390, %v389
      %v403 = vpack.c.b16 %v392, %v391
      %v404 = vpack.c.b16 %v394, %v393
      %v405 = vpack.c.b16 %v396, %v395
      %v406 = vpack.c.b16 %v398, %v397
      %415 = vmatprep.subr.bf16.mxu0 0
      %416 = vmatpush1.bf16.msra.mxu0 %v399
      %417 = vmatprep.subr.bf16.mxu0 0
      %418 = vmatpush1.bf16.msra.mxu0 %v400
      %419 = vmatprep.subr.bf16.mxu0 0
      %420 = vmatpush1.bf16.msra.mxu0 %v401
      %421 = vmatprep.subr.bf16.mxu0 0
      %422 = vmatpush1.bf16.msra.mxu0 %v402
      %423 = vmatprep.subr.bf16.mxu0 0
      %424 = vmatpush1.bf16.msra.mxu0 %v403
      %425 = vmatprep.subr.bf16.mxu0 0
      %426 = vmatpush1.bf16.msra.mxu0 %v404
      %427 = vmatprep.subr.bf16.mxu0 0
      %428 = vmatpush1.bf16.msra.mxu0 %v405
      %429 = vmatprep.subr.bf16.mxu0 0
      %430 = vmatpush1.bf16.msra.mxu0 %v406
      %431 = vmatprep.subr.bf16.mxu0 0
      %432 = vmatpush1.bf16.msra.mxu0 0
      %433 = vmatprep.subr.bf16.mxu0 0
      %434 = vmatpush1.bf16.msra.mxu0 0
      %435 = vmatprep.subr.bf16.mxu0 0
      %436 = vmatpush1.bf16.msra.mxu0 0
      %437 = vmatprep.subr.bf16.mxu0 0
      %438 = vmatpush1.bf16.msra.mxu0 0
      %439 = vmatprep.subr.bf16.mxu0 0
      %440 = vmatpush1.bf16.msra.mxu0 0
      %441 = vmatprep.subr.bf16.mxu0 0
      %442 = vmatpush1.bf16.msra.mxu0 0
      %443 = vmatprep.subr.bf16.mxu0 0
      %444 = vmatpush1.bf16.msra.mxu0 0
      %445 = vmatprep.subr.bf16.mxu0 0
      %446 = vmatpush1.bf16.msra.mxu0 0
      %447 = vmatprep.mubr.bf16.mxu0 0
      %448 = vmatmul.mubr.bf16.gmra.mrb[0].mxu0 %v359
      %v449 = vpop.f32.mrb[0].mxu0
      %v450 = vadd.f32 0.0, %v449
      %v451 = vpop.f32.mrb[0].mxu0
      %v452 = vpop.f32.mrb[0].mxu0
      %v453 = vadd.f32 0.0, %v452
      %v454 = vpop.f32.mrb[0].mxu0
      %455 = vmatprep.mubr.bf16.mxu0 0
      %456 = vmatmul.mubr.bf16.gmra.mrb[0].mxu0 %v360
      %v457 = vpop.f32.mrb[0].mxu0
      %v458 = vadd.f32 0.0, %v457
      %v459 = vpop.f32.mrb[0].mxu0
      %v460 = vpop.f32.mrb[0].mxu0
      %v461 = vadd.f32 0.0, %v460
      %v462 = vpop.f32.mrb[0].mxu0
      %463 = vmatprep.mubr.bf16.mxu0 0
      %464 = vmatmul.mubr.bf16.gmra.mrb[0].mxu0 %v361
      %v465 = vpop.f32.mrb[0].mxu0
      %v466 = vadd.f32 0.0, %v465
      %v467 = vpop.f32.mrb[0].mxu0
      %v468 = vpop.f32.mrb[0].mxu0
      %v469 = vadd.f32 0.0, %v468
      %v470 = vpop.f32.mrb[0].mxu0
      %471 = vmatprep.mubr.bf16.mxu0 0
      %472 = vmatmul.mubr.bf16.gmra.mrb[0].mxu0 %v362
      %v473 = vpop.f32.mrb[0].mxu0
      %v474 = vadd.f32 0.0, %v473
      %v475 = vpop.f32.mrb[0].mxu0
      %v476 = vpop.f32.mrb[0].mxu0
      %v477 = vadd.f32 0.0, %v476
      %v478 = vpop.f32.mrb[0].mxu0
      %479 = vdwg.mxu0
      %v488 = vunpack.c.l.b16 %v183
      %v489 = vunpack.c.l.b16 %v185
      %v490 = vunpack.c.l.b16 %v187
      %v491 = vunpack.c.l.b16 %v189
      %v492 = vunpack.c.l.b16 %v191
      %v493 = vunpack.c.l.b16 %v193
      %v494 = vunpack.c.l.b16 %v195
      %v495 = vunpack.c.l.b16 %v197
      %v496 = vpack.c.b16 %v489, %v488
      %v497 = vpack.c.b16 %v491, %v490
      %v498 = vpack.c.b16 %v493, %v492
      %v499 = vpack.c.b16 %v495, %v494
      %v520 = vunpack.c.l.b16 %v203
      %v521 = vunpack.c.l.b16 %v204
      %v522 = vunpack.c.l.b16 %v205
      %v523 = vunpack.c.l.b16 %v206
      %v524 = vunpack.c.l.b16 %v207
      %v525 = vunpack.c.l.b16 %v208
      %v526 = vunpack.c.l.b16 %v209
      %v527 = vunpack.c.l.b16 %v210
      %v528 = vunpack.c.l.b16 %v211
      %v529 = vunpack.c.l.b16 %v212
      %v530 = vunpack.c.l.b16 %v213
      %v531 = vunpack.c.l.b16 %v214
      %v532 = vunpack.c.l.b16 %v215
      %v533 = vunpack.c.l.b16 %v216
      %v534 = vunpack.c.l.b16 %v217
      %v535 = vunpack.c.l.b16 %v218
      %v536 = vpack.c.b16 %v521, %v520
      %v537 = vpack.c.b16 %v523, %v522
      %v538 = vpack.c.b16 %v525, %v524
      %v539 = vpack.c.b16 %v527, %v526
      %v540 = vpack.c.b16 %v529, %v528
      %v541 = vpack.c.b16 %v531, %v530
      %v542 = vpack.c.b16 %v533, %v532
      %v543 = vpack.c.b16 %v535, %v534
      %552 = vmatprep.subr.bf16.mxu0 0
      %553 = vmatpush1.bf16.msra.mxu0 %v536
      %554 = vmatprep.subr.bf16.mxu0 0
      %555 = vmatpush1.bf16.msra.mxu0 %v537
      %556 = vmatprep.subr.bf16.mxu0 0
      %557 = vmatpush1.bf16.msra.mxu0 %v538
      %558 = vmatprep.subr.bf16.mxu0 0
      %559 = vmatpush1.bf16.msra.mxu0 %v539
      %560 = vmatprep.subr.bf16.mxu0 0
      %561 = vmatpush1.bf16.msra.mxu0 %v540
      %562 = vmatprep.subr.bf16.mxu0 0
      %563 = vmatpush1.bf16.msra.mxu0 %v541
      %564 = vmatprep.subr.bf16.mxu0 0
      %565 = vmatpush1.bf16.msra.mxu0 %v542
      %566 = vmatprep.subr.bf16.mxu0 0
      %567 = vmatpush1.bf16.msra.mxu0 %v543
      %568 = vmatprep.subr.bf16.mxu0 0
      %569 = vmatpush1.bf16.msra.mxu0 0
      %570 = vmatprep.subr.bf16.mxu0 0
      %571 = vmatpush1.bf16.msra.mxu0 0
      %572 = vmatprep.subr.bf16.mxu0 0
      %573 = vmatpush1.bf16.msra.mxu0 0
      %574 = vmatprep.subr.bf16.mxu0 0
      %575 = vmatpush1.bf16.msra.mxu0 0
      %576 = vmatprep.subr.bf16.mxu0 0
      %577 = vmatpush1.bf16.msra.mxu0 0
      %578 = vmatprep.subr.bf16.mxu0 0
      %579 = vmatpush1.bf16.msra.mxu0 0
      %580 = vmatprep.subr.bf16.mxu0 0
      %581 = vmatpush1.bf16.msra.mxu0 0
      %582 = vmatprep.subr.bf16.mxu0 0
      %583 = vmatpush1.bf16.msra.mxu0 0
      %584 = vmatprep.mubr.bf16.mxu0 0
      %585 = vmatmul.mubr.bf16.gmra.mrb[0].mxu0 %v496
      %v586 = vpop.f32.mrb[0].mxu0
      %v587 = vadd.f32 %v450, %v586
      %v588 = vpop.f32.mrb[0].mxu0
      %v589 = vpop.f32.mrb[0].mxu0
      %v590 = vadd.f32 %v453, %v589
      %v591 = vpop.f32.mrb[0].mxu0
      %592 = vmatprep.mubr.bf16.mxu0 0
      %593 = vmatmul.mubr.bf16.gmra.mrb[0].mxu0 %v497
      %v594 = vpop.f32.mrb[0].mxu0
      %v595 = vadd.f32 %v458, %v594
      %v596 = vpop.f32.mrb[0].mxu0
      %v597 = vpop.f32.mrb[0].mxu0
      %v598 = vadd.f32 %v461, %v597
      %v599 = vpop.f32.mrb[0].mxu0
      %600 = vmatprep.mubr.bf16.mxu0 0
      %601 = vmatmul.mubr.bf16.gmra.mrb[0].mxu0 %v498
      %v602 = vpop.f32.mrb[0].mxu0
      %v603 = vadd.f32 %v466, %v602
      %v604 = vpop.f32.mrb[0].mxu0
      %v605 = vpop.f32.mrb[0].mxu0
      %v606 = vadd.f32 %v469, %v605
      %v607 = vpop.f32.mrb[0].mxu0
      %608 = vmatprep.mubr.bf16.mxu0 0
      %609 = vmatmul.mubr.bf16.gmra.mrb[0].mxu0 %v499
      %v610 = vpop.f32.mrb[0].mxu0
      %v611 = vadd.f32 %v474, %v610
      %v612 = vpop.f32.mrb[0].mxu0
      %v613 = vpop.f32.mrb[0].mxu0
      %v614 = vadd.f32 %v477, %v613
      %v615 = vpop.f32.mrb[0].mxu0
      %616 = vdwg.mxu0
      %vm625 = vcmask 1042432
      %vm626 = vcmask 1046532
      %vm627 = vmor %vm625, %vm626
      %v628 = vrot.slane %v183, 5
      %v629 = vrot.slane %v628, 4
      %v630 = vrot.slane %v184, 5
      %v631 = vsel %vm627, %v629, %v630
      %v632 = vrot.slane %v185, 5
      %v633 = vrot.slane %v632, 4
      %v634 = vrot.slane %v186, 5
      %v635 = vsel %vm627, %v633, %v634
      %v636 = vrot.slane %v187, 5
      %v637 = vrot.slane %v636, 4
      %v638 = vrot.slane %v188, 5
      %v639 = vsel %vm627, %v637, %v638
      %v640 = vrot.slane %v189, 5
      %v641 = vrot.slane %v640, 4
      %v642 = vrot.slane %v190, 5
      %v643 = vsel %vm627, %v641, %v642
      %v644 = vrot.slane %v191, 5
      %v645 = vrot.slane %v644, 4
      %v646 = vrot.slane %v192, 5
      %v647 = vsel %vm627, %v645, %v646
      %v648 = vrot.slane %v193, 5
      %v649 = vrot.slane %v648, 4
      %v650 = vrot.slane %v194, 5
      %v651 = vsel %vm627, %v649, %v650
      %v652 = vrot.slane %v195, 5
      %v653 = vrot.slane %v652, 4
      %v654 = vrot.slane %v196, 5
      %v655 = vsel %vm627, %v653, %v654
      %v656 = vrot.slane %v197, 5
      %v657 = vrot.slane %v656, 4
      %v658 = vrot.slane %v198, 5
      %v659 = vsel %vm627, %v657, %v658
      %s660 = scalar_lea.vmem %s1, 128
      %v661 = vld [vmem:[%s660] sm:$0xf]
      %v662 = vld [vmem:[%s660 + $0x4] sm:$0xf]
      %v663 = vld [vmem:[%s660 + $0x8] sm:$0xf]
      %v664 = vld [vmem:[%s660 + $0xc] sm:$0xf]
      %v665 = vld [vmem:[%s660 + $0x10] sm:$0xf]
      %v666 = vld [vmem:[%s660 + $0x14] sm:$0xf]
      %v667 = vld [vmem:[%s660 + $0x18] sm:$0xf]
      %v668 = vld [vmem:[%s660 + $0x1c] sm:$0xf]
      %v669 = vld [vmem:[%s660 + $0x20] sm:$0xf]
      %v670 = vld [vmem:[%s660 + $0x24] sm:$0xf]
      %v671 = vld [vmem:[%s660 + $0x28] sm:$0xf]
      %v672 = vld [vmem:[%s660 + $0x2c] sm:$0xf]
      %v673 = vld [vmem:[%s660 + $0x30] sm:$0xf]
      %v674 = vld [vmem:[%s660 + $0x34] sm:$0xf]
      %v675 = vld [vmem:[%s660 + $0x38] sm:$0xf]
      %v676 = vld [vmem:[%s660 + $0x3c] sm:$0xf]
      %v677 = vunpack.c.l.b16 %v631
      %v678 = vunpack.c.l.b16 %v635
      %v679 = vunpack.c.l.b16 %v639
      %v680 = vunpack.c.l.b16 %v643
      %v681 = vunpack.c.l.b16 %v647
      %v682 = vunpack.c.l.b16 %v651
      %v683 = vunpack.c.l.b16 %v655
      %v684 = vunpack.c.l.b16 %v659
      %v685 = vpack.c.b16 %v678, %v677
      %v686 = vpack.c.b16 %v680, %v679
      %v687 = vpack.c.b16 %v682, %v681
      %v688 = vpack.c.b16 %v684, %v683
      %v709 = vunpack.c.l.b16 %v661
      %v710 = vunpack.c.l.b16 %v662
      %v711 = vunpack.c.l.b16 %v663
      %v712 = vunpack.c.l.b16 %v664
      %v713 = vunpack.c.l.b16 %v665
      %v714 = vunpack.c.l.b16 %v666
      %v715 = vunpack.c.l.b16 %v667
      %v716 = vunpack.c.l.b16 %v668
      %v717 = vunpack.c.l.b16 %v669
      %v718 = vunpack.c.l.b16 %v670
      %v719 = vunpack.c.l.b16 %v671
      %v720 = vunpack.c.l.b16 %v672
      %v721 = vunpack.c.l.b16 %v673
      %v722 = vunpack.c.l.b16 %v674
      %v723 = vunpack.c.l.b16 %v675
      %v724 = vunpack.c.l.b16 %v676
      %v725 = vpack.c.b16 %v710, %v709
      %v726 = vpack.c.b16 %v712, %v711
      %v727 = vpack.c.b16 %v714, %v713
      %v728 = vpack.c.b16 %v716, %v715
      %v729 = vpack.c.b16 %v718, %v717
      %v730 = vpack.c.b16 %v720, %v719
      %v731 = vpack.c.b16 %v722, %v721
      %v732 = vpack.c.b16 %v724, %v723
      %741 = vmatprep.subr.bf16.mxu0 0
      %742 = vmatpush1.bf16.msra.mxu0 %v725
      %743 = vmatprep.subr.bf16.mxu0 0
      %744 = vmatpush1.bf16.msra.mxu0 %v726
      %745 = vmatprep.subr.bf16.mxu0 0
      %746 = vmatpush1.bf16.msra.mxu0 %v727
      %747 = vmatprep.subr.bf16.mxu0 0
      %748 = vmatpush1.bf16.msra.mxu0 %v728
      %749 = vmatprep.subr.bf16.mxu0 0
      %750 = vmatpush1.bf16.msra.mxu0 %v729
      %751 = vmatprep.subr.bf16.mxu0 0
      %752 = vmatpush1.bf16.msra.mxu0 %v730
      %753 = vmatprep.subr.bf16.mxu0 0
      %754 = vmatpush1.bf16.msra.mxu0 %v731
      %755 = vmatprep.subr.bf16.mxu0 0
      %756 = vmatpush1.bf16.msra.mxu0 %v732
      %757 = vmatprep.subr.bf16.mxu0 0
      %758 = vmatpush1.bf16.msra.mxu0 0
      %759 = vmatprep.subr.bf16.mxu0 0
      %760 = vmatpush1.bf16.msra.mxu0 0
      %761 = vmatprep.subr.bf16.mxu0 0
      %762 = vmatpush1.bf16.msra.mxu0 0
      %763 = vmatprep.subr.bf16.mxu0 0
      %764 = vmatpush1.bf16.msra.mxu0 0
      %765 = vmatprep.subr.bf16.mxu0 0
      %766 = vmatpush1.bf16.msra.mxu0 0
      %767 = vmatprep.subr.bf16.mxu0 0
      %768 = vmatpush1.bf16.msra.mxu0 0
      %769 = vmatprep.subr.bf16.mxu0 0
      %770 = vmatpush1.bf16.msra.mxu0 0
      %771 = vmatprep.subr.bf16.mxu0 0
      %772 = vmatpush1.bf16.msra.mxu0 0
      %773 = vmatprep.mubr.bf16.mxu0 0
      %774 = vmatmul.mubr.bf16.gmra.mrb[0].mxu0 %v685
      %v775 = vpop.f32.mrb[0].mxu0
      %v776 = vadd.f32 0.0, %v775
      %v777 = vpop.f32.mrb[0].mxu0
      %v778 = vpop.f32.mrb[0].mxu0
      %v779 = vadd.f32 0.0, %v778
      %v780 = vpop.f32.mrb[0].mxu0
      %781 = vmatprep.mubr.bf16.mxu0 0
      %782 = vmatmul.mubr.bf16.gmra.mrb[0].mxu0 %v686
      %v783 = vpop.f32.mrb[0].mxu0
      %v784 = vadd.f32 0.0, %v783
      %v785 = vpop.f32.mrb[0].mxu0
      %v786 = vpop.f32.mrb[0].mxu0
      %v787 = vadd.f32 0.0, %v786
      %v788 = vpop.f32.mrb[0].mxu0
      %789 = vmatprep.mubr.bf16.mxu0 0
      %790 = vmatmul.mubr.bf16.gmra.mrb[0].mxu0 %v687
      %v791 = vpop.f32.mrb[0].mxu0
      %v792 = vadd.f32 0.0, %v791
      %v793 = vpop.f32.mrb[0].mxu0
      %v794 = vpop.f32.mrb[0].mxu0
      %v795 = vadd.f32 0.0, %v794
      %v796 = vpop.f32.mrb[0].mxu0
      %797 = vmatprep.mubr.bf16.mxu0 0
      %798 = vmatmul.mubr.bf16.gmra.mrb[0].mxu0 %v688
      %v799 = vpop.f32.mrb[0].mxu0
      %v800 = vadd.f32 0.0, %v799
      %v801 = vpop.f32.mrb[0].mxu0
      %v802 = vpop.f32.mrb[0].mxu0
      %v803 = vadd.f32 0.0, %v802
      %v804 = vpop.f32.mrb[0].mxu0
      %805 = vdwg.mxu0
      %v806 = vadd.f32 %v587, %v776
      %v807 = vadd.f32 %v590, %v779
      %v808 = vadd.f32 %v595, %v784
      %v809 = vadd.f32 %v598, %v787
      %v810 = vadd.f32 %v603, %v792
      %v811 = vadd.f32 %v606, %v795
      %v812 = vadd.f32 %v611, %v800
      %v813 = vadd.f32 %v614, %v803
      %s814 = scalar_lea.vmem %s1, 192
      %v815 = vld [vmem:[%s814] sm:$0xf]
      %v816 = vld [vmem:[%s814 + $0x4] sm:$0xf]
      %v817 = vld [vmem:[%s814 + $0x8] sm:$0xf]
      %v818 = vld [vmem:[%s814 + $0xc] sm:$0xf]
      %v819 = vld [vmem:[%s814 + $0x10] sm:$0xf]
      %v820 = vld [vmem:[%s814 + $0x14] sm:$0xf]
      %v821 = vld [vmem:[%s814 + $0x18] sm:$0xf]
      %v822 = vld [vmem:[%s814 + $0x1c] sm:$0xf]
      %v823 = vld [vmem:[%s814 + $0x20] sm:$0xf]
      %v824 = vld [vmem:[%s814 + $0x24] sm:$0xf]
      %v825 = vld [vmem:[%s814 + $0x28] sm:$0xf]
      %v826 = vld [vmem:[%s814 + $0x2c] sm:$0xf]
      %v827 = vld [vmem:[%s814 + $0x30] sm:$0xf]
      %v828 = vld [vmem:[%s814 + $0x34] sm:$0xf]
      %v829 = vld [vmem:[%s814 + $0x38] sm:$0xf]
      %v830 = vld [vmem:[%s814 + $0x3c] sm:$0xf]
      %v832 = vunpack.c.l.b16 %v199
      %v833 = vpack.c.b16 %v490, %v489
      %v834 = vpack.c.b16 %v492, %v491
      %v835 = vpack.c.b16 %v494, %v493
      %v836 = vpack.c.b16 %v832, %v495
      %v857 = vunpack.c.l.b16 %v815
      %v858 = vunpack.c.l.b16 %v816
      %v859 = vunpack.c.l.b16 %v817
      %v860 = vunpack.c.l.b16 %v818
      %v861 = vunpack.c.l.b16 %v819
      %v862 = vunpack.c.l.b16 %v820
      %v863 = vunpack.c.l.b16 %v821
      %v864 = vunpack.c.l.b16 %v822
      %v865 = vunpack.c.l.b16 %v823
      %v866 = vunpack.c.l.b16 %v824
      %v867 = vunpack.c.l.b16 %v825
      %v868 = vunpack.c.l.b16 %v826
      %v869 = vunpack.c.l.b16 %v827
      %v870 = vunpack.c.l.b16 %v828
      %v871 = vunpack.c.l.b16 %v829
      %v872 = vunpack.c.l.b16 %v830
      %v873 = vpack.c.b16 %v858, %v857
      %v874 = vpack.c.b16 %v860, %v859
      %v875 = vpack.c.b16 %v862, %v861
      %v876 = vpack.c.b16 %v864, %v863
      %v877 = vpack.c.b16 %v866, %v865
      %v878 = vpack.c.b16 %v868, %v867
      %v879 = vpack.c.b16 %v870, %v869
      %v880 = vpack.c.b16 %v872, %v871
      %889 = vmatprep.subr.bf16.mxu0 0
      %890 = vmatpush1.bf16.msra.mxu0 %v873
      %891 = vmatprep.subr.bf16.mxu0 0
      %892 = vmatpush1.bf16.msra.mxu0 %v874
      %893 = vmatprep.subr.bf16.mxu0 0
      %894 = vmatpush1.bf16.msra.mxu0 %v875
      %895 = vmatprep.subr.bf16.mxu0 0
      %896 = vmatpush1.bf16.msra.mxu0 %v876
      %897 = vmatprep.subr.bf16.mxu0 0
      %898 = vmatpush1.bf16.msra.mxu0 %v877
      %899 = vmatprep.subr.bf16.mxu0 0
      %900 = vmatpush1.bf16.msra.mxu0 %v878
      %901 = vmatprep.subr.bf16.mxu0 0
      %902 = vmatpush1.bf16.msra.mxu0 %v879
      %903 = vmatprep.subr.bf16.mxu0 0
      %904 = vmatpush1.bf16.msra.mxu0 %v880
      %905 = vmatprep.subr.bf16.mxu0 0
      %906 = vmatpush1.bf16.msra.mxu0 0
      %907 = vmatprep.subr.bf16.mxu0 0
      %908 = vmatpush1.bf16.msra.mxu0 0
      %909 = vmatprep.subr.bf16.mxu0 0
      %910 = vmatpush1.bf16.msra.mxu0 0
      %911 = vmatprep.subr.bf16.mxu0 0
      %912 = vmatpush1.bf16.msra.mxu0 0
      %913 = vmatprep.subr.bf16.mxu0 0
      %914 = vmatpush1.bf16.msra.mxu0 0
      %915 = vmatprep.subr.bf16.mxu0 0
      %916 = vmatpush1.bf16.msra.mxu0 0
      %917 = vmatprep.subr.bf16.mxu0 0
      %918 = vmatpush1.bf16.msra.mxu0 0
      %919 = vmatprep.subr.bf16.mxu0 0
      %920 = vmatpush1.bf16.msra.mxu0 0
      %921 = vmatprep.mubr.bf16.mxu0 0
      %922 = vmatmul.mubr.bf16.gmra.mrb[0].mxu0 %v833
      %v923 = vpop.f32.mrb[0].mxu0
      %v924 = vadd.f32 0.0, %v923
      %v925 = vpop.f32.mrb[0].mxu0
      %v926 = vpop.f32.mrb[0].mxu0
      %v927 = vadd.f32 0.0, %v926
      %v928 = vpop.f32.mrb[0].mxu0
      %929 = vmatprep.mubr.bf16.mxu0 0
      %930 = vmatmul.mubr.bf16.gmra.mrb[0].mxu0 %v834
      %v931 = vpop.f32.mrb[0].mxu0
      %v932 = vadd.f32 0.0, %v931
      %v933 = vpop.f32.mrb[0].mxu0
      %v934 = vpop.f32.mrb[0].mxu0
      %v935 = vadd.f32 0.0, %v934
      %v936 = vpop.f32.mrb[0].mxu0
      %937 = vmatprep.mubr.bf16.mxu0 0
      %938 = vmatmul.mubr.bf16.gmra.mrb[0].mxu0 %v835
      %v939 = vpop.f32.mrb[0].mxu0
      %v940 = vadd.f32 0.0, %v939
      %v941 = vpop.f32.mrb[0].mxu0
      %v942 = vpop.f32.mrb[0].mxu0
      %v943 = vadd.f32 0.0, %v942
      %v944 = vpop.f32.mrb[0].mxu0
      %945 = vmatprep.mubr.bf16.mxu0 0
      %946 = vmatmul.mubr.bf16.gmra.mrb[0].mxu0 %v836
      %v947 = vpop.f32.mrb[0].mxu0
      %v948 = vadd.f32 0.0, %v947
      %v949 = vpop.f32.mrb[0].mxu0
      %v950 = vpop.f32.mrb[0].mxu0
      %v951 = vadd.f32 0.0, %v950
      %v952 = vpop.f32.mrb[0].mxu0
      %953 = vdwg.mxu0
      %v954 = vadd.f32 %v806, %v924
      %v955 = vadd.f32 %v807, %v927
      %v956 = vadd.f32 %v808, %v932
      %v957 = vadd.f32 %v809, %v935
      %v958 = vadd.f32 %v810, %v940
      %v959 = vadd.f32 %v811, %v943
      %v960 = vadd.f32 %v812, %v948
      %v961 = vadd.f32 %v813, %v951
      %v963 = vshrl.u32 %v199, 16
      %v965 = vrot.slane %v963, 4
      %v966 = vshll.u32 %v199, 16
      %v968 = vrot.slane %v966, 5
      %v969 = vor.u32 %v965, %v968
      %v970 = vrot.slane %v969, 4
      %v972 = vshll.u32 %v200, 16
      %v974 = vrot.slane %v972, 5
      %v975 = vsel %vm221, %v970, %v974
      %s976 = scalar_lea.vmem %s1, 256
      %v977 = vld [vmem:[%s976] sm:$0xf]
      %v978 = vld [vmem:[%s976 + $0x4] sm:$0xf]
      %v979 = vld [vmem:[%s976 + $0x8] sm:$0xf]
      %v980 = vld [vmem:[%s976 + $0xc] sm:$0xf]
      %v981 = vld [vmem:[%s976 + $0x10] sm:$0xf]
      %v982 = vld [vmem:[%s976 + $0x14] sm:$0xf]
      %v983 = vld [vmem:[%s976 + $0x18] sm:$0xf]
      %v984 = vld [vmem:[%s976 + $0x1c] sm:$0xf]
      %v985 = vld [vmem:[%s976 + $0x20] sm:$0xf]
      %v986 = vld [vmem:[%s976 + $0x24] sm:$0xf]
      %v987 = vld [vmem:[%s976 + $0x28] sm:$0xf]
      %v988 = vld [vmem:[%s976 + $0x2c] sm:$0xf]
      %v989 = vld [vmem:[%s976 + $0x30] sm:$0xf]
      %v990 = vld [vmem:[%s976 + $0x34] sm:$0xf]
      %v991 = vld [vmem:[%s976 + $0x38] sm:$0xf]
      %v992 = vld [vmem:[%s976 + $0x3c] sm:$0xf]
      %v993 = vunpack.c.l.b16 %v975
      %v994 = vpack.c.b16 %v353, %v352
      %v995 = vpack.c.b16 %v355, %v354
      %v996 = vpack.c.b16 %v357, %v356
      %v997 = vpack.c.b16 %v993, %v358
      %v1018 = vunpack.c.l.b16 %v977
      %v1019 = vunpack.c.l.b16 %v978
      %v1020 = vunpack.c.l.b16 %v979
      %v1021 = vunpack.c.l.b16 %v980
      %v1022 = vunpack.c.l.b16 %v981
      %v1023 = vunpack.c.l.b16 %v982
      %v1024 = vunpack.c.l.b16 %v983
      %v1025 = vunpack.c.l.b16 %v984
      %v1026 = vunpack.c.l.b16 %v985
      %v1027 = vunpack.c.l.b16 %v986
      %v1028 = vunpack.c.l.b16 %v987
      %v1029 = vunpack.c.l.b16 %v988
      %v1030 = vunpack.c.l.b16 %v989
      %v1031 = vunpack.c.l.b16 %v990
      %v1032 = vunpack.c.l.b16 %v991
      %v1033 = vunpack.c.l.b16 %v992
      %v1034 = vpack.c.b16 %v1019, %v1018
      %v1035 = vpack.c.b16 %v1021, %v1020
      %v1036 = vpack.c.b16 %v1023, %v1022
      %v1037 = vpack.c.b16 %v1025, %v1024
      %v1038 = vpack.c.b16 %v1027, %v1026
      %v1039 = vpack.c.b16 %v1029, %v1028
      %v1040 = vpack.c.b16 %v1031, %v1030
      %v1041 = vpack.c.b16 %v1033, %v1032
      %1050 = vmatprep.subr.bf16.mxu0 0
      %1051 = vmatpush1.bf16.msra.mxu0 %v1034
      %1052 = vmatprep.subr.bf16.mxu0 0
      %1053 = vmatpush1.bf16.msra.mxu0 %v1035
      %1054 = vmatprep.subr.bf16.mxu0 0
      %1055 = vmatpush1.bf16.msra.mxu0 %v1036
      %1056 = vmatprep.subr.bf16.mxu0 0
      %1057 = vmatpush1.bf16.msra.mxu0 %v1037
      %1058 = vmatprep.subr.bf16.mxu0 0
      %1059 = vmatpush1.bf16.msra.mxu0 %v1038
      %1060 = vmatprep.subr.bf16.mxu0 0
      %1061 = vmatpush1.bf16.msra.mxu0 %v1039
      %1062 = vmatprep.subr.bf16.mxu0 0
      %1063 = vmatpush1.bf16.msra.mxu0 %v1040
      %1064 = vmatprep.subr.bf16.mxu0 0
      %1065 = vmatpush1.bf16.msra.mxu0 %v1041
      %1066 = vmatprep.subr.bf16.mxu0 0
      %1067 = vmatpush1.bf16.msra.mxu0 0
      %1068 = vmatprep.subr.bf16.mxu0 0
      %1069 = vmatpush1.bf16.msra.mxu0 0
      %1070 = vmatprep.subr.bf16.mxu0 0
      %1071 = vmatpush1.bf16.msra.mxu0 0
      %1072 = vmatprep.subr.bf16.mxu0 0
      %1073 = vmatpush1.bf16.msra.mxu0 0
      %1074 = vmatprep.subr.bf16.mxu0 0
      %1075 = vmatpush1.bf16.msra.mxu0 0
      %1076 = vmatprep.subr.bf16.mxu0 0
      %1077 = vmatpush1.bf16.msra.mxu0 0
      %1078 = vmatprep.subr.bf16.mxu0 0
      %1079 = vmatpush1.bf16.msra.mxu0 0
      %1080 = vmatprep.subr.bf16.mxu0 0
      %1081 = vmatpush1.bf16.msra.mxu0 0
      %1082 = vmatprep.mubr.bf16.mxu0 0
      %1083 = vmatmul.mubr.bf16.gmra.mrb[0].mxu0 %v994
      %v1084 = vpop.f32.mrb[0].mxu0
      %v1085 = vadd.f32 0.0, %v1084
      %v1086 = vpop.f32.mrb[0].mxu0
      %v1087 = vpop.f32.mrb[0].mxu0
      %v1088 = vadd.f32 0.0, %v1087
      %v1089 = vpop.f32.mrb[0].mxu0
      %1090 = vmatprep.mubr.bf16.mxu0 0
      %1091 = vmatmul.mubr.bf16.gmra.mrb[0].mxu0 %v995
      %v1092 = vpop.f32.mrb[0].mxu0
      %v1093 = vadd.f32 0.0, %v1092
      %v1094 = vpop.f32.mrb[0].mxu0
      %v1095 = vpop.f32.mrb[0].mxu0
      %v1096 = vadd.f32 0.0, %v1095
      %v1097 = vpop.f32.mrb[0].mxu0
      %1098 = vmatprep.mubr.bf16.mxu0 0
      %1099 = vmatmul.mubr.bf16.gmra.mrb[0].mxu0 %v996
      %v1100 = vpop.f32.mrb[0].mxu0
      %v1101 = vadd.f32 0.0, %v1100
      %v1102 = vpop.f32.mrb[0].mxu0
      %v1103 = vpop.f32.mrb[0].mxu0
      %v1104 = vadd.f32 0.0, %v1103
      %v1105 = vpop.f32.mrb[0].mxu0
      %1106 = vmatprep.mubr.bf16.mxu0 0
      %1107 = vmatmul.mubr.bf16.gmra.mrb[0].mxu0 %v997
      %v1108 = vpop.f32.mrb[0].mxu0
      %v1109 = vadd.f32 0.0, %v1108
      %v1110 = vpop.f32.mrb[0].mxu0
      %v1111 = vpop.f32.mrb[0].mxu0
      %v1112 = vadd.f32 0.0, %v1111
      %v1113 = vpop.f32.mrb[0].mxu0
      %1114 = vdwg.mxu0
      %v1115 = vadd.f32 %v954, %v1085
      %v1116 = vadd.f32 %v955, %v1088
      %v1117 = vadd.f32 %v956, %v1093
      %v1118 = vadd.f32 %v957, %v1096
      %v1119 = vadd.f32 %v958, %v1101
      %v1120 = vadd.f32 %v959, %v1104
      %v1121 = vadd.f32 %v960, %v1109
      %v1122 = vadd.f32 %v961, %v1112
      %v1124 = vrot.slane %v199, 5
      %v1125 = vrot.slane %v1124, 4
      %v1126 = vrot.slane %v200, 5
      %v1127 = vsel %vm627, %v1125, %v1126
      %s1128 = scalar_lea.vmem %s1, 320
      %v1129 = vld [vmem:[%s1128] sm:$0xf]
      %v1130 = vld [vmem:[%s1128 + $0x4] sm:$0xf]
      %v1131 = vld [vmem:[%s1128 + $0x8] sm:$0xf]
      %v1132 = vld [vmem:[%s1128 + $0xc] sm:$0xf]
      %v1133 = vld [vmem:[%s1128 + $0x10] sm:$0xf]
      %v1134 = vld [vmem:[%s1128 + $0x14] sm:$0xf]
      %v1135 = vld [vmem:[%s1128 + $0x18] sm:$0xf]
      %v1136 = vld [vmem:[%s1128 + $0x1c] sm:$0xf]
      %v1137 = vld [vmem:[%s1128 + $0x20] sm:$0xf]
      %v1138 = vld [vmem:[%s1128 + $0x24] sm:$0xf]
      %v1139 = vld [vmem:[%s1128 + $0x28] sm:$0xf]
      %v1140 = vld [vmem:[%s1128 + $0x2c] sm:$0xf]
      %v1141 = vld [vmem:[%s1128 + $0x30] sm:$0xf]
      %v1142 = vld [vmem:[%s1128 + $0x34] sm:$0xf]
      %v1143 = vld [vmem:[%s1128 + $0x38] sm:$0xf]
      %v1144 = vld [vmem:[%s1128 + $0x3c] sm:$0xf]
      %v1145 = vunpack.c.l.b16 %v1127
      %v1146 = vpack.c.b16 %v679, %v678
      %v1147 = vpack.c.b16 %v681, %v680
      %v1148 = vpack.c.b16 %v683, %v682
      %v1149 = vpack.c.b16 %v1145, %v684
      %v1170 = vunpack.c.l.b16 %v1129
      %v1171 = vunpack.c.l.b16 %v1130
      %v1172 = vunpack.c.l.b16 %v1131
      %v1173 = vunpack.c.l.b16 %v1132
      %v1174 = vunpack.c.l.b16 %v1133
      %v1175 = vunpack.c.l.b16 %v1134
      %v1176 = vunpack.c.l.b16 %v1135
      %v1177 = vunpack.c.l.b16 %v1136
      %v1178 = vunpack.c.l.b16 %v1137
      %v1179 = vunpack.c.l.b16 %v1138
      %v1180 = vunpack.c.l.b16 %v1139
      %v1181 = vunpack.c.l.b16 %v1140
      %v1182 = vunpack.c.l.b16 %v1141
      %v1183 = vunpack.c.l.b16 %v1142
      %v1184 = vunpack.c.l.b16 %v1143
      %v1185 = vunpack.c.l.b16 %v1144
      %v1186 = vpack.c.b16 %v1171, %v1170
      %v1187 = vpack.c.b16 %v1173, %v1172
      %v1188 = vpack.c.b16 %v1175, %v1174
      %v1189 = vpack.c.b16 %v1177, %v1176
      %v1190 = vpack.c.b16 %v1179, %v1178
      %v1191 = vpack.c.b16 %v1181, %v1180
      %v1192 = vpack.c.b16 %v1183, %v1182
      %v1193 = vpack.c.b16 %v1185, %v1184
      %1202 = vmatprep.subr.bf16.mxu0 0
      %1203 = vmatpush1.bf16.msra.mxu0 %v1186
      %1204 = vmatprep.subr.bf16.mxu0 0
      %1205 = vmatpush1.bf16.msra.mxu0 %v1187
      %1206 = vmatprep.subr.bf16.mxu0 0
      %1207 = vmatpush1.bf16.msra.mxu0 %v1188
      %1208 = vmatprep.subr.bf16.mxu0 0
      %1209 = vmatpush1.bf16.msra.mxu0 %v1189
      %1210 = vmatprep.subr.bf16.mxu0 0
      %1211 = vmatpush1.bf16.msra.mxu0 %v1190
      %1212 = vmatprep.subr.bf16.mxu0 0
      %1213 = vmatpush1.bf16.msra.mxu0 %v1191
      %1214 = vmatprep.subr.bf16.mxu0 0
      %1215 = vmatpush1.bf16.msra.mxu0 %v1192
      %1216 = vmatprep.subr.bf16.mxu0 0
      %1217 = vmatpush1.bf16.msra.mxu0 %v1193
      %1218 = vmatprep.subr.bf16.mxu0 0
      %1219 = vmatpush1.bf16.msra.mxu0 0
      %1220 = vmatprep.subr.bf16.mxu0 0
      %1221 = vmatpush1.bf16.msra.mxu0 0
      %1222 = vmatprep.subr.bf16.mxu0 0
      %1223 = vmatpush1.bf16.msra.mxu0 0
      %1224 = vmatprep.subr.bf16.mxu0 0
      %1225 = vmatpush1.bf16.msra.mxu0 0
      %1226 = vmatprep.subr.bf16.mxu0 0
      %1227 = vmatpush1.bf16.msra.mxu0 0
      %1228 = vmatprep.subr.bf16.mxu0 0
      %1229 = vmatpush1.bf16.msra.mxu0 0
      %1230 = vmatprep.subr.bf16.mxu0 0
      %1231 = vmatpush1.bf16.msra.mxu0 0
      %1232 = vmatprep.subr.bf16.mxu0 0
      %1233 = vmatpush1.bf16.msra.mxu0 0
      %1234 = vmatprep.mubr.bf16.mxu0 0
      %1235 = vmatmul.mubr.bf16.gmra.mrb[0].mxu0 %v1146
      %v1236 = vpop.f32.mrb[0].mxu0
      %v1237 = vadd.f32 0.0, %v1236
      %v1238 = vpop.f32.mrb[0].mxu0
      %v1239 = vpop.f32.mrb[0].mxu0
      %v1240 = vadd.f32 0.0, %v1239
      %v1241 = vpop.f32.mrb[0].mxu0
      %1242 = vmatprep.mubr.bf16.mxu0 0
      %1243 = vmatmul.mubr.bf16.gmra.mrb[0].mxu0 %v1147
      %v1244 = vpop.f32.mrb[0].mxu0
      %v1245 = vadd.f32 0.0, %v1244
      %v1246 = vpop.f32.mrb[0].mxu0
      %v1247 = vpop.f32.mrb[0].mxu0
      %v1248 = vadd.f32 0.0, %v1247
      %v1249 = vpop.f32.mrb[0].mxu0
      %1250 = vmatprep.mubr.bf16.mxu0 0
      %1251 = vmatmul.mubr.bf16.gmra.mrb[0].mxu0 %v1148
      %v1252 = vpop.f32.mrb[0].mxu0
      %v1253 = vadd.f32 0.0, %v1252
      %v1254 = vpop.f32.mrb[0].mxu0
      %v1255 = vpop.f32.mrb[0].mxu0
      %v1256 = vadd.f32 0.0, %v1255
      %v1257 = vpop.f32.mrb[0].mxu0
      %1258 = vmatprep.mubr.bf16.mxu0 0
      %1259 = vmatmul.mubr.bf16.gmra.mrb[0].mxu0 %v1149
      %v1260 = vpop.f32.mrb[0].mxu0
      %v1261 = vadd.f32 0.0, %v1260
      %v1262 = vpop.f32.mrb[0].mxu0
      %v1263 = vpop.f32.mrb[0].mxu0
      %v1264 = vadd.f32 0.0, %v1263
      %v1265 = vpop.f32.mrb[0].mxu0
      %1266 = vdwg.mxu0
      %v1267 = vadd.f32 %v1115, %v1237
      %v1268 = vadd.f32 %v1116, %v1240
      %v1269 = vadd.f32 %v1117, %v1245
      %v1270 = vadd.f32 %v1118, %v1248
      %v1271 = vadd.f32 %v1119, %v1253
      %v1272 = vadd.f32 %v1120, %v1256
      %v1273 = vadd.f32 %v1121, %v1261
      %v1274 = vadd.f32 %v1122, %v1264
      %s1275 = scalar_lea.vmem %s1, 384
      %v1276 = vld [vmem:[%s1275] sm:$0xf]
      %v1277 = vld [vmem:[%s1275 + $0x4] sm:$0xf]
      %v1278 = vld [vmem:[%s1275 + $0x8] sm:$0xf]
      %v1279 = vld [vmem:[%s1275 + $0xc] sm:$0xf]
      %v1280 = vld [vmem:[%s1275 + $0x10] sm:$0xf]
      %v1281 = vld [vmem:[%s1275 + $0x14] sm:$0xf]
      %v1282 = vld [vmem:[%s1275 + $0x18] sm:$0xf]
      %v1283 = vld [vmem:[%s1275 + $0x1c] sm:$0xf]
      %v1284 = vld [vmem:[%s1275 + $0x20] sm:$0xf]
      %v1285 = vld [vmem:[%s1275 + $0x24] sm:$0xf]
      %v1286 = vld [vmem:[%s1275 + $0x28] sm:$0xf]
      %v1287 = vld [vmem:[%s1275 + $0x2c] sm:$0xf]
      %v1288 = vld [vmem:[%s1275 + $0x30] sm:$0xf]
      %v1289 = vld [vmem:[%s1275 + $0x34] sm:$0xf]
      %v1290 = vld [vmem:[%s1275 + $0x38] sm:$0xf]
      %v1291 = vld [vmem:[%s1275 + $0x3c] sm:$0xf]
      %v1293 = vunpack.c.l.b16 %v201
      %v1294 = vpack.c.b16 %v1293, %v832
      %v1312 = vunpack.c.l.b16 %v1276
      %v1313 = vunpack.c.l.b16 %v1277
      %v1314 = vunpack.c.l.b16 %v1278
      %v1315 = vunpack.c.l.b16 %v1279
      %v1316 = vunpack.c.l.b16 %v1280
      %v1317 = vunpack.c.l.b16 %v1281
      %v1318 = vunpack.c.l.b16 %v1282
      %v1319 = vunpack.c.l.b16 %v1283
      %v1320 = vunpack.c.l.b16 %v1284
      %v1321 = vunpack.c.l.b16 %v1285
      %v1322 = vunpack.c.l.b16 %v1286
      %v1323 = vunpack.c.l.b16 %v1287
      %v1324 = vunpack.c.l.b16 %v1288
      %v1325 = vunpack.c.l.b16 %v1289
      %v1326 = vunpack.c.l.b16 %v1290
      %v1327 = vunpack.c.l.b16 %v1291
      %v1328 = vpack.c.b16 %v1313, %v1312
      %v1329 = vpack.c.b16 %v1315, %v1314
      %v1330 = vpack.c.b16 %v1317, %v1316
      %v1331 = vpack.c.b16 %v1319, %v1318
      %v1332 = vpack.c.b16 %v1321, %v1320
      %v1333 = vpack.c.b16 %v1323, %v1322
      %v1334 = vpack.c.b16 %v1325, %v1324
      %v1335 = vpack.c.b16 %v1327, %v1326
      %1344 = vmatprep.subr.bf16.mxu0 0
      %1345 = vmatpush1.bf16.msra.mxu0 %v1328
      %1346 = vmatprep.subr.bf16.mxu0 0
      %1347 = vmatpush1.bf16.msra.mxu0 %v1329
      %1348 = vmatprep.subr.bf16.mxu0 0
      %1349 = vmatpush1.bf16.msra.mxu0 %v1330
      %1350 = vmatprep.subr.bf16.mxu0 0
      %1351 = vmatpush1.bf16.msra.mxu0 %v1331
      %1352 = vmatprep.subr.bf16.mxu0 0
      %1353 = vmatpush1.bf16.msra.mxu0 %v1332
      %1354 = vmatprep.subr.bf16.mxu0 0
      %1355 = vmatpush1.bf16.msra.mxu0 %v1333
      %1356 = vmatprep.subr.bf16.mxu0 0
      %1357 = vmatpush1.bf16.msra.mxu0 %v1334
      %1358 = vmatprep.subr.bf16.mxu0 0
      %1359 = vmatpush1.bf16.msra.mxu0 %v1335
      %1360 = vmatprep.subr.bf16.mxu0 0
      %1361 = vmatpush1.bf16.msra.mxu0 0
      %1362 = vmatprep.subr.bf16.mxu0 0
      %1363 = vmatpush1.bf16.msra.mxu0 0
      %1364 = vmatprep.subr.bf16.mxu0 0
      %1365 = vmatpush1.bf16.msra.mxu0 0
      %1366 = vmatprep.subr.bf16.mxu0 0
      %1367 = vmatpush1.bf16.msra.mxu0 0
      %1368 = vmatprep.subr.bf16.mxu0 0
      %1369 = vmatpush1.bf16.msra.mxu0 0
      %1370 = vmatprep.subr.bf16.mxu0 0
      %1371 = vmatpush1.bf16.msra.mxu0 0
      %1372 = vmatprep.subr.bf16.mxu0 0
      %1373 = vmatpush1.bf16.msra.mxu0 0
      %1374 = vmatprep.subr.bf16.mxu0 0
      %1375 = vmatpush1.bf16.msra.mxu0 0
      %1376 = vmatprep.mubr.bf16.mxu0 0
      %1377 = vmatmul.mubr.bf16.gmra.mrb[0].mxu0 %v497
      %v1378 = vpop.f32.mrb[0].mxu0
      %v1379 = vadd.f32 0.0, %v1378
      %v1380 = vpop.f32.mrb[0].mxu0
      %v1381 = vpop.f32.mrb[0].mxu0
      %v1382 = vadd.f32 0.0, %v1381
      %v1383 = vpop.f32.mrb[0].mxu0
      %1384 = vmatprep.mubr.bf16.mxu0 0
      %1385 = vmatmul.mubr.bf16.gmra.mrb[0].mxu0 %v498
      %v1386 = vpop.f32.mrb[0].mxu0
      %v1387 = vadd.f32 0.0, %v1386
      %v1388 = vpop.f32.mrb[0].mxu0
      %v1389 = vpop.f32.mrb[0].mxu0
      %v1390 = vadd.f32 0.0, %v1389
      %v1391 = vpop.f32.mrb[0].mxu0
      %1392 = vmatprep.mubr.bf16.mxu0 0
      %1393 = vmatmul.mubr.bf16.gmra.mrb[0].mxu0 %v499
      %v1394 = vpop.f32.mrb[0].mxu0
      %v1395 = vadd.f32 0.0, %v1394
      %v1396 = vpop.f32.mrb[0].mxu0
      %v1397 = vpop.f32.mrb[0].mxu0
      %v1398 = vadd.f32 0.0, %v1397
      %v1399 = vpop.f32.mrb[0].mxu0
      %1400 = vmatprep.mubr.bf16.mxu0 0
      %1401 = vmatmul.mubr.bf16.gmra.mrb[0].mxu0 %v1294
      %v1402 = vpop.f32.mrb[0].mxu0
      %v1403 = vadd.f32 0.0, %v1402
      %v1404 = vpop.f32.mrb[0].mxu0
      %v1405 = vpop.f32.mrb[0].mxu0
      %v1406 = vadd.f32 0.0, %v1405
      %v1407 = vpop.f32.mrb[0].mxu0
      %1408 = vdwg.mxu0
      %v1409 = vadd.f32 %v1267, %v1379
      %v1410 = vadd.f32 %v1268, %v1382
      %v1411 = vadd.f32 %v1269, %v1387
      %v1412 = vadd.f32 %v1270, %v1390
      %v1413 = vadd.f32 %v1271, %v1395
      %v1414 = vadd.f32 %v1272, %v1398
      %v1415 = vadd.f32 %v1273, %v1403
      %v1416 = vadd.f32 %v1274, %v1406
      %v1418 = vshrl.u32 %v201, 16
      %v1420 = vrot.slane %v1418, 4
      %v1421 = vshll.u32 %v201, 16
      %v1423 = vrot.slane %v1421, 5
      %v1424 = vor.u32 %v1420, %v1423
      %v1425 = vrot.slane %v1424, 4
      %v1427 = vshll.u32 %v202, 16
      %v1429 = vrot.slane %v1427, 5
      %v1430 = vsel %vm221, %v1425, %v1429
      %s1431 = scalar_lea.vmem %s1, 448
      %v1432 = vld [vmem:[%s1431] sm:$0xf]
      %v1433 = vld [vmem:[%s1431 + $0x4] sm:$0xf]
      %v1434 = vld [vmem:[%s1431 + $0x8] sm:$0xf]
      %v1435 = vld [vmem:[%s1431 + $0xc] sm:$0xf]
      %v1436 = vld [vmem:[%s1431 + $0x10] sm:$0xf]
      %v1437 = vld [vmem:[%s1431 + $0x14] sm:$0xf]
      %v1438 = vld [vmem:[%s1431 + $0x18] sm:$0xf]
      %v1439 = vld [vmem:[%s1431 + $0x1c] sm:$0xf]
      %v1440 = vld [vmem:[%s1431 + $0x20] sm:$0xf]
      %v1441 = vld [vmem:[%s1431 + $0x24] sm:$0xf]
      %v1442 = vld [vmem:[%s1431 + $0x28] sm:$0xf]
      %v1443 = vld [vmem:[%s1431 + $0x2c] sm:$0xf]
      %v1444 = vld [vmem:[%s1431 + $0x30] sm:$0xf]
      %v1445 = vld [vmem:[%s1431 + $0x34] sm:$0xf]
      %v1446 = vld [vmem:[%s1431 + $0x38] sm:$0xf]
      %v1447 = vld [vmem:[%s1431 + $0x3c] sm:$0xf]
      %v1448 = vunpack.c.l.b16 %v1430
      %v1449 = vpack.c.b16 %v1448, %v993
      %v1467 = vunpack.c.l.b16 %v1432
      %v1468 = vunpack.c.l.b16 %v1433
      %v1469 = vunpack.c.l.b16 %v1434
      %v1470 = vunpack.c.l.b16 %v1435
      %v1471 = vunpack.c.l.b16 %v1436
      %v1472 = vunpack.c.l.b16 %v1437
      %v1473 = vunpack.c.l.b16 %v1438
      %v1474 = vunpack.c.l.b16 %v1439
      %v1475 = vunpack.c.l.b16 %v1440
      %v1476 = vunpack.c.l.b16 %v1441
      %v1477 = vunpack.c.l.b16 %v1442
      %v1478 = vunpack.c.l.b16 %v1443
      %v1479 = vunpack.c.l.b16 %v1444
      %v1480 = vunpack.c.l.b16 %v1445
      %v1481 = vunpack.c.l.b16 %v1446
      %v1482 = vunpack.c.l.b16 %v1447
      %v1483 = vpack.c.b16 %v1468, %v1467
      %v1484 = vpack.c.b16 %v1470, %v1469
      %v1485 = vpack.c.b16 %v1472, %v1471
      %v1486 = vpack.c.b16 %v1474, %v1473
      %v1487 = vpack.c.b16 %v1476, %v1475
      %v1488 = vpack.c.b16 %v1478, %v1477
      %v1489 = vpack.c.b16 %v1480, %v1479
      %v1490 = vpack.c.b16 %v1482, %v1481
      %1499 = vmatprep.subr.bf16.mxu0 0
      %1500 = vmatpush1.bf16.msra.mxu0 %v1483
      %1501 = vmatprep.subr.bf16.mxu0 0
      %1502 = vmatpush1.bf16.msra.mxu0 %v1484
      %1503 = vmatprep.subr.bf16.mxu0 0
      %1504 = vmatpush1.bf16.msra.mxu0 %v1485
      %1505 = vmatprep.subr.bf16.mxu0 0
      %1506 = vmatpush1.bf16.msra.mxu0 %v1486
      %1507 = vmatprep.subr.bf16.mxu0 0
      %1508 = vmatpush1.bf16.msra.mxu0 %v1487
      %1509 = vmatprep.subr.bf16.mxu0 0
      %1510 = vmatpush1.bf16.msra.mxu0 %v1488
      %1511 = vmatprep.subr.bf16.mxu0 0
      %1512 = vmatpush1.bf16.msra.mxu0 %v1489
      %1513 = vmatprep.subr.bf16.mxu0 0
      %1514 = vmatpush1.bf16.msra.mxu0 %v1490
      %1515 = vmatprep.subr.bf16.mxu0 0
      %1516 = vmatpush1.bf16.msra.mxu0 0
      %1517 = vmatprep.subr.bf16.mxu0 0
      %1518 = vmatpush1.bf16.msra.mxu0 0
      %1519 = vmatprep.subr.bf16.mxu0 0
      %1520 = vmatpush1.bf16.msra.mxu0 0
      %1521 = vmatprep.subr.bf16.mxu0 0
      %1522 = vmatpush1.bf16.msra.mxu0 0
      %1523 = vmatprep.subr.bf16.mxu0 0
      %1524 = vmatpush1.bf16.msra.mxu0 0
      %1525 = vmatprep.subr.bf16.mxu0 0
      %1526 = vmatpush1.bf16.msra.mxu0 0
      %1527 = vmatprep.subr.bf16.mxu0 0
      %1528 = vmatpush1.bf16.msra.mxu0 0
      %1529 = vmatprep.subr.bf16.mxu0 0
      %1530 = vmatpush1.bf16.msra.mxu0 0
      %1531 = vmatprep.mubr.bf16.mxu0 0
      %1532 = vmatmul.mubr.bf16.gmra.mrb[0].mxu0 %v360
      %v1533 = vpop.f32.mrb[0].mxu0
      %v1534 = vadd.f32 0.0, %v1533
      %v1535 = vpop.f32.mrb[0].mxu0
      %v1536 = vpop.f32.mrb[0].mxu0
      %v1537 = vadd.f32 0.0, %v1536
      %v1538 = vpop.f32.mrb[0].mxu0
      %1539 = vmatprep.mubr.bf16.mxu0 0
      %1540 = vmatmul.mubr.bf16.gmra.mrb[0].mxu0 %v361
      %v1541 = vpop.f32.mrb[0].mxu0
      %v1542 = vadd.f32 0.0, %v1541
      %v1543 = vpop.f32.mrb[0].mxu0
      %v1544 = vpop.f32.mrb[0].mxu0
      %v1545 = vadd.f32 0.0, %v1544
      %v1546 = vpop.f32.mrb[0].mxu0
      %1547 = vmatprep.mubr.bf16.mxu0 0
      %1548 = vmatmul.mubr.bf16.gmra.mrb[0].mxu0 %v362
      %v1549 = vpop.f32.mrb[0].mxu0
      %v1550 = vadd.f32 0.0, %v1549
      %v1551 = vpop.f32.mrb[0].mxu0
      %v1552 = vpop.f32.mrb[0].mxu0
      %v1553 = vadd.f32 0.0, %v1552
      %v1554 = vpop.f32.mrb[0].mxu0
      %1555 = vmatprep.mubr.bf16.mxu0 0
      %1556 = vmatmul.mubr.bf16.gmra.mrb[0].mxu0 %v1449
      %v1557 = vpop.f32.mrb[0].mxu0
      %v1558 = vadd.f32 0.0, %v1557
      %v1559 = vpop.f32.mrb[0].mxu0
      %v1560 = vpop.f32.mrb[0].mxu0
      %v1561 = vadd.f32 0.0, %v1560
      %v1562 = vpop.f32.mrb[0].mxu0
      %1563 = vdwg.mxu0
      %v1564 = vadd.f32 %v1409, %v1534
      %v1565 = vadd.f32 %v1410, %v1537
      %v1566 = vadd.f32 %v1411, %v1542
      %v1567 = vadd.f32 %v1412, %v1545
      %v1568 = vadd.f32 %v1413, %v1550
      %v1569 = vadd.f32 %v1414, %v1553
      %v1570 = vadd.f32 %v1415, %v1558
      %v1571 = vadd.f32 %v1416, %v1561
      %v1573 = vrot.slane %v201, 5
      %v1574 = vrot.slane %v1573, 4
      %v1575 = vrot.slane %v202, 5
      %v1576 = vsel %vm627, %v1574, %v1575
      %s1577 = scalar_lea.vmem %s1, 512
      %v1578 = vld [vmem:[%s1577] sm:$0xf]
      %v1579 = vld [vmem:[%s1577 + $0x4] sm:$0xf]
      %v1580 = vld [vmem:[%s1577 + $0x8] sm:$0xf]
      %v1581 = vld [vmem:[%s1577 + $0xc] sm:$0xf]
      %v1582 = vld [vmem:[%s1577 + $0x10] sm:$0xf]
      %v1583 = vld [vmem:[%s1577 + $0x14] sm:$0xf]
      %v1584 = vld [vmem:[%s1577 + $0x18] sm:$0xf]
      %v1585 = vld [vmem:[%s1577 + $0x1c] sm:$0xf]
      %v1586 = vld [vmem:[%s1577 + $0x20] sm:$0xf]
      %v1587 = vld [vmem:[%s1577 + $0x24] sm:$0xf]
      %v1588 = vld [vmem:[%s1577 + $0x28] sm:$0xf]
      %v1589 = vld [vmem:[%s1577 + $0x2c] sm:$0xf]
      %v1590 = vld [vmem:[%s1577 + $0x30] sm:$0xf]
      %v1591 = vld [vmem:[%s1577 + $0x34] sm:$0xf]
      %v1592 = vld [vmem:[%s1577 + $0x38] sm:$0xf]
      %v1593 = vld [vmem:[%s1577 + $0x3c] sm:$0xf]
      %v1594 = vunpack.c.l.b16 %v1576
      %v1595 = vpack.c.b16 %v1594, %v1145
      %v1613 = vunpack.c.l.b16 %v1578
      %v1614 = vunpack.c.l.b16 %v1579
      %v1615 = vunpack.c.l.b16 %v1580
      %v1616 = vunpack.c.l.b16 %v1581
      %v1617 = vunpack.c.l.b16 %v1582
      %v1618 = vunpack.c.l.b16 %v1583
      %v1619 = vunpack.c.l.b16 %v1584
      %v1620 = vunpack.c.l.b16 %v1585
      %v1621 = vunpack.c.l.b16 %v1586
      %v1622 = vunpack.c.l.b16 %v1587
      %v1623 = vunpack.c.l.b16 %v1588
      %v1624 = vunpack.c.l.b16 %v1589
      %v1625 = vunpack.c.l.b16 %v1590
      %v1626 = vunpack.c.l.b16 %v1591
      %v1627 = vunpack.c.l.b16 %v1592
      %v1628 = vunpack.c.l.b16 %v1593
      %v1629 = vpack.c.b16 %v1614, %v1613
      %v1630 = vpack.c.b16 %v1616, %v1615
      %v1631 = vpack.c.b16 %v1618, %v1617
      %v1632 = vpack.c.b16 %v1620, %v1619
      %v1633 = vpack.c.b16 %v1622, %v1621
      %v1634 = vpack.c.b16 %v1624, %v1623
      %v1635 = vpack.c.b16 %v1626, %v1625
      %v1636 = vpack.c.b16 %v1628, %v1627
      %1645 = vmatprep.subr.bf16.mxu0 0
      %1646 = vmatpush1.bf16.msra.mxu0 %v1629
      %1647 = vmatprep.subr.bf16.mxu0 0
      %1648 = vmatpush1.bf16.msra.mxu0 %v1630
      %1649 = vmatprep.subr.bf16.mxu0 0
      %1650 = vmatpush1.bf16.msra.mxu0 %v1631
      %1651 = vmatprep.subr.bf16.mxu0 0
      %1652 = vmatpush1.bf16.msra.mxu0 %v1632
      %1653 = vmatprep.subr.bf16.mxu0 0
      %1654 = vmatpush1.bf16.msra.mxu0 %v1633
      %1655 = vmatprep.subr.bf16.mxu0 0
      %1656 = vmatpush1.bf16.msra.mxu0 %v1634
      %1657 = vmatprep.subr.bf16.mxu0 0
      %1658 = vmatpush1.bf16.msra.mxu0 %v1635
      %1659 = vmatprep.subr.bf16.mxu0 0
      %1660 = vmatpush1.bf16.msra.mxu0 %v1636
      %1661 = vmatprep.subr.bf16.mxu0 0
      %1662 = vmatpush1.bf16.msra.mxu0 0
      %1663 = vmatprep.subr.bf16.mxu0 0
      %1664 = vmatpush1.bf16.msra.mxu0 0
      %1665 = vmatprep.subr.bf16.mxu0 0
      %1666 = vmatpush1.bf16.msra.mxu0 0
      %1667 = vmatprep.subr.bf16.mxu0 0
      %1668 = vmatpush1.bf16.msra.mxu0 0
      %1669 = vmatprep.subr.bf16.mxu0 0
      %1670 = vmatpush1.bf16.msra.mxu0 0
      %1671 = vmatprep.subr.bf16.mxu0 0
      %1672 = vmatpush1.bf16.msra.mxu0 0
      %1673 = vmatprep.subr.bf16.mxu0 0
      %1674 = vmatpush1.bf16.msra.mxu0 0
      %1675 = vmatprep.subr.bf16.mxu0 0
      %1676 = vmatpush1.bf16.msra.mxu0 0
      %1677 = vmatprep.mubr.bf16.mxu0 0
      %1678 = vmatmul.mubr.bf16.gmra.mrb[0].mxu0 %v686
      %v1679 = vpop.f32.mrb[0].mxu0
      %v1680 = vadd.f32 0.0, %v1679
      %v1681 = vpop.f32.mrb[0].mxu0
      %v1682 = vpop.f32.mrb[0].mxu0
      %v1683 = vadd.f32 0.0, %v1682
      %v1684 = vpop.f32.mrb[0].mxu0
      %1685 = vmatprep.mubr.bf16.mxu0 0
      %1686 = vmatmul.mubr.bf16.gmra.mrb[0].mxu0 %v687
      %v1687 = vpop.f32.mrb[0].mxu0
      %v1688 = vadd.f32 0.0, %v1687
      %v1689 = vpop.f32.mrb[0].mxu0
      %v1690 = vpop.f32.mrb[0].mxu0
      %v1691 = vadd.f32 0.0, %v1690
      %v1692 = vpop.f32.mrb[0].mxu0
      %1693 = vmatprep.mubr.bf16.mxu0 0
      %1694 = vmatmul.mubr.bf16.gmra.mrb[0].mxu0 %v688
      %v1695 = vpop.f32.mrb[0].mxu0
      %v1696 = vadd.f32 0.0, %v1695
      %v1697 = vpop.f32.mrb[0].mxu0
      %v1698 = vpop.f32.mrb[0].mxu0
      %v1699 = vadd.f32 0.0, %v1698
      %v1700 = vpop.f32.mrb[0].mxu0
      %1701 = vmatprep.mubr.bf16.mxu0 0
      %1702 = vmatmul.mubr.bf16.gmra.mrb[0].mxu0 %v1595
      %v1703 = vpop.f32.mrb[0].mxu0
      %v1704 = vadd.f32 0.0, %v1703
      %v1705 = vpop.f32.mrb[0].mxu0
      %v1706 = vpop.f32.mrb[0].mxu0
      %v1707 = vadd.f32 0.0, %v1706
      %v1708 = vpop.f32.mrb[0].mxu0
      %1709 = vdwg.mxu0
      %v1710 = vadd.f32 %v1564, %v1680
      %v1711 = vadd.f32 %v1565, %v1683
      %v1712 = vadd.f32 %v1566, %v1688
      %v1713 = vadd.f32 %v1567, %v1691
      %v1714 = vadd.f32 %v1568, %v1696
      %v1715 = vadd.f32 %v1569, %v1699
      %v1716 = vadd.f32 %v1570, %v1704
      %v1717 = vadd.f32 %v1571, %v1707
      %v1718 = vpack.c.bf16 %v1711, %v1710
      %v1719 = vpack.c.bf16 %v1713, %v1712
      %v1720 = vpack.c.bf16 %v1715, %v1714
      %v1721 = vpack.c.bf16 %v1717, %v1716
      %v1726 = vunpack.c.l.b16 %v1718
      %v1727 = vunpack.c.h.b16 %v1718
      %v1728 = vunpack.c.l.b16 %v1719
      %v1729 = vunpack.c.h.b16 %v1719
      %v1730 = vunpack.c.l.b16 %v1720
      %v1731 = vunpack.c.h.b16 %v1720
      %v1732 = vunpack.c.l.b16 %v1721
      %v1733 = vunpack.c.h.b16 %v1721
      %v1734 = vpack.c.b16 %v1726, %v1726
      %v1735 = vpack.c.b16 %v1727, %v1727
      %v1736 = vpack.c.b16 %v1728, %v1728
      %v1737 = vpack.c.b16 %v1729, %v1729
      %v1738 = vpack.c.b16 %v1730, %v1730
      %v1739 = vpack.c.b16 %v1731, %v1731
      %v1740 = vpack.c.b16 %v1732, %v1732
      %v1741 = vpack.c.b16 %v1733, %v1733
      %1750 = vst [vmem:[%s177] sm:$0xf] %v1734
      %1751 = vst [vmem:[%s177 + $0x4] sm:$0xf] %v1735
      %1752 = vst [vmem:[%s177 + $0x8] sm:$0xf] %v1736
      %1753 = vst [vmem:[%s177 + $0xc] sm:$0xf] %v1737
      %1754 = vst [vmem:[%s177 + $0x10] sm:$0xf] %v1738
      %1755 = vst [vmem:[%s177 + $0x14] sm:$0xf] %v1739
      %1756 = vst [vmem:[%s177 + $0x18] sm:$0xf] %v1740
      %1757 = vst [vmem:[%s177 + $0x1c] sm:$0xf] %v1741
      %v1758 = vadd.f32 %v1710, %v1711
      %v1759 = vadd.f32 %v1758, %v1712
      %v1760 = vadd.f32 %v1759, %v1713
      %v1761 = vadd.f32 %v1760, %v1714
      %v1762 = vadd.f32 %v1761, %v1715
      %v1763 = vadd.f32 %v1762, %v1716
      %v1764 = vadd.f32 %v1763, %v1717
      %v1765 = vrot.slane %v1764, 4
      %v1766 = vadd.f32 %v1764, %v1765
      %v1767 = vrot.slane %v1766, 2
      %v1768 = vadd.f32 %v1766, %v1767
      %v1769 = vrot.slane %v1768, 1
      %v1770 = vadd.f32 %v1768, %v1769
      %v1771 = vmul.f32 %v1710, %v1710
      %v1772 = vmul.f32 %v1711, %v1711
      %v1773 = vmul.f32 %v1712, %v1712
      %v1774 = vmul.f32 %v1713, %v1713
      %v1775 = vmul.f32 %v1714, %v1714
      %v1776 = vmul.f32 %v1715, %v1715
      %v1777 = vmul.f32 %v1716, %v1716
      %v1778 = vmul.f32 %v1717, %v1717
      %v1779 = vadd.f32 %v1771, %v1772
      %v1780 = vadd.f32 %v1779, %v1773
      %v1781 = vadd.f32 %v1780, %v1774
      %v1782 = vadd.f32 %v1781, %v1775
      %v1783 = vadd.f32 %v1782, %v1776
      %v1784 = vadd.f32 %v1783, %v1777
      %v1785 = vadd.f32 %v1784, %v1778
      %v1786 = vrot.slane %v1785, 4
      %v1787 = vadd.f32 %v1785, %v1786
      %v1788 = vrot.slane %v1787, 2
      %v1789 = vadd.f32 %v1787, %v1788
      %v1790 = vrot.slane %v1789, 1
      %v1791 = vadd.f32 %v1789, %v1790
      %vm1792 = vcmask 1040384
      %v1793 = vsel %vm1792, %v1770, %v1791
      %vm1794 = vcmask 1041408
      %v1795 = vsel %vm1794, %v1793, 0.0
      %1796 = vst [vmem:[%s181] sm:$0xff] %v1795
      %p1797 = scmp.lt.s32.totalorder %s15, 1
      %s1798 = scalar_select %p1797, %s15, 1
      %s1799 = smul.addr %s1798, 8
      %s1800 = smul.addr %s1799, 4
      %s1801 = scalar_lea.vmem %s2, %s1800
      %p1802 = scmp.lt.s32.totalorder %s15, 1
      %s1803 = scalar_select %p1802, %s15, 1
      %s1804 = smul.addr %s1803, 8
      %s1805 = scalar_lea.vmem %s3, %s1804
      // Predicated region
      $region29: #{convnet_forward.8} parent=27 // pred_check
        %p1806 = pneg %p80
      $region30: #{convnet_forward.8} parent=27 // pred_check_branch
        %1808 = sbr.rel (%p1806) target = $region32
      $region31: #{convnet_forward.8} parent=27 // pred_region
        _
      $region32: #{convnet_forward.8} parent=27 // pred_fallthru
        _
      // Predicated region
      $region33: #{convnet_forward.8} parent=27 // pred_check
        %p1809 = pneg %p106
      $region34: #{convnet_forward.8} parent=27 // pred_check_branch
        %1811 = sbr.rel (%p1809) target = $region36
      $region35: #{convnet_forward.8} parent=27 // pred_region
        _
      $region36: #{convnet_forward.8} parent=27 // pred_fallthru
        _
    $region28: #{convnet_forward.8} parent=5 // pred_fallthru
      _
    %p1812 = scmp.le.s32.totalorder 2, %s10
    // Predicated region
    $region37: #{convnet_forward.8} parent=5 // pred_check
      %p1813 = pneg %p1812
    $region38: #{convnet_forward.8} parent=5 // pred_check_branch
      %1815 = sbr.rel (%p1813) target = $region40
    $region39: #{convnet_forward.8} parent=5 // pred_region
      %s1816 = ssub.s32 %s10, 2
      // Predicated region
      $region41: #{convnet_forward.8} parent=39 // pred_check
        %p1817 = pneg %p86
      $region42: #{convnet_forward.8} parent=39 // pred_check_branch
        %1819 = sbr.rel (%p1817) target = $region44
      $region43: #{convnet_forward.8} parent=39 // pred_region
        %p1820 = scmp.lt.s32.totalorder %s16, 1
        %s1821 = scalar_select %p1820, %s16, 1
        %s1822 = smul.addr %s1821, 8
        %s1823 = smul.addr %s1822, 4
        %s1824 = scalar_lea.vmem %s2, %s1823
      $region44: #{convnet_forward.8} parent=39 // pred_fallthru
        _
      // Predicated region
      $region45: #{convnet_forward.8} parent=39 // pred_check
        %p1825 = pneg %p112
      $region46: #{convnet_forward.8} parent=39 // pred_check_branch
        %1827 = sbr.rel (%p1825) target = $region48
      $region47: #{convnet_forward.8} parent=39 // pred_region
        %p1828 = scmp.lt.s32.totalorder %s16, 1
        %s1829 = scalar_select %p1828, %s16, 1
        %s1830 = smul.addr %s1829, 8
        %s1831 = scalar_lea.vmem %s3, %s1830
      $region48: #{convnet_forward.8} parent=39 // pred_fallthru
        _
    $region40: #{convnet_forward.8} parent=5 // pred_fallthru
      _
  $region6: #{convnet_forward.8} parent=0 // loop_footer
    %s14 = sadd.s32 1, %s10
  $region7: #{convnet_forward.8} parent=0 // loop_footer_branch
    %9 = sbr.rel target = $region3
  $region8: #{convnet_forward.8} parent=0 // loop_exit
    _

// kernel: convnet_forward.11
$region0: #{convnet_forward.11}
  #allocation0 [shape = 'u32[]', space=smem, size = 0x4, offset = 0x4, fixed_abs, tag = 'smem constant byte address 0x4 - core index']
  #allocation1 [shape = 'u32[144,128]{1,0:T(1,128)}', space=vmem, size = 0x12000, scoped, tag = 'internal scratch']
  %s0 = inlined_call_operand.vmem [shape: bf16[8,2,256], index: 0, kind: input, shape index: {}]
  %s1 = inlined_call_operand.vmem [shape: f32[1,1,128], index: 1, kind: input, shape index: {}]
  %s2 = inlined_call_operand.vmem [shape: f32[1,1,128], index: 2, kind: input, shape index: {}]
  %s3 = inlined_call_operand.vmem [shape: bf16[4,2,128], index: 3, kind: output, shape index: {}]
  %s4 = sld [smem:[#allocation0]]
  $region45: #{convnet_forward.11} parent=0
    _
  %s6 = ssub.s32 1, %s4
  %s7 = scalar_select 0, %s6, %s4
  loop: start=0, step=1, limit=6
  $region2: #{convnet_forward.11} parent=0 // loop_pre_header
    _
  $region3: #{convnet_forward.11} parent=0 // loop_header
    %s9 = sphi 0, %s13
    %p10 = scmp.ge.s32.totalorder %s9, 6
    %s19 = sphi 0, %s21
    %s22 = sphi 0, %s19
    %s23 = sphi 0, %s22
    %s39 = sphi 0, %s23
    %s43 = sphi 0, %s43
    %s45 = sphi 0, %s43
    %s46 = sphi 0, %s45
    %s60 = sphi 0, %s46
    %s64 = sphi 0, %s64
    %s66 = sphi 0, %s64
    %s67 = sphi 0, %s66
    %s81 = sphi 0, %s67
    %s87 = sphi 0, %s89
    %s90 = sphi 0, %s87
    %s91 = sphi 0, %s90
    %s107 = sphi 0, %s91
  $region4: #{convnet_forward.11} parent=0 // loop_header_branch
    %12 = sbr.rel (%p10) target = $region8
  $region5: #{convnet_forward.11} parent=0 // loop_body
    %s14 = ssub.s32 %s9, 1
    %s15 = ssub.s32 %s9, 2
    %s16 = sadd.s32 %s9, 1
    %s17 = ssub.s32 %s9, %s16
    %p18 = scmp.eq.s32.totalorder %s17, 0
    %s20 = sadd.s32 %s19, 1
    %s21 = scalar_select %p18, %s19, %s20
    %p24 = pneg %p18
    %p25 = scmp.eq.s32.totalorder %s9, 3
    %p26 = por %p24, %p25
    %p27 = scmp.ne.s32.totalorder %s19, %s22
    %p28 = scmp.eq.s32.totalorder %s9, 0
    %p29 = por %p27, %p28
    %p30 = scmp.ne.s32.totalorder %s19, %s22
    %p31 = scmp.eq.s32.totalorder %s14, 3
    %p32 = por %p30, %p31
    %p33 = scmp.ne.s32.totalorder %s22, %s23
    %p34 = scmp.eq.s32.totalorder %s14, 0
    %p35 = por %p33, %p34
    %p36 = scmp.ne.s32.totalorder %s22, %s23
    %p37 = scmp.eq.s32.totalorder %s15, 3
    %p38 = por %p36, %p37
    %p40 = scmp.ne.s32.totalorder %s23, %s39
    %p41 = scmp.eq.s32.totalorder %s15, 0
    %p42 = por %p40, %p41
    %s44 = sadd.s32 %s43, 1
    %p47 = scmp.eq.s32.totalorder %s9, 3
    %p48 = scmp.ne.s32.totalorder %s43, %s45
    %p49 = scmp.eq.s32.totalorder %s9, 0
    %p50 = por %p48, %p49
    %p51 = scmp.ne.s32.totalorder %s43, %s45
    %p52 = scmp.eq.s32.totalorder %s14, 3
    %p53 = por %p51, %p52
    %p54 = scmp.ne.s32.totalorder %s45, %s46
    %p55 = scmp.eq.s32.totalorder %s14, 0
    %p56 = por %p54, %p55
    %p57 = scmp.ne.s32.totalorder %s45, %s46
    %p58 = scmp.eq.s32.totalorder %s15, 3
    %p59 = por %p57, %p58
    %p61 = scmp.ne.s32.totalorder %s46, %s60
    %p62 = scmp.eq.s32.totalorder %s15, 0
    %p63 = por %p61, %p62
    %s65 = sadd.s32 %s64, 1
    %p68 = scmp.eq.s32.totalorder %s9, 3
    %p69 = scmp.ne.s32.totalorder %s64, %s66
    %p70 = scmp.eq.s32.totalorder %s9, 0
    %p71 = por %p69, %p70
    %p72 = scmp.ne.s32.totalorder %s64, %s66
    %p73 = scmp.eq.s32.totalorder %s14, 3
    %p74 = por %p72, %p73
    %p75 = scmp.ne.s32.totalorder %s66, %s67
    %p76 = scmp.eq.s32.totalorder %s14, 0
    %p77 = por %p75, %p76
    %p78 = scmp.ne.s32.totalorder %s66, %s67
    %p79 = scmp.eq.s32.totalorder %s15, 3
    %p80 = por %p78, %p79
    %p82 = scmp.ne.s32.totalorder %s67, %s81
    %p83 = scmp.eq.s32.totalorder %s15, 0
    %p84 = por %p82, %p83
    %s85 = ssub.s32 %s9, %s16
    %p86 = scmp.eq.s32.totalorder %s85, 0
    %s88 = sadd.s32 %s87, 1
    %s89 = scalar_select %p86, %s87, %s88
    %p92 = pneg %p86
    %p93 = scmp.eq.s32.totalorder %s9, 3
    %p94 = por %p92, %p93
    %p95 = scmp.ne.s32.totalorder %s87, %s90
    %p96 = scmp.eq.s32.totalorder %s9, 0
    %p97 = por %p95, %p96
    %p98 = scmp.ne.s32.totalorder %s87, %s90
    %p99 = scmp.eq.s32.totalorder %s14, 3
    %p100 = por %p98, %p99
    %p101 = scmp.ne.s32.totalorder %s90, %s91
    %p102 = scmp.eq.s32.totalorder %s14, 0
    %p103 = por %p101, %p102
    %p104 = scmp.ne.s32.totalorder %s90, %s91
    %p105 = scmp.eq.s32.totalorder %s15, 3
    %p106 = por %p104, %p105
    %p108 = scmp.ne.s32.totalorder %s91, %s107
    %p109 = scmp.eq.s32.totalorder %s15, 0
    %p110 = por %p108, %p109
    %p111 = scmp.le.s32.totalorder 1, %s9
    %p112 = scmp.lt.s32.totalorder %s9, 5
    %p113 = pnand %p111, %p112
    %p114 = pneg %p113
    // Predicated region
    $region9: #{convnet_forward.11} parent=5 // pred_check
      _
    $region10: #{convnet_forward.11} parent=5 // pred_check_branch
      %116 = sbr.rel (%p113) target = $region12
    $region11: #{convnet_forward.11} parent=5 // pred_region
      %s117 = ssub.s32 %s9, 1
      // Predicated region
      $region13: #{convnet_forward.11} parent=11 // pred_check
        %p118 = pneg %p56
      $region14: #{convnet_forward.11} parent=11 // pred_check_branch
        %120 = sbr.rel (%p118) target = $region16
      $region15: #{convnet_forward.11} parent=11 // pred_region
        _
      $region16: #{convnet_forward.11} parent=11 // pred_fallthru
        _
      // Predicated region
      $region17: #{convnet_forward.11} parent=11 // pred_check
        %p121 = pneg %p77
      $region18: #{convnet_forward.11} parent=11 // pred_check_branch
        %123 = sbr.rel (%p121) target = $region20
      $region19: #{convnet_forward.11} parent=11 // pred_region
        _
      $region20: #{convnet_forward.11} parent=11 // pred_fallthru
        _
    $region12: #{convnet_forward.11} parent=5 // pred_fallthru
      _
    %p124 = scmp.lt.s32.totalorder %s9, 4
    // Predicated region
    $region21: #{convnet_forward.11} parent=5 // pred_check
      %p125 = pneg %p124
    $region22: #{convnet_forward.11} parent=5 // pred_check_branch
      %127 = sbr.rel (%p125) target = $region24
    $region23: #{convnet_forward.11} parent=5 // pred_region
      // Predicated region
      $region25: #{convnet_forward.11} parent=23 // pred_check
        %p128 = pneg %p29
      $region26: #{convnet_forward.11} parent=23 // pred_check_branch
        %130 = sbr.rel (%p128) target = $region28
      $region27: #{convnet_forward.11} parent=23 // pred_region
        %s131 = smul.u32 2, %s9
        %p132 = scmp.lt.s32.totalorder %s131, 7
        %s133 = scalar_select %p132, %s131, 7
        %s134 = smul.addr %s133, 2
        %s135 = scalar_lea.vmem %s0, %s134
        %s136 = smul.u32 2, %s9
      $region28: #{convnet_forward.11} parent=23 // pred_fallthru
        _
    $region24: #{convnet_forward.11} parent=5 // pred_fallthru
      _
    %p137 = scmp.le.s32.totalorder 1, %s9
    %p138 = scmp.lt.s32.totalorder %s9, 5
    %p139 = pnand %p137, %p138
    %p140 = pneg %p139
    // Predicated region
    $region29: #{convnet_forward.11} parent=5 // pred_check
      _
    $region30: #{convnet_forward.11} parent=5 // pred_check_branch
      %142 = sbr.rel (%p139) target = $region32
    $region31: #{convnet_forward.11} parent=5 // pred_region
      %s143 = ssub.s32 %s9, 1
      %s144 = smul.u32 2, %s14
      %p145 = scmp.lt.s32.totalorder %s144, 7
      %s146 = scalar_select %p145, %s144, 7
      %s147 = smul.addr %s146, 2
      %s148 = scalar_lea.vmem %s0, %s147
      %p149 = pneg %p35
      %p150 = pneg %p32
      %p151 = pneg %p56
      %p152 = pneg %p53
      %p153 = pneg %p77
      %p154 = pneg %p74
      %p155 = pneg %p103
      %p156 = pneg %p100
      %p157 = scmp.lt.s32.totalorder %s14, 3
      %s158 = scalar_select %p157, %s14, 3
      %s159 = scalar_lea.vmem %s3, %s158
      %s160 = smul.u32 2, %s14
      %p161 = scmp.lt.s32.totalorder %s160, 7
      %s162 = scalar_select %p161, %s160, 7
      %s163 = smul.addr %s162, 2
      %s164 = scalar_lea.vmem %s0, %s163
      %s165 = smul.u32 2, %s14
      %p166 = scmp.lt.s32.totalorder %s14, 3
      %s167 = scalar_select %p166, %s14, 3
      %s168 = scalar_lea.vmem %s3, %s167
      %v169 = vld [vmem:[%s164] sm:$0x3]
      %v170 = vld [vmem:[%s164 + $0x2] sm:$0x3]
      %v171 = vunpack.c.l.bf16 %v169
      %v172 = vunpack.c.l.bf16 %v170
      %v173 = vld [vmem:[%s1] sm:$0x1]
      %v174 = vld [vmem:[%s2] sm:$0x1]
      %v176 = vlaneseq
      %v177 = vshrl.u32 %v176, 7
      %v178 = vsub.s32 0, %v177
      %v179 = vrot.slane %v173, %v178
      %v181 = vmul.f32 %v171, %v179
      %v182 = vmul.f32 %v172, %v179
      %v184 = vlaneseq
      %v185 = vshrl.u32 %v184, 7
      %v186 = vsub.s32 0, %v185
      %v187 = vrot.slane %v174, %v186
      %v189 = vadd.f32 %v181, %v187
      %v190 = vadd.f32 %v182, %v187
      %v191 = vmax.f32 %v189, 0.0
      %v192 = vmax.f32 %v190, 0.0
      %v195 = vrot.slane %v171, 2
      %v196 = vrot.slane %v172, 2
      %v199 = vmul.f32 %v195, %v179
      %v200 = vmul.f32 %v196, %v179
      %v201 = vadd.f32 %v199, %v187
      %v202 = vadd.f32 %v200, %v187
      %v203 = vmax.f32 %v201, 0.0
      %v204 = vmax.f32 %v202, 0.0
      %v205 = vmax.f32 %v191, %v203
      %v206 = vmax.f32 %v192, %v204
      %v207 = vmax.f32 %v205, %v206
      %v208 = vpack.c.bf16 %v207, %v207
      %209 = vst [vmem:[%s168] sm:$0x1] %v208
      %p210 = scmp.lt.s32.totalorder %s14, 3
      %s211 = scalar_select %p210, %s14, 3
      %s212 = scalar_lea.vmem %s3, %s211
      // Predicated region
      $region33: #{convnet_forward.11} parent=31 // pred_check
        %p213 = pneg %p100
      $region34: #{convnet_forward.11} parent=31 // pred_check_branch
        %215 = sbr.rel (%p213) target = $region36
      $region35: #{convnet_forward.11} parent=31 // pred_region
        _
      $region36: #{convnet_forward.11} parent=31 // pred_fallthru
        _
    $region32: #{convnet_forward.11} parent=5 // pred_fallthru
      _
    %p216 = scmp.le.s32.totalorder 2, %s9
    // Predicated region
    $region37: #{convnet_forward.11} parent=5 // pred_check
      %p217 = pneg %p216
    $region38: #{convnet_forward.11} parent=5 // pred_check_branch
      %219 = sbr.rel (%p217) target = $region40
    $region39: #{convnet_forward.11} parent=5 // pred_region
      %s220 = ssub.s32 %s9, 2
      // Predicated region
      $region41: #{convnet_forward.11} parent=39 // pred_check
        %p221 = pneg %p106
      $region42: #{convnet_forward.11} parent=39 // pred_check_branch
        %223 = sbr.rel (%p221) target = $region44
      $region43: #{convnet_forward.11} parent=39 // pred_region
        %p224 = scmp.lt.s32.totalorder %s15, 3
        %s225 = scalar_select %p224, %s15, 3
        %s226 = scalar_lea.vmem %s3, %s225
      $region44: #{convnet_forward.11} parent=39 // pred_fallthru
        _
    $region40: #{convnet_forward.11} parent=5 // pred_fallthru
      _
  $region6: #{convnet_forward.11} parent=0 // loop_footer
    %s13 = sadd.s32 1, %s9
  $region7: #{convnet_forward.11} parent=0 // loop_footer_branch
    %8 = sbr.rel target = $region3
  $region8: #{convnet_forward.11} parent=0 // loop_exit
    _

// kernel: convnet_forward.10
$region0: #{convnet_forward.10}
  #allocation0 [shape = 'u32[]', space=smem, size = 0x4, offset = 0x4, fixed_abs, tag = 'smem constant byte address 0x4 - core index']
  #allocation1 [shape = 'u32[144,128]{1,0:T(1,128)}', space=vmem, size = 0x12000, scoped, tag = 'internal scratch']
  %s0 = inlined_call_operand.vmem [shape: bf16[2,6,6,128], index: 0, kind: input, shape index: {}]
  %s1 = inlined_call_operand.vmem [shape: bf16[9,128,128], index: 1, kind: input, shape index: {}]
  %s2 = inlined_call_operand.vmem [shape: bf16[2,16,128], index: 2, kind: output, shape index: {0}]
  %s3 = inlined_call_operand.vmem [shape: f32[2,8,128], index: 3, kind: output, shape index: {1}]
  %4 = xla_tuple %s2, %s3
  %s5 = sld [smem:[#allocation0]]
  $region49: #{convnet_forward.10} parent=0
    _
  %s7 = ssub.s32 1, %s5
  %s8 = scalar_select 0, %s7, %s5
  loop: start=0, step=1, limit=4
  $region2: #{convnet_forward.10} parent=0 // loop_pre_header
    _
  $region3: #{convnet_forward.10} parent=0 // loop_header
    %s10 = sphi 0, %s14
    %p11 = scmp.ge.s32.totalorder %s10, 4
    %s20 = sphi 0, %s22
    %s23 = sphi 0, %s20
    %s24 = sphi 0, %s23
    %s40 = sphi 0, %s24
    %s44 = sphi 0, %s44
    %s46 = sphi 0, %s44
    %s47 = sphi 0, %s46
    %s61 = sphi 0, %s47
    %s67 = sphi 0, %s69
    %s70 = sphi 0, %s67
    %s71 = sphi 0, %s70
    %s87 = sphi 0, %s71
    %s93 = sphi 0, %s95
    %s96 = sphi 0, %s93
    %s97 = sphi 0, %s96
    %s113 = sphi 0, %s97
  $region4: #{convnet_forward.10} parent=0 // loop_header_branch
    %13 = sbr.rel (%p11) target = $region8
  $region5: #{convnet_forward.10} parent=0 // loop_body
    %s15 = ssub.s32 %s10, 1
    %s16 = ssub.s32 %s10, 2
    %s17 = sadd.s32 %s10, 1
    %s18 = ssub.s32 %s10, %s17
    %p19 = scmp.eq.s32.totalorder %s18, 0
    %s21 = sadd.s32 %s20, 1
    %s22 = scalar_select %p19, %s20, %s21
    %p25 = pneg %p19
    %p26 = scmp.eq.s32.totalorder %s10, 1
    %p27 = por %p25, %p26
    %p28 = scmp.ne.s32.totalorder %s20, %s23
    %p29 = scmp.eq.s32.totalorder %s10, 0
    %p30 = por %p28, %p29
    %p31 = scmp.ne.s32.totalorder %s20, %s23
    %p32 = scmp.eq.s32.totalorder %s15, 1
    %p33 = por %p31, %p32
    %p34 = scmp.ne.s32.totalorder %s23, %s24
    %p35 = scmp.eq.s32.totalorder %s15, 0
    %p36 = por %p34, %p35
    %p37 = scmp.ne.s32.totalorder %s23, %s24
    %p38 = scmp.eq.s32.totalorder %s16, 1
    %p39 = por %p37, %p38
    %p41 = scmp.ne.s32.totalorder %s24, %s40
    %p42 = scmp.eq.s32.totalorder %s16, 0
    %p43 = por %p41, %p42
    %s45 = sadd.s32 %s44, 1
    %p48 = scmp.eq.s32.totalorder %s10, 1
    %p49 = scmp.ne.s32.totalorder %s44, %s46
    %p50 = scmp.eq.s32.totalorder %s10, 0
    %p51 = por %p49, %p50
    %p52 = scmp.ne.s32.totalorder %s44, %s46
    %p53 = scmp.eq.s32.totalorder %s15, 1
    %p54 = por %p52, %p53
    %p55 = scmp.ne.s32.totalorder %s46, %s47
    %p56 = scmp.eq.s32.totalorder %s15, 0
    %p57 = por %p55, %p56
    %p58 = scmp.ne.s32.totalorder %s46, %s47
    %p59 = scmp.eq.s32.totalorder %s16, 1
    %p60 = por %p58, %p59
    %p62 = scmp.ne.s32.totalorder %s47, %s61
    %p63 = scmp.eq.s32.totalorder %s16, 0
    %p64 = por %p62, %p63
    %s65 = ssub.s32 %s10, %s17
    %p66 = scmp.eq.s32.totalorder %s65, 0
    %s68 = sadd.s32 %s67, 1
    %s69 = scalar_select %p66, %s67, %s68
    %p72 = pneg %p66
    %p73 = scmp.eq.s32.totalorder %s10, 1
    %p74 = por %p72, %p73
    %p75 = scmp.ne.s32.totalorder %s67, %s70
    %p76 = scmp.eq.s32.totalorder %s10, 0
    %p77 = por %p75, %p76
    %p78 = scmp.ne.s32.totalorder %s67, %s70
    %p79 = scmp.eq.s32.totalorder %s15, 1
    %p80 = por %p78, %p79
    %p81 = scmp.ne.s32.totalorder %s70, %s71
    %p82 = scmp.eq.s32.totalorder %s15, 0
    %p83 = por %p81, %p82
    %p84 = scmp.ne.s32.totalorder %s70, %s71
    %p85 = scmp.eq.s32.totalorder %s16, 1
    %p86 = por %p84, %p85
    %p88 = scmp.ne.s32.totalorder %s71, %s87
    %p89 = scmp.eq.s32.totalorder %s16, 0
    %p90 = por %p88, %p89
    %s91 = ssub.s32 %s10, %s17
    %p92 = scmp.eq.s32.totalorder %s91, 0
    %s94 = sadd.s32 %s93, 1
    %s95 = scalar_select %p92, %s93, %s94
    %p98 = pneg %p92
    %p99 = scmp.eq.s32.totalorder %s10, 1
    %p100 = por %p98, %p99
    %p101 = scmp.ne.s32.totalorder %s93, %s96
    %p102 = scmp.eq.s32.totalorder %s10, 0
    %p103 = por %p101, %p102
    %p104 = scmp.ne.s32.totalorder %s93, %s96
    %p105 = scmp.eq.s32.totalorder %s15, 1
    %p106 = por %p104, %p105
    %p107 = scmp.ne.s32.totalorder %s96, %s97
    %p108 = scmp.eq.s32.totalorder %s15, 0
    %p109 = por %p107, %p108
    %p110 = scmp.ne.s32.totalorder %s96, %s97
    %p111 = scmp.eq.s32.totalorder %s16, 1
    %p112 = por %p110, %p111
    %p114 = scmp.ne.s32.totalorder %s97, %s113
    %p115 = scmp.eq.s32.totalorder %s16, 0
    %p116 = por %p114, %p115
    %p117 = scmp.le.s32.totalorder 1, %s10
    %p118 = scmp.lt.s32.totalorder %s10, 3
    %p119 = pnand %p117, %p118
    %p120 = pneg %p119
    // Predicated region
    $region9: #{convnet_forward.10} parent=5 // pred_check
      _
    $region10: #{convnet_forward.10} parent=5 // pred_check_branch
      %122 = sbr.rel (%p119) target = $region12
    $region11: #{convnet_forward.10} parent=5 // pred_region
      %s123 = ssub.s32 %s10, 1
      // Predicated region
      $region13: #{convnet_forward.10} parent=11 // pred_check
        %p124 = pneg %p57
      $region14: #{convnet_forward.10} parent=11 // pred_check_branch
        %126 = sbr.rel (%p124) target = $region16
      $region15: #{convnet_forward.10} parent=11 // pred_region
        _
      $region16: #{convnet_forward.10} parent=11 // pred_fallthru
        _
    $region12: #{convnet_forward.10} parent=5 // pred_fallthru
      _
    %p127 = scmp.lt.s32.totalorder %s10, 2
    // Predicated region
    $region17: #{convnet_forward.10} parent=5 // pred_check
      %p128 = pneg %p127
    $region18: #{convnet_forward.10} parent=5 // pred_check_branch
      %130 = sbr.rel (%p128) target = $region20
    $region19: #{convnet_forward.10} parent=5 // pred_region
      // Predicated region
      $region21: #{convnet_forward.10} parent=19 // pred_check
        %p131 = pneg %p30
      $region22: #{convnet_forward.10} parent=19 // pred_check_branch
        %133 = sbr.rel (%p131) target = $region24
      $region23: #{convnet_forward.10} parent=19 // pred_region
        %p134 = scmp.lt.s32.totalorder %s10, 1
        %s135 = scalar_select %p134, %s10, 1
        %s136 = smul.addr %s135, 6
        %s137 = smul.addr %s136, 4
        %s138 = scalar_lea.vmem %s0, %s137
      $region24: #{convnet_forward.10} parent=19 // pred_fallthru
        _
    $region20: #{convnet_forward.10} parent=5 // pred_fallthru
      _
    %p139 = scmp.le.s32.totalorder 1, %s10
    %p140 = scmp.lt.s32.totalorder %s10, 3
    %p141 = pnand %p139, %p140
    %p142 = pneg %p141
    // Predicated region
    $region25: #{convnet_forward.10} parent=5 // pred_check
      _
    $region26: #{convnet_forward.10} parent=5 // pred_check_branch
      %144 = sbr.rel (%p141) target = $region28
    $region27: #{convnet_forward.10} parent=5 // pred_region
      %s145 = ssub.s32 %s10, 1
      %p146 = scmp.lt.s32.totalorder %s15, 1
      %s147 = scalar_select %p146, %s15, 1
      %s148 = smul.addr %s147, 6
      %s149 = smul.addr %s148, 4
      %s150 = scalar_lea.vmem %s0, %s149
      %p151 = pneg %p36
      %p152 = pneg %p33
      %p153 = pneg %p57
      %p154 = pneg %p54
      %p155 = pneg %p83
      %p156 = pneg %p80
      %p157 = scmp.lt.s32.totalorder %s15, 1
      %s158 = scalar_select %p157, %s15, 1
      %s159 = smul.addr %s158, 2
      %s160 = smul.addr %s159, 4
      %s161 = scalar_lea.vmem %s2, %s160
      %p162 = pneg %p109
      %p163 = pneg %p106
      %p164 = scmp.lt.s32.totalorder %s15, 1
      %s165 = scalar_select %p164, %s15, 1
      %s166 = smul.addr %s165, 8
      %s167 = scalar_lea.vmem %s3, %s166
      %p168 = scmp.lt.s32.totalorder %s15, 1
      %s169 = scalar_select %p168, %s15, 1
      %s170 = smul.addr %s169, 6
      %s171 = smul.addr %s170, 4
      %s172 = scalar_lea.vmem %s0, %s171
      %p173 = scmp.lt.s32.totalorder %s15, 1
      %s174 = scalar_select %p173, %s15, 1
      %s175 = smul.addr %s174, 2
      %s176 = smul.addr %s175, 4
      %s177 = scalar_lea.vmem %s2, %s176
      %p178 = scmp.lt.s32.totalorder %s15, 1
      %s179 = scalar_select %p178, %s15, 1
      %s180 = smul.addr %s179, 8
      %s181 = scalar_lea.vmem %s3, %s180
      %v183 = vld [vmem:[%s172] sm:$0x7]
      %v184 = vld [vmem:[%s172 + $0x4] sm:$0x7]
      %v185 = vld [vmem:[%s172 + $0x8] sm:$0x7]
      %v186 = vld [vmem:[%s172 + $0xc] sm:$0x7]
      %v187 = vld [vmem:[%s172 + $0x10] sm:$0x7]
      %v188 = vld [vmem:[%s172 + $0x14] sm:$0x7]
      %v189 = vld [vmem:[%s1] sm:$0xf]
      %v190 = vld [vmem:[%s1 + $0x4] sm:$0xf]
      %v191 = vld [vmem:[%s1 + $0x8] sm:$0xf]
      %v192 = vld [vmem:[%s1 + $0xc] sm:$0xf]
      %v193 = vld [vmem:[%s1 + $0x10] sm:$0xf]
      %v194 = vld [vmem:[%s1 + $0x14] sm:$0xf]
      %v195 = vld [vmem:[%s1 + $0x18] sm:$0xf]
      %v196 = vld [vmem:[%s1 + $0x1c] sm:$0xf]
      %v197 = vld [vmem:[%s1 + $0x20] sm:$0xf]
      %v198 = vld [vmem:[%s1 + $0x24] sm:$0xf]
      %v199 = vld [vmem:[%s1 + $0x28] sm:$0xf]
      %v200 = vld [vmem:[%s1 + $0x2c] sm:$0xf]
      %v201 = vld [vmem:[%s1 + $0x30] sm:$0xf]
      %v202 = vld [vmem:[%s1 + $0x34] sm:$0xf]
      %v203 = vld [vmem:[%s1 + $0x38] sm:$0xf]
      %v204 = vld [vmem:[%s1 + $0x3c] sm:$0xf]
      %v210 = vunpack.c.l.s4 1983009808
      %v211 = vunpack.c.0.s8 %v210
      %v212 = vlaneseq
      %v213 = vshrl.u32 %v212, 7
      %v214 = vsub.s32 %v211, %v213
      %v215 = vrot.slane %v183, %v214
      %v216 = vcombine.high %v215, %v215
      %v218 = vunpack.c.l.s4 1983009808
      %v219 = vunpack.c.0.s8 %v218
      %v220 = vlaneseq
      %v221 = vshrl.u32 %v220, 7
      %v222 = vsub.s32 %v219, %v221
      %v223 = vrot.slane %v184, %v222
      %v224 = vcombine.high %v223, %v223
      %v226 = vunpack.c.l.s4 1983009808
      %v227 = vunpack.c.0.s8 %v226
      %v228 = vlaneseq
      %v229 = vshrl.u32 %v228, 7
      %v230 = vsub.s32 %v227, %v229
      %v231 = vrot.slane %v185, %v230
      %v232 = vcombine.high %v231, %v231
      %v234 = vunpack.c.l.s4 1983009808
      %v235 = vunpack.c.0.s8 %v234
      %v236 = vlaneseq
      %v237 = vshrl.u32 %v236, 7
      %v238 = vsub.s32 %v235, %v237
      %v239 = vrot.slane %v186, %v238
      %v240 = vcombine.high %v239, %v239
      %vm241 = vsmask.f32 1280
      %vm242 = vsmask.f32 3336
      %vm243 = vmor %vm241, %vm242
      %vm244 = vsmask.f32 5392
      %vm245 = vmor %vm243, %vm244
      %vm246 = vsmask.f32 7448
      %vm247 = vmor %vm245, %vm246
      %v249 = vshrl.u32 %v215, 16
      %v251 = vrot.slane %v249, 6
      %v252 = vshll.u32 %v215, 16
      %v254 = vrot.slane %v252, 7
      %v255 = vor.u32 %v251, %v254
      %v256 = vrot.slane %v255, 2
      %v258 = vshll.u32 %v216, 16
      %v260 = vrot.slane %v258, 7
      %v261 = vsel %vm247, %v256, %v260
      %v263 = vshrl.u32 %v223, 16
      %v265 = vrot.slane %v263, 6
      %v266 = vshll.u32 %v223, 16
      %v268 = vrot.slane %v266, 7
      %v269 = vor.u32 %v265, %v268
      %v270 = vrot.slane %v269, 2
      %v272 = vshll.u32 %v224, 16
      %v274 = vrot.slane %v272, 7
      %v275 = vsel %vm247, %v270, %v274
      %v277 = vshrl.u32 %v231, 16
      %v279 = vrot.slane %v277, 6
      %v280 = vshll.u32 %v231, 16
      %v282 = vrot.slane %v280, 7
      %v283 = vor.u32 %v279, %v282
      %v284 = vrot.slane %v283, 2
      %v286 = vshll.u32 %v232, 16
      %v288 = vrot.slane %v286, 7
      %v289 = vsel %vm247, %v284, %v288
      %v291 = vshrl.u32 %v239, 16
      %v293 = vrot.slane %v291, 6
      %v294 = vshll.u32 %v239, 16
      %v296 = vrot.slane %v294, 7
      %v297 = vor.u32 %v293, %v296
      %v298 = vrot.slane %v297, 2
      %v300 = vshll.u32 %v240, 16
      %v302 = vrot.slane %v300, 7
      %v303 = vsel %vm247, %v298, %v302
      %s304 = scalar_lea.vmem %s1, 64
      %v305 = vld [vmem:[%s304] sm:$0xf]
      %v306 = vld [vmem:[%s304 + $0x4] sm:$0xf]
      %v307 = vld [vmem:[%s304 + $0x8] sm:$0xf]
      %v308 = vld [vmem:[%s304 + $0xc] sm:$0xf]
      %v309 = vld [vmem:[%s304 + $0x10] sm:$0xf]
      %v310 = vld [vmem:[%s304 + $0x14] sm:$0xf]
      %v311 = vld [vmem:[%s304 + $0x18] sm:$0xf]
      %v312 = vld [vmem:[%s304 + $0x1c] sm:$0xf]
      %v313 = vld [vmem:[%s304 + $0x20] sm:$0xf]
      %v314 = vld [vmem:[%s304 + $0x24] sm:$0xf]
      %v315 = vld [vmem:[%s304 + $0x28] sm:$0xf]
      %v316 = vld [vmem:[%s304 + $0x2c] sm:$0xf]
      %v317 = vld [vmem:[%s304 + $0x30] sm:$0xf]
      %v318 = vld [vmem:[%s304 + $0x34] sm:$0xf]
      %v319 = vld [vmem:[%s304 + $0x38] sm:$0xf]
      %v320 = vld [vmem:[%s304 + $0x3c] sm:$0xf]
      %v321 = vcombine.low %v261, %v275
      %v322 = vcombine.low %v289, %v303
      %v324 = vunpack.c.l.s4 1983009808
      %v325 = vunpack.c.0.s8 %v324
      %v326 = vlaneseq
      %v327 = vshrl.u32 %v326, 7
      %v328 = vsub.s32 %v325, %v327
      %v329 = vrot.slane %v321, %v328
      %v331 = vunpack.c.l.s4 1983009808
      %v332 = vunpack.c.0.s8 %v331
      %v333 = vlaneseq
      %v334 = vshrl.u32 %v333, 7
      %v335 = vsub.s32 %v332, %v334
      %v336 = vrot.slane %v322, %v335
      %v337 = vcombine.low %v329, %v336
      %v355 = vunpack.c.l.b16 %v305
      %v356 = vunpack.c.l.b16 %v306
      %v357 = vunpack.c.l.b16 %v307
      %v358 = vunpack.c.l.b16 %v308
      %v359 = vunpack.c.l.b16 %v309
      %v360 = vunpack.c.l.b16 %v310
      %v361 = vunpack.c.l.b16 %v311
      %v362 = vunpack.c.l.b16 %v312
      %v363 = vunpack.c.l.b16 %v313
      %v364 = vunpack.c.l.b16 %v314
      %v365 = vunpack.c.l.b16 %v315
      %v366 = vunpack.c.l.b16 %v316
      %v367 = vunpack.c.l.b16 %v317
      %v368 = vunpack.c.l.b16 %v318
      %v369 = vunpack.c.l.b16 %v319
      %v370 = vunpack.c.l.b16 %v320
      %v371 = vpack.c.b16 %v356, %v355
      %v372 = vpack.c.b16 %v358, %v357
      %v373 = vpack.c.b16 %v360, %v359
      %v374 = vpack.c.b16 %v362, %v361
      %v375 = vpack.c.b16 %v364, %v363
      %v376 = vpack.c.b16 %v366, %v365
      %v377 = vpack.c.b16 %v368, %v367
      %v378 = vpack.c.b16 %v370, %v369
      %387 = vmatprep.subr.bf16.mxu0 0
      %388 = vmatpush1.bf16.msra.mxu0 %v371
      %389 = vmatprep.subr.bf16.mxu0 0
      %390 = vmatpush1.bf16.msra.mxu0 %v372
      %391 = vmatprep.subr.bf16.mxu0 0
      %392 = vmatpush1.bf16.msra.mxu0 %v373
      %393 = vmatprep.subr.bf16.mxu0 0
      %394 = vmatpush1.bf16.msra.mxu0 %v374
      %395 = vmatprep.subr.bf16.mxu0 0
      %396 = vmatpush1.bf16.msra.mxu0 %v375
      %397 = vmatprep.subr.bf16.mxu0 0
      %398 = vmatpush1.bf16.msra.mxu0 %v376
      %399 = vmatprep.subr.bf16.mxu0 0
      %400 = vmatpush1.bf16.msra.mxu0 %v377
      %401 = vmatprep.subr.bf16.mxu0 0
      %402 = vmatpush1.bf16.msra.mxu0 %v378
      %403 = vmatprep.subr.bf16.mxu0 0
      %404 = vmatpush1.bf16.msra.mxu0 0
      %405 = vmatprep.subr.bf16.mxu0 0
      %406 = vmatpush1.bf16.msra.mxu0 0
      %407 = vmatprep.subr.bf16.mxu0 0
      %408 = vmatpush1.bf16.msra.mxu0 0
      %409 = vmatprep.subr.bf16.mxu0 0
      %410 = vmatpush1.bf16.msra.mxu0 0
      %411 = vmatprep.subr.bf16.mxu0 0
      %412 = vmatpush1.bf16.msra.mxu0 0
      %413 = vmatprep.subr.bf16.mxu0 0
      %414 = vmatpush1.bf16.msra.mxu0 0
      %415 = vmatprep.subr.bf16.mxu0 0
      %416 = vmatpush1.bf16.msra.mxu0 0
      %417 = vmatprep.subr.bf16.mxu0 0
      %418 = vmatpush1.bf16.msra.mxu0 0
      %419 = vmatprep.mubr.bf16.mxu0 0
      %420 = vmatmul.mubr.bf16.gmra.mrb[0].mxu0 %v337
      %v421 = vpop.f32.mrb[0].mxu0
      %v422 = vadd.f32 0.0, %v421
      %v423 = vpop.f32.mrb[0].mxu0
      %v424 = vpop.f32.mrb[0].mxu0
      %v425 = vadd.f32 0.0, %v424
      %v426 = vpop.f32.mrb[0].mxu0
      %427 = vdwg.mxu0
      %v428 = vcombine.low %v183, %v184
      %v429 = vcombine.low %v185, %v186
      %v431 = vunpack.c.l.s4 1983009808
      %v432 = vunpack.c.0.s8 %v431
      %v433 = vlaneseq
      %v434 = vshrl.u32 %v433, 7
      %v435 = vsub.s32 %v432, %v434
      %v436 = vrot.slane %v428, %v435
      %v438 = vunpack.c.l.s4 1983009808
      %v439 = vunpack.c.0.s8 %v438
      %v440 = vlaneseq
      %v441 = vshrl.u32 %v440, 7
      %v442 = vsub.s32 %v439, %v441
      %v443 = vrot.slane %v429, %v442
      %v444 = vcombine.low %v436, %v443
      %v462 = vunpack.c.l.b16 %v189
      %v463 = vunpack.c.l.b16 %v190
      %v464 = vunpack.c.l.b16 %v191
      %v465 = vunpack.c.l.b16 %v192
      %v466 = vunpack.c.l.b16 %v193
      %v467 = vunpack.c.l.b16 %v194
      %v468 = vunpack.c.l.b16 %v195
      %v469 = vunpack.c.l.b16 %v196
      %v470 = vunpack.c.l.b16 %v197
      %v471 = vunpack.c.l.b16 %v198
      %v472 = vunpack.c.l.b16 %v199
      %v473 = vunpack.c.l.b16 %v200
      %v474 = vunpack.c.l.b16 %v201
      %v475 = vunpack.c.l.b16 %v202
      %v476 = vunpack.c.l.b16 %v203
      %v477 = vunpack.c.l.b16 %v204
      %v478 = vpack.c.b16 %v463, %v462
      %v479 = vpack.c.b16 %v465, %v464
      %v480 = vpack.c.b16 %v467, %v466
      %v481 = vpack.c.b16 %v469, %v468
      %v482 = vpack.c.b16 %v471, %v470
      %v483 = vpack.c.b16 %v473, %v472
      %v484 = vpack.c.b16 %v475, %v474
      %v485 = vpack.c.b16 %v477, %v476
      %494 = vmatprep.subr.bf16.mxu0 0
      %495 = vmatpush1.bf16.msra.mxu0 %v478
      %496 = vmatprep.subr.bf16.mxu0 0
      %497 = vmatpush1.bf16.msra.mxu0 %v479
      %498 = vmatprep.subr.bf16.mxu0 0
      %499 = vmatpush1.bf16.msra.mxu0 %v480
      %500 = vmatprep.subr.bf16.mxu0 0
      %501 = vmatpush1.bf16.msra.mxu0 %v481
      %502 = vmatprep.subr.bf16.mxu0 0
      %503 = vmatpush1.bf16.msra.mxu0 %v482
      %504 = vmatprep.subr.bf16.mxu0 0
      %505 = vmatpush1.bf16.msra.mxu0 %v483
      %506 = vmatprep.subr.bf16.mxu0 0
      %507 = vmatpush1.bf16.msra.mxu0 %v484
      %508 = vmatprep.subr.bf16.mxu0 0
      %509 = vmatpush1.bf16.msra.mxu0 %v485
      %510 = vmatprep.subr.bf16.mxu0 0
      %511 = vmatpush1.bf16.msra.mxu0 0
      %512 = vmatprep.subr.bf16.mxu0 0
      %513 = vmatpush1.bf16.msra.mxu0 0
      %514 = vmatprep.subr.bf16.mxu0 0
      %515 = vmatpush1.bf16.msra.mxu0 0
      %516 = vmatprep.subr.bf16.mxu0 0
      %517 = vmatpush1.bf16.msra.mxu0 0
      %518 = vmatprep.subr.bf16.mxu0 0
      %519 = vmatpush1.bf16.msra.mxu0 0
      %520 = vmatprep.subr.bf16.mxu0 0
      %521 = vmatpush1.bf16.msra.mxu0 0
      %522 = vmatprep.subr.bf16.mxu0 0
      %523 = vmatpush1.bf16.msra.mxu0 0
      %524 = vmatprep.subr.bf16.mxu0 0
      %525 = vmatpush1.bf16.msra.mxu0 0
      %526 = vmatprep.mubr.bf16.mxu0 0
      %527 = vmatmul.mubr.bf16.gmra.mrb[0].mxu0 %v444
      %v528 = vpop.f32.mrb[0].mxu0
      %v529 = vadd.f32 %v422, %v528
      %v530 = vpop.f32.mrb[0].mxu0
      %v531 = vpop.f32.mrb[0].mxu0
      %v532 = vadd.f32 %v425, %v531
      %v533 = vpop.f32.mrb[0].mxu0
      %534 = vdwg.mxu0
      %vm535 = vcmask 1040384
      %vm536 = vcmask 1042434
      %vm537 = vmor %vm535, %vm536
      %vm538 = vcmask 1044484
      %vm539 = vmor %vm537, %vm538
      %vm540 = vcmask 1046534
      %vm541 = vmor %vm539, %vm540
      %v542 = vrot.slane %v215, 7
      %v543 = vrot.slane %v542, 2
      %v544 = vrot.slane %v216, 7
      %v545 = vsel %vm541, %v543, %v544
      %v546 = vrot.slane %v223, 7
      %v547 = vrot.slane %v546, 2
      %v548 = vrot.slane %v224, 7
      %v549 = vsel %vm541, %v547, %v548
      %v550 = vrot.slane %v231, 7
      %v551 = vrot.slane %v550, 2
      %v552 = vrot.slane %v232, 7
      %v553 = vsel %vm541, %v551, %v552
      %v554 = vrot.slane %v239, 7
      %v555 = vrot.slane %v554, 2
      %v556 = vrot.slane %v240, 7
      %v557 = vsel %vm541, %v555, %v556
      %s558 = scalar_lea.vmem %s1, 128
      %v559 = vld [vmem:[%s558] sm:$0xf]
      %v560 = vld [vmem:[%s558 + $0x4] sm:$0xf]
      %v561 = vld [vmem:[%s558 + $0x8] sm:$0xf]
      %v562 = vld [vmem:[%s558 + $0xc] sm:$0xf]
      %v563 = vld [vmem:[%s558 + $0x10] sm:$0xf]
      %v564 = vld [vmem:[%s558 + $0x14] sm:$0xf]
      %v565 = vld [vmem:[%s558 + $0x18] sm:$0xf]
      %v566 = vld [vmem:[%s558 + $0x1c] sm:$0xf]
      %v567 = vld [vmem:[%s558 + $0x20] sm:$0xf]
      %v568 = vld [vmem:[%s558 + $0x24] sm:$0xf]
      %v569 = vld [vmem:[%s558 + $0x28] sm:$0xf]
      %v570 = vld [vmem:[%s558 + $0x2c] sm:$0xf]
      %v571 = vld [vmem:[%s558 + $0x30] sm:$0xf]
      %v572 = vld [vmem:[%s558 + $0x34] sm:$0xf]
      %v573 = vld [vmem:[%s558 + $0x38] sm:$0xf]
      %v574 = vld [vmem:[%s558 + $0x3c] sm:$0xf]
      %v575 = vcombine.low %v545, %v549
      %v576 = vcombine.low %v553, %v557
      %v578 = vunpack.c.l.s4 1983009808
      %v579 = vunpack.c.0.s8 %v578
      %v580 = vlaneseq
      %v581 = vshrl.u32 %v580, 7
      %v582 = vsub.s32 %v579, %v581
      %v583 = vrot.slane %v575, %v582
      %v585 = vunpack.c.l.s4 1983009808
      %v586 = vunpack.c.0.s8 %v585
      %v587 = vlaneseq
      %v588 = vshrl.u32 %v587, 7
      %v589 = vsub.s32 %v586, %v588
      %v590 = vrot.slane %v576, %v589
      %v591 = vcombine.low %v583, %v590
      %v609 = vunpack.c.l.b16 %v559
      %v610 = vunpack.c.l.b16 %v560
      %v611 = vunpack.c.l.b16 %v561
      %v612 = vunpack.c.l.b16 %v562
      %v613 = vunpack.c.l.b16 %v563
      %v614 = vunpack.c.l.b16 %v564
      %v615 = vunpack.c.l.b16 %v565
      %v616 = vunpack.c.l.b16 %v566
      %v617 = vunpack.c.l.b16 %v567
      %v618 = vunpack.c.l.b16 %v568
      %v619 = vunpack.c.l.b16 %v569
      %v620 = vunpack.c.l.b16 %v570
      %v621 = vunpack.c.l.b16 %v571
      %v622 = vunpack.c.l.b16 %v572
      %v623 = vunpack.c.l.b16 %v573
      %v624 = vunpack.c.l.b16 %v574
      %v625 = vpack.c.b16 %v610, %v609
      %v626 = vpack.c.b16 %v612, %v611
      %v627 = vpack.c.b16 %v614, %v613
      %v628 = vpack.c.b16 %v616, %v615
      %v629 = vpack.c.b16 %v618, %v617
      %v630 = vpack.c.b16 %v620, %v619
      %v631 = vpack.c.b16 %v622, %v621
      %v632 = vpack.c.b16 %v624, %v623
      %641 = vmatprep.subr.bf16.mxu0 0
      %642 = vmatpush1.bf16.msra.mxu0 %v625
      %643 = vmatprep.subr.bf16.mxu0 0
      %644 = vmatpush1.bf16.msra.mxu0 %v626
      %645 = vmatprep.subr.bf16.mxu0 0
      %646 = vmatpush1.bf16.msra.mxu0 %v627
      %647 = vmatprep.subr.bf16.mxu0 0
      %648 = vmatpush1.bf16.msra.mxu0 %v628
      %649 = vmatprep.subr.bf16.mxu0 0
      %650 = vmatpush1.bf16.msra.mxu0 %v629
      %651 = vmatprep.subr.bf16.mxu0 0
      %652 = vmatpush1.bf16.msra.mxu0 %v630
      %653 = vmatprep.subr.bf16.mxu0 0
      %654 = vmatpush1.bf16.msra.mxu0 %v631
      %655 = vmatprep.subr.bf16.mxu0 0
      %656 = vmatpush1.bf16.msra.mxu0 %v632
      %657 = vmatprep.subr.bf16.mxu0 0
      %658 = vmatpush1.bf16.msra.mxu0 0
      %659 = vmatprep.subr.bf16.mxu0 0
      %660 = vmatpush1.bf16.msra.mxu0 0
      %661 = vmatprep.subr.bf16.mxu0 0
      %662 = vmatpush1.bf16.msra.mxu0 0
      %663 = vmatprep.subr.bf16.mxu0 0
      %664 = vmatpush1.bf16.msra.mxu0 0
      %665 = vmatprep.subr.bf16.mxu0 0
      %666 = vmatpush1.bf16.msra.mxu0 0
      %667 = vmatprep.subr.bf16.mxu0 0
      %668 = vmatpush1.bf16.msra.mxu0 0
      %669 = vmatprep.subr.bf16.mxu0 0
      %670 = vmatpush1.bf16.msra.mxu0 0
      %671 = vmatprep.subr.bf16.mxu0 0
      %672 = vmatpush1.bf16.msra.mxu0 0
      %673 = vmatprep.mubr.bf16.mxu0 0
      %674 = vmatmul.mubr.bf16.gmra.mrb[0].mxu0 %v591
      %v675 = vpop.f32.mrb[0].mxu0
      %v676 = vadd.f32 0.0, %v675
      %v677 = vpop.f32.mrb[0].mxu0
      %v678 = vpop.f32.mrb[0].mxu0
      %v679 = vadd.f32 0.0, %v678
      %v680 = vpop.f32.mrb[0].mxu0
      %681 = vdwg.mxu0
      %v682 = vadd.f32 %v529, %v676
      %v683 = vadd.f32 %v532, %v679
      %s684 = scalar_lea.vmem %s1, 192
      %v685 = vld [vmem:[%s684] sm:$0xf]
      %v686 = vld [vmem:[%s684 + $0x4] sm:$0xf]
      %v687 = vld [vmem:[%s684 + $0x8] sm:$0xf]
      %v688 = vld [vmem:[%s684 + $0xc] sm:$0xf]
      %v689 = vld [vmem:[%s684 + $0x10] sm:$0xf]
      %v690 = vld [vmem:[%s684 + $0x14] sm:$0xf]
      %v691 = vld [vmem:[%s684 + $0x18] sm:$0xf]
      %v692 = vld [vmem:[%s684 + $0x1c] sm:$0xf]
      %v693 = vld [vmem:[%s684 + $0x20] sm:$0xf]
      %v694 = vld [vmem:[%s684 + $0x24] sm:$0xf]
      %v695 = vld [vmem:[%s684 + $0x28] sm:$0xf]
      %v696 = vld [vmem:[%s684 + $0x2c] sm:$0xf]
      %v697 = vld [vmem:[%s684 + $0x30] sm:$0xf]
      %v698 = vld [vmem:[%s684 + $0x34] sm:$0xf]
      %v699 = vld [vmem:[%s684 + $0x38] sm:$0xf]
      %v700 = vld [vmem:[%s684 + $0x3c] sm:$0xf]
      %v702 = vcombine.low %v184, %v185
      %v703 = vcombine.low %v186, %v187
      %v705 = vunpack.c.l.s4 1983009808
      %v706 = vunpack.c.0.s8 %v705
      %v707 = vlaneseq
      %v708 = vshrl.u32 %v707, 7
      %v709 = vsub.s32 %v706, %v708
      %v710 = vrot.slane %v702, %v709
      %v712 = vunpack.c.l.s4 1983009808
      %v713 = vunpack.c.0.s8 %v712
      %v714 = vlaneseq
      %v715 = vshrl.u32 %v714, 7
      %v716 = vsub.s32 %v713, %v715
      %v717 = vrot.slane %v703, %v716
      %v718 = vcombine.low %v710, %v717
      %v736 = vunpack.c.l.b16 %v685
      %v737 = vunpack.c.l.b16 %v686
      %v738 = vunpack.c.l.b16 %v687
      %v739 = vunpack.c.l.b16 %v688
      %v740 = vunpack.c.l.b16 %v689
      %v741 = vunpack.c.l.b16 %v690
      %v742 = vunpack.c.l.b16 %v691
      %v743 = vunpack.c.l.b16 %v692
      %v744 = vunpack.c.l.b16 %v693
      %v745 = vunpack.c.l.b16 %v694
      %v746 = vunpack.c.l.b16 %v695
      %v747 = vunpack.c.l.b16 %v696
      %v748 = vunpack.c.l.b16 %v697
      %v749 = vunpack.c.l.b16 %v698
      %v750 = vunpack.c.l.b16 %v699
      %v751 = vunpack.c.l.b16 %v700
      %v752 = vpack.c.b16 %v737, %v736
      %v753 = vpack.c.b16 %v739, %v738
      %v754 = vpack.c.b16 %v741, %v740
      %v755 = vpack.c.b16 %v743, %v742
      %v756 = vpack.c.b16 %v745, %v744
      %v757 = vpack.c.b16 %v747, %v746
      %v758 = vpack.c.b16 %v749, %v748
      %v759 = vpack.c.b16 %v751, %v750
      %768 = vmatprep.subr.bf16.mxu0 0
      %769 = vmatpush1.bf16.msra.mxu0 %v752
      %770 = vmatprep.subr.bf16.mxu0 0
      %771 = vmatpush1.bf16.msra.mxu0 %v753
      %772 = vmatprep.subr.bf16.mxu0 0
      %773 = vmatpush1.bf16.msra.mxu0 %v754
      %774 = vmatprep.subr.bf16.mxu0 0
      %775 = vmatpush1.bf16.msra.mxu0 %v755
      %776 = vmatprep.subr.bf16.mxu0 0
      %777 = vmatpush1.bf16.msra.mxu0 %v756
      %778 = vmatprep.subr.bf16.mxu0 0
      %779 = vmatpush1.bf16.msra.mxu0 %v757
      %780 = vmatprep.subr.bf16.mxu0 0
      %781 = vmatpush1.bf16.msra.mxu0 %v758
      %782 = vmatprep.subr.bf16.mxu0 0
      %783 = vmatpush1.bf16.msra.mxu0 %v759
      %784 = vmatprep.subr.bf16.mxu0 0
      %785 = vmatpush1.bf16.msra.mxu0 0
      %786 = vmatprep.subr.bf16.mxu0 0
      %787 = vmatpush1.bf16.msra.mxu0 0
      %788 = vmatprep.subr.bf16.mxu0 0
      %789 = vmatpush1.bf16.msra.mxu0 0
      %790 = vmatprep.subr.bf16.mxu0 0
      %791 = vmatpush1.bf16.msra.mxu0 0
      %792 = vmatprep.subr.bf16.mxu0 0
      %793 = vmatpush1.bf16.msra.mxu0 0
      %794 = vmatprep.subr.bf16.mxu0 0
      %795 = vmatpush1.bf16.msra.mxu0 0
      %796 = vmatprep.subr.bf16.mxu0 0
      %797 = vmatpush1.bf16.msra.mxu0 0
      %798 = vmatprep.subr.bf16.mxu0 0
      %799 = vmatpush1.bf16.msra.mxu0 0
      %800 = vmatprep.mubr.bf16.mxu0 0
      %801 = vmatmul.mubr.bf16.gmra.mrb[0].mxu0 %v718
      %v802 = vpop.f32.mrb[0].mxu0
      %v803 = vadd.f32 0.0, %v802
      %v804 = vpop.f32.mrb[0].mxu0
      %v805 = vpop.f32.mrb[0].mxu0
      %v806 = vadd.f32 0.0, %v805
      %v807 = vpop.f32.mrb[0].mxu0
      %808 = vdwg.mxu0
      %v809 = vadd.f32 %v682, %v803
      %v810 = vadd.f32 %v683, %v806
      %v812 = vunpack.c.l.s4 1983009808
      %v813 = vunpack.c.0.s8 %v812
      %v814 = vlaneseq
      %v815 = vshrl.u32 %v814, 7
      %v816 = vsub.s32 %v813, %v815
      %v817 = vrot.slane %v187, %v816
      %v818 = vcombine.high %v817, %v817
      %v820 = vshrl.u32 %v817, 16
      %v822 = vrot.slane %v820, 6
      %v823 = vshll.u32 %v817, 16
      %v825 = vrot.slane %v823, 7
      %v826 = vor.u32 %v822, %v825
      %v827 = vrot.slane %v826, 2
      %v829 = vshll.u32 %v818, 16
      %v831 = vrot.slane %v829, 7
      %v832 = vsel %vm247, %v827, %v831
      %s833 = scalar_lea.vmem %s1, 256
      %v834 = vld [vmem:[%s833] sm:$0xf]
      %v835 = vld [vmem:[%s833 + $0x4] sm:$0xf]
      %v836 = vld [vmem:[%s833 + $0x8] sm:$0xf]
      %v837 = vld [vmem:[%s833 + $0xc] sm:$0xf]
      %v838 = vld [vmem:[%s833 + $0x10] sm:$0xf]
      %v839 = vld [vmem:[%s833 + $0x14] sm:$0xf]
      %v840 = vld [vmem:[%s833 + $0x18] sm:$0xf]
      %v841 = vld [vmem:[%s833 + $0x1c] sm:$0xf]
      %v842 = vld [vmem:[%s833 + $0x20] sm:$0xf]
      %v843 = vld [vmem:[%s833 + $0x24] sm:$0xf]
      %v844 = vld [vmem:[%s833 + $0x28] sm:$0xf]
      %v845 = vld [vmem:[%s833 + $0x2c] sm:$0xf]
      %v846 = vld [vmem:[%s833 + $0x30] sm:$0xf]
      %v847 = vld [vmem:[%s833 + $0x34] sm:$0xf]
      %v848 = vld [vmem:[%s833 + $0x38] sm:$0xf]
      %v849 = vld [vmem:[%s833 + $0x3c] sm:$0xf]
      %v850 = vcombine.low %v275, %v289
      %v851 = vcombine.low %v303, %v832
      %v853 = vunpack.c.l.s4 1983009808
      %v854 = vunpack.c.0.s8 %v853
      %v855 = vlaneseq
      %v856 = vshrl.u32 %v855, 7
      %v857 = vsub.s32 %v854, %v856
      %v858 = vrot.slane %v850, %v857
      %v860 = vunpack.c.l.s4 1983009808
      %v861 = vunpack.c.0.s8 %v860
      %v862 = vlaneseq
      %v863 = vshrl.u32 %v862, 7
      %v864 = vsub.s32 %v861, %v863
      %v865 = vrot.slane %v851, %v864
      %v866 = vcombine.low %v858, %v865
      %v884 = vunpack.c.l.b16 %v834
      %v885 = vunpack.c.l.b16 %v835
      %v886 = vunpack.c.l.b16 %v836
      %v887 = vunpack.c.l.b16 %v837
      %v888 = vunpack.c.l.b16 %v838
      %v889 = vunpack.c.l.b16 %v839
      %v890 = vunpack.c.l.b16 %v840
      %v891 = vunpack.c.l.b16 %v841
      %v892 = vunpack.c.l.b16 %v842
      %v893 = vunpack.c.l.b16 %v843
      %v894 = vunpack.c.l.b16 %v844
      %v895 = vunpack.c.l.b16 %v845
      %v896 = vunpack.c.l.b16 %v846
      %v897 = vunpack.c.l.b16 %v847
      %v898 = vunpack.c.l.b16 %v848
      %v899 = vunpack.c.l.b16 %v849
      %v900 = vpack.c.b16 %v885, %v884
      %v901 = vpack.c.b16 %v887, %v886
      %v902 = vpack.c.b16 %v889, %v888
      %v903 = vpack.c.b16 %v891, %v890
      %v904 = vpack.c.b16 %v893, %v892
      %v905 = vpack.c.b16 %v895, %v894
      %v906 = vpack.c.b16 %v897, %v896
      %v907 = vpack.c.b16 %v899, %v898
      %916 = vmatprep.subr.bf16.mxu0 0
      %917 = vmatpush1.bf16.msra.mxu0 %v900
      %918 = vmatprep.subr.bf16.mxu0 0
      %919 = vmatpush1.bf16.msra.mxu0 %v901
      %920 = vmatprep.subr.bf16.mxu0 0
      %921 = vmatpush1.bf16.msra.mxu0 %v902
      %922 = vmatprep.subr.bf16.mxu0 0
      %923 = vmatpush1.bf16.msra.mxu0 %v903
      %924 = vmatprep.subr.bf16.mxu0 0
      %925 = vmatpush1.bf16.msra.mxu0 %v904
      %926 = vmatprep.subr.bf16.mxu0 0
      %927 = vmatpush1.bf16.msra.mxu0 %v905
      %928 = vmatprep.subr.bf16.mxu0 0
      %929 = vmatpush1.bf16.msra.mxu0 %v906
      %930 = vmatprep.subr.bf16.mxu0 0
      %931 = vmatpush1.bf16.msra.mxu0 %v907
      %932 = vmatprep.subr.bf16.mxu0 0
      %933 = vmatpush1.bf16.msra.mxu0 0
      %934 = vmatprep.subr.bf16.mxu0 0
      %935 = vmatpush1.bf16.msra.mxu0 0
      %936 = vmatprep.subr.bf16.mxu0 0
      %937 = vmatpush1.bf16.msra.mxu0 0
      %938 = vmatprep.subr.bf16.mxu0 0
      %939 = vmatpush1.bf16.msra.mxu0 0
      %940 = vmatprep.subr.bf16.mxu0 0
      %941 = vmatpush1.bf16.msra.mxu0 0
      %942 = vmatprep.subr.bf16.mxu0 0
      %943 = vmatpush1.bf16.msra.mxu0 0
      %944 = vmatprep.subr.bf16.mxu0 0
      %945 = vmatpush1.bf16.msra.mxu0 0
      %946 = vmatprep.subr.bf16.mxu0 0
      %947 = vmatpush1.bf16.msra.mxu0 0
      %948 = vmatprep.mubr.bf16.mxu0 0
      %949 = vmatmul.mubr.bf16.gmra.mrb[0].mxu0 %v866
      %v950 = vpop.f32.mrb[0].mxu0
      %v951 = vadd.f32 0.0, %v950
      %v952 = vpop.f32.mrb[0].mxu0
      %v953 = vpop.f32.mrb[0].mxu0
      %v954 = vadd.f32 0.0, %v953
      %v955 = vpop.f32.mrb[0].mxu0
      %956 = vdwg.mxu0
      %v957 = vadd.f32 %v809, %v951
      %v958 = vadd.f32 %v810, %v954
      %v959 = vrot.slane %v817, 7
      %v960 = vrot.slane %v959, 2
      %v961 = vrot.slane %v818, 7
      %v962 = vsel %vm541, %v960, %v961
      %s963 = scalar_lea.vmem %s1, 320
      %v964 = vld [vmem:[%s963] sm:$0xf]
      %v965 = vld [vmem:[%s963 + $0x4] sm:$0xf]
      %v966 = vld [vmem:[%s963 + $0x8] sm:$0xf]
      %v967 = vld [vmem:[%s963 + $0xc] sm:$0xf]
      %v968 = vld [vmem:[%s963 + $0x10] sm:$0xf]
      %v969 = vld [vmem:[%s963 + $0x14] sm:$0xf]
      %v970 = vld [vmem:[%s963 + $0x18] sm:$0xf]
      %v971 = vld [vmem:[%s963 + $0x1c] sm:$0xf]
      %v972 = vld [vmem:[%s963 + $0x20] sm:$0xf]
      %v973 = vld [vmem:[%s963 + $0x24] sm:$0xf]
      %v974 = vld [vmem:[%s963 + $0x28] sm:$0xf]
      %v975 = vld [vmem:[%s963 + $0x2c] sm:$0xf]
      %v976 = vld [vmem:[%s963 + $0x30] sm:$0xf]
      %v977 = vld [vmem:[%s963 + $0x34] sm:$0xf]
      %v978 = vld [vmem:[%s963 + $0x38] sm:$0xf]
      %v979 = vld [vmem:[%s963 + $0x3c] sm:$0xf]
      %v980 = vcombine.low %v549, %v553
      %v981 = vcombine.low %v557, %v962
      %v983 = vunpack.c.l.s4 1983009808
      %v984 = vunpack.c.0.s8 %v983
      %v985 = vlaneseq
      %v986 = vshrl.u32 %v985, 7
      %v987 = vsub.s32 %v984, %v986
      %v988 = vrot.slane %v980, %v987
      %v990 = vunpack.c.l.s4 1983009808
      %v991 = vunpack.c.0.s8 %v990
      %v992 = vlaneseq
      %v993 = vshrl.u32 %v992, 7
      %v994 = vsub.s32 %v991, %v993
      %v995 = vrot.slane %v981, %v994
      %v996 = vcombine.low %v988, %v995
      %v1014 = vunpack.c.l.b16 %v964
      %v1015 = vunpack.c.l.b16 %v965
      %v1016 = vunpack.c.l.b16 %v966
      %v1017 = vunpack.c.l.b16 %v967
      %v1018 = vunpack.c.l.b16 %v968
      %v1019 = vunpack.c.l.b16 %v969
      %v1020 = vunpack.c.l.b16 %v970
      %v1021 = vunpack.c.l.b16 %v971
      %v1022 = vunpack.c.l.b16 %v972
      %v1023 = vunpack.c.l.b16 %v973
      %v1024 = vunpack.c.l.b16 %v974
      %v1025 = vunpack.c.l.b16 %v975
      %v1026 = vunpack.c.l.b16 %v976
      %v1027 = vunpack.c.l.b16 %v977
      %v1028 = vunpack.c.l.b16 %v978
      %v1029 = vunpack.c.l.b16 %v979
      %v1030 = vpack.c.b16 %v1015, %v1014
      %v1031 = vpack.c.b16 %v1017, %v1016
      %v1032 = vpack.c.b16 %v1019, %v1018
      %v1033 = vpack.c.b16 %v1021, %v1020
      %v1034 = vpack.c.b16 %v1023, %v1022
      %v1035 = vpack.c.b16 %v1025, %v1024
      %v1036 = vpack.c.b16 %v1027, %v1026
      %v1037 = vpack.c.b16 %v1029, %v1028
      %1046 = vmatprep.subr.bf16.mxu0 0
      %1047 = vmatpush1.bf16.msra.mxu0 %v1030
      %1048 = vmatprep.subr.bf16.mxu0 0
      %1049 = vmatpush1.bf16.msra.mxu0 %v1031
      %1050 = vmatprep.subr.bf16.mxu0 0
      %1051 = vmatpush1.bf16.msra.mxu0 %v1032
      %1052 = vmatprep.subr.bf16.mxu0 0
      %1053 = vmatpush1.bf16.msra.mxu0 %v1033
      %1054 = vmatprep.subr.bf16.mxu0 0
      %1055 = vmatpush1.bf16.msra.mxu0 %v1034
      %1056 = vmatprep.subr.bf16.mxu0 0
      %1057 = vmatpush1.bf16.msra.mxu0 %v1035
      %1058 = vmatprep.subr.bf16.mxu0 0
      %1059 = vmatpush1.bf16.msra.mxu0 %v1036
      %1060 = vmatprep.subr.bf16.mxu0 0
      %1061 = vmatpush1.bf16.msra.mxu0 %v1037
      %1062 = vmatprep.subr.bf16.mxu0 0
      %1063 = vmatpush1.bf16.msra.mxu0 0
      %1064 = vmatprep.subr.bf16.mxu0 0
      %1065 = vmatpush1.bf16.msra.mxu0 0
      %1066 = vmatprep.subr.bf16.mxu0 0
      %1067 = vmatpush1.bf16.msra.mxu0 0
      %1068 = vmatprep.subr.bf16.mxu0 0
      %1069 = vmatpush1.bf16.msra.mxu0 0
      %1070 = vmatprep.subr.bf16.mxu0 0
      %1071 = vmatpush1.bf16.msra.mxu0 0
      %1072 = vmatprep.subr.bf16.mxu0 0
      %1073 = vmatpush1.bf16.msra.mxu0 0
      %1074 = vmatprep.subr.bf16.mxu0 0
      %1075 = vmatpush1.bf16.msra.mxu0 0
      %1076 = vmatprep.subr.bf16.mxu0 0
      %1077 = vmatpush1.bf16.msra.mxu0 0
      %1078 = vmatprep.mubr.bf16.mxu0 0
      %1079 = vmatmul.mubr.bf16.gmra.mrb[0].mxu0 %v996
      %v1080 = vpop.f32.mrb[0].mxu0
      %v1081 = vadd.f32 0.0, %v1080
      %v1082 = vpop.f32.mrb[0].mxu0
      %v1083 = vpop.f32.mrb[0].mxu0
      %v1084 = vadd.f32 0.0, %v1083
      %v1085 = vpop.f32.mrb[0].mxu0
      %1086 = vdwg.mxu0
      %v1087 = vadd.f32 %v957, %v1081
      %v1088 = vadd.f32 %v958, %v1084
      %s1089 = scalar_lea.vmem %s1, 384
      %v1090 = vld [vmem:[%s1089] sm:$0xf]
      %v1091 = vld [vmem:[%s1089 + $0x4] sm:$0xf]
      %v1092 = vld [vmem:[%s1089 + $0x8] sm:$0xf]
      %v1093 = vld [vmem:[%s1089 + $0xc] sm:$0xf]
      %v1094 = vld [vmem:[%s1089 + $0x10] sm:$0xf]
      %v1095 = vld [vmem:[%s1089 + $0x14] sm:$0xf]
      %v1096 = vld [vmem:[%s1089 + $0x18] sm:$0xf]
      %v1097 = vld [vmem:[%s1089 + $0x1c] sm:$0xf]
      %v1098 = vld [vmem:[%s1089 + $0x20] sm:$0xf]
      %v1099 = vld [vmem:[%s1089 + $0x24] sm:$0xf]
      %v1100 = vld [vmem:[%s1089 + $0x28] sm:$0xf]
      %v1101 = vld [vmem:[%s1089 + $0x2c] sm:$0xf]
      %v1102 = vld [vmem:[%s1089 + $0x30] sm:$0xf]
      %v1103 = vld [vmem:[%s1089 + $0x34] sm:$0xf]
      %v1104 = vld [vmem:[%s1089 + $0x38] sm:$0xf]
      %v1105 = vld [vmem:[%s1089 + $0x3c] sm:$0xf]
      %v1107 = vcombine.low %v187, %v188
      %v1109 = vunpack.c.l.s4 1983009808
      %v1110 = vunpack.c.0.s8 %v1109
      %v1111 = vlaneseq
      %v1112 = vshrl.u32 %v1111, 7
      %v1113 = vsub.s32 %v1110, %v1112
      %v1114 = vrot.slane %v1107, %v1113
      %v1115 = vcombine.low %v443, %v1114
      %v1133 = vunpack.c.l.b16 %v1090
      %v1134 = vunpack.c.l.b16 %v1091
      %v1135 = vunpack.c.l.b16 %v1092
      %v1136 = vunpack.c.l.b16 %v1093
      %v1137 = vunpack.c.l.b16 %v1094
      %v1138 = vunpack.c.l.b16 %v1095
      %v1139 = vunpack.c.l.b16 %v1096
      %v1140 = vunpack.c.l.b16 %v1097
      %v1141 = vunpack.c.l.b16 %v1098
      %v1142 = vunpack.c.l.b16 %v1099
      %v1143 = vunpack.c.l.b16 %v1100
      %v1144 = vunpack.c.l.b16 %v1101
      %v1145 = vunpack.c.l.b16 %v1102
      %v1146 = vunpack.c.l.b16 %v1103
      %v1147 = vunpack.c.l.b16 %v1104
      %v1148 = vunpack.c.l.b16 %v1105
      %v1149 = vpack.c.b16 %v1134, %v1133
      %v1150 = vpack.c.b16 %v1136, %v1135
      %v1151 = vpack.c.b16 %v1138, %v1137
      %v1152 = vpack.c.b16 %v1140, %v1139
      %v1153 = vpack.c.b16 %v1142, %v1141
      %v1154 = vpack.c.b16 %v1144, %v1143
      %v1155 = vpack.c.b16 %v1146, %v1145
      %v1156 = vpack.c.b16 %v1148, %v1147
      %1165 = vmatprep.subr.bf16.mxu0 0
      %1166 = vmatpush1.bf16.msra.mxu0 %v1149
      %1167 = vmatprep.subr.bf16.mxu0 0
      %1168 = vmatpush1.bf16.msra.mxu0 %v1150
      %1169 = vmatprep.subr.bf16.mxu0 0
      %1170 = vmatpush1.bf16.msra.mxu0 %v1151
      %1171 = vmatprep.subr.bf16.mxu0 0
      %1172 = vmatpush1.bf16.msra.mxu0 %v1152
      %1173 = vmatprep.subr.bf16.mxu0 0
      %1174 = vmatpush1.bf16.msra.mxu0 %v1153
      %1175 = vmatprep.subr.bf16.mxu0 0
      %1176 = vmatpush1.bf16.msra.mxu0 %v1154
      %1177 = vmatprep.subr.bf16.mxu0 0
      %1178 = vmatpush1.bf16.msra.mxu0 %v1155
      %1179 = vmatprep.subr.bf16.mxu0 0
      %1180 = vmatpush1.bf16.msra.mxu0 %v1156
      %1181 = vmatprep.subr.bf16.mxu0 0
      %1182 = vmatpush1.bf16.msra.mxu0 0
      %1183 = vmatprep.subr.bf16.mxu0 0
      %1184 = vmatpush1.bf16.msra.mxu0 0
      %1185 = vmatprep.subr.bf16.mxu0 0
      %1186 = vmatpush1.bf16.msra.mxu0 0
      %1187 = vmatprep.subr.bf16.mxu0 0
      %1188 = vmatpush1.bf16.msra.mxu0 0
      %1189 = vmatprep.subr.bf16.mxu0 0
      %1190 = vmatpush1.bf16.msra.mxu0 0
      %1191 = vmatprep.subr.bf16.mxu0 0
      %1192 = vmatpush1.bf16.msra.mxu0 0
      %1193 = vmatprep.subr.bf16.mxu0 0
      %1194 = vmatpush1.bf16.msra.mxu0 0
      %1195 = vmatprep.subr.bf16.mxu0 0
      %1196 = vmatpush1.bf16.msra.mxu0 0
      %1197 = vmatprep.mubr.bf16.mxu0 0
      %1198 = vmatmul.mubr.bf16.gmra.mrb[0].mxu0 %v1115
      %v1199 = vpop.f32.mrb[0].mxu0
      %v1200 = vadd.f32 0.0, %v1199
      %v1201 = vpop.f32.mrb[0].mxu0
      %v1202 = vpop.f32.mrb[0].mxu0
      %v1203 = vadd.f32 0.0, %v1202
      %v1204 = vpop.f32.mrb[0].mxu0
      %1205 = vdwg.mxu0
      %v1206 = vadd.f32 %v1087, %v1200
      %v1207 = vadd.f32 %v1088, %v1203
      %v1209 = vunpack.c.l.s4 1983009808
      %v1210 = vunpack.c.0.s8 %v1209
      %v1211 = vlaneseq
      %v1212 = vshrl.u32 %v1211, 7
      %v1213 = vsub.s32 %v1210, %v1212
      %v1214 = vrot.slane %v188, %v1213
      %v1215 = vcombine.high %v1214, %v1214
      %v1217 = vshrl.u32 %v1214, 16
      %v1219 = vrot.slane %v1217, 6
      %v1220 = vshll.u32 %v1214, 16
      %v1222 = vrot.slane %v1220, 7
      %v1223 = vor.u32 %v1219, %v1222
      %v1224 = vrot.slane %v1223, 2
      %v1226 = vshll.u32 %v1215, 16
      %v1228 = vrot.slane %v1226, 7
      %v1229 = vsel %vm247, %v1224, %v1228
      %s1230 = scalar_lea.vmem %s1, 448
      %v1231 = vld [vmem:[%s1230] sm:$0xf]
      %v1232 = vld [vmem:[%s1230 + $0x4] sm:$0xf]
      %v1233 = vld [vmem:[%s1230 + $0x8] sm:$0xf]
      %v1234 = vld [vmem:[%s1230 + $0xc] sm:$0xf]
      %v1235 = vld [vmem:[%s1230 + $0x10] sm:$0xf]
      %v1236 = vld [vmem:[%s1230 + $0x14] sm:$0xf]
      %v1237 = vld [vmem:[%s1230 + $0x18] sm:$0xf]
      %v1238 = vld [vmem:[%s1230 + $0x1c] sm:$0xf]
      %v1239 = vld [vmem:[%s1230 + $0x20] sm:$0xf]
      %v1240 = vld [vmem:[%s1230 + $0x24] sm:$0xf]
      %v1241 = vld [vmem:[%s1230 + $0x28] sm:$0xf]
      %v1242 = vld [vmem:[%s1230 + $0x2c] sm:$0xf]
      %v1243 = vld [vmem:[%s1230 + $0x30] sm:$0xf]
      %v1244 = vld [vmem:[%s1230 + $0x34] sm:$0xf]
      %v1245 = vld [vmem:[%s1230 + $0x38] sm:$0xf]
      %v1246 = vld [vmem:[%s1230 + $0x3c] sm:$0xf]
      %v1247 = vcombine.low %v832, %v1229
      %v1249 = vunpack.c.l.s4 1983009808
      %v1250 = vunpack.c.0.s8 %v1249
      %v1251 = vlaneseq
      %v1252 = vshrl.u32 %v1251, 7
      %v1253 = vsub.s32 %v1250, %v1252
      %v1254 = vrot.slane %v1247, %v1253
      %v1255 = vcombine.low %v336, %v1254
      %v1273 = vunpack.c.l.b16 %v1231
      %v1274 = vunpack.c.l.b16 %v1232
      %v1275 = vunpack.c.l.b16 %v1233
      %v1276 = vunpack.c.l.b16 %v1234
      %v1277 = vunpack.c.l.b16 %v1235
      %v1278 = vunpack.c.l.b16 %v1236
      %v1279 = vunpack.c.l.b16 %v1237
      %v1280 = vunpack.c.l.b16 %v1238
      %v1281 = vunpack.c.l.b16 %v1239
      %v1282 = vunpack.c.l.b16 %v1240
      %v1283 = vunpack.c.l.b16 %v1241
      %v1284 = vunpack.c.l.b16 %v1242
      %v1285 = vunpack.c.l.b16 %v1243
      %v1286 = vunpack.c.l.b16 %v1244
      %v1287 = vunpack.c.l.b16 %v1245
      %v1288 = vunpack.c.l.b16 %v1246
      %v1289 = vpack.c.b16 %v1274, %v1273
      %v1290 = vpack.c.b16 %v1276, %v1275
      %v1291 = vpack.c.b16 %v1278, %v1277
      %v1292 = vpack.c.b16 %v1280, %v1279
      %v1293 = vpack.c.b16 %v1282, %v1281
      %v1294 = vpack.c.b16 %v1284, %v1283
      %v1295 = vpack.c.b16 %v1286, %v1285
      %v1296 = vpack.c.b16 %v1288, %v1287
      %1305 = vmatprep.subr.bf16.mxu0 0
      %1306 = vmatpush1.bf16.msra.mxu0 %v1289
      %1307 = vmatprep.subr.bf16.mxu0 0
      %1308 = vmatpush1.bf16.msra.mxu0 %v1290
      %1309 = vmatprep.subr.bf16.mxu0 0
      %1310 = vmatpush1.bf16.msra.mxu0 %v1291
      %1311 = vmatprep.subr.bf16.mxu0 0
      %1312 = vmatpush1.bf16.msra.mxu0 %v1292
      %1313 = vmatprep.subr.bf16.mxu0 0
      %1314 = vmatpush1.bf16.msra.mxu0 %v1293
      %1315 = vmatprep.subr.bf16.mxu0 0
      %1316 = vmatpush1.bf16.msra.mxu0 %v1294
      %1317 = vmatprep.subr.bf16.mxu0 0
      %1318 = vmatpush1.bf16.msra.mxu0 %v1295
      %1319 = vmatprep.subr.bf16.mxu0 0
      %1320 = vmatpush1.bf16.msra.mxu0 %v1296
      %1321 = vmatprep.subr.bf16.mxu0 0
      %1322 = vmatpush1.bf16.msra.mxu0 0
      %1323 = vmatprep.subr.bf16.mxu0 0
      %1324 = vmatpush1.bf16.msra.mxu0 0
      %1325 = vmatprep.subr.bf16.mxu0 0
      %1326 = vmatpush1.bf16.msra.mxu0 0
      %1327 = vmatprep.subr.bf16.mxu0 0
      %1328 = vmatpush1.bf16.msra.mxu0 0
      %1329 = vmatprep.subr.bf16.mxu0 0
      %1330 = vmatpush1.bf16.msra.mxu0 0
      %1331 = vmatprep.subr.bf16.mxu0 0
      %1332 = vmatpush1.bf16.msra.mxu0 0
      %1333 = vmatprep.subr.bf16.mxu0 0
      %1334 = vmatpush1.bf16.msra.mxu0 0
      %1335 = vmatprep.subr.bf16.mxu0 0
      %1336 = vmatpush1.bf16.msra.mxu0 0
      %1337 = vmatprep.mubr.bf16.mxu0 0
      %1338 = vmatmul.mubr.bf16.gmra.mrb[0].mxu0 %v1255
      %v1339 = vpop.f32.mrb[0].mxu0
      %v1340 = vadd.f32 0.0, %v1339
      %v1341 = vpop.f32.mrb[0].mxu0
      %v1342 = vpop.f32.mrb[0].mxu0
      %v1343 = vadd.f32 0.0, %v1342
      %v1344 = vpop.f32.mrb[0].mxu0
      %1345 = vdwg.mxu0
      %v1346 = vadd.f32 %v1206, %v1340
      %v1347 = vadd.f32 %v1207, %v1343
      %v1348 = vrot.slane %v1214, 7
      %v1349 = vrot.slane %v1348, 2
      %v1350 = vrot.slane %v1215, 7
      %v1351 = vsel %vm541, %v1349, %v1350
      %s1352 = scalar_lea.vmem %s1, 512
      %v1353 = vld [vmem:[%s1352] sm:$0xf]
      %v1354 = vld [vmem:[%s1352 + $0x4] sm:$0xf]
      %v1355 = vld [vmem:[%s1352 + $0x8] sm:$0xf]
      %v1356 = vld [vmem:[%s1352 + $0xc] sm:$0xf]
      %v1357 = vld [vmem:[%s1352 + $0x10] sm:$0xf]
      %v1358 = vld [vmem:[%s1352 + $0x14] sm:$0xf]
      %v1359 = vld [vmem:[%s1352 + $0x18] sm:$0xf]
      %v1360 = vld [vmem:[%s1352 + $0x1c] sm:$0xf]
      %v1361 = vld [vmem:[%s1352 + $0x20] sm:$0xf]
      %v1362 = vld [vmem:[%s1352 + $0x24] sm:$0xf]
      %v1363 = vld [vmem:[%s1352 + $0x28] sm:$0xf]
      %v1364 = vld [vmem:[%s1352 + $0x2c] sm:$0xf]
      %v1365 = vld [vmem:[%s1352 + $0x30] sm:$0xf]
      %v1366 = vld [vmem:[%s1352 + $0x34] sm:$0xf]
      %v1367 = vld [vmem:[%s1352 + $0x38] sm:$0xf]
      %v1368 = vld [vmem:[%s1352 + $0x3c] sm:$0xf]
      %v1369 = vcombine.low %v962, %v1351
      %v1371 = vunpack.c.l.s4 1983009808
      %v1372 = vunpack.c.0.s8 %v1371
      %v1373 = vlaneseq
      %v1374 = vshrl.u32 %v1373, 7
      %v1375 = vsub.s32 %v1372, %v1374
      %v1376 = vrot.slane %v1369, %v1375
      %v1377 = vcombine.low %v590, %v1376
      %v1395 = vunpack.c.l.b16 %v1353
      %v1396 = vunpack.c.l.b16 %v1354
      %v1397 = vunpack.c.l.b16 %v1355
      %v1398 = vunpack.c.l.b16 %v1356
      %v1399 = vunpack.c.l.b16 %v1357
      %v1400 = vunpack.c.l.b16 %v1358
      %v1401 = vunpack.c.l.b16 %v1359
      %v1402 = vunpack.c.l.b16 %v1360
      %v1403 = vunpack.c.l.b16 %v1361
      %v1404 = vunpack.c.l.b16 %v1362
      %v1405 = vunpack.c.l.b16 %v1363
      %v1406 = vunpack.c.l.b16 %v1364
      %v1407 = vunpack.c.l.b16 %v1365
      %v1408 = vunpack.c.l.b16 %v1366
      %v1409 = vunpack.c.l.b16 %v1367
      %v1410 = vunpack.c.l.b16 %v1368
      %v1411 = vpack.c.b16 %v1396, %v1395
      %v1412 = vpack.c.b16 %v1398, %v1397
      %v1413 = vpack.c.b16 %v1400, %v1399
      %v1414 = vpack.c.b16 %v1402, %v1401
      %v1415 = vpack.c.b16 %v1404, %v1403
      %v1416 = vpack.c.b16 %v1406, %v1405
      %v1417 = vpack.c.b16 %v1408, %v1407
      %v1418 = vpack.c.b16 %v1410, %v1409
      %1427 = vmatprep.subr.bf16.mxu0 0
      %1428 = vmatpush1.bf16.msra.mxu0 %v1411
      %1429 = vmatprep.subr.bf16.mxu0 0
      %1430 = vmatpush1.bf16.msra.mxu0 %v1412
      %1431 = vmatprep.subr.bf16.mxu0 0
      %1432 = vmatpush1.bf16.msra.mxu0 %v1413
      %1433 = vmatprep.subr.bf16.mxu0 0
      %1434 = vmatpush1.bf16.msra.mxu0 %v1414
      %1435 = vmatprep.subr.bf16.mxu0 0
      %1436 = vmatpush1.bf16.msra.mxu0 %v1415
      %1437 = vmatprep.subr.bf16.mxu0 0
      %1438 = vmatpush1.bf16.msra.mxu0 %v1416
      %1439 = vmatprep.subr.bf16.mxu0 0
      %1440 = vmatpush1.bf16.msra.mxu0 %v1417
      %1441 = vmatprep.subr.bf16.mxu0 0
      %1442 = vmatpush1.bf16.msra.mxu0 %v1418
      %1443 = vmatprep.subr.bf16.mxu0 0
      %1444 = vmatpush1.bf16.msra.mxu0 0
      %1445 = vmatprep.subr.bf16.mxu0 0
      %1446 = vmatpush1.bf16.msra.mxu0 0
      %1447 = vmatprep.subr.bf16.mxu0 0
      %1448 = vmatpush1.bf16.msra.mxu0 0
      %1449 = vmatprep.subr.bf16.mxu0 0
      %1450 = vmatpush1.bf16.msra.mxu0 0
      %1451 = vmatprep.subr.bf16.mxu0 0
      %1452 = vmatpush1.bf16.msra.mxu0 0
      %1453 = vmatprep.subr.bf16.mxu0 0
      %1454 = vmatpush1.bf16.msra.mxu0 0
      %1455 = vmatprep.subr.bf16.mxu0 0
      %1456 = vmatpush1.bf16.msra.mxu0 0
      %1457 = vmatprep.subr.bf16.mxu0 0
      %1458 = vmatpush1.bf16.msra.mxu0 0
      %1459 = vmatprep.mubr.bf16.mxu0 0
      %1460 = vmatmul.mubr.bf16.gmra.mrb[0].mxu0 %v1377
      %v1461 = vpop.f32.mrb[0].mxu0
      %v1462 = vadd.f32 0.0, %v1461
      %v1463 = vpop.f32.mrb[0].mxu0
      %v1464 = vpop.f32.mrb[0].mxu0
      %v1465 = vadd.f32 0.0, %v1464
      %v1466 = vpop.f32.mrb[0].mxu0
      %1467 = vdwg.mxu0
      %v1468 = vadd.f32 %v1346, %v1462
      %v1469 = vadd.f32 %v1347, %v1465
      %v1470 = vpack.c.bf16 %v1469, %v1468
      %v1472 = vunpack.c.l.b16 %v1470
      %v1473 = vunpack.c.h.b16 %v1470
      %v1474 = vpack.c.b16 %v1472, %v1472
      %v1475 = vpack.c.b16 %v1473, %v1473
      %1478 = vst [vmem:[%s177] sm:$0xf] %v1474
      %1479 = vst [vmem:[%s177 + $0x4] sm:$0xf] %v1475
      %v1480 = vadd.f32 %v1468, %v1469
      %v1481 = vrot.slane %v1480, 4
      %v1482 = vadd.f32 %v1480, %v1481
      %v1483 = vrot.slane %v1482, 2
      %v1484 = vadd.f32 %v1482, %v1483
      %v1485 = vrot.slane %v1484, 1
      %v1486 = vadd.f32 %v1484, %v1485
      %v1487 = vmul.f32 %v1468, %v1468
      %v1488 = vmul.f32 %v1469, %v1469
      %v1489 = vadd.f32 %v1487, %v1488
      %v1490 = vrot.slane %v1489, 4
      %v1491 = vadd.f32 %v1489, %v1490
      %v1492 = vrot.slane %v1491, 2
      %v1493 = vadd.f32 %v1491, %v1492
      %v1494 = vrot.slane %v1493, 1
      %v1495 = vadd.f32 %v1493, %v1494
      %vm1496 = vcmask 1040384
      %v1497 = vsel %vm1496, %v1486, %v1495
      %vm1498 = vcmask 1041408
      %v1499 = vsel %vm1498, %v1497, 0.0
      %1500 = vst [vmem:[%s181] sm:$0xff] %v1499
      %p1501 = scmp.lt.s32.totalorder %s15, 1
      %s1502 = scalar_select %p1501, %s15, 1
      %s1503 = smul.addr %s1502, 2
      %s1504 = smul.addr %s1503, 4
      %s1505 = scalar_lea.vmem %s2, %s1504
      %p1506 = scmp.lt.s32.totalorder %s15, 1
      %s1507 = scalar_select %p1506, %s15, 1
      %s1508 = smul.addr %s1507, 8
      %s1509 = scalar_lea.vmem %s3, %s1508
      // Predicated region
      $region29: #{convnet_forward.10} parent=27 // pred_check
        %p1510 = pneg %p80
      $region30: #{convnet_forward.10} parent=27 // pred_check_branch
        %1512 = sbr.rel (%p1510) target = $region32
      $region31: #{convnet_forward.10} parent=27 // pred_region
        _
      $region32: #{convnet_forward.10} parent=27 // pred_fallthru
        _
      // Predicated region
      $region33: #{convnet_forward.10} parent=27 // pred_check
        %p1513 = pneg %p106
      $region34: #{convnet_forward.10} parent=27 // pred_check_branch
        %1515 = sbr.rel (%p1513) target = $region36
      $region35: #{convnet_forward.10} parent=27 // pred_region
        _
      $region36: #{convnet_forward.10} parent=27 // pred_fallthru
        _
    $region28: #{convnet_forward.10} parent=5 // pred_fallthru
      _
    %p1516 = scmp.le.s32.totalorder 2, %s10
    // Predicated region
    $region37: #{convnet_forward.10} parent=5 // pred_check
      %p1517 = pneg %p1516
    $region38: #{convnet_forward.10} parent=5 // pred_check_branch
      %1519 = sbr.rel (%p1517) target = $region40
    $region39: #{convnet_forward.10} parent=5 // pred_region
      %s1520 = ssub.s32 %s10, 2
      // Predicated region
      $region41: #{convnet_forward.10} parent=39 // pred_check
        %p1521 = pneg %p86
      $region42: #{convnet_forward.10} parent=39 // pred_check_branch
        %1523 = sbr.rel (%p1521) target = $region44
      $region43: #{convnet_forward.10} parent=39 // pred_region
        %p1524 = scmp.lt.s32.totalorder %s16, 1
        %s1525 = scalar_select %p1524, %s16, 1
        %s1526 = smul.addr %s1525, 2
        %s1527 = smul.addr %s1526, 4
        %s1528 = scalar_lea.vmem %s2, %s1527
      $region44: #{convnet_forward.10} parent=39 // pred_fallthru
        _
      // Predicated region
      $region45: #{convnet_forward.10} parent=39 // pred_check
        %p1529 = pneg %p112
      $region46: #{convnet_forward.10} parent=39 // pred_check_branch
        %1531 = sbr.rel (%p1529) target = $region48
      $region47: #{convnet_forward.10} parent=39 // pred_region
        %p1532 = scmp.lt.s32.totalorder %s16, 1
        %s1533 = scalar_select %p1532, %s16, 1
        %s1534 = smul.addr %s1533, 8
        %s1535 = scalar_lea.vmem %s3, %s1534
      $region48: #{convnet_forward.10} parent=39 // pred_fallthru
        _
    $region40: #{convnet_forward.10} parent=5 // pred_fallthru
      _
  $region6: #{convnet_forward.10} parent=0 // loop_footer
    %s14 = sadd.s32 1, %s10
  $region7: #{convnet_forward.10} parent=0 // loop_footer_branch
    %9 = sbr.rel target = $region3
  $region8: #{convnet_forward.10} parent=0 // loop_exit
    _

</llo_original>
